<compile_context>
chip_gen: v7x
topology: tpu7x:2x2x1
jax: 0.10.0
libtpu: 0.0.40
codegen_flags: <defaults>
</compile_context>

<pallas_src>
import functools

import jax
import jax.numpy as jnp
from jax.experimental import pallas as pl
from jax.experimental.pallas import tpu as pltpu

MXU_DTYPE = jnp.bfloat16      # matmul operand dtype (accumulation is always fp32)


def _round_up(x, m):
    return (x + m - 1) // m * m


def _default_vmem_limit():
    try:
        cap = pltpu.get_tpu_info().vmem_capacity_bytes
    except Exception:
        cap = 64 * 1024 * 1024
    # v7x (64 MiB physical): stay at the safe 32 MiB scope; v5e/v6e (128 MiB): raise.
    return 32 * 1024 * 1024 if cap <= 64 * 1024 * 1024 else 80 * 1024 * 1024


_VMEM_LIMIT = _default_vmem_limit()


# --------------------------------------------------------------------------------------
# Kernel 1: wav_conv — 1x1 conv + sequence mask, bf16 activation output
# --------------------------------------------------------------------------------------
def _make_pointwise_mask_kernel(t_tile):
    def kernel(len_ref, x_ref, w_ref, b_ref, o_ref):
        b = pl.program_id(0)
        t = pl.program_id(1)
        y = jnp.dot(w_ref[...], x_ref[0].astype(MXU_DTYPE),
                    preferred_element_type=jnp.float32)          # (C_out, T_tile)
        y = y + b_ref[...]                                       # (C_out, 1) broadcast
        col = jax.lax.broadcasted_iota(jnp.int32, (1, t_tile), 1) + t * t_tile
        mask = (col < len_ref[b]).astype(jnp.float32)            # (1, T_tile)
        o_ref[0] = (y * mask).astype(o_ref.dtype)
    return kernel


def pointwise_conv_mask(x, w, b, lengths, *, t_tile, out_dtype=jnp.bfloat16):
    """(W @ x + b) * sequence_mask  —  Conv1d(kernel=1) + mask, bf16 output activation."""
    B, C_in, T = x.shape
    C_out = w.shape[0]
    nT = T // t_tile
    cost = pl.CostEstimate(
        flops=int(2 * B * T * C_out * C_in),
        transcendentals=0,
        bytes_accessed=int(B * T * (C_in * 4 + C_out * jnp.dtype(out_dtype).itemsize)
                           + C_out * (C_in * 2 + 4)))
    return pl.pallas_call(
        _make_pointwise_mask_kernel(t_tile),
        out_shape=jax.ShapeDtypeStruct((B, C_out, T), out_dtype),
        grid=(B, nT),
        in_specs=[
            pl.BlockSpec(memory_space=pltpu.MemorySpace.SMEM),            # lengths
            pl.BlockSpec((1, C_in, t_tile), lambda b, t: (b, 0, t)),      # wave tile
            pl.BlockSpec((C_out, C_in), lambda b, t: (0, 0)),             # weight
            pl.BlockSpec((C_out, 1), lambda b, t: (0, 0)),                # bias
        ],
        out_specs=pl.BlockSpec((1, C_out, t_tile), lambda b, t: (b, 0, t)),
        compiler_params=pltpu.CompilerParams(
            dimension_semantics=("parallel", "parallel"),
            vmem_limit_bytes=_VMEM_LIMIT),
        cost_estimate=cost,
    )(lengths, x, w, b)


# --------------------------------------------------------------------------------------
# Kernel 2: fully fused WN stack + out conv + reparameterisation
#   Per (batch, time-tile): read x once (center tile + two narrow halo blocks),
#   run all n_layers with x/skip VMEM-resident (overlap region recomputed),
#   then stats = out(skip)*mask, split, z = (m + noise*exp(logs))*mask.
# --------------------------------------------------------------------------------------
def _make_wn_out_fused_kernel(H, C, K, dilation_rate, n_layers, t_tile, pad, nT):
    W0 = t_tile + 2 * pad

    def kernel(len_ref, xl_ref, xc_ref, xr_ref, noise_ref, gb_ref,
               w_in_ref, w_rs_ref, b_rs_ref, w_out_ref, b_out_ref,
               z_ref, m_ref, logs_ref):
        b = pl.program_id(0)
        t = pl.program_id(1)

        # Widened window: [t*t_tile - pad, t*t_tile + t_tile + pad).  Halo blocks are
        # zeroed at the tensor edges (== 'same' zero padding; interior x is mask-zeroed
        # by the wav_conv kernel so out-of-length columns are already exactly zero).
        valid_l = (t > 0).astype(jnp.float32)
        valid_r = (t < nT - 1).astype(jnp.float32)
        x_cur = jnp.concatenate(
            [xl_ref[0].astype(jnp.float32) * valid_l,
             xc_ref[0].astype(jnp.float32),
             xr_ref[0].astype(jnp.float32) * valid_r], axis=1)          # (H, W0) f32

        col0 = jax.lax.broadcasted_iota(jnp.int32, (1, W0), 1) + (t * t_tile - pad)
        mask_full = jnp.logical_and(col0 >= 0,
                                    col0 < len_ref[b]).astype(jnp.float32)  # (1, W0)

        skip = jnp.zeros((H, t_tile), jnp.float32)
        for i in range(n_layers):
            d = dilation_rate ** i
            halo = d * (K - 1) // 2
            # Zero-extend so every layer computes a full-width ('same'-padded) output;
            # edge columns become stale but never reach the center (pad >= sum of halos).
            zext = jnp.zeros((H, halo), jnp.float32)
            x_ext = jnp.concatenate([zext, x_cur, zext], axis=1)        # (H, W0 + 2*halo)

            # K accumulating (2H,H)x(H,W0) MXU matmuls (no stacked-operand copy).
            pre = None
            for k in range(K):
                xk = x_ext[:, k * d:k * d + W0].astype(MXU_DTYPE)
                c = jnp.dot(w_in_ref[i, k], xk, preferred_element_type=jnp.float32)
                pre = c if pre is None else pre + c
            pre = pre + gb_ref[0, i]                                    # cond + bias

            acts = jnp.tanh(pre[:H]) * jax.nn.sigmoid(pre[H:])          # gated act, f32
            rs = jnp.dot(w_rs_ref[i], acts.astype(MXU_DTYPE),
                         preferred_element_type=jnp.float32) + b_rs_ref[i]

            # masked residual update (mask every layer: keeps halo columns beyond the
            # sequence length exactly zero — required for the next layer's conv).
            x_cur = (x_cur + rs[:H]) * mask_full
            skip = skip + rs[H:, pad:pad + t_tile]

        # out conv (1x1) + mask + split + reparameterisation, all on the center tile.
        mask_c = mask_full[:, pad:pad + t_tile]                         # (1, t_tile)
        stats = jnp.dot(w_out_ref[...], skip.astype(MXU_DTYPE),
                        preferred_element_type=jnp.float32) + b_out_ref[...]
        stats = stats * mask_c
        m = stats[:C]
        logs = stats[C:]
        z = (m + noise_ref[0].astype(jnp.float32) * jnp.exp(logs)) * mask_c
        z_ref[0] = z.astype(z_ref.dtype)
        m_ref[0] = m.astype(m_ref.dtype)
        logs_ref[0] = logs.astype(logs_ref.dtype)

    return kernel


def wn_out_fused(x, noise, lengths, gb_all, w_in_all, w_rs_all, b_rs_all, w_out, b_out,
                 *, H, C, K, dilation_rate, n_layers, t_tile, pad):
    B, _, T_pad = x.shape
    nT = T_pad // t_tile
    r = t_tile // pad
    n_pb = T_pad // pad

    x_center = pl.BlockSpec((1, H, t_tile), lambda b, t: (b, 0, t))
    # Narrow halo reads: block the time axis in `pad`-sized units and fetch only the
    # pad columns immediately left/right of the current tile (clamped at the edges).
    x_left = pl.BlockSpec((1, H, pad),
                          lambda b, t: (b, 0, jnp.maximum(t * r - 1, 0)))
    x_right = pl.BlockSpec((1, H, pad),
                           lambda b, t: (b, 0, jnp.minimum(t * r + r, n_pb - 1)))
    c_spec = pl.BlockSpec((1, C, t_tile), lambda b, t: (b, 0, t))

    cost = pl.CostEstimate(
        flops=int(2 * B * (t_tile + 2 * pad) * nT
                  * (n_layers * (2 * H * H * K + 2 * H * H)) + 2 * B * T_pad * 2 * C * H),
        transcendentals=int(B * (t_tile + 2 * pad) * nT * 2 * n_layers * H
                            + B * T_pad * C),
        bytes_accessed=int(
            B * H * (T_pad + 2 * pad * nT) * 2            # x: center + halo reads (bf16)
            + B * C * T_pad * 4                           # noise (f32)
            + B * C * T_pad * (4 + 2 + 2)                 # z (f32), m/logs (bf16)
            + (n_layers * (K * 2 * H * H + 2 * H * H) + 2 * C * H) * 2
            + B * n_layers * 2 * H * 4))

    return pl.pallas_call(
        _make_wn_out_fused_kernel(H, C, K, dilation_rate, n_layers, t_tile, pad, nT),
        out_shape=(jax.ShapeDtypeStruct((B, C, T_pad), jnp.float32),     # z
                   jax.ShapeDtypeStruct((B, C, T_pad), jnp.bfloat16),    # m
                   jax.ShapeDtypeStruct((B, C, T_pad), jnp.bfloat16)),   # logs
        grid=(B, nT),
        in_specs=[
            pl.BlockSpec(memory_space=pltpu.MemorySpace.SMEM),                    # lengths
            x_left, x_center, x_right,                                            # x views
            c_spec,                                                               # noise
            pl.BlockSpec((1, n_layers, 2 * H, 1), lambda b, t: (b, 0, 0, 0)),     # cond+bias
            pl.BlockSpec((n_layers, K, 2 * H, H), lambda b, t: (0, 0, 0, 0)),     # in_layer W
            pl.BlockSpec((n_layers, 2 * H, H), lambda b, t: (0, 0, 0)),           # res_skip W
            pl.BlockSpec((n_layers, 2 * H, 1), lambda b, t: (0, 0, 0)),           # res_skip b
            pl.BlockSpec((2 * C, H), lambda b, t: (0, 0)),                        # out W
            pl.BlockSpec((2 * C, 1), lambda b, t: (0, 0)),                        # out b
        ],
        out_specs=[c_spec, c_spec, c_spec],
        compiler_params=pltpu.CompilerParams(
            dimension_semantics=("parallel", "parallel"),
            vmem_limit_bytes=_VMEM_LIMIT),
        cost_estimate=cost,
    )(lengths, x, x, x, noise, gb_all, w_in_all, w_rs_all, b_rs_all, w_out, b_out)


# --------------------------------------------------------------------------------------
# Parameters (torch layout, deterministic synthetic init; weight_norm folded away)
# --------------------------------------------------------------------------------------
def init_posterior_encoder_params(key, in_channels, out_channels, hidden_channels,
                                  kernel_size, dilation_rate, n_layers, gin_channels):
    def nrm(k, shape, scale=0.05):
        return scale * jax.random.normal(k, shape, jnp.float32)

    keys = iter(jax.random.split(key, 6 + 4 * n_layers))
    p = {
        "wav_w": nrm(next(keys), (hidden_channels, in_channels, 1)),
        "wav_b": nrm(next(keys), (hidden_channels,)),
        "cond_w": nrm(next(keys), (2 * hidden_channels * n_layers, gin_channels, 1)),
        "cond_b": nrm(next(keys), (2 * hidden_channels * n_layers,)),
        "out_w": nrm(next(keys), (2 * out_channels, hidden_channels, 1)),
        "out_b": nrm(next(keys), (2 * out_channels,)),
        "in_w": [], "in_b": [], "rs_w": [], "rs_b": [],
    }
    for i in range(n_layers):
        p["in_w"].append(nrm(next(keys), (2 * hidden_channels, hidden_channels, kernel_size)))
        p["in_b"].append(nrm(next(keys), (2 * hidden_channels,)))
        c_rs = 2 * hidden_channels if i < n_layers - 1 else hidden_channels
        p["rs_w"].append(nrm(next(keys), (c_rs, hidden_channels, 1)))
        p["rs_b"].append(nrm(next(keys), (c_rs,)))
    return p


def prepare_kernel_params(p, hidden_channels, kernel_size, n_layers):
    """Kernel-ready layouts: bf16 MXU weights (per-tap matrices stacked), fp32 biases.

    The last layer's res_skip conv (H output channels, all 'skip') is padded to 2H with
    zeros in the residual half so every layer uses the same uniform update.
    """
    H, K = hidden_channels, kernel_size
    in_w_all = jnp.stack([jnp.transpose(w, (2, 0, 1)) for w in p["in_w"]])   # (L,K,2H,H)
    rs_w_list, rs_b_list = [], []
    for i in range(n_layers):
        w = p["rs_w"][i][:, :, 0]
        b = p["rs_b"][i]
        if i == n_layers - 1:
            w = jnp.concatenate([jnp.zeros((H, H), w.dtype), w], axis=0)
            b = jnp.concatenate([jnp.zeros((H,), b.dtype), b], axis=0)
        rs_w_list.append(w)
        rs_b_list.append(b)
    return {
        "wav_w": p["wav_w"][:, :, 0].astype(MXU_DTYPE),
        "wav_b": p["wav_b"].reshape(-1, 1).astype(jnp.float32),
        # cond projection runs as tiny fp32 glue; round through bf16 like the others
        "cond_w": p["cond_w"][:, :, 0].astype(MXU_DTYPE).astype(jnp.float32),
        "cond_b": p["cond_b"].astype(jnp.float32),
        "out_w": p["out_w"][:, :, 0].astype(MXU_DTYPE),
        "out_b": p["out_b"].reshape(-1, 1).astype(jnp.float32),
        "in_w_all": in_w_all.astype(MXU_DTYPE),                       # (L, K, 2H, H)
        "in_b": jnp.stack(p["in_b"]).astype(jnp.float32),             # (L, 2H)
        "rs_w_all": jnp.stack(rs_w_list).astype(MXU_DTYPE),           # (L, 2H, H)
        "rs_b_all": jnp.stack(rs_b_list)[:, :, None].astype(jnp.float32),  # (L, 2H, 1)
    }


# --------------------------------------------------------------------------------------
# PosteriorEncoder.forward
# --------------------------------------------------------------------------------------
def _choose_time_tile(T, pad):
    base = min(1024, max(128, _round_up(T, 128)))
    return _round_up(max(base, pad), pad)


def posterior_encoder_forward(kp, wave, wave_lengths, style_embed, noise, *,
                              hidden_channels, out_channels, kernel_size,
                              dilation_rate, n_layers, t_tile=None):
    H, K, C = hidden_channels, kernel_size, out_channels
    B, _, T = wave.shape
    lengths = wave_lengths.astype(jnp.int32)

    halo_total = sum((dilation_rate ** i) * (K - 1) // 2 for i in range(n_layers))
    pad = _round_up(max(halo_total, 1), 128)       # halo-read granularity (lane aligned)
    if t_tile is None:
        t_tile = _choose_time_tile(T, pad)
    assert t_tile % pad == 0 and t_tile >= pad

    T_pad = _round_up(T, t_tile)
    if T_pad != T:  # single cheap pad of the raw inputs; padded tail stays mask-zero
        wave = jnp.pad(wave, ((0, 0), (0, 0), (0, T_pad - T)))
        noise = jnp.pad(noise, ((0, 0), (0, 0), (0, T_pad - T)))

    # wav_conv (1x1) fused with the sequence mask; bf16 inter-kernel activation.
    x = pointwise_conv_mask(wave, kp["wav_w"], kp["wav_b"], lengths, t_tile=t_tile)

    # conditioning projection (tiny (B,gin) x (gin, 2H*L) matvec -> plain JAX glue)
    g = jnp.einsum("bg,og->bo", style_embed[:, :, 0].astype(jnp.float32),
                   kp["cond_w"]) + kp["cond_b"][None, :]
    gb_all = (g.reshape(B, n_layers, 2 * H) + kp["in_b"][None])[:, :, :, None]  # (B,L,2H,1)

    # all WN layers + out conv + reparameterisation in a single fused kernel
    z, m, logs = wn_out_fused(
        x, noise, lengths, gb_all, kp["in_w_all"], kp["rs_w_all"], kp["rs_b_all"],
        kp["out_w"], kp["out_b"], H=H, C=C, K=K, dilation_rate=dilation_rate,
        n_layers=n_layers, t_tile=t_tile, pad=pad)

    mask = (jnp.arange(T)[None, :] < lengths[:, None]).astype(jnp.float32)[:, None, :]
    # m / logs are emitted in bf16 (they only feed the KL term); z stays fp32.
    return z[:, :, :T], m[:, :, :T], logs[:, :, :T], mask


# --------------------------------------------------------------------------------------
# Pure-JAX reference (uses the same bf16-rounded weights) for a correctness check
# --------------------------------------------------------------------------------------
def reference_forward(p, wave, wave_lengths, style_embed, noise, *, hidden_channels,
                      out_channels, kernel_size, dilation_rate, n_layers):
    H = hidden_channels
    B, _, T = wave.shape
    mask = (jnp.arange(T)[None, :] < wave_lengths[:, None]).astype(jnp.float32)[:, None, :]

    def rnd(w):
        return w.astype(MXU_DTYPE).astype(jnp.float32)

    def conv1d(x, w, b, d=1, pad=0):
        y = jax.lax.conv_general_dilated(
            x, rnd(w), window_strides=(1,), padding=[(pad, pad)],
            rhs_dilation=(d,), dimension_numbers=("NCH", "OIH", "NCH"))
        return y + b[None, :, None]

    x = conv1d(wave, p["wav_w"], p["wav_b"]) * mask
    g = conv1d(style_embed, p["cond_w"], p["cond_b"])
    out_acc = jnp.zeros_like(x)
    for i in range(n_layers):
        d = dilation_rate ** i
        pad = (kernel_size * d - d) // 2
        x_in = conv1d(x, p["in_w"][i], p["in_b"][i], d=d, pad=pad)
        pre = x_in + g[:, i * 2 * H:(i + 1) * 2 * H, :]
        acts = jnp.tanh(pre[:, :H]) * jax.nn.sigmoid(pre[:, H:])
        rs = conv1d(acts, p["rs_w"][i], p["rs_b"][i])
        if i < n_layers - 1:
            x = (x + rs[:, :H]) * mask
            out_acc = out_acc + rs[:, H:]
        else:
            out_acc = out_acc + rs
    stats = conv1d(out_acc * mask, p["out_w"], p["out_b"]) * mask
    m, logs = stats[:, :out_channels], stats[:, out_channels:]
    z = (m + noise * jnp.exp(logs)) * mask
    return z, m, logs, mask


# --------------------------------------------------------------------------------------
if __name__ == "__main__":
    in_channels, out_channels = 16, 8
    hidden_channels, kernel_size = 32, 5
    dilation_rate, n_layers, gin_channels = 2, 4, 16
    B, T = 2, 640                  # T not a multiple of t_tile: exercises padding path

    key = jax.random.PRNGKey(0)
    k_par, k_w, k_s, k_n = jax.random.split(key, 4)

    params = init_posterior_encoder_params(
        k_par, in_channels, out_channels, hidden_channels, kernel_size,
        dilation_rate, n_layers, gin_channels)
    kparams = prepare_kernel_params(params, hidden_channels, kernel_size, n_layers)

    wave = jax.random.normal(k_w, (B, in_channels, T), jnp.float32)
    wave_lengths = jnp.array([T, 500], jnp.int32)
    style_embed = jax.random.normal(k_s, (B, gin_channels, 1), jnp.float32)
    # torch.randn_like(m) equivalent, drawn host-side for determinism
    noise = jax.random.normal(k_n, (B, out_channels, T), jnp.float32)

    fwd = jax.jit(functools.partial(
        posterior_encoder_forward,
        hidden_channels=hidden_channels, out_channels=out_channels,
        kernel_size=kernel_size, dilation_rate=dilation_rate, n_layers=n_layers,
        t_tile=256))                # small tile so the cross-tile halo path is exercised

    z, m, logs, mask = jax.block_until_ready(
        fwd(kparams, wave, wave_lengths, style_embed, noise))

    assert z.shape == (B, out_channels, T), z.shape
    assert m.shape == (B, out_channels, T) and logs.shape == (B, out_channels, T)
    assert mask.shape == (B, 1, T)
    assert bool(jnp.all(jnp.isfinite(z)))
    # masked tail of the shorter sequence must be exactly zero
    assert float(jnp.max(jnp.abs(z[1, :, 500:]))) == 0.0
    assert float(jnp.max(jnp.abs(m[1, :, 500:].astype(jnp.float32)))) == 0.0

    # numerical check against the pure-JAX reference (same bf16-rounded weights)
    z_r, m_r, logs_r, _ = reference_forward(
        params, wave, wave_lengths, style_embed, noise,
        hidden_channels=hidden_channels, out_channels=out_channels,
        kernel_size=kernel_size, dilation_rate=dilation_rate, n_layers=n_layers)
    for name, a, b in (("z", z, z_r), ("m", m, m_r), ("logs", logs, logs_r)):
        err = float(jnp.max(jnp.abs(a.astype(jnp.float32) - b)))
        assert err < 2.5e-2, (name, err)

    print("KERNEL_OK")
</pallas_src>

<mosaic_0001>
module attributes {stable_mosaic.version = 11 : i64} {
  func.func @kernel(%arg0: i32, %arg1: i32, %arg2: memref<2xi32, #tpu.memory_space<smem>>, %arg3: memref<1x16x256xf32, #tpu.memory_space<vmem>>, %arg4: memref<32x16xbf16, #tpu.memory_space<vmem>>, %arg5: memref<32x1xf32, #tpu.memory_space<vmem>>, %arg6: memref<1x32x256xbf16, #tpu.memory_space<vmem>>) attributes {dimension_semantics = [#tpu.dimension_semantics<parallel>, #tpu.dimension_semantics<parallel>], iteration_bounds = array<i64: 2, 3>, scalar_prefetch = 0 : i64, scratch_operands = 0 : i64, tpu.core_type = #tpu.core_type<tc>, window_params = [{transform_indices = @transform_0, window_bounds = array<i64: 2>}, {transform_indices = @transform_1, window_bounds = array<i64: 1, 16, 256>}, {pipeline_mode = #tpu.pipeline_mode<synchronous>, transform_indices = @transform_2, window_bounds = array<i64: 32, 16>}, {pipeline_mode = #tpu.pipeline_mode<synchronous>, transform_indices = @transform_3, window_bounds = array<i64: 32, 1>}, {transform_indices = @transform_4, window_bounds = array<i64: 1, 32, 256>}]} {
    %c0 = arith.constant 0 : index
    %c0_0 = arith.constant 0 : index
    %0 = vector.load %arg4[%c0, %c0_0] : memref<32x16xbf16, #tpu.memory_space<vmem>>, vector<32x16xbf16>
    %c0_1 = arith.constant 0 : index
    %c0_2 = arith.constant 0 : index
    %c0_3 = arith.constant 0 : index
    %1 = vector.load %arg3[%c0_1, %c0_2, %c0_3] : memref<1x16x256xf32, #tpu.memory_space<vmem>>, vector<1x16x256xf32>
    %2 = vector.shape_cast %1 : vector<1x16x256xf32> to vector<16x256xf32>
    %3 = arith.truncf %2 : vector<16x256xf32> to vector<16x256xbf16>
    %cst = arith.constant dense<0.000000e+00> : vector<32x256xf32>
    %4 = tpu.matmul %0, %3, %cst {dimension_numbers = #tpu.dot_dimension_numbers<[1], [0], [0], [1], [0, 0, 1, 1], [], []>} : vector<32x16xbf16>, vector<16x256xbf16>, vector<32x256xf32> -> vector<32x256xf32>
    %c0_4 = arith.constant 0 : index
    %c0_5 = arith.constant 0 : index
    %5 = vector.load %arg5[%c0_4, %c0_5] : memref<32x1xf32, #tpu.memory_space<vmem>>, vector<32x1xf32>
    %6 = vector.broadcast %5 : vector<32x1xf32> to vector<32x256xf32>
    %7 = arith.addf %4, %6 : vector<32x256xf32>
    %8 = tpu.iota {dimensions = array<i32: 1>} : vector<1x256xi32>
    %c256_i32 = arith.constant 256 : i32
    %9 = arith.muli %arg1, %c256_i32 : i32
    %10 = vector.broadcast %9 : i32 to vector<1x256xi32>
    %11 = arith.addi %8, %10 : vector<1x256xi32>
    %12 = arith.index_cast %arg0 : i32 to index
    %13 = memref.load %arg2[%12] : memref<2xi32, #tpu.memory_space<smem>>
    %14 = vector.broadcast %13 : i32 to vector<1x256xi32>
    %15 = arith.cmpi slt, %11, %14 : vector<1x256xi32>
    %16 = arith.extui %15 : vector<1x256xi1> to vector<1x256xi32>
    %17 = arith.sitofp %16 : vector<1x256xi32> to vector<1x256xf32>
    %18 = vector.broadcast %17 : vector<1x256xf32> to vector<32x256xf32>
    %19 = arith.mulf %7, %18 : vector<32x256xf32>
    %20 = arith.truncf %19 : vector<32x256xf32> to vector<32x256xbf16>
    %c0_6 = arith.constant 0 : index
    %c0_7 = arith.constant 0 : index
    %c0_8 = arith.constant 0 : index
    %21 = vector.load %arg6[%c0_6, %c0_7, %c0_8] : memref<1x32x256xbf16, #tpu.memory_space<vmem>>, vector<1x32x256xbf16>
    %22 = vector.shape_cast %21 : vector<1x32x256xbf16> to vector<32x256xbf16>
    %23 = vector.shape_cast %20 : vector<32x256xbf16> to vector<1x32x256xbf16>
    tpu.vector_store %arg6[%c0_6, %c0_7, %c0_8], %23 {strides = array<i32>} : memref<1x32x256xbf16, #tpu.memory_space<vmem>>, vector<1x32x256xbf16>,
    return
  }
  func.func @transform_0(%arg0: i32, %arg1: i32) -> i32 {
    %c0_i32 = arith.constant 0 : i32
    %c0_i32_0 = arith.constant 0 : i32
    return %c0_i32 : i32
  }
  func.func @transform_1(%arg0: i32, %arg1: i32) -> (i32, i32, i32) {
    %c0_i32 = arith.constant 0 : i32
    %c0_i32_0 = arith.constant 0 : i32
    return %arg0, %c0_i32, %arg1 : i32, i32, i32
  }
  func.func @transform_2(%arg0: i32, %arg1: i32) -> (i32, i32) {
    %c0_i32 = arith.constant 0 : i32
    %c0_i32_0 = arith.constant 0 : i32
    %c0_i32_1 = arith.constant 0 : i32
    return %c0_i32, %c0_i32_0 : i32, i32
  }
  func.func @transform_3(%arg0: i32, %arg1: i32) -> (i32, i32) {
    %c0_i32 = arith.constant 0 : i32
    %c0_i32_0 = arith.constant 0 : i32
    %c0_i32_1 = arith.constant 0 : i32
    return %c0_i32, %c0_i32_0 : i32, i32
  }
  func.func @transform_4(%arg0: i32, %arg1: i32) -> (i32, i32, i32) {
    %c0_i32 = arith.constant 0 : i32
    %c0_i32_0 = arith.constant 0 : i32
    return %arg0, %c0_i32, %arg1 : i32, i32, i32
  }
}

module attributes {stable_mosaic.version = 11 : i64} {
  func.func @kernel(%arg0: i32, %arg1: i32, %arg2: memref<2xi32, #tpu.memory_space<smem>>, %arg3: memref<1x32x128xbf16, #tpu.memory_space<vmem>>, %arg4: memref<1x32x256xbf16, #tpu.memory_space<vmem>>, %arg5: memref<1x32x128xbf16, #tpu.memory_space<vmem>>, %arg6: memref<1x8x256xf32, #tpu.memory_space<vmem>>, %arg7: memref<1x4x64x1xf32, #tpu.memory_space<vmem>>, %arg8: memref<4x5x64x32xbf16, #tpu.memory_space<vmem>>, %arg9: memref<4x64x32xbf16, #tpu.memory_space<vmem>>, %arg10: memref<4x64x1xf32, #tpu.memory_space<vmem>>, %arg11: memref<16x32xbf16, #tpu.memory_space<vmem>>, %arg12: memref<16x1xf32, #tpu.memory_space<vmem>>, %arg13: memref<1x8x256xf32, #tpu.memory_space<vmem>>, %arg14: memref<1x8x256xbf16, #tpu.memory_space<vmem>>, %arg15: memref<1x8x256xbf16, #tpu.memory_space<vmem>>) attributes {dimension_semantics = [#tpu.dimension_semantics<parallel>, #tpu.dimension_semantics<parallel>], iteration_bounds = array<i64: 2, 3>, scalar_prefetch = 0 : i64, scratch_operands = 0 : i64, tpu.core_type = #tpu.core_type<tc>, window_params = [{transform_indices = @transform_0, window_bounds = array<i64: 2>}, {transform_indices = @transform_1, window_bounds = array<i64: 1, 32, 128>}, {transform_indices = @transform_2, window_bounds = array<i64: 1, 32, 256>}, {transform_indices = @transform_3, window_bounds = array<i64: 1, 32, 128>}, {transform_indices = @transform_4, window_bounds = array<i64: 1, 8, 256>}, {transform_indices = @transform_5, window_bounds = array<i64: 1, 4, 64, 1>}, {pipeline_mode = #tpu.pipeline_mode<synchronous>, transform_indices = @transform_6, window_bounds = array<i64: 4, 5, 64, 32>}, {pipeline_mode = #tpu.pipeline_mode<synchronous>, transform_indices = @transform_7, window_bounds = array<i64: 4, 64, 32>}, {pipeline_mode = #tpu.pipeline_mode<synchronous>, transform_indices = @transform_8, window_bounds = array<i64: 4, 64, 1>}, {pipeline_mode = #tpu.pipeline_mode<synchronous>, transform_indices = @transform_9, window_bounds = array<i64: 16, 32>}, {pipeline_mode = #tpu.pipeline_mode<synchronous>, transform_indices = @transform_10, window_bounds = array<i64: 16, 1>}, {transform_indices = @transform_11, window_bounds = array<i64: 1, 8, 256>}, {transform_indices = @transform_12, window_bounds = array<i64: 1, 8, 256>}, {transform_indices = @transform_13, window_bounds = array<i64: 1, 8, 256>}]} {
    %c0_i32 = arith.constant 0 : i32
    %0 = arith.cmpi sgt, %arg1, %c0_i32 : i32
    %1 = arith.extui %0 : i1 to i32
    %2 = arith.sitofp %1 : i32 to f32
    %c2_i32 = arith.constant 2 : i32
    %3 = arith.cmpi slt, %arg1, %c2_i32 : i32
    %4 = arith.extui %3 : i1 to i32
    %5 = arith.sitofp %4 : i32 to f32
    %c0 = arith.constant 0 : index
    %c0_0 = arith.constant 0 : index
    %c0_1 = arith.constant 0 : index
    %6 = vector.load %arg3[%c0, %c0_0, %c0_1] : memref<1x32x128xbf16, #tpu.memory_space<vmem>>, vector<1x32x128xbf16>
    %7 = vector.shape_cast %6 : vector<1x32x128xbf16> to vector<32x128xbf16>
    %8 = arith.extf %7 : vector<32x128xbf16> to vector<32x128xf32>
    %9 = vector.broadcast %2 : f32 to vector<32x128xf32>
    %10 = arith.mulf %8, %9 : vector<32x128xf32>
    %c0_2 = arith.constant 0 : index
    %c0_3 = arith.constant 0 : index
    %c0_4 = arith.constant 0 : index
    %11 = vector.load %arg4[%c0_2, %c0_3, %c0_4] : memref<1x32x256xbf16, #tpu.memory_space<vmem>>, vector<1x32x256xbf16>
    %12 = vector.shape_cast %11 : vector<1x32x256xbf16> to vector<32x256xbf16>
    %13 = arith.extf %12 : vector<32x256xbf16> to vector<32x256xf32>
    %c0_5 = arith.constant 0 : index
    %c0_6 = arith.constant 0 : index
    %c0_7 = arith.constant 0 : index
    %14 = vector.load %arg5[%c0_5, %c0_6, %c0_7] : memref<1x32x128xbf16, #tpu.memory_space<vmem>>, vector<1x32x128xbf16>
    %15 = vector.shape_cast %14 : vector<1x32x128xbf16> to vector<32x128xbf16>
    %16 = arith.extf %15 : vector<32x128xbf16> to vector<32x128xf32>
    %17 = vector.broadcast %5 : f32 to vector<32x128xf32>
    %18 = arith.mulf %16, %17 : vector<32x128xf32>
    %19 = tpu.concatenate %10, %13, %18 in 1 : vector<32x128xf32>, vector<32x256xf32>, vector<32x128xf32> -> vector<32x512xf32>
    %20 = tpu.iota {dimensions = array<i32: 1>} : vector<1x512xi32>
    %c256_i32 = arith.constant 256 : i32
    %21 = arith.muli %arg1, %c256_i32 : i32
    %c128_i32 = arith.constant 128 : i32
    %22 = arith.subi %21, %c128_i32 : i32
    %23 = vector.broadcast %22 : i32 to vector<1x512xi32>
    %24 = arith.addi %20, %23 : vector<1x512xi32>
    %c0_i32_8 = arith.constant 0 : i32
    %25 = vector.broadcast %c0_i32_8 : i32 to vector<1x512xi32>
    %26 = arith.cmpi sge, %24, %25 : vector<1x512xi32>
    %27 = arith.index_cast %arg0 : i32 to index
    %28 = memref.load %arg2[%27] : memref<2xi32, #tpu.memory_space<smem>>
    %29 = vector.broadcast %28 : i32 to vector<1x512xi32>
    %30 = arith.cmpi slt, %24, %29 : vector<1x512xi32>
    %31 = arith.andi %26, %30 : vector<1x512xi1>
    %32 = arith.extui %31 : vector<1x512xi1> to vector<1x512xi32>
    %33 = arith.sitofp %32 : vector<1x512xi32> to vector<1x512xf32>
    %cst = arith.constant 0.000000e+00 : f32
    %34 = vector.broadcast %cst : f32 to vector<32x256xf32>
    %cst_9 = arith.constant 0.000000e+00 : f32
    %35 = vector.broadcast %cst_9 : f32 to vector<32x2xf32>
    %36 = tpu.concatenate %35, %19, %35 in 1 : vector<32x2xf32>, vector<32x512xf32>, vector<32x2xf32> -> vector<32x516xf32>
    %37 = vector.extract_strided_slice %36 {offsets = [0, 0], sizes = [32, 512], strides = [1, 1]} : vector<32x516xf32> to vector<32x512xf32>
    %38 = arith.truncf %37 : vector<32x512xf32> to vector<32x512xbf16>
    %c0_10 = arith.constant 0 : index
    %c0_11 = arith.constant 0 : index
    %c0_12 = arith.constant 0 : index
    %c0_13 = arith.constant 0 : index
    %39 = vector.load %arg8[%c0_10, %c0_11, %c0_12, %c0_13] : memref<4x5x64x32xbf16, #tpu.memory_space<vmem>>, vector<1x1x64x32xbf16>
    %40 = vector.shape_cast %39 : vector<1x1x64x32xbf16> to vector<64x32xbf16>
    %cst_14 = arith.constant dense<0.000000e+00> : vector<64x512xf32>
    %41 = tpu.matmul %40, %38, %cst_14 {dimension_numbers = #tpu.dot_dimension_numbers<[1], [0], [0], [1], [0, 0, 1, 1], [], []>} : vector<64x32xbf16>, vector<32x512xbf16>, vector<64x512xf32> -> vector<64x512xf32>
    %42 = vector.extract_strided_slice %36 {offsets = [0, 1], sizes = [32, 512], strides = [1, 1]} : vector<32x516xf32> to vector<32x512xf32>
    %43 = arith.truncf %42 : vector<32x512xf32> to vector<32x512xbf16>
    %c0_15 = arith.constant 0 : index
    %c1 = arith.constant 1 : index
    %c0_16 = arith.constant 0 : index
    %c0_17 = arith.constant 0 : index
    %44 = vector.load %arg8[%c0_15, %c1, %c0_16, %c0_17] : memref<4x5x64x32xbf16, #tpu.memory_space<vmem>>, vector<1x1x64x32xbf16>
    %45 = vector.shape_cast %44 : vector<1x1x64x32xbf16> to vector<64x32xbf16>
    %cst_18 = arith.constant dense<0.000000e+00> : vector<64x512xf32>
    %46 = tpu.matmul %45, %43, %cst_18 {dimension_numbers = #tpu.dot_dimension_numbers<[1], [0], [0], [1], [0, 0, 1, 1], [], []>} : vector<64x32xbf16>, vector<32x512xbf16>, vector<64x512xf32> -> vector<64x512xf32>
    %47 = arith.addf %41, %46 : vector<64x512xf32>
    %48 = vector.extract_strided_slice %36 {offsets = [0, 2], sizes = [32, 512], strides = [1, 1]} : vector<32x516xf32> to vector<32x512xf32>
    %49 = arith.truncf %48 : vector<32x512xf32> to vector<32x512xbf16>
    %c0_19 = arith.constant 0 : index
    %c2 = arith.constant 2 : index
    %c0_20 = arith.constant 0 : index
    %c0_21 = arith.constant 0 : index
    %50 = vector.load %arg8[%c0_19, %c2, %c0_20, %c0_21] : memref<4x5x64x32xbf16, #tpu.memory_space<vmem>>, vector<1x1x64x32xbf16>
    %51 = vector.shape_cast %50 : vector<1x1x64x32xbf16> to vector<64x32xbf16>
    %cst_22 = arith.constant dense<0.000000e+00> : vector<64x512xf32>
    %52 = tpu.matmul %51, %49, %cst_22 {dimension_numbers = #tpu.dot_dimension_numbers<[1], [0], [0], [1], [0, 0, 1, 1], [], []>} : vector<64x32xbf16>, vector<32x512xbf16>, vector<64x512xf32> -> vector<64x512xf32>
    %53 = arith.addf %47, %52 : vector<64x512xf32>
    %54 = vector.extract_strided_slice %36 {offsets = [0, 3], sizes = [32, 512], strides = [1, 1]} : vector<32x516xf32> to vector<32x512xf32>
    %55 = arith.truncf %54 : vector<32x512xf32> to vector<32x512xbf16>
    %c0_23 = arith.constant 0 : index
    %c3 = arith.constant 3 : index
    %c0_24 = arith.constant 0 : index
    %c0_25 = arith.constant 0 : index
    %56 = vector.load %arg8[%c0_23, %c3, %c0_24, %c0_25] : memref<4x5x64x32xbf16, #tpu.memory_space<vmem>>, vector<1x1x64x32xbf16>
    %57 = vector.shape_cast %56 : vector<1x1x64x32xbf16> to vector<64x32xbf16>
    %cst_26 = arith.constant dense<0.000000e+00> : vector<64x512xf32>
    %58 = tpu.matmul %57, %55, %cst_26 {dimension_numbers = #tpu.dot_dimension_numbers<[1], [0], [0], [1], [0, 0, 1, 1], [], []>} : vector<64x32xbf16>, vector<32x512xbf16>, vector<64x512xf32> -> vector<64x512xf32>
    %59 = arith.addf %53, %58 : vector<64x512xf32>
    %60 = vector.extract_strided_slice %36 {offsets = [0, 4], sizes = [32, 512], strides = [1, 1]} : vector<32x516xf32> to vector<32x512xf32>
    %61 = arith.truncf %60 : vector<32x512xf32> to vector<32x512xbf16>
    %c0_27 = arith.constant 0 : index
    %c4 = arith.constant 4 : index
    %c0_28 = arith.constant 0 : index
    %c0_29 = arith.constant 0 : index
    %62 = vector.load %arg8[%c0_27, %c4, %c0_28, %c0_29] : memref<4x5x64x32xbf16, #tpu.memory_space<vmem>>, vector<1x1x64x32xbf16>
    %63 = vector.shape_cast %62 : vector<1x1x64x32xbf16> to vector<64x32xbf16>
    %cst_30 = arith.constant dense<0.000000e+00> : vector<64x512xf32>
    %64 = tpu.matmul %63, %61, %cst_30 {dimension_numbers = #tpu.dot_dimension_numbers<[1], [0], [0], [1], [0, 0, 1, 1], [], []>} : vector<64x32xbf16>, vector<32x512xbf16>, vector<64x512xf32> -> vector<64x512xf32>
    %65 = arith.addf %59, %64 : vector<64x512xf32>
    %c0_31 = arith.constant 0 : index
    %c0_32 = arith.constant 0 : index
    %c0_33 = arith.constant 0 : index
    %c0_34 = arith.constant 0 : index
    %66 = vector.load %arg7[%c0_31, %c0_32, %c0_33, %c0_34] : memref<1x4x64x1xf32, #tpu.memory_space<vmem>>, vector<1x1x64x1xf32>
    %67 = vector.shape_cast %66 : vector<1x1x64x1xf32> to vector<64x1xf32>
    %68 = vector.broadcast %67 : vector<64x1xf32> to vector<64x512xf32>
    %69 = arith.addf %65, %68 : vector<64x512xf32>
    %70 = vector.extract_strided_slice %69 {offsets = [0, 0], sizes = [32, 512], strides = [1, 1]} : vector<64x512xf32> to vector<32x512xf32>
    %71 = math.tanh %70 : vector<32x512xf32>
    %72 = vector.extract_strided_slice %69 {offsets = [32, 0], sizes = [32, 512], strides = [1, 1]} : vector<64x512xf32> to vector<32x512xf32>
    %73 = arith.negf %72 : vector<32x512xf32>
    %74 = math.exp %73 : vector<32x512xf32>
    %cst_35 = arith.constant 1.000000e+00 : f32
    %75 = vector.broadcast %cst_35 : f32 to vector<32x512xf32>
    %76 = arith.addf %75, %74 : vector<32x512xf32>
    %77 = arith.divf %75, %76 : vector<32x512xf32>
    %78 = arith.mulf %71, %77 : vector<32x512xf32>
    %c0_36 = arith.constant 0 : index
    %c0_37 = arith.constant 0 : index
    %c0_38 = arith.constant 0 : index
    %79 = vector.load %arg9[%c0_36, %c0_37, %c0_38] : memref<4x64x32xbf16, #tpu.memory_space<vmem>>, vector<1x64x32xbf16>
    %80 = vector.shape_cast %79 : vector<1x64x32xbf16> to vector<64x32xbf16>
    %81 = arith.truncf %78 : vector<32x512xf32> to vector<32x512xbf16>
    %cst_39 = arith.constant dense<0.000000e+00> : vector<64x512xf32>
    %82 = tpu.matmul %80, %81, %cst_39 {dimension_numbers = #tpu.dot_dimension_numbers<[1], [0], [0], [1], [0, 0, 1, 1], [], []>} : vector<64x32xbf16>, vector<32x512xbf16>, vector<64x512xf32> -> vector<64x512xf32>
    %c0_40 = arith.constant 0 : index
    %c0_41 = arith.constant 0 : index
    %c0_42 = arith.constant 0 : index
    %83 = vector.load %arg10[%c0_40, %c0_41, %c0_42] : memref<4x64x1xf32, #tpu.memory_space<vmem>>, vector<1x64x1xf32>
    %84 = vector.shape_cast %83 : vector<1x64x1xf32> to vector<64x1xf32>
    %85 = vector.broadcast %84 : vector<64x1xf32> to vector<64x512xf32>
    %86 = arith.addf %82, %85 : vector<64x512xf32>
    %87 = vector.extract_strided_slice %86 {offsets = [0, 0], sizes = [32, 512], strides = [1, 1]} : vector<64x512xf32> to vector<32x512xf32>
    %88 = arith.addf %19, %87 : vector<32x512xf32>
    %89 = vector.broadcast %33 : vector<1x512xf32> to vector<32x512xf32>
    %90 = arith.mulf %88, %89 : vector<32x512xf32>
    %91 = vector.extract_strided_slice %86 {offsets = [32, 128], sizes = [32, 256], strides = [1, 1]} : vector<64x512xf32> to vector<32x256xf32>
    %92 = arith.addf %34, %91 : vector<32x256xf32>
    %cst_43 = arith.constant 0.000000e+00 : f32
    %93 = vector.broadcast %cst_43 : f32 to vector<32x4xf32>
    %94 = tpu.concatenate %93, %90, %93 in 1 : vector<32x4xf32>, vector<32x512xf32>, vector<32x4xf32> -> vector<32x520xf32>
    %95 = vector.extract_strided_slice %94 {offsets = [0, 0], sizes = [32, 512], strides = [1, 1]} : vector<32x520xf32> to vector<32x512xf32>
    %96 = arith.truncf %95 : vector<32x512xf32> to vector<32x512xbf16>
    %c1_44 = arith.constant 1 : index
    %c0_45 = arith.constant 0 : index
    %c0_46 = arith.constant 0 : index
    %c0_47 = arith.constant 0 : index
    %97 = vector.load %arg8[%c1_44, %c0_45, %c0_46, %c0_47] : memref<4x5x64x32xbf16, #tpu.memory_space<vmem>>, vector<1x1x64x32xbf16>
    %98 = vector.shape_cast %97 : vector<1x1x64x32xbf16> to vector<64x32xbf16>
    %cst_48 = arith.constant dense<0.000000e+00> : vector<64x512xf32>
    %99 = tpu.matmul %98, %96, %cst_48 {dimension_numbers = #tpu.dot_dimension_numbers<[1], [0], [0], [1], [0, 0, 1, 1], [], []>} : vector<64x32xbf16>, vector<32x512xbf16>, vector<64x512xf32> -> vector<64x512xf32>
    %100 = vector.extract_strided_slice %94 {offsets = [0, 2], sizes = [32, 512], strides = [1, 1]} : vector<32x520xf32> to vector<32x512xf32>
    %101 = arith.truncf %100 : vector<32x512xf32> to vector<32x512xbf16>
    %c1_49 = arith.constant 1 : index
    %c1_50 = arith.constant 1 : index
    %c0_51 = arith.constant 0 : index
    %c0_52 = arith.constant 0 : index
    %102 = vector.load %arg8[%c1_49, %c1_50, %c0_51, %c0_52] : memref<4x5x64x32xbf16, #tpu.memory_space<vmem>>, vector<1x1x64x32xbf16>
    %103 = vector.shape_cast %102 : vector<1x1x64x32xbf16> to vector<64x32xbf16>
    %cst_53 = arith.constant dense<0.000000e+00> : vector<64x512xf32>
    %104 = tpu.matmul %103, %101, %cst_53 {dimension_numbers = #tpu.dot_dimension_numbers<[1], [0], [0], [1], [0, 0, 1, 1], [], []>} : vector<64x32xbf16>, vector<32x512xbf16>, vector<64x512xf32> -> vector<64x512xf32>
    %105 = arith.addf %99, %104 : vector<64x512xf32>
    %106 = vector.extract_strided_slice %94 {offsets = [0, 4], sizes = [32, 512], strides = [1, 1]} : vector<32x520xf32> to vector<32x512xf32>
    %107 = arith.truncf %106 : vector<32x512xf32> to vector<32x512xbf16>
    %c1_54 = arith.constant 1 : index
    %c2_55 = arith.constant 2 : index
    %c0_56 = arith.constant 0 : index
    %c0_57 = arith.constant 0 : index
    %108 = vector.load %arg8[%c1_54, %c2_55, %c0_56, %c0_57] : memref<4x5x64x32xbf16, #tpu.memory_space<vmem>>, vector<1x1x64x32xbf16>
    %109 = vector.shape_cast %108 : vector<1x1x64x32xbf16> to vector<64x32xbf16>
    %cst_58 = arith.constant dense<0.000000e+00> : vector<64x512xf32>
    %110 = tpu.matmul %109, %107, %cst_58 {dimension_numbers = #tpu.dot_dimension_numbers<[1], [0], [0], [1], [0, 0, 1, 1], [], []>} : vector<64x32xbf16>, vector<32x512xbf16>, vector<64x512xf32> -> vector<64x512xf32>
    %111 = arith.addf %105, %110 : vector<64x512xf32>
    %112 = vector.extract_strided_slice %94 {offsets = [0, 6], sizes = [32, 512], strides = [1, 1]} : vector<32x520xf32> to vector<32x512xf32>
    %113 = arith.truncf %112 : vector<32x512xf32> to vector<32x512xbf16>
    %c1_59 = arith.constant 1 : index
    %c3_60 = arith.constant 3 : index
    %c0_61 = arith.constant 0 : index
    %c0_62 = arith.constant 0 : index
    %114 = vector.load %arg8[%c1_59, %c3_60, %c0_61, %c0_62] : memref<4x5x64x32xbf16, #tpu.memory_space<vmem>>, vector<1x1x64x32xbf16>
    %115 = vector.shape_cast %114 : vector<1x1x64x32xbf16> to vector<64x32xbf16>
    %cst_63 = arith.constant dense<0.000000e+00> : vector<64x512xf32>
    %116 = tpu.matmul %115, %113, %cst_63 {dimension_numbers = #tpu.dot_dimension_numbers<[1], [0], [0], [1], [0, 0, 1, 1], [], []>} : vector<64x32xbf16>, vector<32x512xbf16>, vector<64x512xf32> -> vector<64x512xf32>
    %117 = arith.addf %111, %116 : vector<64x512xf32>
    %118 = vector.extract_strided_slice %94 {offsets = [0, 8], sizes = [32, 512], strides = [1, 1]} : vector<32x520xf32> to vector<32x512xf32>
    %119 = arith.truncf %118 : vector<32x512xf32> to vector<32x512xbf16>
    %c1_64 = arith.constant 1 : index
    %c4_65 = arith.constant 4 : index
    %c0_66 = arith.constant 0 : index
    %c0_67 = arith.constant 0 : index
    %120 = vector.load %arg8[%c1_64, %c4_65, %c0_66, %c0_67] : memref<4x5x64x32xbf16, #tpu.memory_space<vmem>>, vector<1x1x64x32xbf16>
    %121 = vector.shape_cast %120 : vector<1x1x64x32xbf16> to vector<64x32xbf16>
    %cst_68 = arith.constant dense<0.000000e+00> : vector<64x512xf32>
    %122 = tpu.matmul %121, %119, %cst_68 {dimension_numbers = #tpu.dot_dimension_numbers<[1], [0], [0], [1], [0, 0, 1, 1], [], []>} : vector<64x32xbf16>, vector<32x512xbf16>, vector<64x512xf32> -> vector<64x512xf32>
    %123 = arith.addf %117, %122 : vector<64x512xf32>
    %c0_69 = arith.constant 0 : index
    %c1_70 = arith.constant 1 : index
    %c0_71 = arith.constant 0 : index
    %c0_72 = arith.constant 0 : index
    %124 = vector.load %arg7[%c0_69, %c1_70, %c0_71, %c0_72] : memref<1x4x64x1xf32, #tpu.memory_space<vmem>>, vector<1x1x64x1xf32>
    %125 = vector.shape_cast %124 : vector<1x1x64x1xf32> to vector<64x1xf32>
    %126 = vector.broadcast %125 : vector<64x1xf32> to vector<64x512xf32>
    %127 = arith.addf %123, %126 : vector<64x512xf32>
    %128 = vector.extract_strided_slice %127 {offsets = [0, 0], sizes = [32, 512], strides = [1, 1]} : vector<64x512xf32> to vector<32x512xf32>
    %129 = math.tanh %128 : vector<32x512xf32>
    %130 = vector.extract_strided_slice %127 {offsets = [32, 0], sizes = [32, 512], strides = [1, 1]} : vector<64x512xf32> to vector<32x512xf32>
    %131 = arith.negf %130 : vector<32x512xf32>
    %132 = math.exp %131 : vector<32x512xf32>
    %cst_73 = arith.constant 1.000000e+00 : f32
    %133 = vector.broadcast %cst_73 : f32 to vector<32x512xf32>
    %134 = arith.addf %133, %132 : vector<32x512xf32>
    %135 = arith.divf %133, %134 : vector<32x512xf32>
    %136 = arith.mulf %129, %135 : vector<32x512xf32>
    %c1_74 = arith.constant 1 : index
    %c0_75 = arith.constant 0 : index
    %c0_76 = arith.constant 0 : index
    %137 = vector.load %arg9[%c1_74, %c0_75, %c0_76] : memref<4x64x32xbf16, #tpu.memory_space<vmem>>, vector<1x64x32xbf16>
    %138 = vector.shape_cast %137 : vector<1x64x32xbf16> to vector<64x32xbf16>
    %139 = arith.truncf %136 : vector<32x512xf32> to vector<32x512xbf16>
    %cst_77 = arith.constant dense<0.000000e+00> : vector<64x512xf32>
    %140 = tpu.matmul %138, %139, %cst_77 {dimension_numbers = #tpu.dot_dimension_numbers<[1], [0], [0], [1], [0, 0, 1, 1], [], []>} : vector<64x32xbf16>, vector<32x512xbf16>, vector<64x512xf32> -> vector<64x512xf32>
    %c1_78 = arith.constant 1 : index
    %c0_79 = arith.constant 0 : index
    %c0_80 = arith.constant 0 : index
    %141 = vector.load %arg10[%c1_78, %c0_79, %c0_80] : memref<4x64x1xf32, #tpu.memory_space<vmem>>, vector<1x64x1xf32>
    %142 = vector.shape_cast %141 : vector<1x64x1xf32> to vector<64x1xf32>
    %143 = vector.broadcast %142 : vector<64x1xf32> to vector<64x512xf32>
    %144 = arith.addf %140, %143 : vector<64x512xf32>
    %145 = vector.extract_strided_slice %144 {offsets = [0, 0], sizes = [32, 512], strides = [1, 1]} : vector<64x512xf32> to vector<32x512xf32>
    %146 = arith.addf %90, %145 : vector<32x512xf32>
    %147 = vector.broadcast %33 : vector<1x512xf32> to vector<32x512xf32>
    %148 = arith.mulf %146, %147 : vector<32x512xf32>
    %149 = vector.extract_strided_slice %144 {offsets = [32, 128], sizes = [32, 256], strides = [1, 1]} : vector<64x512xf32> to vector<32x256xf32>
    %150 = arith.addf %92, %149 : vector<32x256xf32>
    %cst_81 = arith.constant 0.000000e+00 : f32
    %151 = vector.broadcast %cst_81 : f32 to vector<32x8xf32>
    %152 = tpu.concatenate %151, %148, %151 in 1 : vector<32x8xf32>, vector<32x512xf32>, vector<32x8xf32> -> vector<32x528xf32>
    %153 = vector.extract_strided_slice %152 {offsets = [0, 0], sizes = [32, 512], strides = [1, 1]} : vector<32x528xf32> to vector<32x512xf32>
    %154 = arith.truncf %153 : vector<32x512xf32> to vector<32x512xbf16>
    %c2_82 = arith.constant 2 : index
    %c0_83 = arith.constant 0 : index
    %c0_84 = arith.constant 0 : index
    %c0_85 = arith.constant 0 : index
    %155 = vector.load %arg8[%c2_82, %c0_83, %c0_84, %c0_85] : memref<4x5x64x32xbf16, #tpu.memory_space<vmem>>, vector<1x1x64x32xbf16>
    %156 = vector.shape_cast %155 : vector<1x1x64x32xbf16> to vector<64x32xbf16>
    %cst_86 = arith.constant dense<0.000000e+00> : vector<64x512xf32>
    %157 = tpu.matmul %156, %154, %cst_86 {dimension_numbers = #tpu.dot_dimension_numbers<[1], [0], [0], [1], [0, 0, 1, 1], [], []>} : vector<64x32xbf16>, vector<32x512xbf16>, vector<64x512xf32> -> vector<64x512xf32>
    %158 = vector.extract_strided_slice %152 {offsets = [0, 4], sizes = [32, 512], strides = [1, 1]} : vector<32x528xf32> to vector<32x512xf32>
    %159 = arith.truncf %158 : vector<32x512xf32> to vector<32x512xbf16>
    %c2_87 = arith.constant 2 : index
    %c1_88 = arith.constant 1 : index
    %c0_89 = arith.constant 0 : index
    %c0_90 = arith.constant 0 : index
    %160 = vector.load %arg8[%c2_87, %c1_88, %c0_89, %c0_90] : memref<4x5x64x32xbf16, #tpu.memory_space<vmem>>, vector<1x1x64x32xbf16>
    %161 = vector.shape_cast %160 : vector<1x1x64x32xbf16> to vector<64x32xbf16>
    %cst_91 = arith.constant dense<0.000000e+00> : vector<64x512xf32>
    %162 = tpu.matmul %161, %159, %cst_91 {dimension_numbers = #tpu.dot_dimension_numbers<[1], [0], [0], [1], [0, 0, 1, 1], [], []>} : vector<64x32xbf16>, vector<32x512xbf16>, vector<64x512xf32> -> vector<64x512xf32>
    %163 = arith.addf %157, %162 : vector<64x512xf32>
    %164 = vector.extract_strided_slice %152 {offsets = [0, 8], sizes = [32, 512], strides = [1, 1]} : vector<32x528xf32> to vector<32x512xf32>
    %165 = arith.truncf %164 : vector<32x512xf32> to vector<32x512xbf16>
    %c2_92 = arith.constant 2 : index
    %c2_93 = arith.constant 2 : index
    %c0_94 = arith.constant 0 : index
    %c0_95 = arith.constant 0 : index
    %166 = vector.load %arg8[%c2_92, %c2_93, %c0_94, %c0_95] : memref<4x5x64x32xbf16, #tpu.memory_space<vmem>>, vector<1x1x64x32xbf16>
    %167 = vector.shape_cast %166 : vector<1x1x64x32xbf16> to vector<64x32xbf16>
    %cst_96 = arith.constant dense<0.000000e+00> : vector<64x512xf32>
    %168 = tpu.matmul %167, %165, %cst_96 {dimension_numbers = #tpu.dot_dimension_numbers<[1], [0], [0], [1], [0, 0, 1, 1], [], []>} : vector<64x32xbf16>, vector<32x512xbf16>, vector<64x512xf32> -> vector<64x512xf32>
    %169 = arith.addf %163, %168 : vector<64x512xf32>
    %170 = vector.extract_strided_slice %152 {offsets = [0, 12], sizes = [32, 512], strides = [1, 1]} : vector<32x528xf32> to vector<32x512xf32>
    %171 = arith.truncf %170 : vector<32x512xf32> to vector<32x512xbf16>
    %c2_97 = arith.constant 2 : index
    %c3_98 = arith.constant 3 : index
    %c0_99 = arith.constant 0 : index
    %c0_100 = arith.constant 0 : index
    %172 = vector.load %arg8[%c2_97, %c3_98, %c0_99, %c0_100] : memref<4x5x64x32xbf16, #tpu.memory_space<vmem>>, vector<1x1x64x32xbf16>
    %173 = vector.shape_cast %172 : vector<1x1x64x32xbf16> to vector<64x32xbf16>
    %cst_101 = arith.constant dense<0.000000e+00> : vector<64x512xf32>
    %174 = tpu.matmul %173, %171, %cst_101 {dimension_numbers = #tpu.dot_dimension_numbers<[1], [0], [0], [1], [0, 0, 1, 1], [], []>} : vector<64x32xbf16>, vector<32x512xbf16>, vector<64x512xf32> -> vector<64x512xf32>
    %175 = arith.addf %169, %174 : vector<64x512xf32>
    %176 = vector.extract_strided_slice %152 {offsets = [0, 16], sizes = [32, 512], strides = [1, 1]} : vector<32x528xf32> to vector<32x512xf32>
    %177 = arith.truncf %176 : vector<32x512xf32> to vector<32x512xbf16>
    %c2_102 = arith.constant 2 : index
    %c4_103 = arith.constant 4 : index
    %c0_104 = arith.constant 0 : index
    %c0_105 = arith.constant 0 : index
    %178 = vector.load %arg8[%c2_102, %c4_103, %c0_104, %c0_105] : memref<4x5x64x32xbf16, #tpu.memory_space<vmem>>, vector<1x1x64x32xbf16>
    %179 = vector.shape_cast %178 : vector<1x1x64x32xbf16> to vector<64x32xbf16>
    %cst_106 = arith.constant dense<0.000000e+00> : vector<64x512xf32>
    %180 = tpu.matmul %179, %177, %cst_106 {dimension_numbers = #tpu.dot_dimension_numbers<[1], [0], [0], [1], [0, 0, 1, 1], [], []>} : vector<64x32xbf16>, vector<32x512xbf16>, vector<64x512xf32> -> vector<64x512xf32>
    %181 = arith.addf %175, %180 : vector<64x512xf32>
    %c0_107 = arith.constant 0 : index
    %c2_108 = arith.constant 2 : index
    %c0_109 = arith.constant 0 : index
    %c0_110 = arith.constant 0 : index
    %182 = vector.load %arg7[%c0_107, %c2_108, %c0_109, %c0_110] : memref<1x4x64x1xf32, #tpu.memory_space<vmem>>, vector<1x1x64x1xf32>
    %183 = vector.shape_cast %182 : vector<1x1x64x1xf32> to vector<64x1xf32>
    %184 = vector.broadcast %183 : vector<64x1xf32> to vector<64x512xf32>
    %185 = arith.addf %181, %184 : vector<64x512xf32>
    %186 = vector.extract_strided_slice %185 {offsets = [0, 0], sizes = [32, 512], strides = [1, 1]} : vector<64x512xf32> to vector<32x512xf32>
    %187 = math.tanh %186 : vector<32x512xf32>
    %188 = vector.extract_strided_slice %185 {offsets = [32, 0], sizes = [32, 512], strides = [1, 1]} : vector<64x512xf32> to vector<32x512xf32>
    %189 = arith.negf %188 : vector<32x512xf32>
    %190 = math.exp %189 : vector<32x512xf32>
    %cst_111 = arith.constant 1.000000e+00 : f32
    %191 = vector.broadcast %cst_111 : f32 to vector<32x512xf32>
    %192 = arith.addf %191, %190 : vector<32x512xf32>
    %193 = arith.divf %191, %192 : vector<32x512xf32>
    %194 = arith.mulf %187, %193 : vector<32x512xf32>
    %c2_112 = arith.constant 2 : index
    %c0_113 = arith.constant 0 : index
    %c0_114 = arith.constant 0 : index
    %195 = vector.load %arg9[%c2_112, %c0_113, %c0_114] : memref<4x64x32xbf16, #tpu.memory_space<vmem>>, vector<1x64x32xbf16>
    %196 = vector.shape_cast %195 : vector<1x64x32xbf16> to vector<64x32xbf16>
    %197 = arith.truncf %194 : vector<32x512xf32> to vector<32x512xbf16>
    %cst_115 = arith.constant dense<0.000000e+00> : vector<64x512xf32>
    %198 = tpu.matmul %196, %197, %cst_115 {dimension_numbers = #tpu.dot_dimension_numbers<[1], [0], [0], [1], [0, 0, 1, 1], [], []>} : vector<64x32xbf16>, vector<32x512xbf16>, vector<64x512xf32> -> vector<64x512xf32>
    %c2_116 = arith.constant 2 : index
    %c0_117 = arith.constant 0 : index
    %c0_118 = arith.constant 0 : index
    %199 = vector.load %arg10[%c2_116, %c0_117, %c0_118] : memref<4x64x1xf32, #tpu.memory_space<vmem>>, vector<1x64x1xf32>
    %200 = vector.shape_cast %199 : vector<1x64x1xf32> to vector<64x1xf32>
    %201 = vector.broadcast %200 : vector<64x1xf32> to vector<64x512xf32>
    %202 = arith.addf %198, %201 : vector<64x512xf32>
    %203 = vector.extract_strided_slice %202 {offsets = [0, 0], sizes = [32, 512], strides = [1, 1]} : vector<64x512xf32> to vector<32x512xf32>
    %204 = arith.addf %148, %203 : vector<32x512xf32>
    %205 = vector.broadcast %33 : vector<1x512xf32> to vector<32x512xf32>
    %206 = arith.mulf %204, %205 : vector<32x512xf32>
    %207 = vector.extract_strided_slice %202 {offsets = [32, 128], sizes = [32, 256], strides = [1, 1]} : vector<64x512xf32> to vector<32x256xf32>
    %208 = arith.addf %150, %207 : vector<32x256xf32>
    %cst_119 = arith.constant 0.000000e+00 : f32
    %209 = vector.broadcast %cst_119 : f32 to vector<32x16xf32>
    %210 = tpu.concatenate %209, %206, %209 in 1 : vector<32x16xf32>, vector<32x512xf32>, vector<32x16xf32> -> vector<32x544xf32>
    %211 = vector.extract_strided_slice %210 {offsets = [0, 0], sizes = [32, 512], strides = [1, 1]} : vector<32x544xf32> to vector<32x512xf32>
    %212 = arith.truncf %211 : vector<32x512xf32> to vector<32x512xbf16>
    %c3_120 = arith.constant 3 : index
    %c0_121 = arith.constant 0 : index
    %c0_122 = arith.constant 0 : index
    %c0_123 = arith.constant 0 : index
    %213 = vector.load %arg8[%c3_120, %c0_121, %c0_122, %c0_123] : memref<4x5x64x32xbf16, #tpu.memory_space<vmem>>, vector<1x1x64x32xbf16>
    %214 = vector.shape_cast %213 : vector<1x1x64x32xbf16> to vector<64x32xbf16>
    %cst_124 = arith.constant dense<0.000000e+00> : vector<64x512xf32>
    %215 = tpu.matmul %214, %212, %cst_124 {dimension_numbers = #tpu.dot_dimension_numbers<[1], [0], [0], [1], [0, 0, 1, 1], [], []>} : vector<64x32xbf16>, vector<32x512xbf16>, vector<64x512xf32> -> vector<64x512xf32>
    %216 = vector.extract_strided_slice %210 {offsets = [0, 8], sizes = [32, 512], strides = [1, 1]} : vector<32x544xf32> to vector<32x512xf32>
    %217 = arith.truncf %216 : vector<32x512xf32> to vector<32x512xbf16>
    %c3_125 = arith.constant 3 : index
    %c1_126 = arith.constant 1 : index
    %c0_127 = arith.constant 0 : index
    %c0_128 = arith.constant 0 : index
    %218 = vector.load %arg8[%c3_125, %c1_126, %c0_127, %c0_128] : memref<4x5x64x32xbf16, #tpu.memory_space<vmem>>, vector<1x1x64x32xbf16>
    %219 = vector.shape_cast %218 : vector<1x1x64x32xbf16> to vector<64x32xbf16>
    %cst_129 = arith.constant dense<0.000000e+00> : vector<64x512xf32>
    %220 = tpu.matmul %219, %217, %cst_129 {dimension_numbers = #tpu.dot_dimension_numbers<[1], [0], [0], [1], [0, 0, 1, 1], [], []>} : vector<64x32xbf16>, vector<32x512xbf16>, vector<64x512xf32> -> vector<64x512xf32>
    %221 = arith.addf %215, %220 : vector<64x512xf32>
    %222 = vector.extract_strided_slice %210 {offsets = [0, 16], sizes = [32, 512], strides = [1, 1]} : vector<32x544xf32> to vector<32x512xf32>
    %223 = arith.truncf %222 : vector<32x512xf32> to vector<32x512xbf16>
    %c3_130 = arith.constant 3 : index
    %c2_131 = arith.constant 2 : index
    %c0_132 = arith.constant 0 : index
    %c0_133 = arith.constant 0 : index
    %224 = vector.load %arg8[%c3_130, %c2_131, %c0_132, %c0_133] : memref<4x5x64x32xbf16, #tpu.memory_space<vmem>>, vector<1x1x64x32xbf16>
    %225 = vector.shape_cast %224 : vector<1x1x64x32xbf16> to vector<64x32xbf16>
    %cst_134 = arith.constant dense<0.000000e+00> : vector<64x512xf32>
    %226 = tpu.matmul %225, %223, %cst_134 {dimension_numbers = #tpu.dot_dimension_numbers<[1], [0], [0], [1], [0, 0, 1, 1], [], []>} : vector<64x32xbf16>, vector<32x512xbf16>, vector<64x512xf32> -> vector<64x512xf32>
    %227 = arith.addf %221, %226 : vector<64x512xf32>
    %228 = vector.extract_strided_slice %210 {offsets = [0, 24], sizes = [32, 512], strides = [1, 1]} : vector<32x544xf32> to vector<32x512xf32>
    %229 = arith.truncf %228 : vector<32x512xf32> to vector<32x512xbf16>
    %c3_135 = arith.constant 3 : index
    %c3_136 = arith.constant 3 : index
    %c0_137 = arith.constant 0 : index
    %c0_138 = arith.constant 0 : index
    %230 = vector.load %arg8[%c3_135, %c3_136, %c0_137, %c0_138] : memref<4x5x64x32xbf16, #tpu.memory_space<vmem>>, vector<1x1x64x32xbf16>
    %231 = vector.shape_cast %230 : vector<1x1x64x32xbf16> to vector<64x32xbf16>
    %cst_139 = arith.constant dense<0.000000e+00> : vector<64x512xf32>
    %232 = tpu.matmul %231, %229, %cst_139 {dimension_numbers = #tpu.dot_dimension_numbers<[1], [0], [0], [1], [0, 0, 1, 1], [], []>} : vector<64x32xbf16>, vector<32x512xbf16>, vector<64x512xf32> -> vector<64x512xf32>
    %233 = arith.addf %227, %232 : vector<64x512xf32>
    %234 = vector.extract_strided_slice %210 {offsets = [0, 32], sizes = [32, 512], strides = [1, 1]} : vector<32x544xf32> to vector<32x512xf32>
    %235 = arith.truncf %234 : vector<32x512xf32> to vector<32x512xbf16>
    %c3_140 = arith.constant 3 : index
    %c4_141 = arith.constant 4 : index
    %c0_142 = arith.constant 0 : index
    %c0_143 = arith.constant 0 : index
    %236 = vector.load %arg8[%c3_140, %c4_141, %c0_142, %c0_143] : memref<4x5x64x32xbf16, #tpu.memory_space<vmem>>, vector<1x1x64x32xbf16>
    %237 = vector.shape_cast %236 : vector<1x1x64x32xbf16> to vector<64x32xbf16>
    %cst_144 = arith.constant dense<0.000000e+00> : vector<64x512xf32>
    %238 = tpu.matmul %237, %235, %cst_144 {dimension_numbers = #tpu.dot_dimension_numbers<[1], [0], [0], [1], [0, 0, 1, 1], [], []>} : vector<64x32xbf16>, vector<32x512xbf16>, vector<64x512xf32> -> vector<64x512xf32>
    %239 = arith.addf %233, %238 : vector<64x512xf32>
    %c0_145 = arith.constant 0 : index
    %c3_146 = arith.constant 3 : index
    %c0_147 = arith.constant 0 : index
    %c0_148 = arith.constant 0 : index
    %240 = vector.load %arg7[%c0_145, %c3_146, %c0_147, %c0_148] : memref<1x4x64x1xf32, #tpu.memory_space<vmem>>, vector<1x1x64x1xf32>
    %241 = vector.shape_cast %240 : vector<1x1x64x1xf32> to vector<64x1xf32>
    %242 = vector.broadcast %241 : vector<64x1xf32> to vector<64x512xf32>
    %243 = arith.addf %239, %242 : vector<64x512xf32>
    %244 = vector.extract_strided_slice %243 {offsets = [0, 0], sizes = [32, 512], strides = [1, 1]} : vector<64x512xf32> to vector<32x512xf32>
    %245 = math.tanh %244 : vector<32x512xf32>
    %246 = vector.extract_strided_slice %243 {offsets = [32, 0], sizes = [32, 512], strides = [1, 1]} : vector<64x512xf32> to vector<32x512xf32>
    %247 = arith.negf %246 : vector<32x512xf32>
    %248 = math.exp %247 : vector<32x512xf32>
    %cst_149 = arith.constant 1.000000e+00 : f32
    %249 = vector.broadcast %cst_149 : f32 to vector<32x512xf32>
    %250 = arith.addf %249, %248 : vector<32x512xf32>
    %251 = arith.divf %249, %250 : vector<32x512xf32>
    %252 = arith.mulf %245, %251 : vector<32x512xf32>
    %c3_150 = arith.constant 3 : index
    %c0_151 = arith.constant 0 : index
    %c0_152 = arith.constant 0 : index
    %253 = vector.load %arg9[%c3_150, %c0_151, %c0_152] : memref<4x64x32xbf16, #tpu.memory_space<vmem>>, vector<1x64x32xbf16>
    %254 = vector.shape_cast %253 : vector<1x64x32xbf16> to vector<64x32xbf16>
    %255 = arith.truncf %252 : vector<32x512xf32> to vector<32x512xbf16>
    %cst_153 = arith.constant dense<0.000000e+00> : vector<64x512xf32>
    %256 = tpu.matmul %254, %255, %cst_153 {dimension_numbers = #tpu.dot_dimension_numbers<[1], [0], [0], [1], [0, 0, 1, 1], [], []>} : vector<64x32xbf16>, vector<32x512xbf16>, vector<64x512xf32> -> vector<64x512xf32>
    %c3_154 = arith.constant 3 : index
    %c0_155 = arith.constant 0 : index
    %c0_156 = arith.constant 0 : index
    %257 = vector.load %arg10[%c3_154, %c0_155, %c0_156] : memref<4x64x1xf32, #tpu.memory_space<vmem>>, vector<1x64x1xf32>
    %258 = vector.shape_cast %257 : vector<1x64x1xf32> to vector<64x1xf32>
    %259 = vector.broadcast %258 : vector<64x1xf32> to vector<64x512xf32>
    %260 = arith.addf %256, %259 : vector<64x512xf32>
    %261 = vector.extract_strided_slice %260 {offsets = [32, 128], sizes = [32, 256], strides = [1, 1]} : vector<64x512xf32> to vector<32x256xf32>
    %262 = arith.addf %208, %261 : vector<32x256xf32>
    %263 = vector.extract_strided_slice %33 {offsets = [0, 128], sizes = [1, 256], strides = [1, 1]} : vector<1x512xf32> to vector<1x256xf32>
    %c0_157 = arith.constant 0 : index
    %c0_158 = arith.constant 0 : index
    %264 = vector.load %arg11[%c0_157, %c0_158] : memref<16x32xbf16, #tpu.memory_space<vmem>>, vector<16x32xbf16>
    %265 = arith.truncf %262 : vector<32x256xf32> to vector<32x256xbf16>
    %cst_159 = arith.constant dense<0.000000e+00> : vector<16x256xf32>
    %266 = tpu.matmul %264, %265, %cst_159 {dimension_numbers = #tpu.dot_dimension_numbers<[1], [0], [0], [1], [0, 0, 1, 1], [], []>} : vector<16x32xbf16>, vector<32x256xbf16>, vector<16x256xf32> -> vector<16x256xf32>
    %c0_160 = arith.constant 0 : index
    %c0_161 = arith.constant 0 : index
    %267 = vector.load %arg12[%c0_160, %c0_161] : memref<16x1xf32, #tpu.memory_space<vmem>>, vector<16x1xf32>
    %268 = vector.broadcast %267 : vector<16x1xf32> to vector<16x256xf32>
    %269 = arith.addf %266, %268 : vector<16x256xf32>
    %270 = vector.broadcast %263 : vector<1x256xf32> to vector<16x256xf32>
    %271 = arith.mulf %269, %270 : vector<16x256xf32>
    %272 = vector.extract_strided_slice %271 {offsets = [0, 0], sizes = [8, 256], strides = [1, 1]} : vector<16x256xf32> to vector<8x256xf32>
    %273 = vector.extract_strided_slice %271 {offsets = [8, 0], sizes = [8, 256], strides = [1, 1]} : vector<16x256xf32> to vector<8x256xf32>
    %c0_162 = arith.constant 0 : index
    %c0_163 = arith.constant 0 : index
    %c0_164 = arith.constant 0 : index
    %274 = vector.load %arg6[%c0_162, %c0_163, %c0_164] : memref<1x8x256xf32, #tpu.memory_space<vmem>>, vector<1x8x256xf32>
    %275 = vector.shape_cast %274 : vector<1x8x256xf32> to vector<8x256xf32>
    %276 = math.exp %273 : vector<8x256xf32>
    %277 = arith.mulf %275, %276 : vector<8x256xf32>
    %278 = arith.addf %272, %277 : vector<8x256xf32>
    %279 = vector.broadcast %263 : vector<1x256xf32> to vector<8x256xf32>
    %280 = arith.mulf %278, %279 : vector<8x256xf32>
    %c0_165 = arith.constant 0 : index
    %c0_166 = arith.constant 0 : index
    %c0_167 = arith.constant 0 : index
    %281 = vector.load %arg13[%c0_165, %c0_166, %c0_167] : memref<1x8x256xf32, #tpu.memory_space<vmem>>, vector<1x8x256xf32>
    %282 = vector.shape_cast %281 : vector<1x8x256xf32> to vector<8x256xf32>
    %283 = vector.shape_cast %280 : vector<8x256xf32> to vector<1x8x256xf32>
    tpu.vector_store %arg13[%c0_165, %c0_166, %c0_167], %283 {strides = array<i32>} : memref<1x8x256xf32, #tpu.memory_space<vmem>>, vector<1x8x256xf32>,
    %284 = arith.truncf %272 : vector<8x256xf32> to vector<8x256xbf16>
    %c0_168 = arith.constant 0 : index
    %c0_169 = arith.constant 0 : index
    %c0_170 = arith.constant 0 : index
    %285 = vector.load %arg14[%c0_168, %c0_169, %c0_170] : memref<1x8x256xbf16, #tpu.memory_space<vmem>>, vector<1x8x256xbf16>
    %286 = vector.shape_cast %285 : vector<1x8x256xbf16> to vector<8x256xbf16>
    %287 = vector.shape_cast %284 : vector<8x256xbf16> to vector<1x8x256xbf16>
    tpu.vector_store %arg14[%c0_168, %c0_169, %c0_170], %287 {strides = array<i32>} : memref<1x8x256xbf16, #tpu.memory_space<vmem>>, vector<1x8x256xbf16>,
    %288 = arith.truncf %273 : vector<8x256xf32> to vector<8x256xbf16>
    %c0_171 = arith.constant 0 : index
    %c0_172 = arith.constant 0 : index
    %c0_173 = arith.constant 0 : index
    %289 = vector.load %arg15[%c0_171, %c0_172, %c0_173] : memref<1x8x256xbf16, #tpu.memory_space<vmem>>, vector<1x8x256xbf16>
    %290 = vector.shape_cast %289 : vector<1x8x256xbf16> to vector<8x256xbf16>
    %291 = vector.shape_cast %288 : vector<8x256xbf16> to vector<1x8x256xbf16>
    tpu.vector_store %arg15[%c0_171, %c0_172, %c0_173], %291 {strides = array<i32>} : memref<1x8x256xbf16, #tpu.memory_space<vmem>>, vector<1x8x256xbf16>,
    return
  }
  func.func @transform_0(%arg0: i32, %arg1: i32) -> i32 {
    %c0_i32 = arith.constant 0 : i32
    %c0_i32_0 = arith.constant 0 : i32
    return %c0_i32 : i32
  }
  func.func @transform_1(%arg0: i32, %arg1: i32) -> (i32, i32, i32) {
    %c2_i32 = arith.constant 2 : i32
    %0 = arith.muli %arg1, %c2_i32 : i32
    %c1_i32 = arith.constant 1 : i32
    %1 = arith.subi %0, %c1_i32 : i32
    %c0_i32 = arith.constant 0 : i32
    %2 = arith.maxsi %1, %c0_i32 : i32
    %c0_i32_0 = arith.constant 0 : i32
    %c0_i32_1 = arith.constant 0 : i32
    return %arg0, %c0_i32_0, %2 : i32, i32, i32
  }
  func.func @transform_2(%arg0: i32, %arg1: i32) -> (i32, i32, i32) {
    %c0_i32 = arith.constant 0 : i32
    %c0_i32_0 = arith.constant 0 : i32
    return %arg0, %c0_i32, %arg1 : i32, i32, i32
  }
  func.func @transform_3(%arg0: i32, %arg1: i32) -> (i32, i32, i32) {
    %c2_i32 = arith.constant 2 : i32
    %0 = arith.muli %arg1, %c2_i32 : i32
    %c2_i32_0 = arith.constant 2 : i32
    %1 = arith.addi %0, %c2_i32_0 : i32
    %c5_i32 = arith.constant 5 : i32
    %2 = arith.minsi %1, %c5_i32 : i32
    %c0_i32 = arith.constant 0 : i32
    %c0_i32_1 = arith.constant 0 : i32
    return %arg0, %c0_i32, %2 : i32, i32, i32
  }
  func.func @transform_4(%arg0: i32, %arg1: i32) -> (i32, i32, i32) {
    %c0_i32 = arith.constant 0 : i32
    %c0_i32_0 = arith.constant 0 : i32
    return %arg0, %c0_i32, %arg1 : i32, i32, i32
  }
  func.func @transform_5(%arg0: i32, %arg1: i32) -> (i32, i32, i32, i32) {
    %c0_i32 = arith.constant 0 : i32
    %c0_i32_0 = arith.constant 0 : i32
    %c0_i32_1 = arith.constant 0 : i32
    %c0_i32_2 = arith.constant 0 : i32
    return %arg0, %c0_i32, %c0_i32_0, %c0_i32_1 : i32, i32, i32, i32
  }
  func.func @transform_6(%arg0: i32, %arg1: i32) -> (i32, i32, i32, i32) {
    %c0_i32 = arith.constant 0 : i32
    %c0_i32_0 = arith.constant 0 : i32
    %c0_i32_1 = arith.constant 0 : i32
    %c0_i32_2 = arith.constant 0 : i32
    %c0_i32_3 = arith.constant 0 : i32
    return %c0_i32, %c0_i32_0, %c0_i32_1, %c0_i32_2 : i32, i32, i32, i32
  }
  func.func @transform_7(%arg0: i32, %arg1: i32) -> (i32, i32, i32) {
    %c0_i32 = arith.constant 0 : i32
    %c0_i32_0 = arith.constant 0 : i32
    %c0_i32_1 = arith.constant 0 : i32
    %c0_i32_2 = arith.constant 0 : i32
    return %c0_i32, %c0_i32_0, %c0_i32_1 : i32, i32, i32
  }
  func.func @transform_8(%arg0: i32, %arg1: i32) -> (i32, i32, i32) {
    %c0_i32 = arith.constant 0 : i32
    %c0_i32_0 = arith.constant 0 : i32
    %c0_i32_1 = arith.constant 0 : i32
    %c0_i32_2 = arith.constant 0 : i32
    return %c0_i32, %c0_i32_0, %c0_i32_1 : i32, i32, i32
  }
  func.func @transform_9(%arg0: i32, %arg1: i32) -> (i32, i32) {
    %c0_i32 = arith.constant 0 : i32
    %c0_i32_0 = arith.constant 0 : i32
    %c0_i32_1 = arith.constant 0 : i32
    return %c0_i32, %c0_i32_0 : i32, i32
  }
  func.func @transform_10(%arg0: i32, %arg1: i32) -> (i32, i32) {
    %c0_i32 = arith.constant 0 : i32
    %c0_i32_0 = arith.constant 0 : i32
    %c0_i32_1 = arith.constant 0 : i32
    return %c0_i32, %c0_i32_0 : i32, i32
  }
  func.func @transform_11(%arg0: i32, %arg1: i32) -> (i32, i32, i32) {
    %c0_i32 = arith.constant 0 : i32
    %c0_i32_0 = arith.constant 0 : i32
    return %arg0, %c0_i32, %arg1 : i32, i32, i32
  }
  func.func @transform_12(%arg0: i32, %arg1: i32) -> (i32, i32, i32) {
    %c0_i32 = arith.constant 0 : i32
    %c0_i32_0 = arith.constant 0 : i32
    return %arg0, %c0_i32, %arg1 : i32, i32, i32
  }
  func.func @transform_13(%arg0: i32, %arg1: i32) -> (i32, i32, i32) {
    %c0_i32 = arith.constant 0 : i32
    %c0_i32_0 = arith.constant 0 : i32
    return %arg0, %c0_i32, %arg1 : i32, i32, i32
  }
}

</mosaic_0001>

<llo_original>
// kernel: posterior_encoder_forward.2
$region0: #{posterior_encoder_forward.2}
  #allocation0 [shape = 'u32[]', space=smem, size = 0x4, offset = 0x4, fixed_abs, tag = 'smem constant byte address 0x4 - core index']
  #allocation1 [shape = 'u32[144,128]{1,0:T(1,128)}', space=vmem, size = 0x12000, scoped, tag = 'internal scratch']
  %s0 = inlined_call_operand.vmem [shape: s32[2], index: 0, kind: input, shape index: {}]
  %s1 = inlined_call_operand.vmem [shape: f32[2,16,768], index: 1, kind: input, shape index: {}]
  %s2 = inlined_call_operand.vmem [shape: bf16[32,16], index: 2, kind: input, shape index: {}]
  %s3 = inlined_call_operand.vmem [shape: f32[32,1], index: 3, kind: input, shape index: {}]
  %s4 = inlined_call_operand.vmem [shape: bf16[2,32,768], index: 4, kind: output, shape index: {}]
  %s5 = sld [smem:[#allocation0]]
  $region110: #{posterior_encoder_forward.2} parent=0
    _
  %s7 = ssub.s32 1, %s5
  %s8 = scalar_select 0, %s7, %s5
  $region1: #{posterior_encoder_forward.2} parent=0
    #allocation2 [shape = 'u8[512]{0}', space=smem, size = 0x200, scoped, tag = 'input window, operand 0, single buffered']
    #allocation3 [shape = 's32[2]{0}', space=sflag, size = 0x8, scoped, tag = 'scoped memory for posterior_encoder_forward.2']
    #allocation4 [shape = 'u8[32768]{0}', space=vmem, size = 0x8000, scoped, tag = 'input window, operand 1']
    #allocation5 [shape = 'u8[32768]{0}', space=vmem, size = 0x8000, scoped, tag = 'output window, operand 0']
    %9 = vsyncpa [#allocation3], 0
    loop: start=0, step=1, limit=8
    $region2: #{posterior_encoder_forward.2} parent=1 // loop_pre_header
      _
    $region3: #{posterior_encoder_forward.2} parent=1 // loop_header
      %s11 = sphi 0, %s15
      %p12 = scmp.ge.s32.totalorder %s11, 8
      %s18 = sphi 0, %s30
      %s19 = sphi 0, %s26
      %s20 = sphi 0, %s18
      %s21 = sphi 0, %s19
      %s22 = sphi 0, %s20
      %s23 = sphi 0, %s21
      %s31 = sphi 0, %s31
      %s33 = sphi 0, %s31
      %s34 = sphi 0, %s33
      %s48 = sphi 0, %s34
      %s56 = sphi 0, %s58
      %s59 = sphi 0, %s56
      %s60 = sphi 0, %s59
      %s76 = sphi 0, %s60
      %s80 = sphi 0, %s80
      %s82 = sphi 0, %s80
      %s83 = sphi 0, %s82
      %s97 = sphi 0, %s83
      %s101 = sphi 0, %s101
      %s103 = sphi 0, %s101
      %s104 = sphi 0, %s103
      %s118 = sphi 0, %s104
      %s126 = sphi 0, %s128
      %s129 = sphi 0, %s126
      %s130 = sphi 0, %s129
      %s146 = sphi 0, %s130
    $region4: #{posterior_encoder_forward.2} parent=1 // loop_header_branch
      %14 = sbr.rel (%p12) target = $region8
    $region5: #{posterior_encoder_forward.2} parent=1 // loop_body
      %s16 = ssub.s32 %s11, 1
      %s17 = ssub.s32 %s11, 2
      %s24 = sadd.s32 1, %s19
      %p25 = scmp.ge.s32.totalorder %s24, 3
      %s26 = scalar_select %p25, 0, %s24
      %s27 = sadd.s32 1, %s18
      %s28 = scalar_select %p25, %s27, %s18
      %p29 = scmp.ge.s32.totalorder %s28, 2
      %s30 = scalar_select %p29, 0, %s28
      %s32 = sadd.s32 %s31, 1
      %p35 = scmp.eq.s32.totalorder %s11, 5
      %p36 = scmp.ne.s32.totalorder %s31, %s33
      %p37 = scmp.eq.s32.totalorder %s11, 0
      %p38 = por %p36, %p37
      %p39 = scmp.ne.s32.totalorder %s31, %s33
      %p40 = scmp.eq.s32.totalorder %s16, 5
      %p41 = por %p39, %p40
      %p42 = scmp.ne.s32.totalorder %s33, %s34
      %p43 = scmp.eq.s32.totalorder %s16, 0
      %p44 = por %p42, %p43
      %p45 = scmp.ne.s32.totalorder %s33, %s34
      %p46 = scmp.eq.s32.totalorder %s17, 5
      %p47 = por %p45, %p46
      %p49 = scmp.ne.s32.totalorder %s34, %s48
      %p50 = scmp.eq.s32.totalorder %s17, 0
      %p51 = por %p49, %p50
      %s52 = ssub.s32 %s18, %s30
      %s53 = ssub.s32 %s19, %s26
      %s54 = sor.u32 %s52, %s53
      %p55 = scmp.eq.s32.totalorder %s54, 0
      %s57 = sadd.s32 %s56, 1
      %s58 = scalar_select %p55, %s56, %s57
      %p61 = pneg %p55
      %p62 = scmp.eq.s32.totalorder %s11, 5
      %p63 = por %p61, %p62
      %p64 = scmp.ne.s32.totalorder %s56, %s59
      %p65 = scmp.eq.s32.totalorder %s11, 0
      %p66 = por %p64, %p65
      %p67 = scmp.ne.s32.totalorder %s56, %s59
      %p68 = scmp.eq.s32.totalorder %s16, 5
      %p69 = por %p67, %p68
      %p70 = scmp.ne.s32.totalorder %s59, %s60
      %p71 = scmp.eq.s32.totalorder %s16, 0
      %p72 = por %p70, %p71
      %p73 = scmp.ne.s32.totalorder %s59, %s60
      %p74 = scmp.eq.s32.totalorder %s17, 5
      %p75 = por %p73, %p74
      %p77 = scmp.ne.s32.totalorder %s60, %s76
      %p78 = scmp.eq.s32.totalorder %s17, 0
      %p79 = por %p77, %p78
      %s81 = sadd.s32 %s80, 1
      %p84 = scmp.eq.s32.totalorder %s11, 5
      %p85 = scmp.ne.s32.totalorder %s80, %s82
      %p86 = scmp.eq.s32.totalorder %s11, 0
      %p87 = por %p85, %p86
      %p88 = scmp.ne.s32.totalorder %s80, %s82
      %p89 = scmp.eq.s32.totalorder %s16, 5
      %p90 = por %p88, %p89
      %p91 = scmp.ne.s32.totalorder %s82, %s83
      %p92 = scmp.eq.s32.totalorder %s16, 0
      %p93 = por %p91, %p92
      %p94 = scmp.ne.s32.totalorder %s82, %s83
      %p95 = scmp.eq.s32.totalorder %s17, 5
      %p96 = por %p94, %p95
      %p98 = scmp.ne.s32.totalorder %s83, %s97
      %p99 = scmp.eq.s32.totalorder %s17, 0
      %p100 = por %p98, %p99
      %s102 = sadd.s32 %s101, 1
      %p105 = scmp.eq.s32.totalorder %s11, 5
      %p106 = scmp.ne.s32.totalorder %s101, %s103
      %p107 = scmp.eq.s32.totalorder %s11, 0
      %p108 = por %p106, %p107
      %p109 = scmp.ne.s32.totalorder %s101, %s103
      %p110 = scmp.eq.s32.totalorder %s16, 5
      %p111 = por %p109, %p110
      %p112 = scmp.ne.s32.totalorder %s103, %s104
      %p113 = scmp.eq.s32.totalorder %s16, 0
      %p114 = por %p112, %p113
      %p115 = scmp.ne.s32.totalorder %s103, %s104
      %p116 = scmp.eq.s32.totalorder %s17, 5
      %p117 = por %p115, %p116
      %p119 = scmp.ne.s32.totalorder %s104, %s118
      %p120 = scmp.eq.s32.totalorder %s17, 0
      %p121 = por %p119, %p120
      %s122 = ssub.s32 %s18, %s30
      %s123 = ssub.s32 %s19, %s26
      %s124 = sor.u32 %s122, %s123
      %p125 = scmp.eq.s32.totalorder %s124, 0
      %s127 = sadd.s32 %s126, 1
      %s128 = scalar_select %p125, %s126, %s127
      %p131 = pneg %p125
      %p132 = scmp.eq.s32.totalorder %s11, 5
      %p133 = por %p131, %p132
      %p134 = scmp.ne.s32.totalorder %s126, %s129
      %p135 = scmp.eq.s32.totalorder %s11, 0
      %p136 = por %p134, %p135
      %p137 = scmp.ne.s32.totalorder %s126, %s129
      %p138 = scmp.eq.s32.totalorder %s16, 5
      %p139 = por %p137, %p138
      %p140 = scmp.ne.s32.totalorder %s129, %s130
      %p141 = scmp.eq.s32.totalorder %s16, 0
      %p142 = por %p140, %p141
      %p143 = scmp.ne.s32.totalorder %s129, %s130
      %p144 = scmp.eq.s32.totalorder %s17, 5
      %p145 = por %p143, %p144
      %p147 = scmp.ne.s32.totalorder %s130, %s146
      %p148 = scmp.eq.s32.totalorder %s17, 0
      %p149 = por %p147, %p148
      %p150 = scmp.le.s32.totalorder 1, %s11
      %p151 = scmp.lt.s32.totalorder %s11, 7
      %p152 = pnand %p150, %p151
      %p153 = pneg %p152
      // Predicated region
      $region9: #{posterior_encoder_forward.2} parent=5 // pred_check
        _
      $region10: #{posterior_encoder_forward.2} parent=5 // pred_check_branch
        %155 = sbr.rel (%p152) target = $region12
      $region11: #{posterior_encoder_forward.2} parent=5 // pred_region
        %s156 = ssub.s32 %s11, 1
        // Predicated region
        $region13: #{posterior_encoder_forward.2} parent=11 // pred_check
          %p157 = pneg %p44
        $region14: #{posterior_encoder_forward.2} parent=11 // pred_check_branch
          %159 = sbr.rel (%p157) target = $region16
        $region15: #{posterior_encoder_forward.2} parent=11 // pred_region
          %s161 = ssub.s32 16, 16
          %162 = vsyncadd [#allocation3], %s161
          %s164 = sshll.u32 %s0, 4
          %s165 = int_to_ptr.vmem [resolvable:$true] %s164
          %167 = dma.vmem_to_smem %s165, 16, [#allocation2], [#allocation3]
        $region16: #{posterior_encoder_forward.2} parent=11 // pred_fallthru
          _
        // Predicated region
        $region17: #{posterior_encoder_forward.2} parent=11 // pred_check
          %p168 = pneg %p93
        $region18: #{posterior_encoder_forward.2} parent=11 // pred_check_branch
          %170 = sbr.rel (%p168) target = $region20
        $region19: #{posterior_encoder_forward.2} parent=11 // pred_region
          _
        $region20: #{posterior_encoder_forward.2} parent=11 // pred_fallthru
          _
        // Predicated region
        $region21: #{posterior_encoder_forward.2} parent=11 // pred_check
          %p171 = pneg %p114
        $region22: #{posterior_encoder_forward.2} parent=11 // pred_check_branch
          %173 = sbr.rel (%p171) target = $region24
        $region23: #{posterior_encoder_forward.2} parent=11 // pred_region
          _
        $region24: #{posterior_encoder_forward.2} parent=11 // pred_fallthru
          _
      $region12: #{posterior_encoder_forward.2} parent=5 // pred_fallthru
        _
      %p174 = scmp.lt.s32.totalorder %s11, 6
      // Predicated region
      $region25: #{posterior_encoder_forward.2} parent=5 // pred_check
        %p175 = pneg %p174
      $region26: #{posterior_encoder_forward.2} parent=5 // pred_check_branch
        %177 = sbr.rel (%p175) target = $region28
      $region27: #{posterior_encoder_forward.2} parent=5 // pred_region
        // Predicated region
        $region29: #{posterior_encoder_forward.2} parent=27 // pred_check
          %p178 = pneg %p66
        $region30: #{posterior_encoder_forward.2} parent=27 // pred_check_branch
          %180 = sbr.rel (%p178) target = $region32
        $region31: #{posterior_encoder_forward.2} parent=27 // pred_region
          %s181 = sand.u32 %s56, 1
          %s182 = sand.u32 %s56, 1
          %s183 = smul.addr %s182, 32
          %s184 = scalar_lea.vmem [#allocation4], %s183
          %s185 = smul.u32 2, %s19
          %s186 = smul.addr %s18, 12
          %s187 = sadd.s32 %s185, %s186
          %s188 = smul.addr %s187, 8
          %s189 = scalar_lea.vmem %s1, %s188
          // Predicated region
          $region33: #{posterior_encoder_forward.2} parent=31 // pred_check
            _
          $region34: #{posterior_encoder_forward.2} parent=31 // pred_check_branch
            %191 = sbr.rel (0) target = $region36
          $region35: #{posterior_encoder_forward.2} parent=31 // pred_region
            // Predicated region
            $region37: #{posterior_encoder_forward.2} parent=35 // pred_check
              _
            $region38: #{posterior_encoder_forward.2} parent=35 // pred_check_branch
              %193 = sbr.rel (0) target = $region40
            $region39: #{posterior_encoder_forward.2} parent=35 // pred_region
              loop: start=0, step=1, limit=1
              $region41: #{posterior_encoder_forward.2} parent=39 // loop_pre_header
                _
              $region42: #{posterior_encoder_forward.2} parent=39 // loop_header
                %s195 = sphi 0, %s199
                %p196 = scmp.ge.s32.totalorder %s195, 1
                %s200 = sphi %s189, %s189
                %s201 = sphi %s184, %s184
              $region43: #{posterior_encoder_forward.2} parent=39 // loop_header_branch
                %198 = sbr.rel (%p196) target = $region47
              $region44: #{posterior_encoder_forward.2} parent=39 // loop_body
                %v202 = vld [vmem:[%s200] sm:$0xff]
                %203 = vst [vmem:[%s201] sm:$0xff] %v202
                %v204 = vld [vmem:[%s200 + $0x8] sm:$0xff]
                %205 = vst [vmem:[%s201 + $0x8] sm:$0xff] %v204
                %v206 = vld [vmem:[%s200 + $0x30] sm:$0xff]
                %207 = vst [vmem:[%s201 + $0x10] sm:$0xff] %v206
                %v208 = vld [vmem:[%s200 + $0x38] sm:$0xff]
                %209 = vst [vmem:[%s201 + $0x18] sm:$0xff] %v208
              $region45: #{posterior_encoder_forward.2} parent=39 // loop_footer
                %s199 = sadd.s32 1, %s195
              $region46: #{posterior_encoder_forward.2} parent=39 // loop_footer_branch
                %194 = sbr.rel target = $region42
              $region47: #{posterior_encoder_forward.2} parent=39 // loop_exit
                _
            $region40: #{posterior_encoder_forward.2} parent=35 // pred_fallthru
              _
            // Predicated region
            $region48: #{posterior_encoder_forward.2} parent=35 // pred_check
              _
            $region49: #{posterior_encoder_forward.2} parent=35 // pred_check_branch
              %211 = sbr.rel target = $region51
            $region50: #{posterior_encoder_forward.2} parent=35 // pred_region
              _
            $region51: #{posterior_encoder_forward.2} parent=35 // pred_fallthru
              _
          $region36: #{posterior_encoder_forward.2} parent=31 // pred_fallthru
            _
          %212 = vnop
        $region32: #{posterior_encoder_forward.2} parent=27 // pred_fallthru
          _
      $region28: #{posterior_encoder_forward.2} parent=5 // pred_fallthru
        _
      %p213 = scmp.le.s32.totalorder 1, %s11
      %p214 = scmp.lt.s32.totalorder %s11, 7
      %p215 = pnand %p213, %p214
      %p216 = pneg %p215
      // Predicated region
      $region52: #{posterior_encoder_forward.2} parent=5 // pred_check
        _
      $region53: #{posterior_encoder_forward.2} parent=5 // pred_check_branch
        %218 = sbr.rel (%p215) target = $region55
      $region54: #{posterior_encoder_forward.2} parent=5 // pred_region
        %s219 = ssub.s32 %s11, 1
        // Predicated region
        $region56: #{posterior_encoder_forward.2} parent=54 // pred_check
          %p220 = pneg %p44
        $region57: #{posterior_encoder_forward.2} parent=54 // pred_check_branch
          %222 = sbr.rel (%p220) target = $region59
        $region58: #{posterior_encoder_forward.2} parent=54 // pred_region
          %223 = dma.done [#allocation3], 16
        $region59: #{posterior_encoder_forward.2} parent=54 // pred_fallthru
          _
        %s224 = sand.u32 %s59, 1
        %s225 = sand.u32 %s59, 1
        %s226 = smul.addr %s225, 32
        %s227 = scalar_lea.vmem [#allocation4], %s226
        // Predicated region
        $region60: #{posterior_encoder_forward.2} parent=54 // pred_check
          %p228 = pneg %p72
        $region61: #{posterior_encoder_forward.2} parent=54 // pred_check_branch
          %230 = sbr.rel (%p228) target = $region63
        $region62: #{posterior_encoder_forward.2} parent=54 // pred_region
          _
        $region63: #{posterior_encoder_forward.2} parent=54 // pred_fallthru
          _
        %231 = sfence
        %p232 = pneg %p44
        %p233 = pneg %p41
        %s234 = sand.u32 %s59, 1
        %s235 = sand.u32 %s59, 1
        %s236 = smul.addr %s235, 32
        %s237 = scalar_lea.vmem [#allocation4], %s236
        %p238 = pneg %p72
        %p239 = pneg %p69
        %p240 = pneg %p93
        %p241 = pneg %p90
        %p242 = pneg %p114
        %p243 = pneg %p111
        %p244 = pneg %p142
        %p245 = pneg %p139
        %s246 = sand.u32 %s129, 1
        %s247 = sand.u32 %s129, 1
        %s248 = smul.addr %s247, 32
        %s249 = scalar_lea.vmem [#allocation5], %s248
        %s250 = smul.u32 2, %s21
        %s251 = smul.u32 2, %s21
        %v253 = vld [vmem:[%s2] sm:$0xf]
        %v254 = vld [vmem:[%s2 + $0x4] sm:$0xf]
        %v255 = vld [vmem:[%s2 + $0x8] sm:$0xf]
        %v256 = vld [vmem:[%s2 + $0xc] sm:$0xf]
        %v257 = vld [vmem:[%s227] sm:$0xff]
        %v258 = vld [vmem:[%s227 + $0x8] sm:$0xff]
        %v259 = vld [vmem:[%s227 + $0x10] sm:$0xff]
        %v260 = vld [vmem:[%s227 + $0x18] sm:$0xff]
        %v261 = vpack.c.bf16 %v259, %v257
        %v262 = vpack.c.bf16 %v260, %v258
        %v263 = vld [vmem:[%s3] sm:$0xff]
        %v264 = vld [vmem:[%s3 + $0x8] sm:$0xff]
        %v265 = vld [vmem:[%s3 + $0x10] sm:$0xff]
        %v266 = vld [vmem:[%s3 + $0x18] sm:$0xff]
        %268 = vset.pattern.permute.xlu0 0
        %269 = vperm.xlu0 %268, %v263
        %v270 = vpop.permute.xlu0 %269
        %273 = vset.pattern.permute.xlu0 0
        %274 = vperm.xlu0 %273, %v264
        %v275 = vpop.permute.xlu0 %274
        %278 = vset.pattern.permute.xlu0 0
        %279 = vperm.xlu0 %278, %v265
        %v280 = vpop.permute.xlu0 %279
        %283 = vset.pattern.permute.xlu0 0
        %284 = vperm.xlu0 %283, %v266
        %v285 = vpop.permute.xlu0 %284
        %v291 = vunpack.c.l.b16 %v253
        %v292 = vunpack.c.l.b16 %v254
        %v293 = vunpack.c.l.b16 %v255
        %v294 = vunpack.c.l.b16 %v256
        %v295 = vpack.c.b16 %v292, %v291
        %v296 = vpack.c.b16 %v294, %v293
        %vm297 = vcmask 130048
        %v299 = vsel %vm297, %v295, 0
        %v302 = vsel %vm297, %v296, 0
        %304 = vmatprep.subr.bf16.mxu0 %v262
        %305 = vmatpush1.bf16.msra.mxu0 %v261
        %306 = vmatprep.subr.bf16.mxu0 0
        %307 = vmatpush1.bf16.msra.mxu0 0
        %308 = vmatprep.subr.bf16.mxu0 0
        %309 = vmatpush1.bf16.msra.mxu0 0
        %310 = vmatprep.subr.bf16.mxu0 0
        %311 = vmatpush1.bf16.msra.mxu0 0
        %312 = vmatprep.subr.bf16.mxu0 0
        %313 = vmatpush1.bf16.msra.mxu0 0
        %314 = vmatprep.subr.bf16.mxu0 0
        %315 = vmatpush1.bf16.msra.mxu0 0
        %316 = vmatprep.subr.bf16.mxu0 0
        %317 = vmatpush1.bf16.msra.mxu0 0
        %318 = vmatprep.subr.bf16.mxu0 0
        %319 = vmatpush1.bf16.msra.mxu0 0
        %320 = vmatprep.subr.bf16.mxu0 0
        %321 = vmatpush1.bf16.msra.mxu0 0
        %322 = vmatprep.subr.bf16.mxu0 0
        %323 = vmatpush1.bf16.msra.mxu0 0
        %324 = vmatprep.subr.bf16.mxu0 0
        %325 = vmatpush1.bf16.msra.mxu0 0
        %326 = vmatprep.subr.bf16.mxu0 0
        %327 = vmatpush1.bf16.msra.mxu0 0
        %328 = vmatprep.subr.bf16.mxu0 0
        %329 = vmatpush1.bf16.msra.mxu0 0
        %330 = vmatprep.subr.bf16.mxu0 0
        %331 = vmatpush1.bf16.msra.mxu0 0
        %332 = vmatprep.subr.bf16.mxu0 0
        %333 = vmatpush1.bf16.msra.mxu0 0
        %334 = vmatprep.subr.bf16.mxu0 0
        %335 = vmatpush1.bf16.msra.mxu0 0
        %336 = vmatprep.mubr.bf16.mxu0 0
        %337 = vmatmul.mubr.bf16.gmra.mrb[0].mxu0 %v299
        %v338 = vpop.f32.mrb[0].mxu0
        %v339 = vadd.f32 %v270, %v338
        %v340 = vpop.f32.mrb[0].mxu0
        %v341 = vadd.f32 %v270, %v340
        %v342 = vpop.f32.mrb[0].mxu0
        %v343 = vadd.f32 %v275, %v342
        %v344 = vpop.f32.mrb[0].mxu0
        %v345 = vadd.f32 %v275, %v344
        %346 = vmatprep.mubr.bf16.mxu0 0
        %347 = vmatmul.mubr.bf16.gmra.mrb[0].mxu0 %v302
        %v348 = vpop.f32.mrb[0].mxu0
        %v349 = vadd.f32 %v280, %v348
        %v350 = vpop.f32.mrb[0].mxu0
        %v351 = vadd.f32 %v280, %v350
        %v352 = vpop.f32.mrb[0].mxu0
        %v353 = vadd.f32 %v285, %v352
        %v354 = vpop.f32.mrb[0].mxu0
        %v355 = vadd.f32 %v285, %v354
        %356 = vdwg.mxu0
        %v357 = vlaneseq
        %v358 = vand.u32 %v357, 127
        %v359 = vadd.s32 %v358, 128
        %s360 = smul.u32 %s21, 256
        %v361 = vstv %s360
        %v362 = vadd.s32 %v358, %v361
        %v363 = vadd.s32 %v359, %v361
        %s364 = sld [smem:[#allocation2 + %s20]]
        %v365 = vstv %s364
        %vm366 = vcmp.lt.s32.totalorder %v362, %v365
        %vm367 = vcmp.lt.s32.totalorder %v363, %v365
        %v368 = vsel %vm366, 1, 0
        %v369 = vsel %vm367, 1, 0
        %v370 = vcvt.s32.f32 %v368
        %v371 = vcvt.s32.f32 %v369
        %v372 = vmul.f32 %v339, %v370
        %v373 = vmul.f32 %v341, %v371
        %v374 = vmul.f32 %v343, %v370
        %v375 = vmul.f32 %v345, %v371
        %v376 = vmul.f32 %v349, %v370
        %v377 = vmul.f32 %v351, %v371
        %v378 = vmul.f32 %v353, %v370
        %v379 = vmul.f32 %v355, %v371
        %v380 = vpack.c.bf16 %v374, %v372
        %v381 = vpack.c.bf16 %v375, %v373
        %v382 = vpack.c.bf16 %v378, %v376
        %v383 = vpack.c.bf16 %v379, %v377
        %v388 = vunpack.c.l.b16 %v380
        %v389 = vunpack.c.l.b16 %v381
        %v390 = vunpack.c.h.b16 %v380
        %v391 = vunpack.c.h.b16 %v381
        %v392 = vunpack.c.l.b16 %v382
        %v393 = vunpack.c.l.b16 %v383
        %v394 = vunpack.c.h.b16 %v382
        %v395 = vunpack.c.h.b16 %v383
        %v396 = vpack.c.b16 %v389, %v388
        %v397 = vpack.c.b16 %v391, %v390
        %v398 = vpack.c.b16 %v393, %v392
        %v399 = vpack.c.b16 %v395, %v394
        %404 = vst [vmem:[%s249] sm:$0xff] %v396
        %405 = vst [vmem:[%s249 + $0x8] sm:$0xff] %v397
        %406 = vst [vmem:[%s249 + $0x10] sm:$0xff] %v398
        %407 = vst [vmem:[%s249 + $0x18] sm:$0xff] %v399
        %s408 = sand.u32 %s129, 1
        %s409 = sand.u32 %s129, 1
        %s410 = smul.addr %s409, 32
        %s411 = scalar_lea.vmem [#allocation5], %s410
        // Predicated region
        $region64: #{posterior_encoder_forward.2} parent=54 // pred_check
          %p412 = pneg %p139
        $region65: #{posterior_encoder_forward.2} parent=54 // pred_check_branch
          %414 = sbr.rel (%p412) target = $region67
        $region66: #{posterior_encoder_forward.2} parent=54 // pred_region
          %s415 = smul.u32 2, %s21
          %s416 = smul.addr %s20, 24
          %s417 = sadd.s32 %s415, %s416
          %s418 = smul.addr %s417, 4
          %s419 = scalar_lea.vmem %s4, %s418
          // Predicated region
          $region68: #{posterior_encoder_forward.2} parent=66 // pred_check
            _
          $region69: #{posterior_encoder_forward.2} parent=66 // pred_check_branch
            %421 = sbr.rel (0) target = $region71
          $region70: #{posterior_encoder_forward.2} parent=66 // pred_region
            // Predicated region
            $region72: #{posterior_encoder_forward.2} parent=70 // pred_check
              _
            $region73: #{posterior_encoder_forward.2} parent=70 // pred_check_branch
              %423 = sbr.rel (0) target = $region75
            $region74: #{posterior_encoder_forward.2} parent=70 // pred_region
              // Predicated region
              $region87: #{posterior_encoder_forward.2} parent=74 // pred_check
                _
              $region88: #{posterior_encoder_forward.2} parent=74 // pred_check_branch
                %444 = sbr.rel (0) target = $region90
              $region89: #{posterior_encoder_forward.2} parent=74 // pred_region
                loop: start=0, step=1, limit=1
                $region91: #{posterior_encoder_forward.2} parent=89 // loop_pre_header
                  _
                $region92: #{posterior_encoder_forward.2} parent=89 // loop_header
                  %s446 = sphi 0, %s450
                  %p447 = scmp.ge.s32.totalorder %s446, 1
                  %s451 = sphi %s411, %s411
                  %s452 = sphi %s419, %s419
                $region93: #{posterior_encoder_forward.2} parent=89 // loop_header_branch
                  %449 = sbr.rel (%p447) target = $region97
                $region94: #{posterior_encoder_forward.2} parent=89 // loop_body
                  %v453 = vld [vmem:[%s451] sm:$0xff]
                  %454 = vst [vmem:[%s452] sm:$0xff] %v453
                  %v455 = vld [vmem:[%s451 + $0x8] sm:$0xff]
                  %456 = vst [vmem:[%s452 + $0x18] sm:$0xff] %v455
                  %v457 = vld [vmem:[%s451 + $0x10] sm:$0xff]
                  %458 = vst [vmem:[%s452 + $0x30] sm:$0xff] %v457
                  %v459 = vld [vmem:[%s451 + $0x18] sm:$0xff]
                  %460 = vst [vmem:[%s452 + $0x48] sm:$0xff] %v459
                $region95: #{posterior_encoder_forward.2} parent=89 // loop_footer
                  %s450 = sadd.s32 1, %s446
                $region96: #{posterior_encoder_forward.2} parent=89 // loop_footer_branch
                  %445 = sbr.rel target = $region92
                $region97: #{posterior_encoder_forward.2} parent=89 // loop_exit
                  _
              $region90: #{posterior_encoder_forward.2} parent=74 // pred_fallthru
                _
              // Predicated region
              $region98: #{posterior_encoder_forward.2} parent=74 // pred_check
                _
              $region99: #{posterior_encoder_forward.2} parent=74 // pred_check_branch
                %462 = sbr.rel target = $region101
              $region100: #{posterior_encoder_forward.2} parent=74 // pred_region
                _
              $region101: #{posterior_encoder_forward.2} parent=74 // pred_fallthru
                _
            $region75: #{posterior_encoder_forward.2} parent=70 // pred_fallthru
              _
            // Predicated region
            $region76: #{posterior_encoder_forward.2} parent=70 // pred_check
              _
            $region77: #{posterior_encoder_forward.2} parent=70 // pred_check_branch
              %425 = sbr.rel target = $region79
            $region78: #{posterior_encoder_forward.2} parent=70 // pred_region
              loop: start=0, step=1, limit=1
              $region80: #{posterior_encoder_forward.2} parent=78 // loop_pre_header
                _
              $region81: #{posterior_encoder_forward.2} parent=78 // loop_header
                %s428 = sphi 0, %s432
                %p429 = scmp.ge.s32.totalorder %s428, 1
                %s433 = sphi %s411, %s411
                %s434 = sphi %s419, %s419
              $region82: #{posterior_encoder_forward.2} parent=78 // loop_header_branch
                %431 = sbr.rel (%p429) target = $region86
              $region83: #{posterior_encoder_forward.2} parent=78 // loop_body
                %v435 = vld [vmem:[%s433] sm:$0xff]
                %436 = vst [vmem:[%s434] sm:$0xff] %v435
                %v437 = vld [vmem:[%s433 + $0x8] sm:$0xff]
                %438 = vst [vmem:[%s434 + $0x18] sm:$0xff] %v437
                %v439 = vld [vmem:[%s433 + $0x10] sm:$0xff]
                %440 = vst [vmem:[%s434 + $0x30] sm:$0xff] %v439
                %v441 = vld [vmem:[%s433 + $0x18] sm:$0xff]
                %442 = vst [vmem:[%s434 + $0x48] sm:$0xff] %v441
              $region84: #{posterior_encoder_forward.2} parent=78 // loop_footer
                %s432 = sadd.s32 1, %s428
              $region85: #{posterior_encoder_forward.2} parent=78 // loop_footer_branch
                %427 = sbr.rel target = $region81
              $region86: #{posterior_encoder_forward.2} parent=78 // loop_exit
                _
            $region79: #{posterior_encoder_forward.2} parent=70 // pred_fallthru
              _
          $region71: #{posterior_encoder_forward.2} parent=66 // pred_fallthru
            _
          %463 = vnop
        $region67: #{posterior_encoder_forward.2} parent=54 // pred_fallthru
          _
      $region55: #{posterior_encoder_forward.2} parent=5 // pred_fallthru
        _
      %p464 = scmp.le.s32.totalorder 2, %s11
      // Predicated region
      $region102: #{posterior_encoder_forward.2} parent=5 // pred_check
        %p465 = pneg %p464
      $region103: #{posterior_encoder_forward.2} parent=5 // pred_check_branch
        %467 = sbr.rel (%p465) target = $region105
      $region104: #{posterior_encoder_forward.2} parent=5 // pred_region
        %s468 = ssub.s32 %s11, 2
        // Predicated region
        $region106: #{posterior_encoder_forward.2} parent=104 // pred_check
          %p469 = pneg %p145
        $region107: #{posterior_encoder_forward.2} parent=104 // pred_check_branch
          %471 = sbr.rel (%p469) target = $region109
        $region108: #{posterior_encoder_forward.2} parent=104 // pred_region
          %s472 = sand.u32 %s130, 1
          %s473 = sand.u32 %s130, 1
          %s474 = smul.addr %s473, 32
          %s475 = scalar_lea.vmem [#allocation5], %s474
        $region109: #{posterior_encoder_forward.2} parent=104 // pred_fallthru
          _
      $region105: #{posterior_encoder_forward.2} parent=5 // pred_fallthru
        _
    $region6: #{posterior_encoder_forward.2} parent=1 // loop_footer
      %s15 = sadd.s32 1, %s11
    $region7: #{posterior_encoder_forward.2} parent=1 // loop_footer_branch
      %10 = sbr.rel target = $region3
    $region8: #{posterior_encoder_forward.2} parent=1 // loop_exit
      _
    %476 = vsyncpa [#allocation3], 1
    %s477 = scalar_lea.sflag [#allocation3], 1
    %478 = vsyncpa %s477, 1

// kernel: posterior_encoder_forward.3
$region0: #{posterior_encoder_forward.3}
  #allocation0 [shape = 'u32[]', space=smem, size = 0x4, offset = 0x4, fixed_abs, tag = 'smem constant byte address 0x4 - core index']
  #allocation1 [shape = 'u32[144,128]{1,0:T(1,128)}', space=vmem, size = 0x12000, scoped, tag = 'internal scratch']
  %s0 = inlined_call_operand.vmem [shape: s32[2], index: 0, kind: input, shape index: {}]
  %s1 = inlined_call_operand.vmem [shape: bf16[2,32,768], index: 1, kind: input, shape index: {}, may-alias: {1,2,3}]
  %s2 = inlined_call_operand.vmem [shape: bf16[2,32,768], index: 2, kind: input, shape index: {}, may-alias: {1,2,3}]
  %s3 = inlined_call_operand.vmem [shape: bf16[2,32,768], index: 3, kind: input, shape index: {}, may-alias: {1,2,3}]
  %s4 = inlined_call_operand.vmem [shape: f32[2,8,768], index: 4, kind: input, shape index: {}]
  %s5 = inlined_call_operand.vmem [shape: f32[2,4,64,1], index: 5, kind: input, shape index: {}]
  %s6 = inlined_call_operand.vmem [shape: bf16[4,5,64,32], index: 6, kind: input, shape index: {}]
  %s7 = inlined_call_operand.vmem [shape: bf16[4,64,32], index: 7, kind: input, shape index: {}]
  %s8 = inlined_call_operand.vmem [shape: f32[4,64,1], index: 8, kind: input, shape index: {}]
  %s9 = inlined_call_operand.vmem [shape: bf16[16,32], index: 9, kind: input, shape index: {}]
  %s10 = inlined_call_operand.vmem [shape: f32[16,1], index: 10, kind: input, shape index: {}]
  %s11 = inlined_call_operand.vmem [shape: f32[2,8,768], index: 11, kind: output, shape index: {0}]
  %s12 = inlined_call_operand.vmem [shape: bf16[2,8,768], index: 12, kind: output, shape index: {1}]
  %s13 = inlined_call_operand.vmem [shape: bf16[2,8,768], index: 13, kind: output, shape index: {2}]
  %14 = xla_tuple %s11, %s12, %s13
  %s15 = sld [smem:[#allocation0]]
  $region217: #{posterior_encoder_forward.3} parent=0
    _
  %s17 = ssub.s32 1, %s15
  %s18 = scalar_select 0, %s17, %s15
  $region1: #{posterior_encoder_forward.3} parent=0
    #allocation2 [shape = 'u8[512]{0}', space=smem, size = 0x200, scoped, tag = 'input window, operand 0, single buffered']
    #allocation3 [shape = 's32[2]{0}', space=sflag, size = 0x8, scoped, tag = 'scoped memory for posterior_encoder_forward.3']
    #allocation4 [shape = 'u8[16384]{0}', space=vmem, size = 0x4000, scoped, tag = 'input window, operand 1']
    #allocation5 [shape = 'u8[32768]{0}', space=vmem, size = 0x8000, scoped, tag = 'input window, operand 2']
    #allocation6 [shape = 'u8[16384]{0}', space=vmem, size = 0x4000, scoped, tag = 'input window, operand 3']
    %19 = vsyncpa [#allocation3], 0
    loop: start=0, step=1, limit=8
    $region2: #{posterior_encoder_forward.3} parent=1 // loop_pre_header
      _
    $region3: #{posterior_encoder_forward.3} parent=1 // loop_header
      %s21 = sphi 0, %s25
      %p22 = scmp.ge.s32.totalorder %s21, 8
      %s28 = sphi 0, %s40
      %s29 = sphi 0, %s36
      %s30 = sphi 0, %s28
      %s31 = sphi 0, %s29
      %s32 = sphi 0, %s30
      %s33 = sphi 0, %s31
      %s41 = sphi 0, %s41
      %s43 = sphi 0, %s41
      %s44 = sphi 0, %s43
      %s58 = sphi 0, %s44
      %s74 = sphi 0, %s76
      %s77 = sphi 0, %s74
      %s78 = sphi 0, %s77
      %s94 = sphi 0, %s78
      %s102 = sphi 0, %s104
      %s105 = sphi 0, %s102
      %s106 = sphi 0, %s105
      %s122 = sphi 0, %s106
      %s138 = sphi 0, %s140
      %s141 = sphi 0, %s138
      %s142 = sphi 0, %s141
      %s158 = sphi 0, %s142
      %s166 = sphi 0, %s168
      %s169 = sphi 0, %s166
      %s170 = sphi 0, %s169
      %s186 = sphi 0, %s170
      %s192 = sphi 0, %s194
      %s195 = sphi 0, %s192
      %s196 = sphi 0, %s195
      %s212 = sphi 0, %s196
      %s216 = sphi 0, %s216
      %s218 = sphi 0, %s216
      %s219 = sphi 0, %s218
      %s233 = sphi 0, %s219
      %s237 = sphi 0, %s237
      %s239 = sphi 0, %s237
      %s240 = sphi 0, %s239
      %s254 = sphi 0, %s240
      %s258 = sphi 0, %s258
      %s260 = sphi 0, %s258
      %s261 = sphi 0, %s260
      %s275 = sphi 0, %s261
      %s279 = sphi 0, %s279
      %s281 = sphi 0, %s279
      %s282 = sphi 0, %s281
      %s296 = sphi 0, %s282
      %s300 = sphi 0, %s300
      %s302 = sphi 0, %s300
      %s303 = sphi 0, %s302
      %s317 = sphi 0, %s303
      %s325 = sphi 0, %s327
      %s328 = sphi 0, %s325
      %s329 = sphi 0, %s328
      %s345 = sphi 0, %s329
      %s353 = sphi 0, %s355
      %s356 = sphi 0, %s353
      %s357 = sphi 0, %s356
      %s373 = sphi 0, %s357
      %s381 = sphi 0, %s383
      %s384 = sphi 0, %s381
      %s385 = sphi 0, %s384
      %s401 = sphi 0, %s385
    $region4: #{posterior_encoder_forward.3} parent=1 // loop_header_branch
      %24 = sbr.rel (%p22) target = $region8
    $region5: #{posterior_encoder_forward.3} parent=1 // loop_body
      %s26 = ssub.s32 %s21, 1
      %s27 = ssub.s32 %s21, 2
      %s34 = sadd.s32 1, %s29
      %p35 = scmp.ge.s32.totalorder %s34, 3
      %s36 = scalar_select %p35, 0, %s34
      %s37 = sadd.s32 1, %s28
      %s38 = scalar_select %p35, %s37, %s28
      %p39 = scmp.ge.s32.totalorder %s38, 2
      %s40 = scalar_select %p39, 0, %s38
      %s42 = sadd.s32 %s41, 1
      %p45 = scmp.eq.s32.totalorder %s21, 5
      %p46 = scmp.ne.s32.totalorder %s41, %s43
      %p47 = scmp.eq.s32.totalorder %s21, 0
      %p48 = por %p46, %p47
      %p49 = scmp.ne.s32.totalorder %s41, %s43
      %p50 = scmp.eq.s32.totalorder %s26, 5
      %p51 = por %p49, %p50
      %p52 = scmp.ne.s32.totalorder %s43, %s44
      %p53 = scmp.eq.s32.totalorder %s26, 0
      %p54 = por %p52, %p53
      %p55 = scmp.ne.s32.totalorder %s43, %s44
      %p56 = scmp.eq.s32.totalorder %s27, 5
      %p57 = por %p55, %p56
      %p59 = scmp.ne.s32.totalorder %s44, %s58
      %p60 = scmp.eq.s32.totalorder %s27, 0
      %p61 = por %p59, %p60
      %s62 = smul.u32 %s29, 2
      %s63 = ssub.s32 %s62, 1
      %p64 = scmp.gt.s32.totalorder %s63, 0
      %s65 = scalar_select %p64, %s63, 0
      %s66 = smul.u32 %s36, 2
      %s67 = ssub.s32 %s66, 1
      %p68 = scmp.gt.s32.totalorder %s67, 0
      %s69 = scalar_select %p68, %s67, 0
      %s70 = ssub.s32 %s28, %s40
      %s71 = ssub.s32 %s65, %s69
      %s72 = sor.u32 %s70, %s71
      %p73 = scmp.eq.s32.totalorder %s72, 0
      %s75 = sadd.s32 %s74, 1
      %s76 = scalar_select %p73, %s74, %s75
      %p79 = pneg %p73
      %p80 = scmp.eq.s32.totalorder %s21, 5
      %p81 = por %p79, %p80
      %p82 = scmp.ne.s32.totalorder %s74, %s77
      %p83 = scmp.eq.s32.totalorder %s21, 0
      %p84 = por %p82, %p83
      %p85 = scmp.ne.s32.totalorder %s74, %s77
      %p86 = scmp.eq.s32.totalorder %s26, 5
      %p87 = por %p85, %p86
      %p88 = scmp.ne.s32.totalorder %s77, %s78
      %p89 = scmp.eq.s32.totalorder %s26, 0
      %p90 = por %p88, %p89
      %p91 = scmp.ne.s32.totalorder %s77, %s78
      %p92 = scmp.eq.s32.totalorder %s27, 5
      %p93 = por %p91, %p92
      %p95 = scmp.ne.s32.totalorder %s78, %s94
      %p96 = scmp.eq.s32.totalorder %s27, 0
      %p97 = por %p95, %p96
      %s98 = ssub.s32 %s28, %s40
      %s99 = ssub.s32 %s29, %s36
      %s100 = sor.u32 %s98, %s99
      %p101 = scmp.eq.s32.totalorder %s100, 0
      %s103 = sadd.s32 %s102, 1
      %s104 = scalar_select %p101, %s102, %s103
      %p107 = pneg %p101
      %p108 = scmp.eq.s32.totalorder %s21, 5
      %p109 = por %p107, %p108
      %p110 = scmp.ne.s32.totalorder %s102, %s105
      %p111 = scmp.eq.s32.totalorder %s21, 0
      %p112 = por %p110, %p111
      %p113 = scmp.ne.s32.totalorder %s102, %s105
      %p114 = scmp.eq.s32.totalorder %s26, 5
      %p115 = por %p113, %p114
      %p116 = scmp.ne.s32.totalorder %s105, %s106
      %p117 = scmp.eq.s32.totalorder %s26, 0
      %p118 = por %p116, %p117
      %p119 = scmp.ne.s32.totalorder %s105, %s106
      %p120 = scmp.eq.s32.totalorder %s27, 5
      %p121 = por %p119, %p120
      %p123 = scmp.ne.s32.totalorder %s106, %s122
      %p124 = scmp.eq.s32.totalorder %s27, 0
      %p125 = por %p123, %p124
      %s126 = smul.u32 %s29, 2
      %s127 = sadd.s32 %s126, 2
      %p128 = scmp.lt.s32.totalorder %s127, 5
      %s129 = scalar_select %p128, %s127, 5
      %s130 = smul.u32 %s36, 2
      %s131 = sadd.s32 %s130, 2
      %p132 = scmp.lt.s32.totalorder %s131, 5
      %s133 = scalar_select %p132, %s131, 5
      %s134 = ssub.s32 %s28, %s40
      %s135 = ssub.s32 %s129, %s133
      %s136 = sor.u32 %s134, %s135
      %p137 = scmp.eq.s32.totalorder %s136, 0
      %s139 = sadd.s32 %s138, 1
      %s140 = scalar_select %p137, %s138, %s139
      %p143 = pneg %p137
      %p144 = scmp.eq.s32.totalorder %s21, 5
      %p145 = por %p143, %p144
      %p146 = scmp.ne.s32.totalorder %s138, %s141
      %p147 = scmp.eq.s32.totalorder %s21, 0
      %p148 = por %p146, %p147
      %p149 = scmp.ne.s32.totalorder %s138, %s141
      %p150 = scmp.eq.s32.totalorder %s26, 5
      %p151 = por %p149, %p150
      %p152 = scmp.ne.s32.totalorder %s141, %s142
      %p153 = scmp.eq.s32.totalorder %s26, 0
      %p154 = por %p152, %p153
      %p155 = scmp.ne.s32.totalorder %s141, %s142
      %p156 = scmp.eq.s32.totalorder %s27, 5
      %p157 = por %p155, %p156
      %p159 = scmp.ne.s32.totalorder %s142, %s158
      %p160 = scmp.eq.s32.totalorder %s27, 0
      %p161 = por %p159, %p160
      %s162 = ssub.s32 %s28, %s40
      %s163 = ssub.s32 %s29, %s36
      %s164 = sor.u32 %s162, %s163
      %p165 = scmp.eq.s32.totalorder %s164, 0
      %s167 = sadd.s32 %s166, 1
      %s168 = scalar_select %p165, %s166, %s167
      %p171 = pneg %p165
      %p172 = scmp.eq.s32.totalorder %s21, 5
      %p173 = por %p171, %p172
      %p174 = scmp.ne.s32.totalorder %s166, %s169
      %p175 = scmp.eq.s32.totalorder %s21, 0
      %p176 = por %p174, %p175
      %p177 = scmp.ne.s32.totalorder %s166, %s169
      %p178 = scmp.eq.s32.totalorder %s26, 5
      %p179 = por %p177, %p178
      %p180 = scmp.ne.s32.totalorder %s169, %s170
      %p181 = scmp.eq.s32.totalorder %s26, 0
      %p182 = por %p180, %p181
      %p183 = scmp.ne.s32.totalorder %s169, %s170
      %p184 = scmp.eq.s32.totalorder %s27, 5
      %p185 = por %p183, %p184
      %p187 = scmp.ne.s32.totalorder %s170, %s186
      %p188 = scmp.eq.s32.totalorder %s27, 0
      %p189 = por %p187, %p188
      %s190 = ssub.s32 %s28, %s40
      %p191 = scmp.eq.s32.totalorder %s190, 0
      %s193 = sadd.s32 %s192, 1
      %s194 = scalar_select %p191, %s192, %s193
      %p197 = pneg %p191
      %p198 = scmp.eq.s32.totalorder %s21, 5
      %p199 = por %p197, %p198
      %p200 = scmp.ne.s32.totalorder %s192, %s195
      %p201 = scmp.eq.s32.totalorder %s21, 0
      %p202 = por %p200, %p201
      %p203 = scmp.ne.s32.totalorder %s192, %s195
      %p204 = scmp.eq.s32.totalorder %s26, 5
      %p205 = por %p203, %p204
      %p206 = scmp.ne.s32.totalorder %s195, %s196
      %p207 = scmp.eq.s32.totalorder %s26, 0
      %p208 = por %p206, %p207
      %p209 = scmp.ne.s32.totalorder %s195, %s196
      %p210 = scmp.eq.s32.totalorder %s27, 5
      %p211 = por %p209, %p210
      %p213 = scmp.ne.s32.totalorder %s196, %s212
      %p214 = scmp.eq.s32.totalorder %s27, 0
      %p215 = por %p213, %p214
      %s217 = sadd.s32 %s216, 1
      %p220 = scmp.eq.s32.totalorder %s21, 5
      %p221 = scmp.ne.s32.totalorder %s216, %s218
      %p222 = scmp.eq.s32.totalorder %s21, 0
      %p223 = por %p221, %p222
      %p224 = scmp.ne.s32.totalorder %s216, %s218
      %p225 = scmp.eq.s32.totalorder %s26, 5
      %p226 = por %p224, %p225
      %p227 = scmp.ne.s32.totalorder %s218, %s219
      %p228 = scmp.eq.s32.totalorder %s26, 0
      %p229 = por %p227, %p228
      %p230 = scmp.ne.s32.totalorder %s218, %s219
      %p231 = scmp.eq.s32.totalorder %s27, 5
      %p232 = por %p230, %p231
      %p234 = scmp.ne.s32.totalorder %s219, %s233
      %p235 = scmp.eq.s32.totalorder %s27, 0
      %p236 = por %p234, %p235
      %s238 = sadd.s32 %s237, 1
      %p241 = scmp.eq.s32.totalorder %s21, 5
      %p242 = scmp.ne.s32.totalorder %s237, %s239
      %p243 = scmp.eq.s32.totalorder %s21, 0
      %p244 = por %p242, %p243
      %p245 = scmp.ne.s32.totalorder %s237, %s239
      %p246 = scmp.eq.s32.totalorder %s26, 5
      %p247 = por %p245, %p246
      %p248 = scmp.ne.s32.totalorder %s239, %s240
      %p249 = scmp.eq.s32.totalorder %s26, 0
      %p250 = por %p248, %p249
      %p251 = scmp.ne.s32.totalorder %s239, %s240
      %p252 = scmp.eq.s32.totalorder %s27, 5
      %p253 = por %p251, %p252
      %p255 = scmp.ne.s32.totalorder %s240, %s254
      %p256 = scmp.eq.s32.totalorder %s27, 0
      %p257 = por %p255, %p256
      %s259 = sadd.s32 %s258, 1
      %p262 = scmp.eq.s32.totalorder %s21, 5
      %p263 = scmp.ne.s32.totalorder %s258, %s260
      %p264 = scmp.eq.s32.totalorder %s21, 0
      %p265 = por %p263, %p264
      %p266 = scmp.ne.s32.totalorder %s258, %s260
      %p267 = scmp.eq.s32.totalorder %s26, 5
      %p268 = por %p266, %p267
      %p269 = scmp.ne.s32.totalorder %s260, %s261
      %p270 = scmp.eq.s32.totalorder %s26, 0
      %p271 = por %p269, %p270
      %p272 = scmp.ne.s32.totalorder %s260, %s261
      %p273 = scmp.eq.s32.totalorder %s27, 5
      %p274 = por %p272, %p273
      %p276 = scmp.ne.s32.totalorder %s261, %s275
      %p277 = scmp.eq.s32.totalorder %s27, 0
      %p278 = por %p276, %p277
      %s280 = sadd.s32 %s279, 1
      %p283 = scmp.eq.s32.totalorder %s21, 5
      %p284 = scmp.ne.s32.totalorder %s279, %s281
      %p285 = scmp.eq.s32.totalorder %s21, 0
      %p286 = por %p284, %p285
      %p287 = scmp.ne.s32.totalorder %s279, %s281
      %p288 = scmp.eq.s32.totalorder %s26, 5
      %p289 = por %p287, %p288
      %p290 = scmp.ne.s32.totalorder %s281, %s282
      %p291 = scmp.eq.s32.totalorder %s26, 0
      %p292 = por %p290, %p291
      %p293 = scmp.ne.s32.totalorder %s281, %s282
      %p294 = scmp.eq.s32.totalorder %s27, 5
      %p295 = por %p293, %p294
      %p297 = scmp.ne.s32.totalorder %s282, %s296
      %p298 = scmp.eq.s32.totalorder %s27, 0
      %p299 = por %p297, %p298
      %s301 = sadd.s32 %s300, 1
      %p304 = scmp.eq.s32.totalorder %s21, 5
      %p305 = scmp.ne.s32.totalorder %s300, %s302
      %p306 = scmp.eq.s32.totalorder %s21, 0
      %p307 = por %p305, %p306
      %p308 = scmp.ne.s32.totalorder %s300, %s302
      %p309 = scmp.eq.s32.totalorder %s26, 5
      %p310 = por %p308, %p309
      %p311 = scmp.ne.s32.totalorder %s302, %s303
      %p312 = scmp.eq.s32.totalorder %s26, 0
      %p313 = por %p311, %p312
      %p314 = scmp.ne.s32.totalorder %s302, %s303
      %p315 = scmp.eq.s32.totalorder %s27, 5
      %p316 = por %p314, %p315
      %p318 = scmp.ne.s32.totalorder %s303, %s317
      %p319 = scmp.eq.s32.totalorder %s27, 0
      %p320 = por %p318, %p319
      %s321 = ssub.s32 %s28, %s40
      %s322 = ssub.s32 %s29, %s36
      %s323 = sor.u32 %s321, %s322
      %p324 = scmp.eq.s32.totalorder %s323, 0
      %s326 = sadd.s32 %s325, 1
      %s327 = scalar_select %p324, %s325, %s326
      %p330 = pneg %p324
      %p331 = scmp.eq.s32.totalorder %s21, 5
      %p332 = por %p330, %p331
      %p333 = scmp.ne.s32.totalorder %s325, %s328
      %p334 = scmp.eq.s32.totalorder %s21, 0
      %p335 = por %p333, %p334
      %p336 = scmp.ne.s32.totalorder %s325, %s328
      %p337 = scmp.eq.s32.totalorder %s26, 5
      %p338 = por %p336, %p337
      %p339 = scmp.ne.s32.totalorder %s328, %s329
      %p340 = scmp.eq.s32.totalorder %s26, 0
      %p341 = por %p339, %p340
      %p342 = scmp.ne.s32.totalorder %s328, %s329
      %p343 = scmp.eq.s32.totalorder %s27, 5
      %p344 = por %p342, %p343
      %p346 = scmp.ne.s32.totalorder %s329, %s345
      %p347 = scmp.eq.s32.totalorder %s27, 0
      %p348 = por %p346, %p347
      %s349 = ssub.s32 %s28, %s40
      %s350 = ssub.s32 %s29, %s36
      %s351 = sor.u32 %s349, %s350
      %p352 = scmp.eq.s32.totalorder %s351, 0
      %s354 = sadd.s32 %s353, 1
      %s355 = scalar_select %p352, %s353, %s354
      %p358 = pneg %p352
      %p359 = scmp.eq.s32.totalorder %s21, 5
      %p360 = por %p358, %p359
      %p361 = scmp.ne.s32.totalorder %s353, %s356
      %p362 = scmp.eq.s32.totalorder %s21, 0
      %p363 = por %p361, %p362
      %p364 = scmp.ne.s32.totalorder %s353, %s356
      %p365 = scmp.eq.s32.totalorder %s26, 5
      %p366 = por %p364, %p365
      %p367 = scmp.ne.s32.totalorder %s356, %s357
      %p368 = scmp.eq.s32.totalorder %s26, 0
      %p369 = por %p367, %p368
      %p370 = scmp.ne.s32.totalorder %s356, %s357
      %p371 = scmp.eq.s32.totalorder %s27, 5
      %p372 = por %p370, %p371
      %p374 = scmp.ne.s32.totalorder %s357, %s373
      %p375 = scmp.eq.s32.totalorder %s27, 0
      %p376 = por %p374, %p375
      %s377 = ssub.s32 %s28, %s40
      %s378 = ssub.s32 %s29, %s36
      %s379 = sor.u32 %s377, %s378
      %p380 = scmp.eq.s32.totalorder %s379, 0
      %s382 = sadd.s32 %s381, 1
      %s383 = scalar_select %p380, %s381, %s382
      %p386 = pneg %p380
      %p387 = scmp.eq.s32.totalorder %s21, 5
      %p388 = por %p386, %p387
      %p389 = scmp.ne.s32.totalorder %s381, %s384
      %p390 = scmp.eq.s32.totalorder %s21, 0
      %p391 = por %p389, %p390
      %p392 = scmp.ne.s32.totalorder %s381, %s384
      %p393 = scmp.eq.s32.totalorder %s26, 5
      %p394 = por %p392, %p393
      %p395 = scmp.ne.s32.totalorder %s384, %s385
      %p396 = scmp.eq.s32.totalorder %s26, 0
      %p397 = por %p395, %p396
      %p398 = scmp.ne.s32.totalorder %s384, %s385
      %p399 = scmp.eq.s32.totalorder %s27, 5
      %p400 = por %p398, %p399
      %p402 = scmp.ne.s32.totalorder %s385, %s401
      %p403 = scmp.eq.s32.totalorder %s27, 0
      %p404 = por %p402, %p403
      %p405 = scmp.le.s32.totalorder 1, %s21
      %p406 = scmp.lt.s32.totalorder %s21, 7
      %p407 = pnand %p405, %p406
      %p408 = pneg %p407
      // Predicated region
      $region9: #{posterior_encoder_forward.3} parent=5 // pred_check
        _
      $region10: #{posterior_encoder_forward.3} parent=5 // pred_check_branch
        %410 = sbr.rel (%p407) target = $region12
      $region11: #{posterior_encoder_forward.3} parent=5 // pred_region
        %s411 = ssub.s32 %s21, 1
        // Predicated region
        $region13: #{posterior_encoder_forward.3} parent=11 // pred_check
          %p412 = pneg %p54
        $region14: #{posterior_encoder_forward.3} parent=11 // pred_check_branch
          %414 = sbr.rel (%p412) target = $region16
        $region15: #{posterior_encoder_forward.3} parent=11 // pred_region
          %s416 = ssub.s32 16, 16
          %417 = vsyncadd [#allocation3], %s416
          %s419 = sshll.u32 %s0, 4
          %s420 = int_to_ptr.vmem [resolvable:$true] %s419
          %422 = dma.vmem_to_smem %s420, 16, [#allocation2], [#allocation3]
        $region16: #{posterior_encoder_forward.3} parent=11 // pred_fallthru
          _
        // Predicated region
        $region17: #{posterior_encoder_forward.3} parent=11 // pred_check
          %p423 = pneg %p229
        $region18: #{posterior_encoder_forward.3} parent=11 // pred_check_branch
          %425 = sbr.rel (%p423) target = $region20
        $region19: #{posterior_encoder_forward.3} parent=11 // pred_region
          _
        $region20: #{posterior_encoder_forward.3} parent=11 // pred_fallthru
          _
        // Predicated region
        $region21: #{posterior_encoder_forward.3} parent=11 // pred_check
          %p426 = pneg %p250
        $region22: #{posterior_encoder_forward.3} parent=11 // pred_check_branch
          %428 = sbr.rel (%p426) target = $region24
        $region23: #{posterior_encoder_forward.3} parent=11 // pred_region
          _
        $region24: #{posterior_encoder_forward.3} parent=11 // pred_fallthru
          _
        // Predicated region
        $region25: #{posterior_encoder_forward.3} parent=11 // pred_check
          %p429 = pneg %p271
        $region26: #{posterior_encoder_forward.3} parent=11 // pred_check_branch
          %431 = sbr.rel (%p429) target = $region28
        $region27: #{posterior_encoder_forward.3} parent=11 // pred_region
          _
        $region28: #{posterior_encoder_forward.3} parent=11 // pred_fallthru
          _
        // Predicated region
        $region29: #{posterior_encoder_forward.3} parent=11 // pred_check
          %p432 = pneg %p292
        $region30: #{posterior_encoder_forward.3} parent=11 // pred_check_branch
          %434 = sbr.rel (%p432) target = $region32
        $region31: #{posterior_encoder_forward.3} parent=11 // pred_region
          _
        $region32: #{posterior_encoder_forward.3} parent=11 // pred_fallthru
          _
        // Predicated region
        $region33: #{posterior_encoder_forward.3} parent=11 // pred_check
          %p435 = pneg %p313
        $region34: #{posterior_encoder_forward.3} parent=11 // pred_check_branch
          %437 = sbr.rel (%p435) target = $region36
        $region35: #{posterior_encoder_forward.3} parent=11 // pred_region
          _
        $region36: #{posterior_encoder_forward.3} parent=11 // pred_fallthru
          _
      $region12: #{posterior_encoder_forward.3} parent=5 // pred_fallthru
        _
      %p438 = scmp.lt.s32.totalorder %s21, 6
      // Predicated region
      $region37: #{posterior_encoder_forward.3} parent=5 // pred_check
        %p439 = pneg %p438
      $region38: #{posterior_encoder_forward.3} parent=5 // pred_check_branch
        %441 = sbr.rel (%p439) target = $region40
      $region39: #{posterior_encoder_forward.3} parent=5 // pred_region
        // Predicated region
        $region41: #{posterior_encoder_forward.3} parent=39 // pred_check
          %p442 = pneg %p84
        $region42: #{posterior_encoder_forward.3} parent=39 // pred_check_branch
          %444 = sbr.rel (%p442) target = $region44
        $region43: #{posterior_encoder_forward.3} parent=39 // pred_region
          %s445 = sand.u32 %s74, 1
          %s446 = sand.u32 %s74, 1
          %s447 = smul.addr %s446, 16
          %s448 = scalar_lea.vmem [#allocation4], %s447
          %s449 = smul.u32 %s29, 2
          %s450 = ssub.s32 %s449, 1
          %p451 = scmp.gt.s32.totalorder %s450, 0
          %s452 = scalar_select %p451, %s450, 0
          %s453 = smul.addr %s28, 24
          %s454 = sadd.s32 %s452, %s453
          %s455 = smul.addr %s454, 4
          %s456 = scalar_lea.vmem %s1, %s455
          // Predicated region
          $region45: #{posterior_encoder_forward.3} parent=43 // pred_check
            _
          $region46: #{posterior_encoder_forward.3} parent=43 // pred_check_branch
            %458 = sbr.rel (0) target = $region48
          $region47: #{posterior_encoder_forward.3} parent=43 // pred_region
            // Predicated region
            $region49: #{posterior_encoder_forward.3} parent=47 // pred_check
              _
            $region50: #{posterior_encoder_forward.3} parent=47 // pred_check_branch
              %460 = sbr.rel target = $region52
            $region51: #{posterior_encoder_forward.3} parent=47 // pred_region
              // Predicated region
              $region64: #{posterior_encoder_forward.3} parent=51 // pred_check
                _
              $region65: #{posterior_encoder_forward.3} parent=51 // pred_check_branch
                %481 = sbr.rel (0) target = $region67
              $region66: #{posterior_encoder_forward.3} parent=51 // pred_region
                loop: start=0, step=1, limit=1
                $region68: #{posterior_encoder_forward.3} parent=66 // loop_pre_header
                  _
                $region69: #{posterior_encoder_forward.3} parent=66 // loop_header
                  %s483 = sphi 0, %s487
                  %p484 = scmp.ge.s32.totalorder %s483, 1
                  %s488 = sphi %s456, %s456
                  %s489 = sphi %s448, %s448
                $region70: #{posterior_encoder_forward.3} parent=66 // loop_header_branch
                  %486 = sbr.rel (%p484) target = $region74
                $region71: #{posterior_encoder_forward.3} parent=66 // loop_body
                  _
                $region72: #{posterior_encoder_forward.3} parent=66 // loop_footer
                  %s487 = sadd.s32 1, %s483
                $region73: #{posterior_encoder_forward.3} parent=66 // loop_footer_branch
                  %482 = sbr.rel target = $region69
                $region74: #{posterior_encoder_forward.3} parent=66 // loop_exit
                  _
                loop: start=0, step=1, limit=1
                $region75: #{posterior_encoder_forward.3} parent=66 // loop_pre_header
                  _
                $region76: #{posterior_encoder_forward.3} parent=66 // loop_header
                  %s492 = sphi 0, %s496
                  %p493 = scmp.ge.s32.totalorder %s492, 1
                  %s497 = sphi %s456, %s456
                  %s498 = sphi %s448, %s448
                $region77: #{posterior_encoder_forward.3} parent=66 // loop_header_branch
                  %495 = sbr.rel (%p493) target = $region81
                $region78: #{posterior_encoder_forward.3} parent=66 // loop_body
                  %v499 = vld [vmem:[%s497] sm:$0xf]
                  %500 = vst [vmem:[%s498] sm:$0xf] %v499
                  %v501 = vld [vmem:[%s497 + $0x18] sm:$0xf]
                  %502 = vst [vmem:[%s498 + $0x4] sm:$0xf] %v501
                  %v503 = vld [vmem:[%s497 + $0x30] sm:$0xf]
                  %504 = vst [vmem:[%s498 + $0x8] sm:$0xf] %v503
                  %v505 = vld [vmem:[%s497 + $0x48] sm:$0xf]
                  %506 = vst [vmem:[%s498 + $0xc] sm:$0xf] %v505
                $region79: #{posterior_encoder_forward.3} parent=66 // loop_footer
                  %s496 = sadd.s32 1, %s492
                $region80: #{posterior_encoder_forward.3} parent=66 // loop_footer_branch
                  %491 = sbr.rel target = $region76
                $region81: #{posterior_encoder_forward.3} parent=66 // loop_exit
                  _
              $region67: #{posterior_encoder_forward.3} parent=51 // pred_fallthru
                _
            $region52: #{posterior_encoder_forward.3} parent=47 // pred_fallthru
              _
            // Predicated region
            $region53: #{posterior_encoder_forward.3} parent=47 // pred_check
              _
            $region54: #{posterior_encoder_forward.3} parent=47 // pred_check_branch
              %462 = sbr.rel (0) target = $region56
            $region55: #{posterior_encoder_forward.3} parent=47 // pred_region
              loop: start=0, step=1, limit=1
              $region57: #{posterior_encoder_forward.3} parent=55 // loop_pre_header
                _
              $region58: #{posterior_encoder_forward.3} parent=55 // loop_header
                %s465 = sphi 0, %s469
                %p466 = scmp.ge.s32.totalorder %s465, 1
                %s470 = sphi %s456, %s456
                %s471 = sphi %s448, %s448
              $region59: #{posterior_encoder_forward.3} parent=55 // loop_header_branch
                %468 = sbr.rel (%p466) target = $region63
              $region60: #{posterior_encoder_forward.3} parent=55 // loop_body
                %v472 = vld [vmem:[%s470] sm:$0xf]
                %473 = vst [vmem:[%s471] sm:$0xf] %v472
                %v474 = vld [vmem:[%s470 + $0x18] sm:$0xf]
                %475 = vst [vmem:[%s471 + $0x4] sm:$0xf] %v474
                %v476 = vld [vmem:[%s470 + $0x30] sm:$0xf]
                %477 = vst [vmem:[%s471 + $0x8] sm:$0xf] %v476
                %v478 = vld [vmem:[%s470 + $0x48] sm:$0xf]
                %479 = vst [vmem:[%s471 + $0xc] sm:$0xf] %v478
              $region61: #{posterior_encoder_forward.3} parent=55 // loop_footer
                %s469 = sadd.s32 1, %s465
              $region62: #{posterior_encoder_forward.3} parent=55 // loop_footer_branch
                %464 = sbr.rel target = $region58
              $region63: #{posterior_encoder_forward.3} parent=55 // loop_exit
                _
            $region56: #{posterior_encoder_forward.3} parent=47 // pred_fallthru
              _
          $region48: #{posterior_encoder_forward.3} parent=43 // pred_fallthru
            _
          %507 = vnop
        $region44: #{posterior_encoder_forward.3} parent=39 // pred_fallthru
          _
        // Predicated region
        $region82: #{posterior_encoder_forward.3} parent=39 // pred_check
          %p508 = pneg %p112
        $region83: #{posterior_encoder_forward.3} parent=39 // pred_check_branch
          %510 = sbr.rel (%p508) target = $region85
        $region84: #{posterior_encoder_forward.3} parent=39 // pred_region
          %s511 = sand.u32 %s102, 1
          %s512 = sand.u32 %s102, 1
          %s513 = smul.addr %s512, 32
          %s514 = scalar_lea.vmem [#allocation5], %s513
          %s515 = smul.u32 2, %s29
          %s516 = smul.addr %s28, 24
          %s517 = sadd.s32 %s515, %s516
          %s518 = smul.addr %s517, 4
          %s519 = scalar_lea.vmem %s2, %s518
          // Predicated region
          $region86: #{posterior_encoder_forward.3} parent=84 // pred_check
            _
          $region87: #{posterior_encoder_forward.3} parent=84 // pred_check_branch
            %521 = sbr.rel (0) target = $region89
          $region88: #{posterior_encoder_forward.3} parent=84 // pred_region
            // Predicated region
            $region90: #{posterior_encoder_forward.3} parent=88 // pred_check
              _
            $region91: #{posterior_encoder_forward.3} parent=88 // pred_check_branch
              %523 = sbr.rel (0) target = $region93
            $region92: #{posterior_encoder_forward.3} parent=88 // pred_region
              // Predicated region
              $region105: #{posterior_encoder_forward.3} parent=92 // pred_check
                _
              $region106: #{posterior_encoder_forward.3} parent=92 // pred_check_branch
                %544 = sbr.rel (0) target = $region108
              $region107: #{posterior_encoder_forward.3} parent=92 // pred_region
                loop: start=0, step=1, limit=1
                $region109: #{posterior_encoder_forward.3} parent=107 // loop_pre_header
                  _
                $region110: #{posterior_encoder_forward.3} parent=107 // loop_header
                  %s546 = sphi 0, %s550
                  %p547 = scmp.ge.s32.totalorder %s546, 1
                  %s551 = sphi %s519, %s519
                  %s552 = sphi %s514, %s514
                $region111: #{posterior_encoder_forward.3} parent=107 // loop_header_branch
                  %549 = sbr.rel (%p547) target = $region115
                $region112: #{posterior_encoder_forward.3} parent=107 // loop_body
                  %v553 = vld [vmem:[%s551] sm:$0xff]
                  %554 = vst [vmem:[%s552] sm:$0xff] %v553
                  %v555 = vld [vmem:[%s551 + $0x18] sm:$0xff]
                  %556 = vst [vmem:[%s552 + $0x8] sm:$0xff] %v555
                  %v557 = vld [vmem:[%s551 + $0x30] sm:$0xff]
                  %558 = vst [vmem:[%s552 + $0x10] sm:$0xff] %v557
                  %v559 = vld [vmem:[%s551 + $0x48] sm:$0xff]
                  %560 = vst [vmem:[%s552 + $0x18] sm:$0xff] %v559
                $region113: #{posterior_encoder_forward.3} parent=107 // loop_footer
                  %s550 = sadd.s32 1, %s546
                $region114: #{posterior_encoder_forward.3} parent=107 // loop_footer_branch
                  %545 = sbr.rel target = $region110
                $region115: #{posterior_encoder_forward.3} parent=107 // loop_exit
                  _
              $region108: #{posterior_encoder_forward.3} parent=92 // pred_fallthru
                _
              // Predicated region
              $region116: #{posterior_encoder_forward.3} parent=92 // pred_check
                _
              $region117: #{posterior_encoder_forward.3} parent=92 // pred_check_branch
                %562 = sbr.rel target = $region119
              $region118: #{posterior_encoder_forward.3} parent=92 // pred_region
                _
              $region119: #{posterior_encoder_forward.3} parent=92 // pred_fallthru
                _
            $region93: #{posterior_encoder_forward.3} parent=88 // pred_fallthru
              _
            // Predicated region
            $region94: #{posterior_encoder_forward.3} parent=88 // pred_check
              _
            $region95: #{posterior_encoder_forward.3} parent=88 // pred_check_branch
              %525 = sbr.rel target = $region97
            $region96: #{posterior_encoder_forward.3} parent=88 // pred_region
              loop: start=0, step=1, limit=1
              $region98: #{posterior_encoder_forward.3} parent=96 // loop_pre_header
                _
              $region99: #{posterior_encoder_forward.3} parent=96 // loop_header
                %s528 = sphi 0, %s532
                %p529 = scmp.ge.s32.totalorder %s528, 1
                %s533 = sphi %s519, %s519
                %s534 = sphi %s514, %s514
              $region100: #{posterior_encoder_forward.3} parent=96 // loop_header_branch
                %531 = sbr.rel (%p529) target = $region104
              $region101: #{posterior_encoder_forward.3} parent=96 // loop_body
                %v535 = vld [vmem:[%s533] sm:$0xff]
                %536 = vst [vmem:[%s534] sm:$0xff] %v535
                %v537 = vld [vmem:[%s533 + $0x18] sm:$0xff]
                %538 = vst [vmem:[%s534 + $0x8] sm:$0xff] %v537
                %v539 = vld [vmem:[%s533 + $0x30] sm:$0xff]
                %540 = vst [vmem:[%s534 + $0x10] sm:$0xff] %v539
                %v541 = vld [vmem:[%s533 + $0x48] sm:$0xff]
                %542 = vst [vmem:[%s534 + $0x18] sm:$0xff] %v541
              $region102: #{posterior_encoder_forward.3} parent=96 // loop_footer
                %s532 = sadd.s32 1, %s528
              $region103: #{posterior_encoder_forward.3} parent=96 // loop_footer_branch
                %527 = sbr.rel target = $region99
              $region104: #{posterior_encoder_forward.3} parent=96 // loop_exit
                _
            $region97: #{posterior_encoder_forward.3} parent=88 // pred_fallthru
              _
          $region89: #{posterior_encoder_forward.3} parent=84 // pred_fallthru
            _
          %563 = vnop
        $region85: #{posterior_encoder_forward.3} parent=39 // pred_fallthru
          _
        // Predicated region
        $region120: #{posterior_encoder_forward.3} parent=39 // pred_check
          %p564 = pneg %p148
        $region121: #{posterior_encoder_forward.3} parent=39 // pred_check_branch
          %566 = sbr.rel (%p564) target = $region123
        $region122: #{posterior_encoder_forward.3} parent=39 // pred_region
          %s567 = sand.u32 %s138, 1
          %s568 = sand.u32 %s138, 1
          %s569 = smul.addr %s568, 16
          %s570 = scalar_lea.vmem [#allocation6], %s569
          %s571 = smul.u32 %s29, 2
          %s572 = sadd.s32 %s571, 2
          %p573 = scmp.lt.s32.totalorder %s572, 5
          %s574 = scalar_select %p573, %s572, 5
          %s575 = smul.addr %s28, 24
          %s576 = sadd.s32 %s574, %s575
          %s577 = smul.addr %s576, 4
          %s578 = scalar_lea.vmem %s3, %s577
          // Predicated region
          $region124: #{posterior_encoder_forward.3} parent=122 // pred_check
            _
          $region125: #{posterior_encoder_forward.3} parent=122 // pred_check_branch
            %580 = sbr.rel (0) target = $region127
          $region126: #{posterior_encoder_forward.3} parent=122 // pred_region
            // Predicated region
            $region128: #{posterior_encoder_forward.3} parent=126 // pred_check
              _
            $region129: #{posterior_encoder_forward.3} parent=126 // pred_check_branch
              %582 = sbr.rel target = $region131
            $region130: #{posterior_encoder_forward.3} parent=126 // pred_region
              // Predicated region
              $region143: #{posterior_encoder_forward.3} parent=130 // pred_check
                _
              $region144: #{posterior_encoder_forward.3} parent=130 // pred_check_branch
                %603 = sbr.rel (0) target = $region146
              $region145: #{posterior_encoder_forward.3} parent=130 // pred_region
                loop: start=0, step=1, limit=1
                $region147: #{posterior_encoder_forward.3} parent=145 // loop_pre_header
                  _
                $region148: #{posterior_encoder_forward.3} parent=145 // loop_header
                  %s605 = sphi 0, %s609
                  %p606 = scmp.ge.s32.totalorder %s605, 1
                  %s610 = sphi %s578, %s578
                  %s611 = sphi %s570, %s570
                $region149: #{posterior_encoder_forward.3} parent=145 // loop_header_branch
                  %608 = sbr.rel (%p606) target = $region153
                $region150: #{posterior_encoder_forward.3} parent=145 // loop_body
                  _
                $region151: #{posterior_encoder_forward.3} parent=145 // loop_footer
                  %s609 = sadd.s32 1, %s605
                $region152: #{posterior_encoder_forward.3} parent=145 // loop_footer_branch
                  %604 = sbr.rel target = $region148
                $region153: #{posterior_encoder_forward.3} parent=145 // loop_exit
                  _
                loop: start=0, step=1, limit=1
                $region154: #{posterior_encoder_forward.3} parent=145 // loop_pre_header
                  _
                $region155: #{posterior_encoder_forward.3} parent=145 // loop_header
                  %s614 = sphi 0, %s618
                  %p615 = scmp.ge.s32.totalorder %s614, 1
                  %s619 = sphi %s578, %s578
                  %s620 = sphi %s570, %s570
                $region156: #{posterior_encoder_forward.3} parent=145 // loop_header_branch
                  %617 = sbr.rel (%p615) target = $region160
                $region157: #{posterior_encoder_forward.3} parent=145 // loop_body
                  %v621 = vld [vmem:[%s619] sm:$0xf]
                  %622 = vst [vmem:[%s620] sm:$0xf] %v621
                  %v623 = vld [vmem:[%s619 + $0x18] sm:$0xf]
                  %624 = vst [vmem:[%s620 + $0x4] sm:$0xf] %v623
                  %v625 = vld [vmem:[%s619 + $0x30] sm:$0xf]
                  %626 = vst [vmem:[%s620 + $0x8] sm:$0xf] %v625
                  %v627 = vld [vmem:[%s619 + $0x48] sm:$0xf]
                  %628 = vst [vmem:[%s620 + $0xc] sm:$0xf] %v627
                $region158: #{posterior_encoder_forward.3} parent=145 // loop_footer
                  %s618 = sadd.s32 1, %s614
                $region159: #{posterior_encoder_forward.3} parent=145 // loop_footer_branch
                  %613 = sbr.rel target = $region155
                $region160: #{posterior_encoder_forward.3} parent=145 // loop_exit
                  _
              $region146: #{posterior_encoder_forward.3} parent=130 // pred_fallthru
                _
            $region131: #{posterior_encoder_forward.3} parent=126 // pred_fallthru
              _
            // Predicated region
            $region132: #{posterior_encoder_forward.3} parent=126 // pred_check
              _
            $region133: #{posterior_encoder_forward.3} parent=126 // pred_check_branch
              %584 = sbr.rel (0) target = $region135
            $region134: #{posterior_encoder_forward.3} parent=126 // pred_region
              loop: start=0, step=1, limit=1
              $region136: #{posterior_encoder_forward.3} parent=134 // loop_pre_header
                _
              $region137: #{posterior_encoder_forward.3} parent=134 // loop_header
                %s587 = sphi 0, %s591
                %p588 = scmp.ge.s32.totalorder %s587, 1
                %s592 = sphi %s578, %s578
                %s593 = sphi %s570, %s570
              $region138: #{posterior_encoder_forward.3} parent=134 // loop_header_branch
                %590 = sbr.rel (%p588) target = $region142
              $region139: #{posterior_encoder_forward.3} parent=134 // loop_body
                %v594 = vld [vmem:[%s592] sm:$0xf]
                %595 = vst [vmem:[%s593] sm:$0xf] %v594
                %v596 = vld [vmem:[%s592 + $0x18] sm:$0xf]
                %597 = vst [vmem:[%s593 + $0x4] sm:$0xf] %v596
                %v598 = vld [vmem:[%s592 + $0x30] sm:$0xf]
                %599 = vst [vmem:[%s593 + $0x8] sm:$0xf] %v598
                %v600 = vld [vmem:[%s592 + $0x48] sm:$0xf]
                %601 = vst [vmem:[%s593 + $0xc] sm:$0xf] %v600
              $region140: #{posterior_encoder_forward.3} parent=134 // loop_footer
                %s591 = sadd.s32 1, %s587
              $region141: #{posterior_encoder_forward.3} parent=134 // loop_footer_branch
                %586 = sbr.rel target = $region137
              $region142: #{posterior_encoder_forward.3} parent=134 // loop_exit
                _
            $region135: #{posterior_encoder_forward.3} parent=126 // pred_fallthru
              _
          $region127: #{posterior_encoder_forward.3} parent=122 // pred_fallthru
            _
          %629 = vnop
        $region123: #{posterior_encoder_forward.3} parent=39 // pred_fallthru
          _
        // Predicated region
        $region161: #{posterior_encoder_forward.3} parent=39 // pred_check
          %p630 = pneg %p176
        $region162: #{posterior_encoder_forward.3} parent=39 // pred_check_branch
          %632 = sbr.rel (%p630) target = $region164
        $region163: #{posterior_encoder_forward.3} parent=39 // pred_region
          %s633 = smul.u32 2, %s29
          %p634 = scmp.lt.s32.totalorder %s28, 1
          %s635 = scalar_select %p634, %s28, 1
          %p636 = scmp.lt.s32.totalorder %s633, 5
          %s637 = scalar_select %p636, %s633, 5
          %s638 = smul.addr %s635, 6
          %s639 = sadd.s32 %s637, %s638
          %s640 = smul.addr %s639, 8
          %s641 = scalar_lea.vmem %s4, %s640
          %s642 = smul.u32 2, %s29
        $region164: #{posterior_encoder_forward.3} parent=39 // pred_fallthru
          _
        // Predicated region
        $region165: #{posterior_encoder_forward.3} parent=39 // pred_check
          %p643 = pneg %p202
        $region166: #{posterior_encoder_forward.3} parent=39 // pred_check_branch
          %645 = sbr.rel (%p643) target = $region168
        $region167: #{posterior_encoder_forward.3} parent=39 // pred_region
          %p646 = scmp.lt.s32.totalorder %s28, 1
          %s647 = scalar_select %p646, %s28, 1
          %s648 = smul.addr %s647, 32
          %s649 = smul.addr %s648, 8
          %s650 = scalar_lea.vmem %s5, %s649
        $region168: #{posterior_encoder_forward.3} parent=39 // pred_fallthru
          _
      $region40: #{posterior_encoder_forward.3} parent=5 // pred_fallthru
        _
      %p651 = scmp.le.s32.totalorder 1, %s21
      %p652 = scmp.lt.s32.totalorder %s21, 7
      %p653 = pnand %p651, %p652
      %p654 = pneg %p653
      // Predicated region
      $region169: #{posterior_encoder_forward.3} parent=5 // pred_check
        _
      $region170: #{posterior_encoder_forward.3} parent=5 // pred_check_branch
        %656 = sbr.rel (%p653) target = $region172
      $region171: #{posterior_encoder_forward.3} parent=5 // pred_region
        %s657 = ssub.s32 %s21, 1
        // Predicated region
        $region173: #{posterior_encoder_forward.3} parent=171 // pred_check
          %p658 = pneg %p54
        $region174: #{posterior_encoder_forward.3} parent=171 // pred_check_branch
          %660 = sbr.rel (%p658) target = $region176
        $region175: #{posterior_encoder_forward.3} parent=171 // pred_region
          %661 = dma.done [#allocation3], 16
        $region176: #{posterior_encoder_forward.3} parent=171 // pred_fallthru
          _
        %s662 = sand.u32 %s77, 1
        %s663 = sand.u32 %s77, 1
        %s664 = smul.addr %s663, 16
        %s665 = scalar_lea.vmem [#allocation4], %s664
        // Predicated region
        $region177: #{posterior_encoder_forward.3} parent=171 // pred_check
          %p666 = pneg %p90
        $region178: #{posterior_encoder_forward.3} parent=171 // pred_check_branch
          %668 = sbr.rel (%p666) target = $region180
        $region179: #{posterior_encoder_forward.3} parent=171 // pred_region
          _
        $region180: #{posterior_encoder_forward.3} parent=171 // pred_fallthru
          _
        %s669 = sand.u32 %s105, 1
        %s670 = sand.u32 %s105, 1
        %s671 = smul.addr %s670, 32
        %s672 = scalar_lea.vmem [#allocation5], %s671
        // Predicated region
        $region181: #{posterior_encoder_forward.3} parent=171 // pred_check
          %p673 = pneg %p118
        $region182: #{posterior_encoder_forward.3} parent=171 // pred_check_branch
          %675 = sbr.rel (%p673) target = $region184
        $region183: #{posterior_encoder_forward.3} parent=171 // pred_region
          _
        $region184: #{posterior_encoder_forward.3} parent=171 // pred_fallthru
          _
        %s676 = sand.u32 %s141, 1
        %s677 = sand.u32 %s141, 1
        %s678 = smul.addr %s677, 16
        %s679 = scalar_lea.vmem [#allocation6], %s678
        // Predicated region
        $region185: #{posterior_encoder_forward.3} parent=171 // pred_check
          %p680 = pneg %p154
        $region186: #{posterior_encoder_forward.3} parent=171 // pred_check_branch
          %682 = sbr.rel (%p680) target = $region188
        $region187: #{posterior_encoder_forward.3} parent=171 // pred_region
          _
        $region188: #{posterior_encoder_forward.3} parent=171 // pred_fallthru
          _
        %683 = sfence
        %p684 = pneg %p54
        %p685 = pneg %p51
        %s686 = sand.u32 %s77, 1
        %s687 = sand.u32 %s77, 1
        %s688 = smul.addr %s687, 16
        %s689 = scalar_lea.vmem [#allocation4], %s688
        %p690 = pneg %p90
        %p691 = pneg %p87
        %s692 = sand.u32 %s105, 1
        %s693 = sand.u32 %s105, 1
        %s694 = smul.addr %s693, 32
        %s695 = scalar_lea.vmem [#allocation5], %s694
        %p696 = pneg %p118
        %p697 = pneg %p115
        %s698 = sand.u32 %s141, 1
        %s699 = sand.u32 %s141, 1
        %s700 = smul.addr %s699, 16
        %s701 = scalar_lea.vmem [#allocation6], %s700
        %p702 = pneg %p154
        %p703 = pneg %p151
        %s704 = smul.u32 2, %s31
        %p705 = scmp.lt.s32.totalorder %s30, 1
        %s706 = scalar_select %p705, %s30, 1
        %p707 = scmp.lt.s32.totalorder %s704, 5
        %s708 = scalar_select %p707, %s704, 5
        %s709 = smul.addr %s706, 6
        %s710 = sadd.s32 %s708, %s709
        %s711 = smul.addr %s710, 8
        %s712 = scalar_lea.vmem %s4, %s711
        %p713 = pneg %p182
        %p714 = pneg %p179
        %p715 = scmp.lt.s32.totalorder %s30, 1
        %s716 = scalar_select %p715, %s30, 1
        %s717 = smul.addr %s716, 32
        %s718 = smul.addr %s717, 8
        %s719 = scalar_lea.vmem %s5, %s718
        %p720 = pneg %p208
        %p721 = pneg %p205
        %p722 = pneg %p229
        %p723 = pneg %p226
        %p724 = pneg %p250
        %p725 = pneg %p247
        %p726 = pneg %p271
        %p727 = pneg %p268
        %p728 = pneg %p292
        %p729 = pneg %p289
        %p730 = pneg %p313
        %p731 = pneg %p310
        %p732 = pneg %p341
        %p733 = pneg %p338
        %s734 = smul.u32 2, %s31
        %p735 = scmp.lt.s32.totalorder %s30, 1
        %s736 = scalar_select %p735, %s30, 1
        %p737 = scmp.lt.s32.totalorder %s734, 5
        %s738 = scalar_select %p737, %s734, 5
        %s739 = smul.addr %s736, 6
        %s740 = sadd.s32 %s738, %s739
        %s741 = smul.addr %s740, 8
        %s742 = scalar_lea.vmem %s11, %s741
        %p743 = pneg %p369
        %p744 = pneg %p366
        %s745 = smul.u32 2, %s31
        %p746 = scmp.lt.s32.totalorder %s30, 1
        %s747 = scalar_select %p746, %s30, 1
        %p748 = scmp.lt.s32.totalorder %s745, 5
        %s749 = scalar_select %p748, %s745, 5
        %s750 = smul.addr %s747, 6
        %s751 = sadd.s32 %s749, %s750
        %s752 = smul.addr %s751, 4
        %s753 = scalar_lea.vmem %s12, %s752
        %p754 = pneg %p397
        %p755 = pneg %p394
        %s756 = smul.u32 2, %s31
        %p757 = scmp.lt.s32.totalorder %s30, 1
        %s758 = scalar_select %p757, %s30, 1
        %p759 = scmp.lt.s32.totalorder %s756, 5
        %s760 = scalar_select %p759, %s756, 5
        %s761 = smul.addr %s758, 6
        %s762 = sadd.s32 %s760, %s761
        %s763 = smul.addr %s762, 4
        %s764 = scalar_lea.vmem %s13, %s763
        %s765 = smul.u32 %s31, 2
        %s766 = ssub.s32 %s765, 1
        %p767 = scmp.gt.s32.totalorder %s766, 0
        %s768 = scalar_select %p767, %s766, 0
        %s769 = smul.u32 2, %s31
        %s770 = smul.u32 %s31, 2
        %s771 = sadd.s32 %s770, 2
        %p772 = scmp.lt.s32.totalorder %s771, 5
        %s773 = scalar_select %p772, %s771, 5
        %s774 = smul.u32 2, %s31
        %p775 = scmp.lt.s32.totalorder %s30, 1
        %s776 = scalar_select %p775, %s30, 1
        %p777 = scmp.lt.s32.totalorder %s774, 5
        %s778 = scalar_select %p777, %s774, 5
        %s779 = smul.addr %s776, 6
        %s780 = sadd.s32 %s778, %s779
        %s781 = smul.addr %s780, 8
        %s782 = scalar_lea.vmem %s4, %s781
        %s783 = smul.u32 2, %s31
        %p784 = scmp.lt.s32.totalorder %s30, 1
        %s785 = scalar_select %p784, %s30, 1
        %s786 = smul.addr %s785, 32
        %s787 = smul.addr %s786, 8
        %s788 = scalar_lea.vmem %s5, %s787
        %s789 = smul.u32 2, %s31
        %p790 = scmp.lt.s32.totalorder %s30, 1
        %s791 = scalar_select %p790, %s30, 1
        %p792 = scmp.lt.s32.totalorder %s789, 5
        %s793 = scalar_select %p792, %s789, 5
        %s794 = smul.addr %s791, 6
        %s795 = sadd.s32 %s793, %s794
        %s796 = smul.addr %s795, 8
        %s797 = scalar_lea.vmem %s11, %s796
        %s798 = smul.u32 2, %s31
        %s799 = smul.u32 2, %s31
        %p800 = scmp.lt.s32.totalorder %s30, 1
        %s801 = scalar_select %p800, %s30, 1
        %p802 = scmp.lt.s32.totalorder %s799, 5
        %s803 = scalar_select %p802, %s799, 5
        %s804 = smul.addr %s801, 6
        %s805 = sadd.s32 %s803, %s804
        %s806 = smul.addr %s805, 4
        %s807 = scalar_lea.vmem %s12, %s806
        %s808 = smul.u32 2, %s31
        %s809 = smul.u32 2, %s31
        %p810 = scmp.lt.s32.totalorder %s30, 1
        %s811 = scalar_select %p810, %s30, 1
        %p812 = scmp.lt.s32.totalorder %s809, 5
        %s813 = scalar_select %p812, %s809, 5
        %s814 = smul.addr %s811, 6
        %s815 = sadd.s32 %s813, %s814
        %s816 = smul.addr %s815, 4
        %s817 = scalar_lea.vmem %s13, %s816
        %s818 = smul.u32 2, %s31
        %p820 = scmp.gt.s32.totalorder %s31, 0
        %s821 = scalar_select %p820, 1, 0
        %s822 = scvt.s32.f32 %s821
        %p823 = scmp.lt.s32.totalorder %s31, 2
        %s824 = scalar_select %p823, 1, 0
        %s825 = scvt.s32.f32 %s824
        %v826 = vld [vmem:[%s665] sm:$0xf]
        %v827 = vld [vmem:[%s665 + $0x4] sm:$0xf]
        %v828 = vld [vmem:[%s665 + $0x8] sm:$0xf]
        %v829 = vld [vmem:[%s665 + $0xc] sm:$0xf]
        %v830 = vunpack.c.l.bf16 %v826
        %v831 = vunpack.c.l.bf16 %v827
        %v832 = vunpack.c.l.bf16 %v828
        %v833 = vunpack.c.l.bf16 %v829
        %v834 = vstv %s822
        %v835 = vmul.f32 %v830, %v834
        %v836 = vmul.f32 %v831, %v834
        %v837 = vmul.f32 %v832, %v834
        %v838 = vmul.f32 %v833, %v834
        %v839 = vld [vmem:[%s672] sm:$0xff]
        %v840 = vld [vmem:[%s672 + $0x8] sm:$0xff]
        %v841 = vld [vmem:[%s672 + $0x10] sm:$0xff]
        %v842 = vld [vmem:[%s672 + $0x18] sm:$0xff]
        %v843 = vunpack.c.l.bf16 %v839
        %v844 = vunpack.c.h.bf16 %v839
        %v845 = vunpack.c.l.bf16 %v840
        %v846 = vunpack.c.h.bf16 %v840
        %v847 = vunpack.c.l.bf16 %v841
        %v848 = vunpack.c.h.bf16 %v841
        %v849 = vunpack.c.l.bf16 %v842
        %v850 = vunpack.c.h.bf16 %v842
        %v851 = vld [vmem:[%s679] sm:$0xf]
        %v852 = vld [vmem:[%s679 + $0x4] sm:$0xf]
        %v853 = vld [vmem:[%s679 + $0x8] sm:$0xf]
        %v854 = vld [vmem:[%s679 + $0xc] sm:$0xf]
        %v855 = vunpack.c.l.bf16 %v851
        %v856 = vunpack.c.l.bf16 %v852
        %v857 = vunpack.c.l.bf16 %v853
        %v858 = vunpack.c.l.bf16 %v854
        %v859 = vstv %s825
        %v860 = vmul.f32 %v855, %v859
        %v861 = vmul.f32 %v856, %v859
        %v862 = vmul.f32 %v857, %v859
        %v863 = vmul.f32 %v858, %v859
        %v864 = vlaneseq
        %v865 = vand.u32 %v864, 127
        %v866 = vadd.s32 %v865, 128
        %v867 = vadd.s32 %v865, 256
        %v868 = vadd.s32 %v865, 384
        %s869 = smul.u32 %s31, 256
        %s870 = ssub.s32 %s869, 128
        %v871 = vstv %s870
        %v872 = vadd.s32 %v865, %v871
        %v873 = vadd.s32 %v866, %v871
        %v874 = vadd.s32 %v867, %v871
        %v875 = vadd.s32 %v868, %v871
        %vm876 = vcmp.ge.s32.totalorder %v872, 0
        %vm877 = vcmp.ge.s32.totalorder %v873, 0
        %vm878 = vcmp.ge.s32.totalorder %v874, 0
        %vm879 = vcmp.ge.s32.totalorder %v875, 0
        %s880 = sld [smem:[#allocation2 + %s30]]
        %v881 = vstv %s880
        %vm882 = vcmp.lt.s32.totalorder %v872, %v881
        %vm883 = vcmp.lt.s32.totalorder %v873, %v881
        %vm884 = vcmp.lt.s32.totalorder %v874, %v881
        %vm885 = vcmp.lt.s32.totalorder %v875, %v881
        %vm886 = vmand %vm876, %vm882
        %vm887 = vmand %vm877, %vm883
        %vm888 = vmand %vm878, %vm884
        %vm889 = vmand %vm879, %vm885
        %v890 = vsel %vm886, 1, 0
        %v891 = vsel %vm887, 1, 0
        %v892 = vsel %vm888, 1, 0
        %v893 = vsel %vm889, 1, 0
        %v894 = vcvt.s32.f32 %v890
        %v895 = vcvt.s32.f32 %v891
        %v896 = vcvt.s32.f32 %v892
        %v897 = vcvt.s32.f32 %v893
        %914 = vrot.lane.b32.xlu0 %v835, 2
        %v915 = vpop.permute.xlu0 %914
        %916 = vrot.lane.b32.xlu0 %v843, 2
        %v917 = vpop.permute.xlu0 %916
        %918 = vrot.lane.b32.xlu0 %v844, 2
        %v919 = vpop.permute.xlu0 %918
        %920 = vrot.lane.b32.xlu0 %v860, 2
        %v921 = vpop.permute.xlu0 %920
        %922 = vrot.lane.b32.xlu0 %v836, 2
        %v923 = vpop.permute.xlu0 %922
        %924 = vrot.lane.b32.xlu0 %v845, 2
        %v925 = vpop.permute.xlu0 %924
        %926 = vrot.lane.b32.xlu0 %v846, 2
        %v927 = vpop.permute.xlu0 %926
        %928 = vrot.lane.b32.xlu0 %v861, 2
        %v929 = vpop.permute.xlu0 %928
        %930 = vrot.lane.b32.xlu0 %v837, 2
        %v931 = vpop.permute.xlu0 %930
        %932 = vrot.lane.b32.xlu0 %v847, 2
        %v933 = vpop.permute.xlu0 %932
        %934 = vrot.lane.b32.xlu0 %v848, 2
        %v935 = vpop.permute.xlu0 %934
        %936 = vrot.lane.b32.xlu0 %v862, 2
        %v937 = vpop.permute.xlu0 %936
        %938 = vrot.lane.b32.xlu0 %v838, 2
        %v939 = vpop.permute.xlu0 %938
        %940 = vrot.lane.b32.xlu0 %v849, 2
        %v941 = vpop.permute.xlu0 %940
        %942 = vrot.lane.b32.xlu0 %v850, 2
        %v943 = vpop.permute.xlu0 %942
        %944 = vrot.lane.b32.xlu0 %v863, 2
        %v945 = vpop.permute.xlu0 %944
        %vm946 = vcmask 15360
        %v947 = vsel %vm946, %v915, %v917
        %v948 = vsel %vm946, %v917, %v919
        %v949 = vsel %vm946, %v919, %v921
        %v950 = vsel %vm946, %v923, %v925
        %v951 = vsel %vm946, %v925, %v927
        %v952 = vsel %vm946, %v927, %v929
        %v953 = vsel %vm946, %v931, %v933
        %v954 = vsel %vm946, %v933, %v935
        %v955 = vsel %vm946, %v935, %v937
        %v956 = vsel %vm946, %v939, %v941
        %v957 = vsel %vm946, %v941, %v943
        %v958 = vsel %vm946, %v943, %v945
        %v979 = vsel %vm946, 0.0, %v915
        %v980 = vsel %vm946, 0.0, %v923
        %v981 = vsel %vm946, 0.0, %v931
        %v982 = vsel %vm946, 0.0, %v939
        %v983 = vsel %vm946, %v921, 0.0
        %v984 = vsel %vm946, %v929, 0.0
        %v985 = vsel %vm946, %v937, 0.0
        %v986 = vsel %vm946, %v945, 0.0
        %v987 = vpack.c.bf16 %v980, %v979
        %v988 = vpack.c.bf16 %v950, %v947
        %v989 = vpack.c.bf16 %v951, %v948
        %v990 = vpack.c.bf16 %v952, %v949
        %v991 = vpack.c.bf16 %v982, %v981
        %v992 = vpack.c.bf16 %v956, %v953
        %v993 = vpack.c.bf16 %v957, %v954
        %v994 = vpack.c.bf16 %v958, %v955
        %v995 = vld [vmem:[%s6] sm:$0xf]
        %v996 = vld [vmem:[%s6 + $0x4] sm:$0xf]
        %v997 = vld [vmem:[%s6 + $0x8] sm:$0xf]
        %v998 = vld [vmem:[%s6 + $0xc] sm:$0xf]
        %v999 = vld [vmem:[%s6 + $0x10] sm:$0xf]
        %v1000 = vld [vmem:[%s6 + $0x14] sm:$0xf]
        %v1001 = vld [vmem:[%s6 + $0x18] sm:$0xf]
        %v1002 = vld [vmem:[%s6 + $0x1c] sm:$0xf]
        %v1003 = vpack.c.bf16 %v984, %v983
        %v1004 = vpack.c.bf16 %v986, %v985
        %s1005 = scalar_lea.vmem %s6, 32
        %v1006 = vld [vmem:[%s1005] sm:$0xf]
        %v1007 = vld [vmem:[%s1005 + $0x4] sm:$0xf]
        %v1008 = vld [vmem:[%s1005 + $0x8] sm:$0xf]
        %v1009 = vld [vmem:[%s1005 + $0xc] sm:$0xf]
        %v1010 = vld [vmem:[%s1005 + $0x10] sm:$0xf]
        %v1011 = vld [vmem:[%s1005 + $0x14] sm:$0xf]
        %v1012 = vld [vmem:[%s1005 + $0x18] sm:$0xf]
        %v1013 = vld [vmem:[%s1005 + $0x1c] sm:$0xf]
        %v1022 = vunpack.c.l.b16 %v1006
        %v1023 = vunpack.c.l.b16 %v1007
        %v1024 = vunpack.c.l.b16 %v1008
        %v1025 = vunpack.c.l.b16 %v1009
        %v1026 = vunpack.c.l.b16 %v1010
        %v1027 = vunpack.c.l.b16 %v1011
        %v1028 = vunpack.c.l.b16 %v1012
        %v1029 = vunpack.c.l.b16 %v1013
        %v1030 = vpack.c.b16 %v1023, %v1022
        %v1031 = vpack.c.b16 %v1025, %v1024
        %v1032 = vpack.c.b16 %v1027, %v1026
        %v1033 = vpack.c.b16 %v1029, %v1028
        %1044 = vrot.lane.b32.xlu0 %v987, 127
        %v1045 = vpop.permute.xlu0 %1044
        %1046 = vrot.lane.b32.xlu0 %v988, 127
        %v1047 = vpop.permute.xlu0 %1046
        %1048 = vrot.lane.b32.xlu0 %v989, 127
        %v1049 = vpop.permute.xlu0 %1048
        %1050 = vrot.lane.b32.xlu0 %v990, 127
        %v1051 = vpop.permute.xlu0 %1050
        %1052 = vrot.lane.b32.xlu0 %v1003, 127
        %v1053 = vpop.permute.xlu0 %1052
        %1054 = vrot.lane.b32.xlu0 %v991, 127
        %v1055 = vpop.permute.xlu0 %1054
        %1056 = vrot.lane.b32.xlu0 %v992, 127
        %v1057 = vpop.permute.xlu0 %1056
        %1058 = vrot.lane.b32.xlu0 %v993, 127
        %v1059 = vpop.permute.xlu0 %1058
        %1060 = vrot.lane.b32.xlu0 %v994, 127
        %v1061 = vpop.permute.xlu0 %1060
        %1062 = vrot.lane.b32.xlu0 %v1004, 127
        %v1063 = vpop.permute.xlu0 %1062
        %vm1064 = vcmask 1039360
        %v1065 = vsel %vm1064, %v1045, %v1047
        %v1066 = vsel %vm1064, %v1047, %v1049
        %v1067 = vsel %vm1064, %v1049, %v1051
        %v1068 = vsel %vm1064, %v1051, %v1053
        %v1069 = vsel %vm1064, %v1055, %v1057
        %v1070 = vsel %vm1064, %v1057, %v1059
        %v1071 = vsel %vm1064, %v1059, %v1061
        %v1072 = vsel %vm1064, %v1061, %v1063
        %vm1081 = vcmask 261120
        %v1083 = vsel %vm1081, %v1030, 0
        %v1086 = vsel %vm1081, %v1031, 0
        %v1089 = vsel %vm1081, %v1032, 0
        %v1092 = vsel %vm1081, %v1033, 0
        %1094 = vmatprep.subr.bf16.mxu0 %v1066
        %1095 = vmatpush1.bf16.msra.mxu0 %v1065
        %1096 = vmatprep.subr.bf16.mxu0 %v1070
        %1097 = vmatpush1.bf16.msra.mxu0 %v1069
        %1098 = vmatprep.subr.bf16.mxu0 0
        %1099 = vmatpush1.bf16.msra.mxu0 0
        %1100 = vmatprep.subr.bf16.mxu0 0
        %1101 = vmatpush1.bf16.msra.mxu0 0
        %1102 = vmatprep.subr.bf16.mxu0 0
        %1103 = vmatpush1.bf16.msra.mxu0 0
        %1104 = vmatprep.subr.bf16.mxu0 0
        %1105 = vmatpush1.bf16.msra.mxu0 0
        %1106 = vmatprep.subr.bf16.mxu0 0
        %1107 = vmatpush1.bf16.msra.mxu0 0
        %1108 = vmatprep.subr.bf16.mxu0 0
        %1109 = vmatpush1.bf16.msra.mxu0 0
        %1110 = vmatprep.subr.bf16.mxu0 0
        %1111 = vmatpush1.bf16.msra.mxu0 0
        %1112 = vmatprep.subr.bf16.mxu0 0
        %1113 = vmatpush1.bf16.msra.mxu0 0
        %1114 = vmatprep.subr.bf16.mxu0 0
        %1115 = vmatpush1.bf16.msra.mxu0 0
        %1116 = vmatprep.subr.bf16.mxu0 0
        %1117 = vmatpush1.bf16.msra.mxu0 0
        %1118 = vmatprep.subr.bf16.mxu0 0
        %1119 = vmatpush1.bf16.msra.mxu0 0
        %1120 = vmatprep.subr.bf16.mxu0 0
        %1121 = vmatpush1.bf16.msra.mxu0 0
        %1122 = vmatprep.subr.bf16.mxu0 0
        %1123 = vmatpush1.bf16.msra.mxu0 0
        %1124 = vmatprep.subr.bf16.mxu0 0
        %1125 = vmatpush1.bf16.msra.mxu0 0
        %1126 = vmatprep.mubr.bf16.mxu0 0
        %1127 = vmatmul.mubr.bf16.gmra.mrb[0].mxu0 %v1083
        %v1128 = vpop.f32.mrb[0].mxu0
        %v1129 = vadd.f32 0.0, %v1128
        %v1130 = vpop.f32.mrb[0].mxu0
        %v1131 = vadd.f32 0.0, %v1130
        %v1132 = vpop.f32.mrb[0].mxu0
        %v1133 = vadd.f32 0.0, %v1132
        %v1134 = vpop.f32.mrb[0].mxu0
        %v1135 = vadd.f32 0.0, %v1134
        %1136 = vmatprep.mubr.bf16.mxu0 0
        %1137 = vmatmul.mubr.bf16.gmra.mrb[0].mxu0 %v1086
        %v1138 = vpop.f32.mrb[0].mxu0
        %v1139 = vadd.f32 0.0, %v1138
        %v1140 = vpop.f32.mrb[0].mxu0
        %v1141 = vadd.f32 0.0, %v1140
        %v1142 = vpop.f32.mrb[0].mxu0
        %v1143 = vadd.f32 0.0, %v1142
        %v1144 = vpop.f32.mrb[0].mxu0
        %v1145 = vadd.f32 0.0, %v1144
        %1146 = vmatprep.mubr.bf16.mxu0 0
        %1147 = vmatmul.mubr.bf16.gmra.mrb[0].mxu0 %v1089
        %v1148 = vpop.f32.mrb[0].mxu0
        %v1149 = vadd.f32 0.0, %v1148
        %v1150 = vpop.f32.mrb[0].mxu0
        %v1151 = vadd.f32 0.0, %v1150
        %v1152 = vpop.f32.mrb[0].mxu0
        %v1153 = vadd.f32 0.0, %v1152
        %v1154 = vpop.f32.mrb[0].mxu0
        %v1155 = vadd.f32 0.0, %v1154
        %1156 = vmatprep.mubr.bf16.mxu0 0
        %1157 = vmatmul.mubr.bf16.gmra.mrb[0].mxu0 %v1092
        %v1158 = vpop.f32.mrb[0].mxu0
        %v1159 = vadd.f32 0.0, %v1158
        %v1160 = vpop.f32.mrb[0].mxu0
        %v1161 = vadd.f32 0.0, %v1160
        %v1162 = vpop.f32.mrb[0].mxu0
        %v1163 = vadd.f32 0.0, %v1162
        %v1164 = vpop.f32.mrb[0].mxu0
        %v1165 = vadd.f32 0.0, %v1164
        %1166 = vdwg.mxu0
        %1167 = vmatprep.subr.bf16.mxu0 %v1068
        %1168 = vmatpush1.bf16.msra.mxu0 %v1067
        %1169 = vmatprep.subr.bf16.mxu0 %v1072
        %1170 = vmatpush1.bf16.msra.mxu0 %v1071
        %1171 = vmatprep.subr.bf16.mxu0 0
        %1172 = vmatpush1.bf16.msra.mxu0 0
        %1173 = vmatprep.subr.bf16.mxu0 0
        %1174 = vmatpush1.bf16.msra.mxu0 0
        %1175 = vmatprep.subr.bf16.mxu0 0
        %1176 = vmatpush1.bf16.msra.mxu0 0
        %1177 = vmatprep.subr.bf16.mxu0 0
        %1178 = vmatpush1.bf16.msra.mxu0 0
        %1179 = vmatprep.subr.bf16.mxu0 0
        %1180 = vmatpush1.bf16.msra.mxu0 0
        %1181 = vmatprep.subr.bf16.mxu0 0
        %1182 = vmatpush1.bf16.msra.mxu0 0
        %1183 = vmatprep.subr.bf16.mxu0 0
        %1184 = vmatpush1.bf16.msra.mxu0 0
        %1185 = vmatprep.subr.bf16.mxu0 0
        %1186 = vmatpush1.bf16.msra.mxu0 0
        %1187 = vmatprep.subr.bf16.mxu0 0
        %1188 = vmatpush1.bf16.msra.mxu0 0
        %1189 = vmatprep.subr.bf16.mxu0 0
        %1190 = vmatpush1.bf16.msra.mxu0 0
        %1191 = vmatprep.subr.bf16.mxu0 0
        %1192 = vmatpush1.bf16.msra.mxu0 0
        %1193 = vmatprep.subr.bf16.mxu0 0
        %1194 = vmatpush1.bf16.msra.mxu0 0
        %1195 = vmatprep.subr.bf16.mxu0 0
        %1196 = vmatpush1.bf16.msra.mxu0 0
        %1197 = vmatprep.subr.bf16.mxu0 0
        %1198 = vmatpush1.bf16.msra.mxu0 0
        %1199 = vmatprep.mubr.bf16.mxu0 0
        %1200 = vmatmul.mubr.bf16.gmra.mrb[0].mxu0 %v1083
        %v1201 = vpop.f32.mrb[0].mxu0
        %v1202 = vadd.f32 0.0, %v1201
        %v1203 = vpop.f32.mrb[0].mxu0
        %v1204 = vadd.f32 0.0, %v1203
        %v1205 = vpop.f32.mrb[0].mxu0
        %v1206 = vadd.f32 0.0, %v1205
        %v1207 = vpop.f32.mrb[0].mxu0
        %v1208 = vadd.f32 0.0, %v1207
        %1209 = vmatprep.mubr.bf16.mxu0 0
        %1210 = vmatmul.mubr.bf16.gmra.mrb[0].mxu0 %v1086
        %v1211 = vpop.f32.mrb[0].mxu0
        %v1212 = vadd.f32 0.0, %v1211
        %v1213 = vpop.f32.mrb[0].mxu0
        %v1214 = vadd.f32 0.0, %v1213
        %v1215 = vpop.f32.mrb[0].mxu0
        %v1216 = vadd.f32 0.0, %v1215
        %v1217 = vpop.f32.mrb[0].mxu0
        %v1218 = vadd.f32 0.0, %v1217
        %1219 = vmatprep.mubr.bf16.mxu0 0
        %1220 = vmatmul.mubr.bf16.gmra.mrb[0].mxu0 %v1089
        %v1221 = vpop.f32.mrb[0].mxu0
        %v1222 = vadd.f32 0.0, %v1221
        %v1223 = vpop.f32.mrb[0].mxu0
        %v1224 = vadd.f32 0.0, %v1223
        %v1225 = vpop.f32.mrb[0].mxu0
        %v1226 = vadd.f32 0.0, %v1225
        %v1227 = vpop.f32.mrb[0].mxu0
        %v1228 = vadd.f32 0.0, %v1227
        %1229 = vmatprep.mubr.bf16.mxu0 0
        %1230 = vmatmul.mubr.bf16.gmra.mrb[0].mxu0 %v1092
        %v1231 = vpop.f32.mrb[0].mxu0
        %v1232 = vadd.f32 0.0, %v1231
        %v1233 = vpop.f32.mrb[0].mxu0
        %v1234 = vadd.f32 0.0, %v1233
        %v1235 = vpop.f32.mrb[0].mxu0
        %v1236 = vadd.f32 0.0, %v1235
        %v1237 = vpop.f32.mrb[0].mxu0
        %v1238 = vadd.f32 0.0, %v1237
        %1239 = vdwg.mxu0
        %v1248 = vunpack.c.l.b16 %v995
        %v1249 = vunpack.c.l.b16 %v996
        %v1250 = vunpack.c.l.b16 %v997
        %v1251 = vunpack.c.l.b16 %v998
        %v1252 = vunpack.c.l.b16 %v999
        %v1253 = vunpack.c.l.b16 %v1000
        %v1254 = vunpack.c.l.b16 %v1001
        %v1255 = vunpack.c.l.b16 %v1002
        %v1256 = vpack.c.b16 %v1249, %v1248
        %v1257 = vpack.c.b16 %v1251, %v1250
        %v1258 = vpack.c.b16 %v1253, %v1252
        %v1259 = vpack.c.b16 %v1255, %v1254
        %v1261 = vsel %vm1081, %v1256, 0
        %v1264 = vsel %vm1081, %v1257, 0
        %v1267 = vsel %vm1081, %v1258, 0
        %v1270 = vsel %vm1081, %v1259, 0
        %1272 = vmatprep.subr.bf16.mxu0 %v988
        %1273 = vmatpush1.bf16.msra.mxu0 %v987
        %1274 = vmatprep.subr.bf16.mxu0 %v992
        %1275 = vmatpush1.bf16.msra.mxu0 %v991
        %1276 = vmatprep.subr.bf16.mxu0 0
        %1277 = vmatpush1.bf16.msra.mxu0 0
        %1278 = vmatprep.subr.bf16.mxu0 0
        %1279 = vmatpush1.bf16.msra.mxu0 0
        %1280 = vmatprep.subr.bf16.mxu0 0
        %1281 = vmatpush1.bf16.msra.mxu0 0
        %1282 = vmatprep.subr.bf16.mxu0 0
        %1283 = vmatpush1.bf16.msra.mxu0 0
        %1284 = vmatprep.subr.bf16.mxu0 0
        %1285 = vmatpush1.bf16.msra.mxu0 0
        %1286 = vmatprep.subr.bf16.mxu0 0
        %1287 = vmatpush1.bf16.msra.mxu0 0
        %1288 = vmatprep.subr.bf16.mxu0 0
        %1289 = vmatpush1.bf16.msra.mxu0 0
        %1290 = vmatprep.subr.bf16.mxu0 0
        %1291 = vmatpush1.bf16.msra.mxu0 0
        %1292 = vmatprep.subr.bf16.mxu0 0
        %1293 = vmatpush1.bf16.msra.mxu0 0
        %1294 = vmatprep.subr.bf16.mxu0 0
        %1295 = vmatpush1.bf16.msra.mxu0 0
        %1296 = vmatprep.subr.bf16.mxu0 0
        %1297 = vmatpush1.bf16.msra.mxu0 0
        %1298 = vmatprep.subr.bf16.mxu0 0
        %1299 = vmatpush1.bf16.msra.mxu0 0
        %1300 = vmatprep.subr.bf16.mxu0 0
        %1301 = vmatpush1.bf16.msra.mxu0 0
        %1302 = vmatprep.subr.bf16.mxu0 0
        %1303 = vmatpush1.bf16.msra.mxu0 0
        %1304 = vmatprep.mubr.bf16.mxu0 0
        %1305 = vmatmul.mubr.bf16.gmra.mrb[0].mxu0 %v1261
        %v1306 = vpop.f32.mrb[0].mxu0
        %v1307 = vadd.f32 %v1129, %v1306
        %v1308 = vpop.f32.mrb[0].mxu0
        %v1309 = vadd.f32 %v1131, %v1308
        %v1310 = vpop.f32.mrb[0].mxu0
        %v1311 = vadd.f32 %v1133, %v1310
        %v1312 = vpop.f32.mrb[0].mxu0
        %v1313 = vadd.f32 %v1135, %v1312
        %1314 = vmatprep.mubr.bf16.mxu0 0
        %1315 = vmatmul.mubr.bf16.gmra.mrb[0].mxu0 %v1264
        %v1316 = vpop.f32.mrb[0].mxu0
        %v1317 = vadd.f32 %v1139, %v1316
        %v1318 = vpop.f32.mrb[0].mxu0
        %v1319 = vadd.f32 %v1141, %v1318
        %v1320 = vpop.f32.mrb[0].mxu0
        %v1321 = vadd.f32 %v1143, %v1320
        %v1322 = vpop.f32.mrb[0].mxu0
        %v1323 = vadd.f32 %v1145, %v1322
        %1324 = vmatprep.mubr.bf16.mxu0 0
        %1325 = vmatmul.mubr.bf16.gmra.mrb[0].mxu0 %v1267
        %v1326 = vpop.f32.mrb[0].mxu0
        %v1327 = vadd.f32 %v1149, %v1326
        %v1328 = vpop.f32.mrb[0].mxu0
        %v1329 = vadd.f32 %v1151, %v1328
        %v1330 = vpop.f32.mrb[0].mxu0
        %v1331 = vadd.f32 %v1153, %v1330
        %v1332 = vpop.f32.mrb[0].mxu0
        %v1333 = vadd.f32 %v1155, %v1332
        %1334 = vmatprep.mubr.bf16.mxu0 0
        %1335 = vmatmul.mubr.bf16.gmra.mrb[0].mxu0 %v1270
        %v1336 = vpop.f32.mrb[0].mxu0
        %v1337 = vadd.f32 %v1159, %v1336
        %v1338 = vpop.f32.mrb[0].mxu0
        %v1339 = vadd.f32 %v1161, %v1338
        %v1340 = vpop.f32.mrb[0].mxu0
        %v1341 = vadd.f32 %v1163, %v1340
        %v1342 = vpop.f32.mrb[0].mxu0
        %v1343 = vadd.f32 %v1165, %v1342
        %1344 = vdwg.mxu0
        %1345 = vmatprep.subr.bf16.mxu0 %v990
        %1346 = vmatpush1.bf16.msra.mxu0 %v989
        %1347 = vmatprep.subr.bf16.mxu0 %v994
        %1348 = vmatpush1.bf16.msra.mxu0 %v993
        %1349 = vmatprep.subr.bf16.mxu0 0
        %1350 = vmatpush1.bf16.msra.mxu0 0
        %1351 = vmatprep.subr.bf16.mxu0 0
        %1352 = vmatpush1.bf16.msra.mxu0 0
        %1353 = vmatprep.subr.bf16.mxu0 0
        %1354 = vmatpush1.bf16.msra.mxu0 0
        %1355 = vmatprep.subr.bf16.mxu0 0
        %1356 = vmatpush1.bf16.msra.mxu0 0
        %1357 = vmatprep.subr.bf16.mxu0 0
        %1358 = vmatpush1.bf16.msra.mxu0 0
        %1359 = vmatprep.subr.bf16.mxu0 0
        %1360 = vmatpush1.bf16.msra.mxu0 0
        %1361 = vmatprep.subr.bf16.mxu0 0
        %1362 = vmatpush1.bf16.msra.mxu0 0
        %1363 = vmatprep.subr.bf16.mxu0 0
        %1364 = vmatpush1.bf16.msra.mxu0 0
        %1365 = vmatprep.subr.bf16.mxu0 0
        %1366 = vmatpush1.bf16.msra.mxu0 0
        %1367 = vmatprep.subr.bf16.mxu0 0
        %1368 = vmatpush1.bf16.msra.mxu0 0
        %1369 = vmatprep.subr.bf16.mxu0 0
        %1370 = vmatpush1.bf16.msra.mxu0 0
        %1371 = vmatprep.subr.bf16.mxu0 0
        %1372 = vmatpush1.bf16.msra.mxu0 0
        %1373 = vmatprep.subr.bf16.mxu0 0
        %1374 = vmatpush1.bf16.msra.mxu0 0
        %1375 = vmatprep.subr.bf16.mxu0 0
        %1376 = vmatpush1.bf16.msra.mxu0 0
        %1377 = vmatprep.mubr.bf16.mxu0 0
        %1378 = vmatmul.mubr.bf16.gmra.mrb[0].mxu0 %v1261
        %v1379 = vpop.f32.mrb[0].mxu0
        %v1380 = vadd.f32 %v1202, %v1379
        %v1381 = vpop.f32.mrb[0].mxu0
        %v1382 = vadd.f32 %v1204, %v1381
        %v1383 = vpop.f32.mrb[0].mxu0
        %v1384 = vadd.f32 %v1206, %v1383
        %v1385 = vpop.f32.mrb[0].mxu0
        %v1386 = vadd.f32 %v1208, %v1385
        %1387 = vmatprep.mubr.bf16.mxu0 0
        %1388 = vmatmul.mubr.bf16.gmra.mrb[0].mxu0 %v1264
        %v1389 = vpop.f32.mrb[0].mxu0
        %v1390 = vadd.f32 %v1212, %v1389
        %v1391 = vpop.f32.mrb[0].mxu0
        %v1392 = vadd.f32 %v1214, %v1391
        %v1393 = vpop.f32.mrb[0].mxu0
        %v1394 = vadd.f32 %v1216, %v1393
        %v1395 = vpop.f32.mrb[0].mxu0
        %v1396 = vadd.f32 %v1218, %v1395
        %1397 = vmatprep.mubr.bf16.mxu0 0
        %1398 = vmatmul.mubr.bf16.gmra.mrb[0].mxu0 %v1267
        %v1399 = vpop.f32.mrb[0].mxu0
        %v1400 = vadd.f32 %v1222, %v1399
        %v1401 = vpop.f32.mrb[0].mxu0
        %v1402 = vadd.f32 %v1224, %v1401
        %v1403 = vpop.f32.mrb[0].mxu0
        %v1404 = vadd.f32 %v1226, %v1403
        %v1405 = vpop.f32.mrb[0].mxu0
        %v1406 = vadd.f32 %v1228, %v1405
        %1407 = vmatprep.mubr.bf16.mxu0 0
        %1408 = vmatmul.mubr.bf16.gmra.mrb[0].mxu0 %v1270
        %v1409 = vpop.f32.mrb[0].mxu0
        %v1410 = vadd.f32 %v1232, %v1409
        %v1411 = vpop.f32.mrb[0].mxu0
        %v1412 = vadd.f32 %v1234, %v1411
        %v1413 = vpop.f32.mrb[0].mxu0
        %v1414 = vadd.f32 %v1236, %v1413
        %v1415 = vpop.f32.mrb[0].mxu0
        %v1416 = vadd.f32 %v1238, %v1415
        %1417 = vdwg.mxu0
        %s1418 = scalar_lea.vmem %s6, 64
        %v1419 = vld [vmem:[%s1418] sm:$0xf]
        %v1420 = vld [vmem:[%s1418 + $0x4] sm:$0xf]
        %v1421 = vld [vmem:[%s1418 + $0x8] sm:$0xf]
        %v1422 = vld [vmem:[%s1418 + $0xc] sm:$0xf]
        %v1423 = vld [vmem:[%s1418 + $0x10] sm:$0xf]
        %v1424 = vld [vmem:[%s1418 + $0x14] sm:$0xf]
        %v1425 = vld [vmem:[%s1418 + $0x18] sm:$0xf]
        %v1426 = vld [vmem:[%s1418 + $0x1c] sm:$0xf]
        %v1435 = vunpack.c.l.b16 %v1419
        %v1436 = vunpack.c.l.b16 %v1420
        %v1437 = vunpack.c.l.b16 %v1421
        %v1438 = vunpack.c.l.b16 %v1422
        %v1439 = vunpack.c.l.b16 %v1423
        %v1440 = vunpack.c.l.b16 %v1424
        %v1441 = vunpack.c.l.b16 %v1425
        %v1442 = vunpack.c.l.b16 %v1426
        %v1443 = vpack.c.b16 %v1436, %v1435
        %v1444 = vpack.c.b16 %v1438, %v1437
        %v1445 = vpack.c.b16 %v1440, %v1439
        %v1446 = vpack.c.b16 %v1442, %v1441
        %1447 = vrot.lane.b32.xlu0 %v987, 126
        %v1448 = vpop.permute.xlu0 %1447
        %1449 = vrot.lane.b32.xlu0 %v988, 126
        %v1450 = vpop.permute.xlu0 %1449
        %1451 = vrot.lane.b32.xlu0 %v989, 126
        %v1452 = vpop.permute.xlu0 %1451
        %1453 = vrot.lane.b32.xlu0 %v990, 126
        %v1454 = vpop.permute.xlu0 %1453
        %1455 = vrot.lane.b32.xlu0 %v1003, 126
        %v1456 = vpop.permute.xlu0 %1455
        %1457 = vrot.lane.b32.xlu0 %v991, 126
        %v1458 = vpop.permute.xlu0 %1457
        %1459 = vrot.lane.b32.xlu0 %v992, 126
        %v1460 = vpop.permute.xlu0 %1459
        %1461 = vrot.lane.b32.xlu0 %v993, 126
        %v1462 = vpop.permute.xlu0 %1461
        %1463 = vrot.lane.b32.xlu0 %v994, 126
        %v1464 = vpop.permute.xlu0 %1463
        %1465 = vrot.lane.b32.xlu0 %v1004, 126
        %v1466 = vpop.permute.xlu0 %1465
        %vm1467 = vcmask 1031168
        %v1468 = vsel %vm1467, %v1448, %v1450
        %v1469 = vsel %vm1467, %v1450, %v1452
        %v1470 = vsel %vm1467, %v1452, %v1454
        %v1471 = vsel %vm1467, %v1454, %v1456
        %v1472 = vsel %vm1467, %v1458, %v1460
        %v1473 = vsel %vm1467, %v1460, %v1462
        %v1474 = vsel %vm1467, %v1462, %v1464
        %v1475 = vsel %vm1467, %v1464, %v1466
        %v1485 = vsel %vm1081, %v1443, 0
        %v1488 = vsel %vm1081, %v1444, 0
        %v1491 = vsel %vm1081, %v1445, 0
        %v1494 = vsel %vm1081, %v1446, 0
        %1496 = vmatprep.subr.bf16.mxu0 %v1469
        %1497 = vmatpush1.bf16.msra.mxu0 %v1468
        %1498 = vmatprep.subr.bf16.mxu0 %v1473
        %1499 = vmatpush1.bf16.msra.mxu0 %v1472
        %1500 = vmatprep.subr.bf16.mxu0 0
        %1501 = vmatpush1.bf16.msra.mxu0 0
        %1502 = vmatprep.subr.bf16.mxu0 0
        %1503 = vmatpush1.bf16.msra.mxu0 0
        %1504 = vmatprep.subr.bf16.mxu0 0
        %1505 = vmatpush1.bf16.msra.mxu0 0
        %1506 = vmatprep.subr.bf16.mxu0 0
        %1507 = vmatpush1.bf16.msra.mxu0 0
        %1508 = vmatprep.subr.bf16.mxu0 0
        %1509 = vmatpush1.bf16.msra.mxu0 0
        %1510 = vmatprep.subr.bf16.mxu0 0
        %1511 = vmatpush1.bf16.msra.mxu0 0
        %1512 = vmatprep.subr.bf16.mxu0 0
        %1513 = vmatpush1.bf16.msra.mxu0 0
        %1514 = vmatprep.subr.bf16.mxu0 0
        %1515 = vmatpush1.bf16.msra.mxu0 0
        %1516 = vmatprep.subr.bf16.mxu0 0
        %1517 = vmatpush1.bf16.msra.mxu0 0
        %1518 = vmatprep.subr.bf16.mxu0 0
        %1519 = vmatpush1.bf16.msra.mxu0 0
        %1520 = vmatprep.subr.bf16.mxu0 0
        %1521 = vmatpush1.bf16.msra.mxu0 0
        %1522 = vmatprep.subr.bf16.mxu0 0
        %1523 = vmatpush1.bf16.msra.mxu0 0
        %1524 = vmatprep.subr.bf16.mxu0 0
        %1525 = vmatpush1.bf16.msra.mxu0 0
        %1526 = vmatprep.subr.bf16.mxu0 0
        %1527 = vmatpush1.bf16.msra.mxu0 0
        %1528 = vmatprep.mubr.bf16.mxu0 0
        %1529 = vmatmul.mubr.bf16.gmra.mrb[0].mxu0 %v1485
        %v1530 = vpop.f32.mrb[0].mxu0
        %v1531 = vadd.f32 0.0, %v1530
        %v1532 = vpop.f32.mrb[0].mxu0
        %v1533 = vadd.f32 0.0, %v1532
        %v1534 = vpop.f32.mrb[0].mxu0
        %v1535 = vadd.f32 0.0, %v1534
        %v1536 = vpop.f32.mrb[0].mxu0
        %v1537 = vadd.f32 0.0, %v1536
        %1538 = vmatprep.mubr.bf16.mxu0 0
        %1539 = vmatmul.mubr.bf16.gmra.mrb[0].mxu0 %v1488
        %v1540 = vpop.f32.mrb[0].mxu0
        %v1541 = vadd.f32 0.0, %v1540
        %v1542 = vpop.f32.mrb[0].mxu0
        %v1543 = vadd.f32 0.0, %v1542
        %v1544 = vpop.f32.mrb[0].mxu0
        %v1545 = vadd.f32 0.0, %v1544
        %v1546 = vpop.f32.mrb[0].mxu0
        %v1547 = vadd.f32 0.0, %v1546
        %1548 = vmatprep.mubr.bf16.mxu0 0
        %1549 = vmatmul.mubr.bf16.gmra.mrb[0].mxu0 %v1491
        %v1550 = vpop.f32.mrb[0].mxu0
        %v1551 = vadd.f32 0.0, %v1550
        %v1552 = vpop.f32.mrb[0].mxu0
        %v1553 = vadd.f32 0.0, %v1552
        %v1554 = vpop.f32.mrb[0].mxu0
        %v1555 = vadd.f32 0.0, %v1554
        %v1556 = vpop.f32.mrb[0].mxu0
        %v1557 = vadd.f32 0.0, %v1556
        %1558 = vmatprep.mubr.bf16.mxu0 0
        %1559 = vmatmul.mubr.bf16.gmra.mrb[0].mxu0 %v1494
        %v1560 = vpop.f32.mrb[0].mxu0
        %v1561 = vadd.f32 0.0, %v1560
        %v1562 = vpop.f32.mrb[0].mxu0
        %v1563 = vadd.f32 0.0, %v1562
        %v1564 = vpop.f32.mrb[0].mxu0
        %v1565 = vadd.f32 0.0, %v1564
        %v1566 = vpop.f32.mrb[0].mxu0
        %v1567 = vadd.f32 0.0, %v1566
        %1568 = vdwg.mxu0
        %1569 = vmatprep.subr.bf16.mxu0 %v1471
        %1570 = vmatpush1.bf16.msra.mxu0 %v1470
        %1571 = vmatprep.subr.bf16.mxu0 %v1475
        %1572 = vmatpush1.bf16.msra.mxu0 %v1474
        %1573 = vmatprep.subr.bf16.mxu0 0
        %1574 = vmatpush1.bf16.msra.mxu0 0
        %1575 = vmatprep.subr.bf16.mxu0 0
        %1576 = vmatpush1.bf16.msra.mxu0 0
        %1577 = vmatprep.subr.bf16.mxu0 0
        %1578 = vmatpush1.bf16.msra.mxu0 0
        %1579 = vmatprep.subr.bf16.mxu0 0
        %1580 = vmatpush1.bf16.msra.mxu0 0
        %1581 = vmatprep.subr.bf16.mxu0 0
        %1582 = vmatpush1.bf16.msra.mxu0 0
        %1583 = vmatprep.subr.bf16.mxu0 0
        %1584 = vmatpush1.bf16.msra.mxu0 0
        %1585 = vmatprep.subr.bf16.mxu0 0
        %1586 = vmatpush1.bf16.msra.mxu0 0
        %1587 = vmatprep.subr.bf16.mxu0 0
        %1588 = vmatpush1.bf16.msra.mxu0 0
        %1589 = vmatprep.subr.bf16.mxu0 0
        %1590 = vmatpush1.bf16.msra.mxu0 0
        %1591 = vmatprep.subr.bf16.mxu0 0
        %1592 = vmatpush1.bf16.msra.mxu0 0
        %1593 = vmatprep.subr.bf16.mxu0 0
        %1594 = vmatpush1.bf16.msra.mxu0 0
        %1595 = vmatprep.subr.bf16.mxu0 0
        %1596 = vmatpush1.bf16.msra.mxu0 0
        %1597 = vmatprep.subr.bf16.mxu0 0
        %1598 = vmatpush1.bf16.msra.mxu0 0
        %1599 = vmatprep.subr.bf16.mxu0 0
        %1600 = vmatpush1.bf16.msra.mxu0 0
        %1601 = vmatprep.mubr.bf16.mxu0 0
        %1602 = vmatmul.mubr.bf16.gmra.mrb[0].mxu0 %v1485
        %v1603 = vpop.f32.mrb[0].mxu0
        %v1604 = vadd.f32 0.0, %v1603
        %v1605 = vpop.f32.mrb[0].mxu0
        %v1606 = vadd.f32 0.0, %v1605
        %v1607 = vpop.f32.mrb[0].mxu0
        %v1608 = vadd.f32 0.0, %v1607
        %v1609 = vpop.f32.mrb[0].mxu0
        %v1610 = vadd.f32 0.0, %v1609
        %1611 = vmatprep.mubr.bf16.mxu0 0
        %1612 = vmatmul.mubr.bf16.gmra.mrb[0].mxu0 %v1488
        %v1613 = vpop.f32.mrb[0].mxu0
        %v1614 = vadd.f32 0.0, %v1613
        %v1615 = vpop.f32.mrb[0].mxu0
        %v1616 = vadd.f32 0.0, %v1615
        %v1617 = vpop.f32.mrb[0].mxu0
        %v1618 = vadd.f32 0.0, %v1617
        %v1619 = vpop.f32.mrb[0].mxu0
        %v1620 = vadd.f32 0.0, %v1619
        %1621 = vmatprep.mubr.bf16.mxu0 0
        %1622 = vmatmul.mubr.bf16.gmra.mrb[0].mxu0 %v1491
        %v1623 = vpop.f32.mrb[0].mxu0
        %v1624 = vadd.f32 0.0, %v1623
        %v1625 = vpop.f32.mrb[0].mxu0
        %v1626 = vadd.f32 0.0, %v1625
        %v1627 = vpop.f32.mrb[0].mxu0
        %v1628 = vadd.f32 0.0, %v1627
        %v1629 = vpop.f32.mrb[0].mxu0
        %v1630 = vadd.f32 0.0, %v1629
        %1631 = vmatprep.mubr.bf16.mxu0 0
        %1632 = vmatmul.mubr.bf16.gmra.mrb[0].mxu0 %v1494
        %v1633 = vpop.f32.mrb[0].mxu0
        %v1634 = vadd.f32 0.0, %v1633
        %v1635 = vpop.f32.mrb[0].mxu0
        %v1636 = vadd.f32 0.0, %v1635
        %v1637 = vpop.f32.mrb[0].mxu0
        %v1638 = vadd.f32 0.0, %v1637
        %v1639 = vpop.f32.mrb[0].mxu0
        %v1640 = vadd.f32 0.0, %v1639
        %1641 = vdwg.mxu0
        %v1642 = vadd.f32 %v1307, %v1531
        %v1643 = vadd.f32 %v1309, %v1533
        %v1644 = vadd.f32 %v1380, %v1604
        %v1645 = vadd.f32 %v1382, %v1606
        %v1646 = vadd.f32 %v1311, %v1535
        %v1647 = vadd.f32 %v1313, %v1537
        %v1648 = vadd.f32 %v1384, %v1608
        %v1649 = vadd.f32 %v1386, %v1610
        %v1650 = vadd.f32 %v1317, %v1541
        %v1651 = vadd.f32 %v1319, %v1543
        %v1652 = vadd.f32 %v1390, %v1614
        %v1653 = vadd.f32 %v1392, %v1616
        %v1654 = vadd.f32 %v1321, %v1545
        %v1655 = vadd.f32 %v1323, %v1547
        %v1656 = vadd.f32 %v1394, %v1618
        %v1657 = vadd.f32 %v1396, %v1620
        %v1658 = vadd.f32 %v1327, %v1551
        %v1659 = vadd.f32 %v1329, %v1553
        %v1660 = vadd.f32 %v1400, %v1624
        %v1661 = vadd.f32 %v1402, %v1626
        %v1662 = vadd.f32 %v1331, %v1555
        %v1663 = vadd.f32 %v1333, %v1557
        %v1664 = vadd.f32 %v1404, %v1628
        %v1665 = vadd.f32 %v1406, %v1630
        %v1666 = vadd.f32 %v1337, %v1561
        %v1667 = vadd.f32 %v1339, %v1563
        %v1668 = vadd.f32 %v1410, %v1634
        %v1669 = vadd.f32 %v1412, %v1636
        %v1670 = vadd.f32 %v1341, %v1565
        %v1671 = vadd.f32 %v1343, %v1567
        %v1672 = vadd.f32 %v1414, %v1638
        %v1673 = vadd.f32 %v1416, %v1640
        %s1674 = scalar_lea.vmem %s6, 96
        %v1675 = vld [vmem:[%s1674] sm:$0xf]
        %v1676 = vld [vmem:[%s1674 + $0x4] sm:$0xf]
        %v1677 = vld [vmem:[%s1674 + $0x8] sm:$0xf]
        %v1678 = vld [vmem:[%s1674 + $0xc] sm:$0xf]
        %v1679 = vld [vmem:[%s1674 + $0x10] sm:$0xf]
        %v1680 = vld [vmem:[%s1674 + $0x14] sm:$0xf]
        %v1681 = vld [vmem:[%s1674 + $0x18] sm:$0xf]
        %v1682 = vld [vmem:[%s1674 + $0x1c] sm:$0xf]
        %v1691 = vunpack.c.l.b16 %v1675
        %v1692 = vunpack.c.l.b16 %v1676
        %v1693 = vunpack.c.l.b16 %v1677
        %v1694 = vunpack.c.l.b16 %v1678
        %v1695 = vunpack.c.l.b16 %v1679
        %v1696 = vunpack.c.l.b16 %v1680
        %v1697 = vunpack.c.l.b16 %v1681
        %v1698 = vunpack.c.l.b16 %v1682
        %v1699 = vpack.c.b16 %v1692, %v1691
        %v1700 = vpack.c.b16 %v1694, %v1693
        %v1701 = vpack.c.b16 %v1696, %v1695
        %v1702 = vpack.c.b16 %v1698, %v1697
        %1703 = vrot.lane.b32.xlu0 %v987, 125
        %v1704 = vpop.permute.xlu0 %1703
        %1705 = vrot.lane.b32.xlu0 %v988, 125
        %v1706 = vpop.permute.xlu0 %1705
        %1707 = vrot.lane.b32.xlu0 %v989, 125
        %v1708 = vpop.permute.xlu0 %1707
        %1709 = vrot.lane.b32.xlu0 %v990, 125
        %v1710 = vpop.permute.xlu0 %1709
        %1711 = vrot.lane.b32.xlu0 %v1003, 125
        %v1712 = vpop.permute.xlu0 %1711
        %1713 = vrot.lane.b32.xlu0 %v991, 125
        %v1714 = vpop.permute.xlu0 %1713
        %1715 = vrot.lane.b32.xlu0 %v992, 125
        %v1716 = vpop.permute.xlu0 %1715
        %1717 = vrot.lane.b32.xlu0 %v993, 125
        %v1718 = vpop.permute.xlu0 %1717
        %1719 = vrot.lane.b32.xlu0 %v994, 125
        %v1720 = vpop.permute.xlu0 %1719
        %1721 = vrot.lane.b32.xlu0 %v1004, 125
        %v1722 = vpop.permute.xlu0 %1721
        %vm1723 = vcmask 1022976
        %v1724 = vsel %vm1723, %v1704, %v1706
        %v1725 = vsel %vm1723, %v1706, %v1708
        %v1726 = vsel %vm1723, %v1708, %v1710
        %v1727 = vsel %vm1723, %v1710, %v1712
        %v1728 = vsel %vm1723, %v1714, %v1716
        %v1729 = vsel %vm1723, %v1716, %v1718
        %v1730 = vsel %vm1723, %v1718, %v1720
        %v1731 = vsel %vm1723, %v1720, %v1722
        %v1741 = vsel %vm1081, %v1699, 0
        %v1744 = vsel %vm1081, %v1700, 0
        %v1747 = vsel %vm1081, %v1701, 0
        %v1750 = vsel %vm1081, %v1702, 0
        %1752 = vmatprep.subr.bf16.mxu0 %v1725
        %1753 = vmatpush1.bf16.msra.mxu0 %v1724
        %1754 = vmatprep.subr.bf16.mxu0 %v1729
        %1755 = vmatpush1.bf16.msra.mxu0 %v1728
        %1756 = vmatprep.subr.bf16.mxu0 0
        %1757 = vmatpush1.bf16.msra.mxu0 0
        %1758 = vmatprep.subr.bf16.mxu0 0
        %1759 = vmatpush1.bf16.msra.mxu0 0
        %1760 = vmatprep.subr.bf16.mxu0 0
        %1761 = vmatpush1.bf16.msra.mxu0 0
        %1762 = vmatprep.subr.bf16.mxu0 0
        %1763 = vmatpush1.bf16.msra.mxu0 0
        %1764 = vmatprep.subr.bf16.mxu0 0
        %1765 = vmatpush1.bf16.msra.mxu0 0
        %1766 = vmatprep.subr.bf16.mxu0 0
        %1767 = vmatpush1.bf16.msra.mxu0 0
        %1768 = vmatprep.subr.bf16.mxu0 0
        %1769 = vmatpush1.bf16.msra.mxu0 0
        %1770 = vmatprep.subr.bf16.mxu0 0
        %1771 = vmatpush1.bf16.msra.mxu0 0
        %1772 = vmatprep.subr.bf16.mxu0 0
        %1773 = vmatpush1.bf16.msra.mxu0 0
        %1774 = vmatprep.subr.bf16.mxu0 0
        %1775 = vmatpush1.bf16.msra.mxu0 0
        %1776 = vmatprep.subr.bf16.mxu0 0
        %1777 = vmatpush1.bf16.msra.mxu0 0
        %1778 = vmatprep.subr.bf16.mxu0 0
        %1779 = vmatpush1.bf16.msra.mxu0 0
        %1780 = vmatprep.subr.bf16.mxu0 0
        %1781 = vmatpush1.bf16.msra.mxu0 0
        %1782 = vmatprep.subr.bf16.mxu0 0
        %1783 = vmatpush1.bf16.msra.mxu0 0
        %1784 = vmatprep.mubr.bf16.mxu0 0
        %1785 = vmatmul.mubr.bf16.gmra.mrb[0].mxu0 %v1741
        %v1786 = vpop.f32.mrb[0].mxu0
        %v1787 = vadd.f32 0.0, %v1786
        %v1788 = vpop.f32.mrb[0].mxu0
        %v1789 = vadd.f32 0.0, %v1788
        %v1790 = vpop.f32.mrb[0].mxu0
        %v1791 = vadd.f32 0.0, %v1790
        %v1792 = vpop.f32.mrb[0].mxu0
        %v1793 = vadd.f32 0.0, %v1792
        %1794 = vmatprep.mubr.bf16.mxu0 0
        %1795 = vmatmul.mubr.bf16.gmra.mrb[0].mxu0 %v1744
        %v1796 = vpop.f32.mrb[0].mxu0
        %v1797 = vadd.f32 0.0, %v1796
        %v1798 = vpop.f32.mrb[0].mxu0
        %v1799 = vadd.f32 0.0, %v1798
        %v1800 = vpop.f32.mrb[0].mxu0
        %v1801 = vadd.f32 0.0, %v1800
        %v1802 = vpop.f32.mrb[0].mxu0
        %v1803 = vadd.f32 0.0, %v1802
        %1804 = vmatprep.mubr.bf16.mxu0 0
        %1805 = vmatmul.mubr.bf16.gmra.mrb[0].mxu0 %v1747
        %v1806 = vpop.f32.mrb[0].mxu0
        %v1807 = vadd.f32 0.0, %v1806
        %v1808 = vpop.f32.mrb[0].mxu0
        %v1809 = vadd.f32 0.0, %v1808
        %v1810 = vpop.f32.mrb[0].mxu0
        %v1811 = vadd.f32 0.0, %v1810
        %v1812 = vpop.f32.mrb[0].mxu0
        %v1813 = vadd.f32 0.0, %v1812
        %1814 = vmatprep.mubr.bf16.mxu0 0
        %1815 = vmatmul.mubr.bf16.gmra.mrb[0].mxu0 %v1750
        %v1816 = vpop.f32.mrb[0].mxu0
        %v1817 = vadd.f32 0.0, %v1816
        %v1818 = vpop.f32.mrb[0].mxu0
        %v1819 = vadd.f32 0.0, %v1818
        %v1820 = vpop.f32.mrb[0].mxu0
        %v1821 = vadd.f32 0.0, %v1820
        %v1822 = vpop.f32.mrb[0].mxu0
        %v1823 = vadd.f32 0.0, %v1822
        %1824 = vdwg.mxu0
        %1825 = vmatprep.subr.bf16.mxu0 %v1727
        %1826 = vmatpush1.bf16.msra.mxu0 %v1726
        %1827 = vmatprep.subr.bf16.mxu0 %v1731
        %1828 = vmatpush1.bf16.msra.mxu0 %v1730
        %1829 = vmatprep.subr.bf16.mxu0 0
        %1830 = vmatpush1.bf16.msra.mxu0 0
        %1831 = vmatprep.subr.bf16.mxu0 0
        %1832 = vmatpush1.bf16.msra.mxu0 0
        %1833 = vmatprep.subr.bf16.mxu0 0
        %1834 = vmatpush1.bf16.msra.mxu0 0
        %1835 = vmatprep.subr.bf16.mxu0 0
        %1836 = vmatpush1.bf16.msra.mxu0 0
        %1837 = vmatprep.subr.bf16.mxu0 0
        %1838 = vmatpush1.bf16.msra.mxu0 0
        %1839 = vmatprep.subr.bf16.mxu0 0
        %1840 = vmatpush1.bf16.msra.mxu0 0
        %1841 = vmatprep.subr.bf16.mxu0 0
        %1842 = vmatpush1.bf16.msra.mxu0 0
        %1843 = vmatprep.subr.bf16.mxu0 0
        %1844 = vmatpush1.bf16.msra.mxu0 0
        %1845 = vmatprep.subr.bf16.mxu0 0
        %1846 = vmatpush1.bf16.msra.mxu0 0
        %1847 = vmatprep.subr.bf16.mxu0 0
        %1848 = vmatpush1.bf16.msra.mxu0 0
        %1849 = vmatprep.subr.bf16.mxu0 0
        %1850 = vmatpush1.bf16.msra.mxu0 0
        %1851 = vmatprep.subr.bf16.mxu0 0
        %1852 = vmatpush1.bf16.msra.mxu0 0
        %1853 = vmatprep.subr.bf16.mxu0 0
        %1854 = vmatpush1.bf16.msra.mxu0 0
        %1855 = vmatprep.subr.bf16.mxu0 0
        %1856 = vmatpush1.bf16.msra.mxu0 0
        %1857 = vmatprep.mubr.bf16.mxu0 0
        %1858 = vmatmul.mubr.bf16.gmra.mrb[0].mxu0 %v1741
        %v1859 = vpop.f32.mrb[0].mxu0
        %v1860 = vadd.f32 0.0, %v1859
        %v1861 = vpop.f32.mrb[0].mxu0
        %v1862 = vadd.f32 0.0, %v1861
        %v1863 = vpop.f32.mrb[0].mxu0
        %v1864 = vadd.f32 0.0, %v1863
        %v1865 = vpop.f32.mrb[0].mxu0
        %v1866 = vadd.f32 0.0, %v1865
        %1867 = vmatprep.mubr.bf16.mxu0 0
        %1868 = vmatmul.mubr.bf16.gmra.mrb[0].mxu0 %v1744
        %v1869 = vpop.f32.mrb[0].mxu0
        %v1870 = vadd.f32 0.0, %v1869
        %v1871 = vpop.f32.mrb[0].mxu0
        %v1872 = vadd.f32 0.0, %v1871
        %v1873 = vpop.f32.mrb[0].mxu0
        %v1874 = vadd.f32 0.0, %v1873
        %v1875 = vpop.f32.mrb[0].mxu0
        %v1876 = vadd.f32 0.0, %v1875
        %1877 = vmatprep.mubr.bf16.mxu0 0
        %1878 = vmatmul.mubr.bf16.gmra.mrb[0].mxu0 %v1747
        %v1879 = vpop.f32.mrb[0].mxu0
        %v1880 = vadd.f32 0.0, %v1879
        %v1881 = vpop.f32.mrb[0].mxu0
        %v1882 = vadd.f32 0.0, %v1881
        %v1883 = vpop.f32.mrb[0].mxu0
        %v1884 = vadd.f32 0.0, %v1883
        %v1885 = vpop.f32.mrb[0].mxu0
        %v1886 = vadd.f32 0.0, %v1885
        %1887 = vmatprep.mubr.bf16.mxu0 0
        %1888 = vmatmul.mubr.bf16.gmra.mrb[0].mxu0 %v1750
        %v1889 = vpop.f32.mrb[0].mxu0
        %v1890 = vadd.f32 0.0, %v1889
        %v1891 = vpop.f32.mrb[0].mxu0
        %v1892 = vadd.f32 0.0, %v1891
        %v1893 = vpop.f32.mrb[0].mxu0
        %v1894 = vadd.f32 0.0, %v1893
        %v1895 = vpop.f32.mrb[0].mxu0
        %v1896 = vadd.f32 0.0, %v1895
        %1897 = vdwg.mxu0
        %v1898 = vadd.f32 %v1642, %v1787
        %v1899 = vadd.f32 %v1643, %v1789
        %v1900 = vadd.f32 %v1644, %v1860
        %v1901 = vadd.f32 %v1645, %v1862
        %v1902 = vadd.f32 %v1646, %v1791
        %v1903 = vadd.f32 %v1647, %v1793
        %v1904 = vadd.f32 %v1648, %v1864
        %v1905 = vadd.f32 %v1649, %v1866
        %v1906 = vadd.f32 %v1650, %v1797
        %v1907 = vadd.f32 %v1651, %v1799
        %v1908 = vadd.f32 %v1652, %v1870
        %v1909 = vadd.f32 %v1653, %v1872
        %v1910 = vadd.f32 %v1654, %v1801
        %v1911 = vadd.f32 %v1655, %v1803
        %v1912 = vadd.f32 %v1656, %v1874
        %v1913 = vadd.f32 %v1657, %v1876
        %v1914 = vadd.f32 %v1658, %v1807
        %v1915 = vadd.f32 %v1659, %v1809
        %v1916 = vadd.f32 %v1660, %v1880
        %v1917 = vadd.f32 %v1661, %v1882
        %v1918 = vadd.f32 %v1662, %v1811
        %v1919 = vadd.f32 %v1663, %v1813
        %v1920 = vadd.f32 %v1664, %v1884
        %v1921 = vadd.f32 %v1665, %v1886
        %v1922 = vadd.f32 %v1666, %v1817
        %v1923 = vadd.f32 %v1667, %v1819
        %v1924 = vadd.f32 %v1668, %v1890
        %v1925 = vadd.f32 %v1669, %v1892
        %v1926 = vadd.f32 %v1670, %v1821
        %v1927 = vadd.f32 %v1671, %v1823
        %v1928 = vadd.f32 %v1672, %v1894
        %v1929 = vadd.f32 %v1673, %v1896
        %s1930 = scalar_lea.vmem %s6, 128
        %v1931 = vld [vmem:[%s1930] sm:$0xf]
        %v1932 = vld [vmem:[%s1930 + $0x4] sm:$0xf]
        %v1933 = vld [vmem:[%s1930 + $0x8] sm:$0xf]
        %v1934 = vld [vmem:[%s1930 + $0xc] sm:$0xf]
        %v1935 = vld [vmem:[%s1930 + $0x10] sm:$0xf]
        %v1936 = vld [vmem:[%s1930 + $0x14] sm:$0xf]
        %v1937 = vld [vmem:[%s1930 + $0x18] sm:$0xf]
        %v1938 = vld [vmem:[%s1930 + $0x1c] sm:$0xf]
        %v1947 = vunpack.c.l.b16 %v1931
        %v1948 = vunpack.c.l.b16 %v1932
        %v1949 = vunpack.c.l.b16 %v1933
        %v1950 = vunpack.c.l.b16 %v1934
        %v1951 = vunpack.c.l.b16 %v1935
        %v1952 = vunpack.c.l.b16 %v1936
        %v1953 = vunpack.c.l.b16 %v1937
        %v1954 = vunpack.c.l.b16 %v1938
        %v1955 = vpack.c.b16 %v1948, %v1947
        %v1956 = vpack.c.b16 %v1950, %v1949
        %v1957 = vpack.c.b16 %v1952, %v1951
        %v1958 = vpack.c.b16 %v1954, %v1953
        %1959 = vrot.lane.b32.xlu0 %v987, 124
        %v1960 = vpop.permute.xlu0 %1959
        %1961 = vrot.lane.b32.xlu0 %v988, 124
        %v1962 = vpop.permute.xlu0 %1961
        %1963 = vrot.lane.b32.xlu0 %v989, 124
        %v1964 = vpop.permute.xlu0 %1963
        %1965 = vrot.lane.b32.xlu0 %v990, 124
        %v1966 = vpop.permute.xlu0 %1965
        %1967 = vrot.lane.b32.xlu0 %v1003, 124
        %v1968 = vpop.permute.xlu0 %1967
        %1969 = vrot.lane.b32.xlu0 %v991, 124
        %v1970 = vpop.permute.xlu0 %1969
        %1971 = vrot.lane.b32.xlu0 %v992, 124
        %v1972 = vpop.permute.xlu0 %1971
        %1973 = vrot.lane.b32.xlu0 %v993, 124
        %v1974 = vpop.permute.xlu0 %1973
        %1975 = vrot.lane.b32.xlu0 %v994, 124
        %v1976 = vpop.permute.xlu0 %1975
        %1977 = vrot.lane.b32.xlu0 %v1004, 124
        %v1978 = vpop.permute.xlu0 %1977
        %vm1979 = vcmask 1014784
        %v1980 = vsel %vm1979, %v1960, %v1962
        %v1981 = vsel %vm1979, %v1962, %v1964
        %v1982 = vsel %vm1979, %v1964, %v1966
        %v1983 = vsel %vm1979, %v1966, %v1968
        %v1984 = vsel %vm1979, %v1970, %v1972
        %v1985 = vsel %vm1979, %v1972, %v1974
        %v1986 = vsel %vm1979, %v1974, %v1976
        %v1987 = vsel %vm1979, %v1976, %v1978
        %v1997 = vsel %vm1081, %v1955, 0
        %v2000 = vsel %vm1081, %v1956, 0
        %v2003 = vsel %vm1081, %v1957, 0
        %v2006 = vsel %vm1081, %v1958, 0
        %2008 = vmatprep.subr.bf16.mxu0 %v1981
        %2009 = vmatpush1.bf16.msra.mxu0 %v1980
        %2010 = vmatprep.subr.bf16.mxu0 %v1985
        %2011 = vmatpush1.bf16.msra.mxu0 %v1984
        %2012 = vmatprep.subr.bf16.mxu0 0
        %2013 = vmatpush1.bf16.msra.mxu0 0
        %2014 = vmatprep.subr.bf16.mxu0 0
        %2015 = vmatpush1.bf16.msra.mxu0 0
        %2016 = vmatprep.subr.bf16.mxu0 0
        %2017 = vmatpush1.bf16.msra.mxu0 0
        %2018 = vmatprep.subr.bf16.mxu0 0
        %2019 = vmatpush1.bf16.msra.mxu0 0
        %2020 = vmatprep.subr.bf16.mxu0 0
        %2021 = vmatpush1.bf16.msra.mxu0 0
        %2022 = vmatprep.subr.bf16.mxu0 0
        %2023 = vmatpush1.bf16.msra.mxu0 0
        %2024 = vmatprep.subr.bf16.mxu0 0
        %2025 = vmatpush1.bf16.msra.mxu0 0
        %2026 = vmatprep.subr.bf16.mxu0 0
        %2027 = vmatpush1.bf16.msra.mxu0 0
        %2028 = vmatprep.subr.bf16.mxu0 0
        %2029 = vmatpush1.bf16.msra.mxu0 0
        %2030 = vmatprep.subr.bf16.mxu0 0
        %2031 = vmatpush1.bf16.msra.mxu0 0
        %2032 = vmatprep.subr.bf16.mxu0 0
        %2033 = vmatpush1.bf16.msra.mxu0 0
        %2034 = vmatprep.subr.bf16.mxu0 0
        %2035 = vmatpush1.bf16.msra.mxu0 0
        %2036 = vmatprep.subr.bf16.mxu0 0
        %2037 = vmatpush1.bf16.msra.mxu0 0
        %2038 = vmatprep.subr.bf16.mxu0 0
        %2039 = vmatpush1.bf16.msra.mxu0 0
        %2040 = vmatprep.mubr.bf16.mxu0 0
        %2041 = vmatmul.mubr.bf16.gmra.mrb[0].mxu0 %v1997
        %v2042 = vpop.f32.mrb[0].mxu0
        %v2043 = vadd.f32 0.0, %v2042
        %v2044 = vpop.f32.mrb[0].mxu0
        %v2045 = vadd.f32 0.0, %v2044
        %v2046 = vpop.f32.mrb[0].mxu0
        %v2047 = vadd.f32 0.0, %v2046
        %v2048 = vpop.f32.mrb[0].mxu0
        %v2049 = vadd.f32 0.0, %v2048
        %2050 = vmatprep.mubr.bf16.mxu0 0
        %2051 = vmatmul.mubr.bf16.gmra.mrb[0].mxu0 %v2000
        %v2052 = vpop.f32.mrb[0].mxu0
        %v2053 = vadd.f32 0.0, %v2052
        %v2054 = vpop.f32.mrb[0].mxu0
        %v2055 = vadd.f32 0.0, %v2054
        %v2056 = vpop.f32.mrb[0].mxu0
        %v2057 = vadd.f32 0.0, %v2056
        %v2058 = vpop.f32.mrb[0].mxu0
        %v2059 = vadd.f32 0.0, %v2058
        %2060 = vmatprep.mubr.bf16.mxu0 0
        %2061 = vmatmul.mubr.bf16.gmra.mrb[0].mxu0 %v2003
        %v2062 = vpop.f32.mrb[0].mxu0
        %v2063 = vadd.f32 0.0, %v2062
        %v2064 = vpop.f32.mrb[0].mxu0
        %v2065 = vadd.f32 0.0, %v2064
        %v2066 = vpop.f32.mrb[0].mxu0
        %v2067 = vadd.f32 0.0, %v2066
        %v2068 = vpop.f32.mrb[0].mxu0
        %v2069 = vadd.f32 0.0, %v2068
        %2070 = vmatprep.mubr.bf16.mxu0 0
        %2071 = vmatmul.mubr.bf16.gmra.mrb[0].mxu0 %v2006
        %v2072 = vpop.f32.mrb[0].mxu0
        %v2073 = vadd.f32 0.0, %v2072
        %v2074 = vpop.f32.mrb[0].mxu0
        %v2075 = vadd.f32 0.0, %v2074
        %v2076 = vpop.f32.mrb[0].mxu0
        %v2077 = vadd.f32 0.0, %v2076
        %v2078 = vpop.f32.mrb[0].mxu0
        %v2079 = vadd.f32 0.0, %v2078
        %2080 = vdwg.mxu0
        %2081 = vmatprep.subr.bf16.mxu0 %v1983
        %2082 = vmatpush1.bf16.msra.mxu0 %v1982
        %2083 = vmatprep.subr.bf16.mxu0 %v1987
        %2084 = vmatpush1.bf16.msra.mxu0 %v1986
        %2085 = vmatprep.subr.bf16.mxu0 0
        %2086 = vmatpush1.bf16.msra.mxu0 0
        %2087 = vmatprep.subr.bf16.mxu0 0
        %2088 = vmatpush1.bf16.msra.mxu0 0
        %2089 = vmatprep.subr.bf16.mxu0 0
        %2090 = vmatpush1.bf16.msra.mxu0 0
        %2091 = vmatprep.subr.bf16.mxu0 0
        %2092 = vmatpush1.bf16.msra.mxu0 0
        %2093 = vmatprep.subr.bf16.mxu0 0
        %2094 = vmatpush1.bf16.msra.mxu0 0
        %2095 = vmatprep.subr.bf16.mxu0 0
        %2096 = vmatpush1.bf16.msra.mxu0 0
        %2097 = vmatprep.subr.bf16.mxu0 0
        %2098 = vmatpush1.bf16.msra.mxu0 0
        %2099 = vmatprep.subr.bf16.mxu0 0
        %2100 = vmatpush1.bf16.msra.mxu0 0
        %2101 = vmatprep.subr.bf16.mxu0 0
        %2102 = vmatpush1.bf16.msra.mxu0 0
        %2103 = vmatprep.subr.bf16.mxu0 0
        %2104 = vmatpush1.bf16.msra.mxu0 0
        %2105 = vmatprep.subr.bf16.mxu0 0
        %2106 = vmatpush1.bf16.msra.mxu0 0
        %2107 = vmatprep.subr.bf16.mxu0 0
        %2108 = vmatpush1.bf16.msra.mxu0 0
        %2109 = vmatprep.subr.bf16.mxu0 0
        %2110 = vmatpush1.bf16.msra.mxu0 0
        %2111 = vmatprep.subr.bf16.mxu0 0
        %2112 = vmatpush1.bf16.msra.mxu0 0
        %2113 = vmatprep.mubr.bf16.mxu0 0
        %2114 = vmatmul.mubr.bf16.gmra.mrb[0].mxu0 %v1997
        %v2115 = vpop.f32.mrb[0].mxu0
        %v2116 = vadd.f32 0.0, %v2115
        %v2117 = vpop.f32.mrb[0].mxu0
        %v2118 = vadd.f32 0.0, %v2117
        %v2119 = vpop.f32.mrb[0].mxu0
        %v2120 = vadd.f32 0.0, %v2119
        %v2121 = vpop.f32.mrb[0].mxu0
        %v2122 = vadd.f32 0.0, %v2121
        %2123 = vmatprep.mubr.bf16.mxu0 0
        %2124 = vmatmul.mubr.bf16.gmra.mrb[0].mxu0 %v2000
        %v2125 = vpop.f32.mrb[0].mxu0
        %v2126 = vadd.f32 0.0, %v2125
        %v2127 = vpop.f32.mrb[0].mxu0
        %v2128 = vadd.f32 0.0, %v2127
        %v2129 = vpop.f32.mrb[0].mxu0
        %v2130 = vadd.f32 0.0, %v2129
        %v2131 = vpop.f32.mrb[0].mxu0
        %v2132 = vadd.f32 0.0, %v2131
        %2133 = vmatprep.mubr.bf16.mxu0 0
        %2134 = vmatmul.mubr.bf16.gmra.mrb[0].mxu0 %v2003
        %v2135 = vpop.f32.mrb[0].mxu0
        %v2136 = vadd.f32 0.0, %v2135
        %v2137 = vpop.f32.mrb[0].mxu0
        %v2138 = vadd.f32 0.0, %v2137
        %v2139 = vpop.f32.mrb[0].mxu0
        %v2140 = vadd.f32 0.0, %v2139
        %v2141 = vpop.f32.mrb[0].mxu0
        %v2142 = vadd.f32 0.0, %v2141
        %2143 = vmatprep.mubr.bf16.mxu0 0
        %2144 = vmatmul.mubr.bf16.gmra.mrb[0].mxu0 %v2006
        %v2145 = vpop.f32.mrb[0].mxu0
        %v2146 = vadd.f32 0.0, %v2145
        %v2147 = vpop.f32.mrb[0].mxu0
        %v2148 = vadd.f32 0.0, %v2147
        %v2149 = vpop.f32.mrb[0].mxu0
        %v2150 = vadd.f32 0.0, %v2149
        %v2151 = vpop.f32.mrb[0].mxu0
        %v2152 = vadd.f32 0.0, %v2151
        %2153 = vdwg.mxu0
        %v2154 = vadd.f32 %v1898, %v2043
        %v2155 = vadd.f32 %v1899, %v2045
        %v2156 = vadd.f32 %v1900, %v2116
        %v2157 = vadd.f32 %v1901, %v2118
        %v2158 = vadd.f32 %v1902, %v2047
        %v2159 = vadd.f32 %v1903, %v2049
        %v2160 = vadd.f32 %v1904, %v2120
        %v2161 = vadd.f32 %v1905, %v2122
        %v2162 = vadd.f32 %v1906, %v2053
        %v2163 = vadd.f32 %v1907, %v2055
        %v2164 = vadd.f32 %v1908, %v2126
        %v2165 = vadd.f32 %v1909, %v2128
        %v2166 = vadd.f32 %v1910, %v2057
        %v2167 = vadd.f32 %v1911, %v2059
        %v2168 = vadd.f32 %v1912, %v2130
        %v2169 = vadd.f32 %v1913, %v2132
        %v2170 = vadd.f32 %v1914, %v2063
        %v2171 = vadd.f32 %v1915, %v2065
        %v2172 = vadd.f32 %v1916, %v2136
        %v2173 = vadd.f32 %v1917, %v2138
        %v2174 = vadd.f32 %v1918, %v2067
        %v2175 = vadd.f32 %v1919, %v2069
        %v2176 = vadd.f32 %v1920, %v2140
        %v2177 = vadd.f32 %v1921, %v2142
        %v2178 = vadd.f32 %v1922, %v2073
        %v2179 = vadd.f32 %v1923, %v2075
        %v2180 = vadd.f32 %v1924, %v2146
        %v2181 = vadd.f32 %v1925, %v2148
        %v2182 = vadd.f32 %v1926, %v2077
        %v2183 = vadd.f32 %v1927, %v2079
        %v2184 = vadd.f32 %v1928, %v2150
        %v2185 = vadd.f32 %v1929, %v2152
        %v2186 = vld [vmem:[%s788] sm:$0xff]
        %v2187 = vld [vmem:[%s788 + $0x8] sm:$0xff]
        %v2188 = vld [vmem:[%s788 + $0x10] sm:$0xff]
        %v2189 = vld [vmem:[%s788 + $0x18] sm:$0xff]
        %v2190 = vld [vmem:[%s788 + $0x20] sm:$0xff]
        %v2191 = vld [vmem:[%s788 + $0x28] sm:$0xff]
        %v2192 = vld [vmem:[%s788 + $0x30] sm:$0xff]
        %v2193 = vld [vmem:[%s788 + $0x38] sm:$0xff]
        %2195 = vset.pattern.permute.xlu0 0
        %2196 = vperm.xlu0 %2195, %v2186
        %v2197 = vpop.permute.xlu0 %2196
        %2200 = vset.pattern.permute.xlu0 0
        %2201 = vperm.xlu0 %2200, %v2187
        %v2202 = vpop.permute.xlu0 %2201
        %2205 = vset.pattern.permute.xlu0 0
        %2206 = vperm.xlu0 %2205, %v2188
        %v2207 = vpop.permute.xlu0 %2206
        %2210 = vset.pattern.permute.xlu0 0
        %2211 = vperm.xlu0 %2210, %v2189
        %v2212 = vpop.permute.xlu0 %2211
        %2215 = vset.pattern.permute.xlu0 0
        %2216 = vperm.xlu0 %2215, %v2190
        %v2217 = vpop.permute.xlu0 %2216
        %2220 = vset.pattern.permute.xlu0 0
        %2221 = vperm.xlu0 %2220, %v2191
        %v2222 = vpop.permute.xlu0 %2221
        %2225 = vset.pattern.permute.xlu0 0
        %2226 = vperm.xlu0 %2225, %v2192
        %v2227 = vpop.permute.xlu0 %2226
        %2230 = vset.pattern.permute.xlu0 0
        %2231 = vperm.xlu0 %2230, %v2193
        %v2232 = vpop.permute.xlu0 %2231
        %v2234 = vadd.f32 %v2154, %v2197
        %v2235 = vadd.f32 %v2155, %v2197
        %v2236 = vadd.f32 %v2156, %v2197
        %v2237 = vadd.f32 %v2157, %v2197
        %v2238 = vadd.f32 %v2158, %v2202
        %v2239 = vadd.f32 %v2159, %v2202
        %v2240 = vadd.f32 %v2160, %v2202
        %v2241 = vadd.f32 %v2161, %v2202
        %v2242 = vadd.f32 %v2162, %v2207
        %v2243 = vadd.f32 %v2163, %v2207
        %v2244 = vadd.f32 %v2164, %v2207
        %v2245 = vadd.f32 %v2165, %v2207
        %v2246 = vadd.f32 %v2166, %v2212
        %v2247 = vadd.f32 %v2167, %v2212
        %v2248 = vadd.f32 %v2168, %v2212
        %v2249 = vadd.f32 %v2169, %v2212
        %v2250 = vadd.f32 %v2170, %v2217
        %v2251 = vadd.f32 %v2171, %v2217
        %v2252 = vadd.f32 %v2172, %v2217
        %v2253 = vadd.f32 %v2173, %v2217
        %v2254 = vadd.f32 %v2174, %v2222
        %v2255 = vadd.f32 %v2175, %v2222
        %v2256 = vadd.f32 %v2176, %v2222
        %v2257 = vadd.f32 %v2177, %v2222
        %v2258 = vadd.f32 %v2178, %v2227
        %v2259 = vadd.f32 %v2179, %v2227
        %v2260 = vadd.f32 %v2180, %v2227
        %v2261 = vadd.f32 %v2181, %v2227
        %v2262 = vadd.f32 %v2182, %v2232
        %v2263 = vadd.f32 %v2183, %v2232
        %v2264 = vadd.f32 %v2184, %v2232
        %v2265 = vadd.f32 %v2185, %v2232
        %v2266 = vtanh.pop %v2234
        %v2267 = vtanh.pop %v2235
        %v2268 = vtanh.pop %v2236
        %v2269 = vtanh.pop %v2237
        %v2270 = vtanh.pop %v2238
        %v2271 = vtanh.pop %v2239
        %v2272 = vtanh.pop %v2240
        %v2273 = vtanh.pop %v2241
        %v2274 = vtanh.pop %v2242
        %v2275 = vtanh.pop %v2243
        %v2276 = vtanh.pop %v2244
        %v2277 = vtanh.pop %v2245
        %v2278 = vtanh.pop %v2246
        %v2279 = vtanh.pop %v2247
        %v2280 = vtanh.pop %v2248
        %v2281 = vtanh.pop %v2249
        %v2282 = vxor.u32 %v2250, 2147483648
        %v2283 = vxor.u32 %v2251, 2147483648
        %v2284 = vxor.u32 %v2252, 2147483648
        %v2285 = vxor.u32 %v2253, 2147483648
        %v2286 = vxor.u32 %v2254, 2147483648
        %v2287 = vxor.u32 %v2255, 2147483648
        %v2288 = vxor.u32 %v2256, 2147483648
        %v2289 = vxor.u32 %v2257, 2147483648
        %v2290 = vxor.u32 %v2258, 2147483648
        %v2291 = vxor.u32 %v2259, 2147483648
        %v2292 = vxor.u32 %v2260, 2147483648
        %v2293 = vxor.u32 %v2261, 2147483648
        %v2294 = vxor.u32 %v2262, 2147483648
        %v2295 = vxor.u32 %v2263, 2147483648
        %v2296 = vxor.u32 %v2264, 2147483648
        %v2297 = vxor.u32 %v2265, 2147483648
        %v2298 = vmul.f32 %v2282, 1.442695
        %v2299 = vpow.pop %v2298
        %v2300 = vmul.f32 %v2283, 1.442695
        %v2301 = vpow.pop %v2300
        %v2302 = vmul.f32 %v2284, 1.442695
        %v2303 = vpow.pop %v2302
        %v2304 = vmul.f32 %v2285, 1.442695
        %v2305 = vpow.pop %v2304
        %v2306 = vmul.f32 %v2286, 1.442695
        %v2307 = vpow.pop %v2306
        %v2308 = vmul.f32 %v2287, 1.442695
        %v2309 = vpow.pop %v2308
        %v2310 = vmul.f32 %v2288, 1.442695
        %v2311 = vpow.pop %v2310
        %v2312 = vmul.f32 %v2289, 1.442695
        %v2313 = vpow.pop %v2312
        %v2314 = vmul.f32 %v2290, 1.442695
        %v2315 = vpow.pop %v2314
        %v2316 = vmul.f32 %v2291, 1.442695
        %v2317 = vpow.pop %v2316
        %v2318 = vmul.f32 %v2292, 1.442695
        %v2319 = vpow.pop %v2318
        %v2320 = vmul.f32 %v2293, 1.442695
        %v2321 = vpow.pop %v2320
        %v2322 = vmul.f32 %v2294, 1.442695
        %v2323 = vpow.pop %v2322
        %v2324 = vmul.f32 %v2295, 1.442695
        %v2325 = vpow.pop %v2324
        %v2326 = vmul.f32 %v2296, 1.442695
        %v2327 = vpow.pop %v2326
        %v2328 = vmul.f32 %v2297, 1.442695
        %v2329 = vpow.pop %v2328
        %v2330 = vadd.f32 %v2299, 1.0
        %v2331 = vadd.f32 %v2301, 1.0
        %v2332 = vadd.f32 %v2303, 1.0
        %v2333 = vadd.f32 %v2305, 1.0
        %v2334 = vadd.f32 %v2307, 1.0
        %v2335 = vadd.f32 %v2309, 1.0
        %v2336 = vadd.f32 %v2311, 1.0
        %v2337 = vadd.f32 %v2313, 1.0
        %v2338 = vadd.f32 %v2315, 1.0
        %v2339 = vadd.f32 %v2317, 1.0
        %v2340 = vadd.f32 %v2319, 1.0
        %v2341 = vadd.f32 %v2321, 1.0
        %v2342 = vadd.f32 %v2323, 1.0
        %v2343 = vadd.f32 %v2325, 1.0
        %v2344 = vadd.f32 %v2327, 1.0
        %v2345 = vadd.f32 %v2329, 1.0
        %v2346 = vrcp.pop %v2330
        %v2347 = vmul.f32 1.0, %v2346
        %v2348 = vrcp.pop %v2331
        %v2349 = vmul.f32 1.0, %v2348
        %v2350 = vrcp.pop %v2332
        %v2351 = vmul.f32 1.0, %v2350
        %v2352 = vrcp.pop %v2333
        %v2353 = vmul.f32 1.0, %v2352
        %v2354 = vrcp.pop %v2334
        %v2355 = vmul.f32 1.0, %v2354
        %v2356 = vrcp.pop %v2335
        %v2357 = vmul.f32 1.0, %v2356
        %v2358 = vrcp.pop %v2336
        %v2359 = vmul.f32 1.0, %v2358
        %v2360 = vrcp.pop %v2337
        %v2361 = vmul.f32 1.0, %v2360
        %v2362 = vrcp.pop %v2338
        %v2363 = vmul.f32 1.0, %v2362
        %v2364 = vrcp.pop %v2339
        %v2365 = vmul.f32 1.0, %v2364
        %v2366 = vrcp.pop %v2340
        %v2367 = vmul.f32 1.0, %v2366
        %v2368 = vrcp.pop %v2341
        %v2369 = vmul.f32 1.0, %v2368
        %v2370 = vrcp.pop %v2342
        %v2371 = vmul.f32 1.0, %v2370
        %v2372 = vrcp.pop %v2343
        %v2373 = vmul.f32 1.0, %v2372
        %v2374 = vrcp.pop %v2344
        %v2375 = vmul.f32 1.0, %v2374
        %v2376 = vrcp.pop %v2345
        %v2377 = vmul.f32 1.0, %v2376
        %v2378 = vmul.f32 %v2266, %v2347
        %v2379 = vmul.f32 %v2267, %v2349
        %v2380 = vmul.f32 %v2268, %v2351
        %v2381 = vmul.f32 %v2269, %v2353
        %v2382 = vmul.f32 %v2270, %v2355
        %v2383 = vmul.f32 %v2271, %v2357
        %v2384 = vmul.f32 %v2272, %v2359
        %v2385 = vmul.f32 %v2273, %v2361
        %v2386 = vmul.f32 %v2274, %v2363
        %v2387 = vmul.f32 %v2275, %v2365
        %v2388 = vmul.f32 %v2276, %v2367
        %v2389 = vmul.f32 %v2277, %v2369
        %v2390 = vmul.f32 %v2278, %v2371
        %v2391 = vmul.f32 %v2279, %v2373
        %v2392 = vmul.f32 %v2280, %v2375
        %v2393 = vmul.f32 %v2281, %v2377
        %v2394 = vld [vmem:[%s7] sm:$0xf]
        %v2395 = vld [vmem:[%s7 + $0x4] sm:$0xf]
        %v2396 = vld [vmem:[%s7 + $0x8] sm:$0xf]
        %v2397 = vld [vmem:[%s7 + $0xc] sm:$0xf]
        %v2398 = vld [vmem:[%s7 + $0x10] sm:$0xf]
        %v2399 = vld [vmem:[%s7 + $0x14] sm:$0xf]
        %v2400 = vld [vmem:[%s7 + $0x18] sm:$0xf]
        %v2401 = vld [vmem:[%s7 + $0x1c] sm:$0xf]
        %v2402 = vpack.c.bf16 %v2382, %v2378
        %v2403 = vpack.c.bf16 %v2383, %v2379
        %v2404 = vpack.c.bf16 %v2384, %v2380
        %v2405 = vpack.c.bf16 %v2385, %v2381
        %v2406 = vpack.c.bf16 %v2390, %v2386
        %v2407 = vpack.c.bf16 %v2391, %v2387
        %v2408 = vpack.c.bf16 %v2392, %v2388
        %v2409 = vpack.c.bf16 %v2393, %v2389
        %v2410 = vld [vmem:[%s8] sm:$0xff]
        %v2411 = vld [vmem:[%s8 + $0x8] sm:$0xff]
        %v2412 = vld [vmem:[%s8 + $0x10] sm:$0xff]
        %v2413 = vld [vmem:[%s8 + $0x18] sm:$0xff]
        %v2414 = vld [vmem:[%s8 + $0x20] sm:$0xff]
        %v2415 = vld [vmem:[%s8 + $0x28] sm:$0xff]
        %v2416 = vld [vmem:[%s8 + $0x30] sm:$0xff]
        %v2417 = vld [vmem:[%s8 + $0x38] sm:$0xff]
        %2419 = vset.pattern.permute.xlu0 0
        %2420 = vperm.xlu0 %2419, %v2410
        %v2421 = vpop.permute.xlu0 %2420
        %2424 = vset.pattern.permute.xlu0 0
        %2425 = vperm.xlu0 %2424, %v2411
        %v2426 = vpop.permute.xlu0 %2425
        %2429 = vset.pattern.permute.xlu0 0
        %2430 = vperm.xlu0 %2429, %v2412
        %v2431 = vpop.permute.xlu0 %2430
        %2434 = vset.pattern.permute.xlu0 0
        %2435 = vperm.xlu0 %2434, %v2413
        %v2436 = vpop.permute.xlu0 %2435
        %2439 = vset.pattern.permute.xlu0 0
        %2440 = vperm.xlu0 %2439, %v2414
        %v2441 = vpop.permute.xlu0 %2440
        %2444 = vset.pattern.permute.xlu0 0
        %2445 = vperm.xlu0 %2444, %v2415
        %v2446 = vpop.permute.xlu0 %2445
        %2449 = vset.pattern.permute.xlu0 0
        %2450 = vperm.xlu0 %2449, %v2416
        %v2451 = vpop.permute.xlu0 %2450
        %2454 = vset.pattern.permute.xlu0 0
        %2455 = vperm.xlu0 %2454, %v2417
        %v2456 = vpop.permute.xlu0 %2455
        %v2466 = vunpack.c.l.b16 %v2394
        %v2467 = vunpack.c.l.b16 %v2395
        %v2468 = vunpack.c.l.b16 %v2396
        %v2469 = vunpack.c.l.b16 %v2397
        %v2470 = vunpack.c.l.b16 %v2398
        %v2471 = vunpack.c.l.b16 %v2399
        %v2472 = vunpack.c.l.b16 %v2400
        %v2473 = vunpack.c.l.b16 %v2401
        %v2474 = vpack.c.b16 %v2467, %v2466
        %v2475 = vpack.c.b16 %v2469, %v2468
        %v2476 = vpack.c.b16 %v2471, %v2470
        %v2477 = vpack.c.b16 %v2473, %v2472
        %v2479 = vsel %vm1081, %v2474, 0
        %v2482 = vsel %vm1081, %v2475, 0
        %v2485 = vsel %vm1081, %v2476, 0
        %v2488 = vsel %vm1081, %v2477, 0
        %2490 = vmatprep.subr.bf16.mxu0 %v2403
        %2491 = vmatpush1.bf16.msra.mxu0 %v2402
        %2492 = vmatprep.subr.bf16.mxu0 %v2407
        %2493 = vmatpush1.bf16.msra.mxu0 %v2406
        %2494 = vmatprep.subr.bf16.mxu0 0
        %2495 = vmatpush1.bf16.msra.mxu0 0
        %2496 = vmatprep.subr.bf16.mxu0 0
        %2497 = vmatpush1.bf16.msra.mxu0 0
        %2498 = vmatprep.subr.bf16.mxu0 0
        %2499 = vmatpush1.bf16.msra.mxu0 0
        %2500 = vmatprep.subr.bf16.mxu0 0
        %2501 = vmatpush1.bf16.msra.mxu0 0
        %2502 = vmatprep.subr.bf16.mxu0 0
        %2503 = vmatpush1.bf16.msra.mxu0 0
        %2504 = vmatprep.subr.bf16.mxu0 0
        %2505 = vmatpush1.bf16.msra.mxu0 0
        %2506 = vmatprep.subr.bf16.mxu0 0
        %2507 = vmatpush1.bf16.msra.mxu0 0
        %2508 = vmatprep.subr.bf16.mxu0 0
        %2509 = vmatpush1.bf16.msra.mxu0 0
        %2510 = vmatprep.subr.bf16.mxu0 0
        %2511 = vmatpush1.bf16.msra.mxu0 0
        %2512 = vmatprep.subr.bf16.mxu0 0
        %2513 = vmatpush1.bf16.msra.mxu0 0
        %2514 = vmatprep.subr.bf16.mxu0 0
        %2515 = vmatpush1.bf16.msra.mxu0 0
        %2516 = vmatprep.subr.bf16.mxu0 0
        %2517 = vmatpush1.bf16.msra.mxu0 0
        %2518 = vmatprep.subr.bf16.mxu0 0
        %2519 = vmatpush1.bf16.msra.mxu0 0
        %2520 = vmatprep.subr.bf16.mxu0 0
        %2521 = vmatpush1.bf16.msra.mxu0 0
        %2522 = vmatprep.mubr.bf16.mxu0 0
        %2523 = vmatmul.mubr.bf16.gmra.mrb[0].mxu0 %v2479
        %v2524 = vpop.f32.mrb[0].mxu0
        %v2525 = vadd.f32 %v2421, %v2524
        %v2526 = vpop.f32.mrb[0].mxu0
        %v2527 = vadd.f32 %v2421, %v2526
        %v2528 = vpop.f32.mrb[0].mxu0
        %v2529 = vadd.f32 %v2426, %v2528
        %v2530 = vpop.f32.mrb[0].mxu0
        %v2531 = vadd.f32 %v2426, %v2530
        %2532 = vmatprep.mubr.bf16.mxu0 0
        %2533 = vmatmul.mubr.bf16.gmra.mrb[0].mxu0 %v2482
        %v2534 = vpop.f32.mrb[0].mxu0
        %v2535 = vadd.f32 %v2431, %v2534
        %v2536 = vpop.f32.mrb[0].mxu0
        %v2537 = vadd.f32 %v2431, %v2536
        %v2538 = vpop.f32.mrb[0].mxu0
        %v2539 = vadd.f32 %v2436, %v2538
        %v2540 = vpop.f32.mrb[0].mxu0
        %v2541 = vadd.f32 %v2436, %v2540
        %2542 = vmatprep.mubr.bf16.mxu0 0
        %2543 = vmatmul.mubr.bf16.gmra.mrb[0].mxu0 %v2485
        %v2544 = vpop.f32.mrb[0].mxu0
        %v2545 = vpop.f32.mrb[0].mxu0
        %v2546 = vadd.f32 %v2441, %v2545
        %v2547 = vpop.f32.mrb[0].mxu0
        %v2548 = vpop.f32.mrb[0].mxu0
        %v2549 = vadd.f32 %v2446, %v2548
        %2550 = vmatprep.mubr.bf16.mxu0 0
        %2551 = vmatmul.mubr.bf16.gmra.mrb[0].mxu0 %v2488
        %v2552 = vpop.f32.mrb[0].mxu0
        %v2553 = vpop.f32.mrb[0].mxu0
        %v2554 = vadd.f32 %v2451, %v2553
        %v2555 = vpop.f32.mrb[0].mxu0
        %v2556 = vpop.f32.mrb[0].mxu0
        %v2557 = vadd.f32 %v2456, %v2556
        %2558 = vdwg.mxu0
        %2559 = vmatprep.subr.bf16.mxu0 %v2405
        %2560 = vmatpush1.bf16.msra.mxu0 %v2404
        %2561 = vmatprep.subr.bf16.mxu0 %v2409
        %2562 = vmatpush1.bf16.msra.mxu0 %v2408
        %2563 = vmatprep.subr.bf16.mxu0 0
        %2564 = vmatpush1.bf16.msra.mxu0 0
        %2565 = vmatprep.subr.bf16.mxu0 0
        %2566 = vmatpush1.bf16.msra.mxu0 0
        %2567 = vmatprep.subr.bf16.mxu0 0
        %2568 = vmatpush1.bf16.msra.mxu0 0
        %2569 = vmatprep.subr.bf16.mxu0 0
        %2570 = vmatpush1.bf16.msra.mxu0 0
        %2571 = vmatprep.subr.bf16.mxu0 0
        %2572 = vmatpush1.bf16.msra.mxu0 0
        %2573 = vmatprep.subr.bf16.mxu0 0
        %2574 = vmatpush1.bf16.msra.mxu0 0
        %2575 = vmatprep.subr.bf16.mxu0 0
        %2576 = vmatpush1.bf16.msra.mxu0 0
        %2577 = vmatprep.subr.bf16.mxu0 0
        %2578 = vmatpush1.bf16.msra.mxu0 0
        %2579 = vmatprep.subr.bf16.mxu0 0
        %2580 = vmatpush1.bf16.msra.mxu0 0
        %2581 = vmatprep.subr.bf16.mxu0 0
        %2582 = vmatpush1.bf16.msra.mxu0 0
        %2583 = vmatprep.subr.bf16.mxu0 0
        %2584 = vmatpush1.bf16.msra.mxu0 0
        %2585 = vmatprep.subr.bf16.mxu0 0
        %2586 = vmatpush1.bf16.msra.mxu0 0
        %2587 = vmatprep.subr.bf16.mxu0 0
        %2588 = vmatpush1.bf16.msra.mxu0 0
        %2589 = vmatprep.subr.bf16.mxu0 0
        %2590 = vmatpush1.bf16.msra.mxu0 0
        %2591 = vmatprep.mubr.bf16.mxu0 0
        %2592 = vmatmul.mubr.bf16.gmra.mrb[0].mxu0 %v2479
        %v2593 = vpop.f32.mrb[0].mxu0
        %v2594 = vadd.f32 %v2421, %v2593
        %v2595 = vpop.f32.mrb[0].mxu0
        %v2596 = vadd.f32 %v2421, %v2595
        %v2597 = vpop.f32.mrb[0].mxu0
        %v2598 = vadd.f32 %v2426, %v2597
        %v2599 = vpop.f32.mrb[0].mxu0
        %v2600 = vadd.f32 %v2426, %v2599
        %2601 = vmatprep.mubr.bf16.mxu0 0
        %2602 = vmatmul.mubr.bf16.gmra.mrb[0].mxu0 %v2482
        %v2603 = vpop.f32.mrb[0].mxu0
        %v2604 = vadd.f32 %v2431, %v2603
        %v2605 = vpop.f32.mrb[0].mxu0
        %v2606 = vadd.f32 %v2431, %v2605
        %v2607 = vpop.f32.mrb[0].mxu0
        %v2608 = vadd.f32 %v2436, %v2607
        %v2609 = vpop.f32.mrb[0].mxu0
        %v2610 = vadd.f32 %v2436, %v2609
        %2611 = vmatprep.mubr.bf16.mxu0 0
        %2612 = vmatmul.mubr.bf16.gmra.mrb[0].mxu0 %v2485
        %v2613 = vpop.f32.mrb[0].mxu0
        %v2614 = vadd.f32 %v2441, %v2613
        %v2615 = vpop.f32.mrb[0].mxu0
        %v2616 = vpop.f32.mrb[0].mxu0
        %v2617 = vadd.f32 %v2446, %v2616
        %v2618 = vpop.f32.mrb[0].mxu0
        %2619 = vmatprep.mubr.bf16.mxu0 0
        %2620 = vmatmul.mubr.bf16.gmra.mrb[0].mxu0 %v2488
        %v2621 = vpop.f32.mrb[0].mxu0
        %v2622 = vadd.f32 %v2451, %v2621
        %v2623 = vpop.f32.mrb[0].mxu0
        %v2624 = vpop.f32.mrb[0].mxu0
        %v2625 = vadd.f32 %v2456, %v2624
        %v2626 = vpop.f32.mrb[0].mxu0
        %2627 = vdwg.mxu0
        %v2628 = vadd.f32 %v835, %v2525
        %v2629 = vadd.f32 %v843, %v2527
        %v2630 = vadd.f32 %v844, %v2594
        %v2631 = vadd.f32 %v860, %v2596
        %v2632 = vadd.f32 %v836, %v2529
        %v2633 = vadd.f32 %v845, %v2531
        %v2634 = vadd.f32 %v846, %v2598
        %v2635 = vadd.f32 %v861, %v2600
        %v2636 = vadd.f32 %v837, %v2535
        %v2637 = vadd.f32 %v847, %v2537
        %v2638 = vadd.f32 %v848, %v2604
        %v2639 = vadd.f32 %v862, %v2606
        %v2640 = vadd.f32 %v838, %v2539
        %v2641 = vadd.f32 %v849, %v2541
        %v2642 = vadd.f32 %v850, %v2608
        %v2643 = vadd.f32 %v863, %v2610
        %v2644 = vmul.f32 %v2628, %v894
        %v2645 = vmul.f32 %v2629, %v895
        %v2646 = vmul.f32 %v2630, %v896
        %v2647 = vmul.f32 %v2631, %v897
        %v2648 = vmul.f32 %v2632, %v894
        %v2649 = vmul.f32 %v2633, %v895
        %v2650 = vmul.f32 %v2634, %v896
        %v2651 = vmul.f32 %v2635, %v897
        %v2652 = vmul.f32 %v2636, %v894
        %v2653 = vmul.f32 %v2637, %v895
        %v2654 = vmul.f32 %v2638, %v896
        %v2655 = vmul.f32 %v2639, %v897
        %v2656 = vmul.f32 %v2640, %v894
        %v2657 = vmul.f32 %v2641, %v895
        %v2658 = vmul.f32 %v2642, %v896
        %v2659 = vmul.f32 %v2643, %v897
        %v2660 = vadd.f32 %v2546, 0.0
        %v2661 = vadd.f32 %v2614, 0.0
        %v2662 = vadd.f32 %v2549, 0.0
        %v2663 = vadd.f32 %v2617, 0.0
        %v2664 = vadd.f32 %v2554, 0.0
        %v2665 = vadd.f32 %v2622, 0.0
        %v2666 = vadd.f32 %v2557, 0.0
        %v2667 = vadd.f32 %v2625, 0.0
        %2684 = vrot.lane.b32.xlu0 %v2644, 4
        %v2685 = vpop.permute.xlu0 %2684
        %2686 = vrot.lane.b32.xlu0 %v2645, 4
        %v2687 = vpop.permute.xlu0 %2686
        %2688 = vrot.lane.b32.xlu0 %v2646, 4
        %v2689 = vpop.permute.xlu0 %2688
        %2690 = vrot.lane.b32.xlu0 %v2647, 4
        %v2691 = vpop.permute.xlu0 %2690
        %2692 = vrot.lane.b32.xlu0 %v2648, 4
        %v2693 = vpop.permute.xlu0 %2692
        %2694 = vrot.lane.b32.xlu0 %v2649, 4
        %v2695 = vpop.permute.xlu0 %2694
        %2696 = vrot.lane.b32.xlu0 %v2650, 4
        %v2697 = vpop.permute.xlu0 %2696
        %2698 = vrot.lane.b32.xlu0 %v2651, 4
        %v2699 = vpop.permute.xlu0 %2698
        %2700 = vrot.lane.b32.xlu0 %v2652, 4
        %v2701 = vpop.permute.xlu0 %2700
        %2702 = vrot.lane.b32.xlu0 %v2653, 4
        %v2703 = vpop.permute.xlu0 %2702
        %2704 = vrot.lane.b32.xlu0 %v2654, 4
        %v2705 = vpop.permute.xlu0 %2704
        %2706 = vrot.lane.b32.xlu0 %v2655, 4
        %v2707 = vpop.permute.xlu0 %2706
        %2708 = vrot.lane.b32.xlu0 %v2656, 4
        %v2709 = vpop.permute.xlu0 %2708
        %2710 = vrot.lane.b32.xlu0 %v2657, 4
        %v2711 = vpop.permute.xlu0 %2710
        %2712 = vrot.lane.b32.xlu0 %v2658, 4
        %v2713 = vpop.permute.xlu0 %2712
        %2714 = vrot.lane.b32.xlu0 %v2659, 4
        %v2715 = vpop.permute.xlu0 %2714
        %vm2716 = vcmask 31744
        %v2717 = vsel %vm2716, %v2685, %v2687
        %v2718 = vsel %vm2716, %v2687, %v2689
        %v2719 = vsel %vm2716, %v2689, %v2691
        %v2720 = vsel %vm2716, %v2693, %v2695
        %v2721 = vsel %vm2716, %v2695, %v2697
        %v2722 = vsel %vm2716, %v2697, %v2699
        %v2723 = vsel %vm2716, %v2701, %v2703
        %v2724 = vsel %vm2716, %v2703, %v2705
        %v2725 = vsel %vm2716, %v2705, %v2707
        %v2726 = vsel %vm2716, %v2709, %v2711
        %v2727 = vsel %vm2716, %v2711, %v2713
        %v2728 = vsel %vm2716, %v2713, %v2715
        %v2749 = vsel %vm2716, 0.0, %v2685
        %v2750 = vsel %vm2716, 0.0, %v2693
        %v2751 = vsel %vm2716, 0.0, %v2701
        %v2752 = vsel %vm2716, 0.0, %v2709
        %v2753 = vsel %vm2716, %v2691, 0.0
        %v2754 = vsel %vm2716, %v2699, 0.0
        %v2755 = vsel %vm2716, %v2707, 0.0
        %v2756 = vsel %vm2716, %v2715, 0.0
        %v2757 = vpack.c.bf16 %v2750, %v2749
        %v2758 = vpack.c.bf16 %v2720, %v2717
        %v2759 = vpack.c.bf16 %v2721, %v2718
        %v2760 = vpack.c.bf16 %v2722, %v2719
        %v2761 = vpack.c.bf16 %v2752, %v2751
        %v2762 = vpack.c.bf16 %v2726, %v2723
        %v2763 = vpack.c.bf16 %v2727, %v2724
        %v2764 = vpack.c.bf16 %v2728, %v2725
        %s2765 = scalar_lea.vmem %s6, 160
        %v2766 = vld [vmem:[%s2765] sm:$0xf]
        %v2767 = vld [vmem:[%s2765 + $0x4] sm:$0xf]
        %v2768 = vld [vmem:[%s2765 + $0x8] sm:$0xf]
        %v2769 = vld [vmem:[%s2765 + $0xc] sm:$0xf]
        %v2770 = vld [vmem:[%s2765 + $0x10] sm:$0xf]
        %v2771 = vld [vmem:[%s2765 + $0x14] sm:$0xf]
        %v2772 = vld [vmem:[%s2765 + $0x18] sm:$0xf]
        %v2773 = vld [vmem:[%s2765 + $0x1c] sm:$0xf]
        %v2774 = vpack.c.bf16 %v2754, %v2753
        %v2775 = vpack.c.bf16 %v2756, %v2755
        %s2776 = scalar_lea.vmem %s6, 192
        %v2777 = vld [vmem:[%s2776] sm:$0xf]
        %v2778 = vld [vmem:[%s2776 + $0x4] sm:$0xf]
        %v2779 = vld [vmem:[%s2776 + $0x8] sm:$0xf]
        %v2780 = vld [vmem:[%s2776 + $0xc] sm:$0xf]
        %v2781 = vld [vmem:[%s2776 + $0x10] sm:$0xf]
        %v2782 = vld [vmem:[%s2776 + $0x14] sm:$0xf]
        %v2783 = vld [vmem:[%s2776 + $0x18] sm:$0xf]
        %v2784 = vld [vmem:[%s2776 + $0x1c] sm:$0xf]
        %v2793 = vunpack.c.l.b16 %v2777
        %v2794 = vunpack.c.l.b16 %v2778
        %v2795 = vunpack.c.l.b16 %v2779
        %v2796 = vunpack.c.l.b16 %v2780
        %v2797 = vunpack.c.l.b16 %v2781
        %v2798 = vunpack.c.l.b16 %v2782
        %v2799 = vunpack.c.l.b16 %v2783
        %v2800 = vunpack.c.l.b16 %v2784
        %v2801 = vpack.c.b16 %v2794, %v2793
        %v2802 = vpack.c.b16 %v2796, %v2795
        %v2803 = vpack.c.b16 %v2798, %v2797
        %v2804 = vpack.c.b16 %v2800, %v2799
        %2815 = vrot.lane.b32.xlu0 %v2757, 126
        %v2816 = vpop.permute.xlu0 %2815
        %2817 = vrot.lane.b32.xlu0 %v2758, 126
        %v2818 = vpop.permute.xlu0 %2817
        %2819 = vrot.lane.b32.xlu0 %v2759, 126
        %v2820 = vpop.permute.xlu0 %2819
        %2821 = vrot.lane.b32.xlu0 %v2760, 126
        %v2822 = vpop.permute.xlu0 %2821
        %2823 = vrot.lane.b32.xlu0 %v2774, 126
        %v2824 = vpop.permute.xlu0 %2823
        %2825 = vrot.lane.b32.xlu0 %v2761, 126
        %v2826 = vpop.permute.xlu0 %2825
        %2827 = vrot.lane.b32.xlu0 %v2762, 126
        %v2828 = vpop.permute.xlu0 %2827
        %2829 = vrot.lane.b32.xlu0 %v2763, 126
        %v2830 = vpop.permute.xlu0 %2829
        %2831 = vrot.lane.b32.xlu0 %v2764, 126
        %v2832 = vpop.permute.xlu0 %2831
        %2833 = vrot.lane.b32.xlu0 %v2775, 126
        %v2834 = vpop.permute.xlu0 %2833
        %v2835 = vsel %vm1467, %v2816, %v2818
        %v2836 = vsel %vm1467, %v2818, %v2820
        %v2837 = vsel %vm1467, %v2820, %v2822
        %v2838 = vsel %vm1467, %v2822, %v2824
        %v2839 = vsel %vm1467, %v2826, %v2828
        %v2840 = vsel %vm1467, %v2828, %v2830
        %v2841 = vsel %vm1467, %v2830, %v2832
        %v2842 = vsel %vm1467, %v2832, %v2834
        %v2852 = vsel %vm1081, %v2801, 0
        %v2855 = vsel %vm1081, %v2802, 0
        %v2858 = vsel %vm1081, %v2803, 0
        %v2861 = vsel %vm1081, %v2804, 0
        %2863 = vmatprep.subr.bf16.mxu0 %v2836
        %2864 = vmatpush1.bf16.msra.mxu0 %v2835
        %2865 = vmatprep.subr.bf16.mxu0 %v2840
        %2866 = vmatpush1.bf16.msra.mxu0 %v2839
        %2867 = vmatprep.subr.bf16.mxu0 0
        %2868 = vmatpush1.bf16.msra.mxu0 0
        %2869 = vmatprep.subr.bf16.mxu0 0
        %2870 = vmatpush1.bf16.msra.mxu0 0
        %2871 = vmatprep.subr.bf16.mxu0 0
        %2872 = vmatpush1.bf16.msra.mxu0 0
        %2873 = vmatprep.subr.bf16.mxu0 0
        %2874 = vmatpush1.bf16.msra.mxu0 0
        %2875 = vmatprep.subr.bf16.mxu0 0
        %2876 = vmatpush1.bf16.msra.mxu0 0
        %2877 = vmatprep.subr.bf16.mxu0 0
        %2878 = vmatpush1.bf16.msra.mxu0 0
        %2879 = vmatprep.subr.bf16.mxu0 0
        %2880 = vmatpush1.bf16.msra.mxu0 0
        %2881 = vmatprep.subr.bf16.mxu0 0
        %2882 = vmatpush1.bf16.msra.mxu0 0
        %2883 = vmatprep.subr.bf16.mxu0 0
        %2884 = vmatpush1.bf16.msra.mxu0 0
        %2885 = vmatprep.subr.bf16.mxu0 0
        %2886 = vmatpush1.bf16.msra.mxu0 0
        %2887 = vmatprep.subr.bf16.mxu0 0
        %2888 = vmatpush1.bf16.msra.mxu0 0
        %2889 = vmatprep.subr.bf16.mxu0 0
        %2890 = vmatpush1.bf16.msra.mxu0 0
        %2891 = vmatprep.subr.bf16.mxu0 0
        %2892 = vmatpush1.bf16.msra.mxu0 0
        %2893 = vmatprep.subr.bf16.mxu0 0
        %2894 = vmatpush1.bf16.msra.mxu0 0
        %2895 = vmatprep.mubr.bf16.mxu0 0
        %2896 = vmatmul.mubr.bf16.gmra.mrb[0].mxu0 %v2852
        %v2897 = vpop.f32.mrb[0].mxu0
        %v2898 = vadd.f32 0.0, %v2897
        %v2899 = vpop.f32.mrb[0].mxu0
        %v2900 = vadd.f32 0.0, %v2899
        %v2901 = vpop.f32.mrb[0].mxu0
        %v2902 = vadd.f32 0.0, %v2901
        %v2903 = vpop.f32.mrb[0].mxu0
        %v2904 = vadd.f32 0.0, %v2903
        %2905 = vmatprep.mubr.bf16.mxu0 0
        %2906 = vmatmul.mubr.bf16.gmra.mrb[0].mxu0 %v2855
        %v2907 = vpop.f32.mrb[0].mxu0
        %v2908 = vadd.f32 0.0, %v2907
        %v2909 = vpop.f32.mrb[0].mxu0
        %v2910 = vadd.f32 0.0, %v2909
        %v2911 = vpop.f32.mrb[0].mxu0
        %v2912 = vadd.f32 0.0, %v2911
        %v2913 = vpop.f32.mrb[0].mxu0
        %v2914 = vadd.f32 0.0, %v2913
        %2915 = vmatprep.mubr.bf16.mxu0 0
        %2916 = vmatmul.mubr.bf16.gmra.mrb[0].mxu0 %v2858
        %v2917 = vpop.f32.mrb[0].mxu0
        %v2918 = vadd.f32 0.0, %v2917
        %v2919 = vpop.f32.mrb[0].mxu0
        %v2920 = vadd.f32 0.0, %v2919
        %v2921 = vpop.f32.mrb[0].mxu0
        %v2922 = vadd.f32 0.0, %v2921
        %v2923 = vpop.f32.mrb[0].mxu0
        %v2924 = vadd.f32 0.0, %v2923
        %2925 = vmatprep.mubr.bf16.mxu0 0
        %2926 = vmatmul.mubr.bf16.gmra.mrb[0].mxu0 %v2861
        %v2927 = vpop.f32.mrb[0].mxu0
        %v2928 = vadd.f32 0.0, %v2927
        %v2929 = vpop.f32.mrb[0].mxu0
        %v2930 = vadd.f32 0.0, %v2929
        %v2931 = vpop.f32.mrb[0].mxu0
        %v2932 = vadd.f32 0.0, %v2931
        %v2933 = vpop.f32.mrb[0].mxu0
        %v2934 = vadd.f32 0.0, %v2933
        %2935 = vdwg.mxu0
        %2936 = vmatprep.subr.bf16.mxu0 %v2838
        %2937 = vmatpush1.bf16.msra.mxu0 %v2837
        %2938 = vmatprep.subr.bf16.mxu0 %v2842
        %2939 = vmatpush1.bf16.msra.mxu0 %v2841
        %2940 = vmatprep.subr.bf16.mxu0 0
        %2941 = vmatpush1.bf16.msra.mxu0 0
        %2942 = vmatprep.subr.bf16.mxu0 0
        %2943 = vmatpush1.bf16.msra.mxu0 0
        %2944 = vmatprep.subr.bf16.mxu0 0
        %2945 = vmatpush1.bf16.msra.mxu0 0
        %2946 = vmatprep.subr.bf16.mxu0 0
        %2947 = vmatpush1.bf16.msra.mxu0 0
        %2948 = vmatprep.subr.bf16.mxu0 0
        %2949 = vmatpush1.bf16.msra.mxu0 0
        %2950 = vmatprep.subr.bf16.mxu0 0
        %2951 = vmatpush1.bf16.msra.mxu0 0
        %2952 = vmatprep.subr.bf16.mxu0 0
        %2953 = vmatpush1.bf16.msra.mxu0 0
        %2954 = vmatprep.subr.bf16.mxu0 0
        %2955 = vmatpush1.bf16.msra.mxu0 0
        %2956 = vmatprep.subr.bf16.mxu0 0
        %2957 = vmatpush1.bf16.msra.mxu0 0
        %2958 = vmatprep.subr.bf16.mxu0 0
        %2959 = vmatpush1.bf16.msra.mxu0 0
        %2960 = vmatprep.subr.bf16.mxu0 0
        %2961 = vmatpush1.bf16.msra.mxu0 0
        %2962 = vmatprep.subr.bf16.mxu0 0
        %2963 = vmatpush1.bf16.msra.mxu0 0
        %2964 = vmatprep.subr.bf16.mxu0 0
        %2965 = vmatpush1.bf16.msra.mxu0 0
        %2966 = vmatprep.subr.bf16.mxu0 0
        %2967 = vmatpush1.bf16.msra.mxu0 0
        %2968 = vmatprep.mubr.bf16.mxu0 0
        %2969 = vmatmul.mubr.bf16.gmra.mrb[0].mxu0 %v2852
        %v2970 = vpop.f32.mrb[0].mxu0
        %v2971 = vadd.f32 0.0, %v2970
        %v2972 = vpop.f32.mrb[0].mxu0
        %v2973 = vadd.f32 0.0, %v2972
        %v2974 = vpop.f32.mrb[0].mxu0
        %v2975 = vadd.f32 0.0, %v2974
        %v2976 = vpop.f32.mrb[0].mxu0
        %v2977 = vadd.f32 0.0, %v2976
        %2978 = vmatprep.mubr.bf16.mxu0 0
        %2979 = vmatmul.mubr.bf16.gmra.mrb[0].mxu0 %v2855
        %v2980 = vpop.f32.mrb[0].mxu0
        %v2981 = vadd.f32 0.0, %v2980
        %v2982 = vpop.f32.mrb[0].mxu0
        %v2983 = vadd.f32 0.0, %v2982
        %v2984 = vpop.f32.mrb[0].mxu0
        %v2985 = vadd.f32 0.0, %v2984
        %v2986 = vpop.f32.mrb[0].mxu0
        %v2987 = vadd.f32 0.0, %v2986
        %2988 = vmatprep.mubr.bf16.mxu0 0
        %2989 = vmatmul.mubr.bf16.gmra.mrb[0].mxu0 %v2858
        %v2990 = vpop.f32.mrb[0].mxu0
        %v2991 = vadd.f32 0.0, %v2990
        %v2992 = vpop.f32.mrb[0].mxu0
        %v2993 = vadd.f32 0.0, %v2992
        %v2994 = vpop.f32.mrb[0].mxu0
        %v2995 = vadd.f32 0.0, %v2994
        %v2996 = vpop.f32.mrb[0].mxu0
        %v2997 = vadd.f32 0.0, %v2996
        %2998 = vmatprep.mubr.bf16.mxu0 0
        %2999 = vmatmul.mubr.bf16.gmra.mrb[0].mxu0 %v2861
        %v3000 = vpop.f32.mrb[0].mxu0
        %v3001 = vadd.f32 0.0, %v3000
        %v3002 = vpop.f32.mrb[0].mxu0
        %v3003 = vadd.f32 0.0, %v3002
        %v3004 = vpop.f32.mrb[0].mxu0
        %v3005 = vadd.f32 0.0, %v3004
        %v3006 = vpop.f32.mrb[0].mxu0
        %v3007 = vadd.f32 0.0, %v3006
        %3008 = vdwg.mxu0
        %v3017 = vunpack.c.l.b16 %v2766
        %v3018 = vunpack.c.l.b16 %v2767
        %v3019 = vunpack.c.l.b16 %v2768
        %v3020 = vunpack.c.l.b16 %v2769
        %v3021 = vunpack.c.l.b16 %v2770
        %v3022 = vunpack.c.l.b16 %v2771
        %v3023 = vunpack.c.l.b16 %v2772
        %v3024 = vunpack.c.l.b16 %v2773
        %v3025 = vpack.c.b16 %v3018, %v3017
        %v3026 = vpack.c.b16 %v3020, %v3019
        %v3027 = vpack.c.b16 %v3022, %v3021
        %v3028 = vpack.c.b16 %v3024, %v3023
        %v3030 = vsel %vm1081, %v3025, 0
        %v3033 = vsel %vm1081, %v3026, 0
        %v3036 = vsel %vm1081, %v3027, 0
        %v3039 = vsel %vm1081, %v3028, 0
        %3041 = vmatprep.subr.bf16.mxu0 %v2758
        %3042 = vmatpush1.bf16.msra.mxu0 %v2757
        %3043 = vmatprep.subr.bf16.mxu0 %v2762
        %3044 = vmatpush1.bf16.msra.mxu0 %v2761
        %3045 = vmatprep.subr.bf16.mxu0 0
        %3046 = vmatpush1.bf16.msra.mxu0 0
        %3047 = vmatprep.subr.bf16.mxu0 0
        %3048 = vmatpush1.bf16.msra.mxu0 0
        %3049 = vmatprep.subr.bf16.mxu0 0
        %3050 = vmatpush1.bf16.msra.mxu0 0
        %3051 = vmatprep.subr.bf16.mxu0 0
        %3052 = vmatpush1.bf16.msra.mxu0 0
        %3053 = vmatprep.subr.bf16.mxu0 0
        %3054 = vmatpush1.bf16.msra.mxu0 0
        %3055 = vmatprep.subr.bf16.mxu0 0
        %3056 = vmatpush1.bf16.msra.mxu0 0
        %3057 = vmatprep.subr.bf16.mxu0 0
        %3058 = vmatpush1.bf16.msra.mxu0 0
        %3059 = vmatprep.subr.bf16.mxu0 0
        %3060 = vmatpush1.bf16.msra.mxu0 0
        %3061 = vmatprep.subr.bf16.mxu0 0
        %3062 = vmatpush1.bf16.msra.mxu0 0
        %3063 = vmatprep.subr.bf16.mxu0 0
        %3064 = vmatpush1.bf16.msra.mxu0 0
        %3065 = vmatprep.subr.bf16.mxu0 0
        %3066 = vmatpush1.bf16.msra.mxu0 0
        %3067 = vmatprep.subr.bf16.mxu0 0
        %3068 = vmatpush1.bf16.msra.mxu0 0
        %3069 = vmatprep.subr.bf16.mxu0 0
        %3070 = vmatpush1.bf16.msra.mxu0 0
        %3071 = vmatprep.subr.bf16.mxu0 0
        %3072 = vmatpush1.bf16.msra.mxu0 0
        %3073 = vmatprep.mubr.bf16.mxu0 0
        %3074 = vmatmul.mubr.bf16.gmra.mrb[0].mxu0 %v3030
        %v3075 = vpop.f32.mrb[0].mxu0
        %v3076 = vadd.f32 %v2898, %v3075
        %v3077 = vpop.f32.mrb[0].mxu0
        %v3078 = vadd.f32 %v2900, %v3077
        %v3079 = vpop.f32.mrb[0].mxu0
        %v3080 = vadd.f32 %v2902, %v3079
        %v3081 = vpop.f32.mrb[0].mxu0
        %v3082 = vadd.f32 %v2904, %v3081
        %3083 = vmatprep.mubr.bf16.mxu0 0
        %3084 = vmatmul.mubr.bf16.gmra.mrb[0].mxu0 %v3033
        %v3085 = vpop.f32.mrb[0].mxu0
        %v3086 = vadd.f32 %v2908, %v3085
        %v3087 = vpop.f32.mrb[0].mxu0
        %v3088 = vadd.f32 %v2910, %v3087
        %v3089 = vpop.f32.mrb[0].mxu0
        %v3090 = vadd.f32 %v2912, %v3089
        %v3091 = vpop.f32.mrb[0].mxu0
        %v3092 = vadd.f32 %v2914, %v3091
        %3093 = vmatprep.mubr.bf16.mxu0 0
        %3094 = vmatmul.mubr.bf16.gmra.mrb[0].mxu0 %v3036
        %v3095 = vpop.f32.mrb[0].mxu0
        %v3096 = vadd.f32 %v2918, %v3095
        %v3097 = vpop.f32.mrb[0].mxu0
        %v3098 = vadd.f32 %v2920, %v3097
        %v3099 = vpop.f32.mrb[0].mxu0
        %v3100 = vadd.f32 %v2922, %v3099
        %v3101 = vpop.f32.mrb[0].mxu0
        %v3102 = vadd.f32 %v2924, %v3101
        %3103 = vmatprep.mubr.bf16.mxu0 0
        %3104 = vmatmul.mubr.bf16.gmra.mrb[0].mxu0 %v3039
        %v3105 = vpop.f32.mrb[0].mxu0
        %v3106 = vadd.f32 %v2928, %v3105
        %v3107 = vpop.f32.mrb[0].mxu0
        %v3108 = vadd.f32 %v2930, %v3107
        %v3109 = vpop.f32.mrb[0].mxu0
        %v3110 = vadd.f32 %v2932, %v3109
        %v3111 = vpop.f32.mrb[0].mxu0
        %v3112 = vadd.f32 %v2934, %v3111
        %3113 = vdwg.mxu0
        %3114 = vmatprep.subr.bf16.mxu0 %v2760
        %3115 = vmatpush1.bf16.msra.mxu0 %v2759
        %3116 = vmatprep.subr.bf16.mxu0 %v2764
        %3117 = vmatpush1.bf16.msra.mxu0 %v2763
        %3118 = vmatprep.subr.bf16.mxu0 0
        %3119 = vmatpush1.bf16.msra.mxu0 0
        %3120 = vmatprep.subr.bf16.mxu0 0
        %3121 = vmatpush1.bf16.msra.mxu0 0
        %3122 = vmatprep.subr.bf16.mxu0 0
        %3123 = vmatpush1.bf16.msra.mxu0 0
        %3124 = vmatprep.subr.bf16.mxu0 0
        %3125 = vmatpush1.bf16.msra.mxu0 0
        %3126 = vmatprep.subr.bf16.mxu0 0
        %3127 = vmatpush1.bf16.msra.mxu0 0
        %3128 = vmatprep.subr.bf16.mxu0 0
        %3129 = vmatpush1.bf16.msra.mxu0 0
        %3130 = vmatprep.subr.bf16.mxu0 0
        %3131 = vmatpush1.bf16.msra.mxu0 0
        %3132 = vmatprep.subr.bf16.mxu0 0
        %3133 = vmatpush1.bf16.msra.mxu0 0
        %3134 = vmatprep.subr.bf16.mxu0 0
        %3135 = vmatpush1.bf16.msra.mxu0 0
        %3136 = vmatprep.subr.bf16.mxu0 0
        %3137 = vmatpush1.bf16.msra.mxu0 0
        %3138 = vmatprep.subr.bf16.mxu0 0
        %3139 = vmatpush1.bf16.msra.mxu0 0
        %3140 = vmatprep.subr.bf16.mxu0 0
        %3141 = vmatpush1.bf16.msra.mxu0 0
        %3142 = vmatprep.subr.bf16.mxu0 0
        %3143 = vmatpush1.bf16.msra.mxu0 0
        %3144 = vmatprep.subr.bf16.mxu0 0
        %3145 = vmatpush1.bf16.msra.mxu0 0
        %3146 = vmatprep.mubr.bf16.mxu0 0
        %3147 = vmatmul.mubr.bf16.gmra.mrb[0].mxu0 %v3030
        %v3148 = vpop.f32.mrb[0].mxu0
        %v3149 = vadd.f32 %v2971, %v3148
        %v3150 = vpop.f32.mrb[0].mxu0
        %v3151 = vadd.f32 %v2973, %v3150
        %v3152 = vpop.f32.mrb[0].mxu0
        %v3153 = vadd.f32 %v2975, %v3152
        %v3154 = vpop.f32.mrb[0].mxu0
        %v3155 = vadd.f32 %v2977, %v3154
        %3156 = vmatprep.mubr.bf16.mxu0 0
        %3157 = vmatmul.mubr.bf16.gmra.mrb[0].mxu0 %v3033
        %v3158 = vpop.f32.mrb[0].mxu0
        %v3159 = vadd.f32 %v2981, %v3158
        %v3160 = vpop.f32.mrb[0].mxu0
        %v3161 = vadd.f32 %v2983, %v3160
        %v3162 = vpop.f32.mrb[0].mxu0
        %v3163 = vadd.f32 %v2985, %v3162
        %v3164 = vpop.f32.mrb[0].mxu0
        %v3165 = vadd.f32 %v2987, %v3164
        %3166 = vmatprep.mubr.bf16.mxu0 0
        %3167 = vmatmul.mubr.bf16.gmra.mrb[0].mxu0 %v3036
        %v3168 = vpop.f32.mrb[0].mxu0
        %v3169 = vadd.f32 %v2991, %v3168
        %v3170 = vpop.f32.mrb[0].mxu0
        %v3171 = vadd.f32 %v2993, %v3170
        %v3172 = vpop.f32.mrb[0].mxu0
        %v3173 = vadd.f32 %v2995, %v3172
        %v3174 = vpop.f32.mrb[0].mxu0
        %v3175 = vadd.f32 %v2997, %v3174
        %3176 = vmatprep.mubr.bf16.mxu0 0
        %3177 = vmatmul.mubr.bf16.gmra.mrb[0].mxu0 %v3039
        %v3178 = vpop.f32.mrb[0].mxu0
        %v3179 = vadd.f32 %v3001, %v3178
        %v3180 = vpop.f32.mrb[0].mxu0
        %v3181 = vadd.f32 %v3003, %v3180
        %v3182 = vpop.f32.mrb[0].mxu0
        %v3183 = vadd.f32 %v3005, %v3182
        %v3184 = vpop.f32.mrb[0].mxu0
        %v3185 = vadd.f32 %v3007, %v3184
        %3186 = vdwg.mxu0
        %s3187 = scalar_lea.vmem %s6, 224
        %v3188 = vld [vmem:[%s3187] sm:$0xf]
        %v3189 = vld [vmem:[%s3187 + $0x4] sm:$0xf]
        %v3190 = vld [vmem:[%s3187 + $0x8] sm:$0xf]
        %v3191 = vld [vmem:[%s3187 + $0xc] sm:$0xf]
        %v3192 = vld [vmem:[%s3187 + $0x10] sm:$0xf]
        %v3193 = vld [vmem:[%s3187 + $0x14] sm:$0xf]
        %v3194 = vld [vmem:[%s3187 + $0x18] sm:$0xf]
        %v3195 = vld [vmem:[%s3187 + $0x1c] sm:$0xf]
        %v3204 = vunpack.c.l.b16 %v3188
        %v3205 = vunpack.c.l.b16 %v3189
        %v3206 = vunpack.c.l.b16 %v3190
        %v3207 = vunpack.c.l.b16 %v3191
        %v3208 = vunpack.c.l.b16 %v3192
        %v3209 = vunpack.c.l.b16 %v3193
        %v3210 = vunpack.c.l.b16 %v3194
        %v3211 = vunpack.c.l.b16 %v3195
        %v3212 = vpack.c.b16 %v3205, %v3204
        %v3213 = vpack.c.b16 %v3207, %v3206
        %v3214 = vpack.c.b16 %v3209, %v3208
        %v3215 = vpack.c.b16 %v3211, %v3210
        %3216 = vrot.lane.b32.xlu0 %v2757, 124
        %v3217 = vpop.permute.xlu0 %3216
        %3218 = vrot.lane.b32.xlu0 %v2758, 124
        %v3219 = vpop.permute.xlu0 %3218
        %3220 = vrot.lane.b32.xlu0 %v2759, 124
        %v3221 = vpop.permute.xlu0 %3220
        %3222 = vrot.lane.b32.xlu0 %v2760, 124
        %v3223 = vpop.permute.xlu0 %3222
        %3224 = vrot.lane.b32.xlu0 %v2774, 124
        %v3225 = vpop.permute.xlu0 %3224
        %3226 = vrot.lane.b32.xlu0 %v2761, 124
        %v3227 = vpop.permute.xlu0 %3226
        %3228 = vrot.lane.b32.xlu0 %v2762, 124
        %v3229 = vpop.permute.xlu0 %3228
        %3230 = vrot.lane.b32.xlu0 %v2763, 124
        %v3231 = vpop.permute.xlu0 %3230
        %3232 = vrot.lane.b32.xlu0 %v2764, 124
        %v3233 = vpop.permute.xlu0 %3232
        %3234 = vrot.lane.b32.xlu0 %v2775, 124
        %v3235 = vpop.permute.xlu0 %3234
        %v3236 = vsel %vm1979, %v3217, %v3219
        %v3237 = vsel %vm1979, %v3219, %v3221
        %v3238 = vsel %vm1979, %v3221, %v3223
        %v3239 = vsel %vm1979, %v3223, %v3225
        %v3240 = vsel %vm1979, %v3227, %v3229
        %v3241 = vsel %vm1979, %v3229, %v3231
        %v3242 = vsel %vm1979, %v3231, %v3233
        %v3243 = vsel %vm1979, %v3233, %v3235
        %v3253 = vsel %vm1081, %v3212, 0
        %v3256 = vsel %vm1081, %v3213, 0
        %v3259 = vsel %vm1081, %v3214, 0
        %v3262 = vsel %vm1081, %v3215, 0
        %3264 = vmatprep.subr.bf16.mxu0 %v3237
        %3265 = vmatpush1.bf16.msra.mxu0 %v3236
        %3266 = vmatprep.subr.bf16.mxu0 %v3241
        %3267 = vmatpush1.bf16.msra.mxu0 %v3240
        %3268 = vmatprep.subr.bf16.mxu0 0
        %3269 = vmatpush1.bf16.msra.mxu0 0
        %3270 = vmatprep.subr.bf16.mxu0 0
        %3271 = vmatpush1.bf16.msra.mxu0 0
        %3272 = vmatprep.subr.bf16.mxu0 0
        %3273 = vmatpush1.bf16.msra.mxu0 0
        %3274 = vmatprep.subr.bf16.mxu0 0
        %3275 = vmatpush1.bf16.msra.mxu0 0
        %3276 = vmatprep.subr.bf16.mxu0 0
        %3277 = vmatpush1.bf16.msra.mxu0 0
        %3278 = vmatprep.subr.bf16.mxu0 0
        %3279 = vmatpush1.bf16.msra.mxu0 0
        %3280 = vmatprep.subr.bf16.mxu0 0
        %3281 = vmatpush1.bf16.msra.mxu0 0
        %3282 = vmatprep.subr.bf16.mxu0 0
        %3283 = vmatpush1.bf16.msra.mxu0 0
        %3284 = vmatprep.subr.bf16.mxu0 0
        %3285 = vmatpush1.bf16.msra.mxu0 0
        %3286 = vmatprep.subr.bf16.mxu0 0
        %3287 = vmatpush1.bf16.msra.mxu0 0
        %3288 = vmatprep.subr.bf16.mxu0 0
        %3289 = vmatpush1.bf16.msra.mxu0 0
        %3290 = vmatprep.subr.bf16.mxu0 0
        %3291 = vmatpush1.bf16.msra.mxu0 0
        %3292 = vmatprep.subr.bf16.mxu0 0
        %3293 = vmatpush1.bf16.msra.mxu0 0
        %3294 = vmatprep.subr.bf16.mxu0 0
        %3295 = vmatpush1.bf16.msra.mxu0 0
        %3296 = vmatprep.mubr.bf16.mxu0 0
        %3297 = vmatmul.mubr.bf16.gmra.mrb[0].mxu0 %v3253
        %v3298 = vpop.f32.mrb[0].mxu0
        %v3299 = vadd.f32 0.0, %v3298
        %v3300 = vpop.f32.mrb[0].mxu0
        %v3301 = vadd.f32 0.0, %v3300
        %v3302 = vpop.f32.mrb[0].mxu0
        %v3303 = vadd.f32 0.0, %v3302
        %v3304 = vpop.f32.mrb[0].mxu0
        %v3305 = vadd.f32 0.0, %v3304
        %3306 = vmatprep.mubr.bf16.mxu0 0
        %3307 = vmatmul.mubr.bf16.gmra.mrb[0].mxu0 %v3256
        %v3308 = vpop.f32.mrb[0].mxu0
        %v3309 = vadd.f32 0.0, %v3308
        %v3310 = vpop.f32.mrb[0].mxu0
        %v3311 = vadd.f32 0.0, %v3310
        %v3312 = vpop.f32.mrb[0].mxu0
        %v3313 = vadd.f32 0.0, %v3312
        %v3314 = vpop.f32.mrb[0].mxu0
        %v3315 = vadd.f32 0.0, %v3314
        %3316 = vmatprep.mubr.bf16.mxu0 0
        %3317 = vmatmul.mubr.bf16.gmra.mrb[0].mxu0 %v3259
        %v3318 = vpop.f32.mrb[0].mxu0
        %v3319 = vadd.f32 0.0, %v3318
        %v3320 = vpop.f32.mrb[0].mxu0
        %v3321 = vadd.f32 0.0, %v3320
        %v3322 = vpop.f32.mrb[0].mxu0
        %v3323 = vadd.f32 0.0, %v3322
        %v3324 = vpop.f32.mrb[0].mxu0
        %v3325 = vadd.f32 0.0, %v3324
        %3326 = vmatprep.mubr.bf16.mxu0 0
        %3327 = vmatmul.mubr.bf16.gmra.mrb[0].mxu0 %v3262
        %v3328 = vpop.f32.mrb[0].mxu0
        %v3329 = vadd.f32 0.0, %v3328
        %v3330 = vpop.f32.mrb[0].mxu0
        %v3331 = vadd.f32 0.0, %v3330
        %v3332 = vpop.f32.mrb[0].mxu0
        %v3333 = vadd.f32 0.0, %v3332
        %v3334 = vpop.f32.mrb[0].mxu0
        %v3335 = vadd.f32 0.0, %v3334
        %3336 = vdwg.mxu0
        %3337 = vmatprep.subr.bf16.mxu0 %v3239
        %3338 = vmatpush1.bf16.msra.mxu0 %v3238
        %3339 = vmatprep.subr.bf16.mxu0 %v3243
        %3340 = vmatpush1.bf16.msra.mxu0 %v3242
        %3341 = vmatprep.subr.bf16.mxu0 0
        %3342 = vmatpush1.bf16.msra.mxu0 0
        %3343 = vmatprep.subr.bf16.mxu0 0
        %3344 = vmatpush1.bf16.msra.mxu0 0
        %3345 = vmatprep.subr.bf16.mxu0 0
        %3346 = vmatpush1.bf16.msra.mxu0 0
        %3347 = vmatprep.subr.bf16.mxu0 0
        %3348 = vmatpush1.bf16.msra.mxu0 0
        %3349 = vmatprep.subr.bf16.mxu0 0
        %3350 = vmatpush1.bf16.msra.mxu0 0
        %3351 = vmatprep.subr.bf16.mxu0 0
        %3352 = vmatpush1.bf16.msra.mxu0 0
        %3353 = vmatprep.subr.bf16.mxu0 0
        %3354 = vmatpush1.bf16.msra.mxu0 0
        %3355 = vmatprep.subr.bf16.mxu0 0
        %3356 = vmatpush1.bf16.msra.mxu0 0
        %3357 = vmatprep.subr.bf16.mxu0 0
        %3358 = vmatpush1.bf16.msra.mxu0 0
        %3359 = vmatprep.subr.bf16.mxu0 0
        %3360 = vmatpush1.bf16.msra.mxu0 0
        %3361 = vmatprep.subr.bf16.mxu0 0
        %3362 = vmatpush1.bf16.msra.mxu0 0
        %3363 = vmatprep.subr.bf16.mxu0 0
        %3364 = vmatpush1.bf16.msra.mxu0 0
        %3365 = vmatprep.subr.bf16.mxu0 0
        %3366 = vmatpush1.bf16.msra.mxu0 0
        %3367 = vmatprep.subr.bf16.mxu0 0
        %3368 = vmatpush1.bf16.msra.mxu0 0
        %3369 = vmatprep.mubr.bf16.mxu0 0
        %3370 = vmatmul.mubr.bf16.gmra.mrb[0].mxu0 %v3253
        %v3371 = vpop.f32.mrb[0].mxu0
        %v3372 = vadd.f32 0.0, %v3371
        %v3373 = vpop.f32.mrb[0].mxu0
        %v3374 = vadd.f32 0.0, %v3373
        %v3375 = vpop.f32.mrb[0].mxu0
        %v3376 = vadd.f32 0.0, %v3375
        %v3377 = vpop.f32.mrb[0].mxu0
        %v3378 = vadd.f32 0.0, %v3377
        %3379 = vmatprep.mubr.bf16.mxu0 0
        %3380 = vmatmul.mubr.bf16.gmra.mrb[0].mxu0 %v3256
        %v3381 = vpop.f32.mrb[0].mxu0
        %v3382 = vadd.f32 0.0, %v3381
        %v3383 = vpop.f32.mrb[0].mxu0
        %v3384 = vadd.f32 0.0, %v3383
        %v3385 = vpop.f32.mrb[0].mxu0
        %v3386 = vadd.f32 0.0, %v3385
        %v3387 = vpop.f32.mrb[0].mxu0
        %v3388 = vadd.f32 0.0, %v3387
        %3389 = vmatprep.mubr.bf16.mxu0 0
        %3390 = vmatmul.mubr.bf16.gmra.mrb[0].mxu0 %v3259
        %v3391 = vpop.f32.mrb[0].mxu0
        %v3392 = vadd.f32 0.0, %v3391
        %v3393 = vpop.f32.mrb[0].mxu0
        %v3394 = vadd.f32 0.0, %v3393
        %v3395 = vpop.f32.mrb[0].mxu0
        %v3396 = vadd.f32 0.0, %v3395
        %v3397 = vpop.f32.mrb[0].mxu0
        %v3398 = vadd.f32 0.0, %v3397
        %3399 = vmatprep.mubr.bf16.mxu0 0
        %3400 = vmatmul.mubr.bf16.gmra.mrb[0].mxu0 %v3262
        %v3401 = vpop.f32.mrb[0].mxu0
        %v3402 = vadd.f32 0.0, %v3401
        %v3403 = vpop.f32.mrb[0].mxu0
        %v3404 = vadd.f32 0.0, %v3403
        %v3405 = vpop.f32.mrb[0].mxu0
        %v3406 = vadd.f32 0.0, %v3405
        %v3407 = vpop.f32.mrb[0].mxu0
        %v3408 = vadd.f32 0.0, %v3407
        %3409 = vdwg.mxu0
        %v3410 = vadd.f32 %v3076, %v3299
        %v3411 = vadd.f32 %v3078, %v3301
        %v3412 = vadd.f32 %v3149, %v3372
        %v3413 = vadd.f32 %v3151, %v3374
        %v3414 = vadd.f32 %v3080, %v3303
        %v3415 = vadd.f32 %v3082, %v3305
        %v3416 = vadd.f32 %v3153, %v3376
        %v3417 = vadd.f32 %v3155, %v3378
        %v3418 = vadd.f32 %v3086, %v3309
        %v3419 = vadd.f32 %v3088, %v3311
        %v3420 = vadd.f32 %v3159, %v3382
        %v3421 = vadd.f32 %v3161, %v3384
        %v3422 = vadd.f32 %v3090, %v3313
        %v3423 = vadd.f32 %v3092, %v3315
        %v3424 = vadd.f32 %v3163, %v3386
        %v3425 = vadd.f32 %v3165, %v3388
        %v3426 = vadd.f32 %v3096, %v3319
        %v3427 = vadd.f32 %v3098, %v3321
        %v3428 = vadd.f32 %v3169, %v3392
        %v3429 = vadd.f32 %v3171, %v3394
        %v3430 = vadd.f32 %v3100, %v3323
        %v3431 = vadd.f32 %v3102, %v3325
        %v3432 = vadd.f32 %v3173, %v3396
        %v3433 = vadd.f32 %v3175, %v3398
        %v3434 = vadd.f32 %v3106, %v3329
        %v3435 = vadd.f32 %v3108, %v3331
        %v3436 = vadd.f32 %v3179, %v3402
        %v3437 = vadd.f32 %v3181, %v3404
        %v3438 = vadd.f32 %v3110, %v3333
        %v3439 = vadd.f32 %v3112, %v3335
        %v3440 = vadd.f32 %v3183, %v3406
        %v3441 = vadd.f32 %v3185, %v3408
        %s3442 = scalar_lea.vmem %s6, 256
        %v3443 = vld [vmem:[%s3442] sm:$0xf]
        %v3444 = vld [vmem:[%s3442 + $0x4] sm:$0xf]
        %v3445 = vld [vmem:[%s3442 + $0x8] sm:$0xf]
        %v3446 = vld [vmem:[%s3442 + $0xc] sm:$0xf]
        %v3447 = vld [vmem:[%s3442 + $0x10] sm:$0xf]
        %v3448 = vld [vmem:[%s3442 + $0x14] sm:$0xf]
        %v3449 = vld [vmem:[%s3442 + $0x18] sm:$0xf]
        %v3450 = vld [vmem:[%s3442 + $0x1c] sm:$0xf]
        %v3459 = vunpack.c.l.b16 %v3443
        %v3460 = vunpack.c.l.b16 %v3444
        %v3461 = vunpack.c.l.b16 %v3445
        %v3462 = vunpack.c.l.b16 %v3446
        %v3463 = vunpack.c.l.b16 %v3447
        %v3464 = vunpack.c.l.b16 %v3448
        %v3465 = vunpack.c.l.b16 %v3449
        %v3466 = vunpack.c.l.b16 %v3450
        %v3467 = vpack.c.b16 %v3460, %v3459
        %v3468 = vpack.c.b16 %v3462, %v3461
        %v3469 = vpack.c.b16 %v3464, %v3463
        %v3470 = vpack.c.b16 %v3466, %v3465
        %3471 = vrot.lane.b32.xlu0 %v2757, 122
        %v3472 = vpop.permute.xlu0 %3471
        %3473 = vrot.lane.b32.xlu0 %v2758, 122
        %v3474 = vpop.permute.xlu0 %3473
        %3475 = vrot.lane.b32.xlu0 %v2759, 122
        %v3476 = vpop.permute.xlu0 %3475
        %3477 = vrot.lane.b32.xlu0 %v2760, 122
        %v3478 = vpop.permute.xlu0 %3477
        %3479 = vrot.lane.b32.xlu0 %v2774, 122
        %v3480 = vpop.permute.xlu0 %3479
        %3481 = vrot.lane.b32.xlu0 %v2761, 122
        %v3482 = vpop.permute.xlu0 %3481
        %3483 = vrot.lane.b32.xlu0 %v2762, 122
        %v3484 = vpop.permute.xlu0 %3483
        %3485 = vrot.lane.b32.xlu0 %v2763, 122
        %v3486 = vpop.permute.xlu0 %3485
        %3487 = vrot.lane.b32.xlu0 %v2764, 122
        %v3488 = vpop.permute.xlu0 %3487
        %3489 = vrot.lane.b32.xlu0 %v2775, 122
        %v3490 = vpop.permute.xlu0 %3489
        %vm3491 = vcmask 998400
        %v3492 = vsel %vm3491, %v3472, %v3474
        %v3493 = vsel %vm3491, %v3474, %v3476
        %v3494 = vsel %vm3491, %v3476, %v3478
        %v3495 = vsel %vm3491, %v3478, %v3480
        %v3496 = vsel %vm3491, %v3482, %v3484
        %v3497 = vsel %vm3491, %v3484, %v3486
        %v3498 = vsel %vm3491, %v3486, %v3488
        %v3499 = vsel %vm3491, %v3488, %v3490
        %v3509 = vsel %vm1081, %v3467, 0
        %v3512 = vsel %vm1081, %v3468, 0
        %v3515 = vsel %vm1081, %v3469, 0
        %v3518 = vsel %vm1081, %v3470, 0
        %3520 = vmatprep.subr.bf16.mxu0 %v3493
        %3521 = vmatpush1.bf16.msra.mxu0 %v3492
        %3522 = vmatprep.subr.bf16.mxu0 %v3497
        %3523 = vmatpush1.bf16.msra.mxu0 %v3496
        %3524 = vmatprep.subr.bf16.mxu0 0
        %3525 = vmatpush1.bf16.msra.mxu0 0
        %3526 = vmatprep.subr.bf16.mxu0 0
        %3527 = vmatpush1.bf16.msra.mxu0 0
        %3528 = vmatprep.subr.bf16.mxu0 0
        %3529 = vmatpush1.bf16.msra.mxu0 0
        %3530 = vmatprep.subr.bf16.mxu0 0
        %3531 = vmatpush1.bf16.msra.mxu0 0
        %3532 = vmatprep.subr.bf16.mxu0 0
        %3533 = vmatpush1.bf16.msra.mxu0 0
        %3534 = vmatprep.subr.bf16.mxu0 0
        %3535 = vmatpush1.bf16.msra.mxu0 0
        %3536 = vmatprep.subr.bf16.mxu0 0
        %3537 = vmatpush1.bf16.msra.mxu0 0
        %3538 = vmatprep.subr.bf16.mxu0 0
        %3539 = vmatpush1.bf16.msra.mxu0 0
        %3540 = vmatprep.subr.bf16.mxu0 0
        %3541 = vmatpush1.bf16.msra.mxu0 0
        %3542 = vmatprep.subr.bf16.mxu0 0
        %3543 = vmatpush1.bf16.msra.mxu0 0
        %3544 = vmatprep.subr.bf16.mxu0 0
        %3545 = vmatpush1.bf16.msra.mxu0 0
        %3546 = vmatprep.subr.bf16.mxu0 0
        %3547 = vmatpush1.bf16.msra.mxu0 0
        %3548 = vmatprep.subr.bf16.mxu0 0
        %3549 = vmatpush1.bf16.msra.mxu0 0
        %3550 = vmatprep.subr.bf16.mxu0 0
        %3551 = vmatpush1.bf16.msra.mxu0 0
        %3552 = vmatprep.mubr.bf16.mxu0 0
        %3553 = vmatmul.mubr.bf16.gmra.mrb[0].mxu0 %v3509
        %v3554 = vpop.f32.mrb[0].mxu0
        %v3555 = vadd.f32 0.0, %v3554
        %v3556 = vpop.f32.mrb[0].mxu0
        %v3557 = vadd.f32 0.0, %v3556
        %v3558 = vpop.f32.mrb[0].mxu0
        %v3559 = vadd.f32 0.0, %v3558
        %v3560 = vpop.f32.mrb[0].mxu0
        %v3561 = vadd.f32 0.0, %v3560
        %3562 = vmatprep.mubr.bf16.mxu0 0
        %3563 = vmatmul.mubr.bf16.gmra.mrb[0].mxu0 %v3512
        %v3564 = vpop.f32.mrb[0].mxu0
        %v3565 = vadd.f32 0.0, %v3564
        %v3566 = vpop.f32.mrb[0].mxu0
        %v3567 = vadd.f32 0.0, %v3566
        %v3568 = vpop.f32.mrb[0].mxu0
        %v3569 = vadd.f32 0.0, %v3568
        %v3570 = vpop.f32.mrb[0].mxu0
        %v3571 = vadd.f32 0.0, %v3570
        %3572 = vmatprep.mubr.bf16.mxu0 0
        %3573 = vmatmul.mubr.bf16.gmra.mrb[0].mxu0 %v3515
        %v3574 = vpop.f32.mrb[0].mxu0
        %v3575 = vadd.f32 0.0, %v3574
        %v3576 = vpop.f32.mrb[0].mxu0
        %v3577 = vadd.f32 0.0, %v3576
        %v3578 = vpop.f32.mrb[0].mxu0
        %v3579 = vadd.f32 0.0, %v3578
        %v3580 = vpop.f32.mrb[0].mxu0
        %v3581 = vadd.f32 0.0, %v3580
        %3582 = vmatprep.mubr.bf16.mxu0 0
        %3583 = vmatmul.mubr.bf16.gmra.mrb[0].mxu0 %v3518
        %v3584 = vpop.f32.mrb[0].mxu0
        %v3585 = vadd.f32 0.0, %v3584
        %v3586 = vpop.f32.mrb[0].mxu0
        %v3587 = vadd.f32 0.0, %v3586
        %v3588 = vpop.f32.mrb[0].mxu0
        %v3589 = vadd.f32 0.0, %v3588
        %v3590 = vpop.f32.mrb[0].mxu0
        %v3591 = vadd.f32 0.0, %v3590
        %3592 = vdwg.mxu0
        %3593 = vmatprep.subr.bf16.mxu0 %v3495
        %3594 = vmatpush1.bf16.msra.mxu0 %v3494
        %3595 = vmatprep.subr.bf16.mxu0 %v3499
        %3596 = vmatpush1.bf16.msra.mxu0 %v3498
        %3597 = vmatprep.subr.bf16.mxu0 0
        %3598 = vmatpush1.bf16.msra.mxu0 0
        %3599 = vmatprep.subr.bf16.mxu0 0
        %3600 = vmatpush1.bf16.msra.mxu0 0
        %3601 = vmatprep.subr.bf16.mxu0 0
        %3602 = vmatpush1.bf16.msra.mxu0 0
        %3603 = vmatprep.subr.bf16.mxu0 0
        %3604 = vmatpush1.bf16.msra.mxu0 0
        %3605 = vmatprep.subr.bf16.mxu0 0
        %3606 = vmatpush1.bf16.msra.mxu0 0
        %3607 = vmatprep.subr.bf16.mxu0 0
        %3608 = vmatpush1.bf16.msra.mxu0 0
        %3609 = vmatprep.subr.bf16.mxu0 0
        %3610 = vmatpush1.bf16.msra.mxu0 0
        %3611 = vmatprep.subr.bf16.mxu0 0
        %3612 = vmatpush1.bf16.msra.mxu0 0
        %3613 = vmatprep.subr.bf16.mxu0 0
        %3614 = vmatpush1.bf16.msra.mxu0 0
        %3615 = vmatprep.subr.bf16.mxu0 0
        %3616 = vmatpush1.bf16.msra.mxu0 0
        %3617 = vmatprep.subr.bf16.mxu0 0
        %3618 = vmatpush1.bf16.msra.mxu0 0
        %3619 = vmatprep.subr.bf16.mxu0 0
        %3620 = vmatpush1.bf16.msra.mxu0 0
        %3621 = vmatprep.subr.bf16.mxu0 0
        %3622 = vmatpush1.bf16.msra.mxu0 0
        %3623 = vmatprep.subr.bf16.mxu0 0
        %3624 = vmatpush1.bf16.msra.mxu0 0
        %3625 = vmatprep.mubr.bf16.mxu0 0
        %3626 = vmatmul.mubr.bf16.gmra.mrb[0].mxu0 %v3509
        %v3627 = vpop.f32.mrb[0].mxu0
        %v3628 = vadd.f32 0.0, %v3627
        %v3629 = vpop.f32.mrb[0].mxu0
        %v3630 = vadd.f32 0.0, %v3629
        %v3631 = vpop.f32.mrb[0].mxu0
        %v3632 = vadd.f32 0.0, %v3631
        %v3633 = vpop.f32.mrb[0].mxu0
        %v3634 = vadd.f32 0.0, %v3633
        %3635 = vmatprep.mubr.bf16.mxu0 0
        %3636 = vmatmul.mubr.bf16.gmra.mrb[0].mxu0 %v3512
        %v3637 = vpop.f32.mrb[0].mxu0
        %v3638 = vadd.f32 0.0, %v3637
        %v3639 = vpop.f32.mrb[0].mxu0
        %v3640 = vadd.f32 0.0, %v3639
        %v3641 = vpop.f32.mrb[0].mxu0
        %v3642 = vadd.f32 0.0, %v3641
        %v3643 = vpop.f32.mrb[0].mxu0
        %v3644 = vadd.f32 0.0, %v3643
        %3645 = vmatprep.mubr.bf16.mxu0 0
        %3646 = vmatmul.mubr.bf16.gmra.mrb[0].mxu0 %v3515
        %v3647 = vpop.f32.mrb[0].mxu0
        %v3648 = vadd.f32 0.0, %v3647
        %v3649 = vpop.f32.mrb[0].mxu0
        %v3650 = vadd.f32 0.0, %v3649
        %v3651 = vpop.f32.mrb[0].mxu0
        %v3652 = vadd.f32 0.0, %v3651
        %v3653 = vpop.f32.mrb[0].mxu0
        %v3654 = vadd.f32 0.0, %v3653
        %3655 = vmatprep.mubr.bf16.mxu0 0
        %3656 = vmatmul.mubr.bf16.gmra.mrb[0].mxu0 %v3518
        %v3657 = vpop.f32.mrb[0].mxu0
        %v3658 = vadd.f32 0.0, %v3657
        %v3659 = vpop.f32.mrb[0].mxu0
        %v3660 = vadd.f32 0.0, %v3659
        %v3661 = vpop.f32.mrb[0].mxu0
        %v3662 = vadd.f32 0.0, %v3661
        %v3663 = vpop.f32.mrb[0].mxu0
        %v3664 = vadd.f32 0.0, %v3663
        %3665 = vdwg.mxu0
        %v3666 = vadd.f32 %v3410, %v3555
        %v3667 = vadd.f32 %v3411, %v3557
        %v3668 = vadd.f32 %v3412, %v3628
        %v3669 = vadd.f32 %v3413, %v3630
        %v3670 = vadd.f32 %v3414, %v3559
        %v3671 = vadd.f32 %v3415, %v3561
        %v3672 = vadd.f32 %v3416, %v3632
        %v3673 = vadd.f32 %v3417, %v3634
        %v3674 = vadd.f32 %v3418, %v3565
        %v3675 = vadd.f32 %v3419, %v3567
        %v3676 = vadd.f32 %v3420, %v3638
        %v3677 = vadd.f32 %v3421, %v3640
        %v3678 = vadd.f32 %v3422, %v3569
        %v3679 = vadd.f32 %v3423, %v3571
        %v3680 = vadd.f32 %v3424, %v3642
        %v3681 = vadd.f32 %v3425, %v3644
        %v3682 = vadd.f32 %v3426, %v3575
        %v3683 = vadd.f32 %v3427, %v3577
        %v3684 = vadd.f32 %v3428, %v3648
        %v3685 = vadd.f32 %v3429, %v3650
        %v3686 = vadd.f32 %v3430, %v3579
        %v3687 = vadd.f32 %v3431, %v3581
        %v3688 = vadd.f32 %v3432, %v3652
        %v3689 = vadd.f32 %v3433, %v3654
        %v3690 = vadd.f32 %v3434, %v3585
        %v3691 = vadd.f32 %v3435, %v3587
        %v3692 = vadd.f32 %v3436, %v3658
        %v3693 = vadd.f32 %v3437, %v3660
        %v3694 = vadd.f32 %v3438, %v3589
        %v3695 = vadd.f32 %v3439, %v3591
        %v3696 = vadd.f32 %v3440, %v3662
        %v3697 = vadd.f32 %v3441, %v3664
        %s3698 = scalar_lea.vmem %s6, 288
        %v3699 = vld [vmem:[%s3698] sm:$0xf]
        %v3700 = vld [vmem:[%s3698 + $0x4] sm:$0xf]
        %v3701 = vld [vmem:[%s3698 + $0x8] sm:$0xf]
        %v3702 = vld [vmem:[%s3698 + $0xc] sm:$0xf]
        %v3703 = vld [vmem:[%s3698 + $0x10] sm:$0xf]
        %v3704 = vld [vmem:[%s3698 + $0x14] sm:$0xf]
        %v3705 = vld [vmem:[%s3698 + $0x18] sm:$0xf]
        %v3706 = vld [vmem:[%s3698 + $0x1c] sm:$0xf]
        %v3715 = vunpack.c.l.b16 %v3699
        %v3716 = vunpack.c.l.b16 %v3700
        %v3717 = vunpack.c.l.b16 %v3701
        %v3718 = vunpack.c.l.b16 %v3702
        %v3719 = vunpack.c.l.b16 %v3703
        %v3720 = vunpack.c.l.b16 %v3704
        %v3721 = vunpack.c.l.b16 %v3705
        %v3722 = vunpack.c.l.b16 %v3706
        %v3723 = vpack.c.b16 %v3716, %v3715
        %v3724 = vpack.c.b16 %v3718, %v3717
        %v3725 = vpack.c.b16 %v3720, %v3719
        %v3726 = vpack.c.b16 %v3722, %v3721
        %3727 = vrot.lane.b32.xlu0 %v2757, 120
        %v3728 = vpop.permute.xlu0 %3727
        %3729 = vrot.lane.b32.xlu0 %v2758, 120
        %v3730 = vpop.permute.xlu0 %3729
        %3731 = vrot.lane.b32.xlu0 %v2759, 120
        %v3732 = vpop.permute.xlu0 %3731
        %3733 = vrot.lane.b32.xlu0 %v2760, 120
        %v3734 = vpop.permute.xlu0 %3733
        %3735 = vrot.lane.b32.xlu0 %v2774, 120
        %v3736 = vpop.permute.xlu0 %3735
        %3737 = vrot.lane.b32.xlu0 %v2761, 120
        %v3738 = vpop.permute.xlu0 %3737
        %3739 = vrot.lane.b32.xlu0 %v2762, 120
        %v3740 = vpop.permute.xlu0 %3739
        %3741 = vrot.lane.b32.xlu0 %v2763, 120
        %v3742 = vpop.permute.xlu0 %3741
        %3743 = vrot.lane.b32.xlu0 %v2764, 120
        %v3744 = vpop.permute.xlu0 %3743
        %3745 = vrot.lane.b32.xlu0 %v2775, 120
        %v3746 = vpop.permute.xlu0 %3745
        %vm3747 = vcmask 982016
        %v3748 = vsel %vm3747, %v3728, %v3730
        %v3749 = vsel %vm3747, %v3730, %v3732
        %v3750 = vsel %vm3747, %v3732, %v3734
        %v3751 = vsel %vm3747, %v3734, %v3736
        %v3752 = vsel %vm3747, %v3738, %v3740
        %v3753 = vsel %vm3747, %v3740, %v3742
        %v3754 = vsel %vm3747, %v3742, %v3744
        %v3755 = vsel %vm3747, %v3744, %v3746
        %v3765 = vsel %vm1081, %v3723, 0
        %v3768 = vsel %vm1081, %v3724, 0
        %v3771 = vsel %vm1081, %v3725, 0
        %v3774 = vsel %vm1081, %v3726, 0
        %3776 = vmatprep.subr.bf16.mxu0 %v3749
        %3777 = vmatpush1.bf16.msra.mxu0 %v3748
        %3778 = vmatprep.subr.bf16.mxu0 %v3753
        %3779 = vmatpush1.bf16.msra.mxu0 %v3752
        %3780 = vmatprep.subr.bf16.mxu0 0
        %3781 = vmatpush1.bf16.msra.mxu0 0
        %3782 = vmatprep.subr.bf16.mxu0 0
        %3783 = vmatpush1.bf16.msra.mxu0 0
        %3784 = vmatprep.subr.bf16.mxu0 0
        %3785 = vmatpush1.bf16.msra.mxu0 0
        %3786 = vmatprep.subr.bf16.mxu0 0
        %3787 = vmatpush1.bf16.msra.mxu0 0
        %3788 = vmatprep.subr.bf16.mxu0 0
        %3789 = vmatpush1.bf16.msra.mxu0 0
        %3790 = vmatprep.subr.bf16.mxu0 0
        %3791 = vmatpush1.bf16.msra.mxu0 0
        %3792 = vmatprep.subr.bf16.mxu0 0
        %3793 = vmatpush1.bf16.msra.mxu0 0
        %3794 = vmatprep.subr.bf16.mxu0 0
        %3795 = vmatpush1.bf16.msra.mxu0 0
        %3796 = vmatprep.subr.bf16.mxu0 0
        %3797 = vmatpush1.bf16.msra.mxu0 0
        %3798 = vmatprep.subr.bf16.mxu0 0
        %3799 = vmatpush1.bf16.msra.mxu0 0
        %3800 = vmatprep.subr.bf16.mxu0 0
        %3801 = vmatpush1.bf16.msra.mxu0 0
        %3802 = vmatprep.subr.bf16.mxu0 0
        %3803 = vmatpush1.bf16.msra.mxu0 0
        %3804 = vmatprep.subr.bf16.mxu0 0
        %3805 = vmatpush1.bf16.msra.mxu0 0
        %3806 = vmatprep.subr.bf16.mxu0 0
        %3807 = vmatpush1.bf16.msra.mxu0 0
        %3808 = vmatprep.mubr.bf16.mxu0 0
        %3809 = vmatmul.mubr.bf16.gmra.mrb[0].mxu0 %v3765
        %v3810 = vpop.f32.mrb[0].mxu0
        %v3811 = vadd.f32 0.0, %v3810
        %v3812 = vpop.f32.mrb[0].mxu0
        %v3813 = vadd.f32 0.0, %v3812
        %v3814 = vpop.f32.mrb[0].mxu0
        %v3815 = vadd.f32 0.0, %v3814
        %v3816 = vpop.f32.mrb[0].mxu0
        %v3817 = vadd.f32 0.0, %v3816
        %3818 = vmatprep.mubr.bf16.mxu0 0
        %3819 = vmatmul.mubr.bf16.gmra.mrb[0].mxu0 %v3768
        %v3820 = vpop.f32.mrb[0].mxu0
        %v3821 = vadd.f32 0.0, %v3820
        %v3822 = vpop.f32.mrb[0].mxu0
        %v3823 = vadd.f32 0.0, %v3822
        %v3824 = vpop.f32.mrb[0].mxu0
        %v3825 = vadd.f32 0.0, %v3824
        %v3826 = vpop.f32.mrb[0].mxu0
        %v3827 = vadd.f32 0.0, %v3826
        %3828 = vmatprep.mubr.bf16.mxu0 0
        %3829 = vmatmul.mubr.bf16.gmra.mrb[0].mxu0 %v3771
        %v3830 = vpop.f32.mrb[0].mxu0
        %v3831 = vadd.f32 0.0, %v3830
        %v3832 = vpop.f32.mrb[0].mxu0
        %v3833 = vadd.f32 0.0, %v3832
        %v3834 = vpop.f32.mrb[0].mxu0
        %v3835 = vadd.f32 0.0, %v3834
        %v3836 = vpop.f32.mrb[0].mxu0
        %v3837 = vadd.f32 0.0, %v3836
        %3838 = vmatprep.mubr.bf16.mxu0 0
        %3839 = vmatmul.mubr.bf16.gmra.mrb[0].mxu0 %v3774
        %v3840 = vpop.f32.mrb[0].mxu0
        %v3841 = vadd.f32 0.0, %v3840
        %v3842 = vpop.f32.mrb[0].mxu0
        %v3843 = vadd.f32 0.0, %v3842
        %v3844 = vpop.f32.mrb[0].mxu0
        %v3845 = vadd.f32 0.0, %v3844
        %v3846 = vpop.f32.mrb[0].mxu0
        %v3847 = vadd.f32 0.0, %v3846
        %3848 = vdwg.mxu0
        %3849 = vmatprep.subr.bf16.mxu0 %v3751
        %3850 = vmatpush1.bf16.msra.mxu0 %v3750
        %3851 = vmatprep.subr.bf16.mxu0 %v3755
        %3852 = vmatpush1.bf16.msra.mxu0 %v3754
        %3853 = vmatprep.subr.bf16.mxu0 0
        %3854 = vmatpush1.bf16.msra.mxu0 0
        %3855 = vmatprep.subr.bf16.mxu0 0
        %3856 = vmatpush1.bf16.msra.mxu0 0
        %3857 = vmatprep.subr.bf16.mxu0 0
        %3858 = vmatpush1.bf16.msra.mxu0 0
        %3859 = vmatprep.subr.bf16.mxu0 0
        %3860 = vmatpush1.bf16.msra.mxu0 0
        %3861 = vmatprep.subr.bf16.mxu0 0
        %3862 = vmatpush1.bf16.msra.mxu0 0
        %3863 = vmatprep.subr.bf16.mxu0 0
        %3864 = vmatpush1.bf16.msra.mxu0 0
        %3865 = vmatprep.subr.bf16.mxu0 0
        %3866 = vmatpush1.bf16.msra.mxu0 0
        %3867 = vmatprep.subr.bf16.mxu0 0
        %3868 = vmatpush1.bf16.msra.mxu0 0
        %3869 = vmatprep.subr.bf16.mxu0 0
        %3870 = vmatpush1.bf16.msra.mxu0 0
        %3871 = vmatprep.subr.bf16.mxu0 0
        %3872 = vmatpush1.bf16.msra.mxu0 0
        %3873 = vmatprep.subr.bf16.mxu0 0
        %3874 = vmatpush1.bf16.msra.mxu0 0
        %3875 = vmatprep.subr.bf16.mxu0 0
        %3876 = vmatpush1.bf16.msra.mxu0 0
        %3877 = vmatprep.subr.bf16.mxu0 0
        %3878 = vmatpush1.bf16.msra.mxu0 0
        %3879 = vmatprep.subr.bf16.mxu0 0
        %3880 = vmatpush1.bf16.msra.mxu0 0
        %3881 = vmatprep.mubr.bf16.mxu0 0
        %3882 = vmatmul.mubr.bf16.gmra.mrb[0].mxu0 %v3765
        %v3883 = vpop.f32.mrb[0].mxu0
        %v3884 = vadd.f32 0.0, %v3883
        %v3885 = vpop.f32.mrb[0].mxu0
        %v3886 = vadd.f32 0.0, %v3885
        %v3887 = vpop.f32.mrb[0].mxu0
        %v3888 = vadd.f32 0.0, %v3887
        %v3889 = vpop.f32.mrb[0].mxu0
        %v3890 = vadd.f32 0.0, %v3889
        %3891 = vmatprep.mubr.bf16.mxu0 0
        %3892 = vmatmul.mubr.bf16.gmra.mrb[0].mxu0 %v3768
        %v3893 = vpop.f32.mrb[0].mxu0
        %v3894 = vadd.f32 0.0, %v3893
        %v3895 = vpop.f32.mrb[0].mxu0
        %v3896 = vadd.f32 0.0, %v3895
        %v3897 = vpop.f32.mrb[0].mxu0
        %v3898 = vadd.f32 0.0, %v3897
        %v3899 = vpop.f32.mrb[0].mxu0
        %v3900 = vadd.f32 0.0, %v3899
        %3901 = vmatprep.mubr.bf16.mxu0 0
        %3902 = vmatmul.mubr.bf16.gmra.mrb[0].mxu0 %v3771
        %v3903 = vpop.f32.mrb[0].mxu0
        %v3904 = vadd.f32 0.0, %v3903
        %v3905 = vpop.f32.mrb[0].mxu0
        %v3906 = vadd.f32 0.0, %v3905
        %v3907 = vpop.f32.mrb[0].mxu0
        %v3908 = vadd.f32 0.0, %v3907
        %v3909 = vpop.f32.mrb[0].mxu0
        %v3910 = vadd.f32 0.0, %v3909
        %3911 = vmatprep.mubr.bf16.mxu0 0
        %3912 = vmatmul.mubr.bf16.gmra.mrb[0].mxu0 %v3774
        %v3913 = vpop.f32.mrb[0].mxu0
        %v3914 = vadd.f32 0.0, %v3913
        %v3915 = vpop.f32.mrb[0].mxu0
        %v3916 = vadd.f32 0.0, %v3915
        %v3917 = vpop.f32.mrb[0].mxu0
        %v3918 = vadd.f32 0.0, %v3917
        %v3919 = vpop.f32.mrb[0].mxu0
        %v3920 = vadd.f32 0.0, %v3919
        %3921 = vdwg.mxu0
        %v3922 = vadd.f32 %v3666, %v3811
        %v3923 = vadd.f32 %v3667, %v3813
        %v3924 = vadd.f32 %v3668, %v3884
        %v3925 = vadd.f32 %v3669, %v3886
        %v3926 = vadd.f32 %v3670, %v3815
        %v3927 = vadd.f32 %v3671, %v3817
        %v3928 = vadd.f32 %v3672, %v3888
        %v3929 = vadd.f32 %v3673, %v3890
        %v3930 = vadd.f32 %v3674, %v3821
        %v3931 = vadd.f32 %v3675, %v3823
        %v3932 = vadd.f32 %v3676, %v3894
        %v3933 = vadd.f32 %v3677, %v3896
        %v3934 = vadd.f32 %v3678, %v3825
        %v3935 = vadd.f32 %v3679, %v3827
        %v3936 = vadd.f32 %v3680, %v3898
        %v3937 = vadd.f32 %v3681, %v3900
        %v3938 = vadd.f32 %v3682, %v3831
        %v3939 = vadd.f32 %v3683, %v3833
        %v3940 = vadd.f32 %v3684, %v3904
        %v3941 = vadd.f32 %v3685, %v3906
        %v3942 = vadd.f32 %v3686, %v3835
        %v3943 = vadd.f32 %v3687, %v3837
        %v3944 = vadd.f32 %v3688, %v3908
        %v3945 = vadd.f32 %v3689, %v3910
        %v3946 = vadd.f32 %v3690, %v3841
        %v3947 = vadd.f32 %v3691, %v3843
        %v3948 = vadd.f32 %v3692, %v3914
        %v3949 = vadd.f32 %v3693, %v3916
        %v3950 = vadd.f32 %v3694, %v3845
        %v3951 = vadd.f32 %v3695, %v3847
        %v3952 = vadd.f32 %v3696, %v3918
        %v3953 = vadd.f32 %v3697, %v3920
        %s3954 = scalar_lea.vmem %s788, 64
        %v3955 = vld [vmem:[%s3954] sm:$0xff]
        %v3956 = vld [vmem:[%s3954 + $0x8] sm:$0xff]
        %v3957 = vld [vmem:[%s3954 + $0x10] sm:$0xff]
        %v3958 = vld [vmem:[%s3954 + $0x18] sm:$0xff]
        %v3959 = vld [vmem:[%s3954 + $0x20] sm:$0xff]
        %v3960 = vld [vmem:[%s3954 + $0x28] sm:$0xff]
        %v3961 = vld [vmem:[%s3954 + $0x30] sm:$0xff]
        %v3962 = vld [vmem:[%s3954 + $0x38] sm:$0xff]
        %3964 = vset.pattern.permute.xlu0 0
        %3965 = vperm.xlu0 %3964, %v3955
        %v3966 = vpop.permute.xlu0 %3965
        %3969 = vset.pattern.permute.xlu0 0
        %3970 = vperm.xlu0 %3969, %v3956
        %v3971 = vpop.permute.xlu0 %3970
        %3974 = vset.pattern.permute.xlu0 0
        %3975 = vperm.xlu0 %3974, %v3957
        %v3976 = vpop.permute.xlu0 %3975
        %3979 = vset.pattern.permute.xlu0 0
        %3980 = vperm.xlu0 %3979, %v3958
        %v3981 = vpop.permute.xlu0 %3980
        %3984 = vset.pattern.permute.xlu0 0
        %3985 = vperm.xlu0 %3984, %v3959
        %v3986 = vpop.permute.xlu0 %3985
        %3989 = vset.pattern.permute.xlu0 0
        %3990 = vperm.xlu0 %3989, %v3960
        %v3991 = vpop.permute.xlu0 %3990
        %3994 = vset.pattern.permute.xlu0 0
        %3995 = vperm.xlu0 %3994, %v3961
        %v3996 = vpop.permute.xlu0 %3995
        %3999 = vset.pattern.permute.xlu0 0
        %4000 = vperm.xlu0 %3999, %v3962
        %v4001 = vpop.permute.xlu0 %4000
        %v4003 = vadd.f32 %v3922, %v3966
        %v4004 = vadd.f32 %v3923, %v3966
        %v4005 = vadd.f32 %v3924, %v3966
        %v4006 = vadd.f32 %v3925, %v3966
        %v4007 = vadd.f32 %v3926, %v3971
        %v4008 = vadd.f32 %v3927, %v3971
        %v4009 = vadd.f32 %v3928, %v3971
        %v4010 = vadd.f32 %v3929, %v3971
        %v4011 = vadd.f32 %v3930, %v3976
        %v4012 = vadd.f32 %v3931, %v3976
        %v4013 = vadd.f32 %v3932, %v3976
        %v4014 = vadd.f32 %v3933, %v3976
        %v4015 = vadd.f32 %v3934, %v3981
        %v4016 = vadd.f32 %v3935, %v3981
        %v4017 = vadd.f32 %v3936, %v3981
        %v4018 = vadd.f32 %v3937, %v3981
        %v4019 = vadd.f32 %v3938, %v3986
        %v4020 = vadd.f32 %v3939, %v3986
        %v4021 = vadd.f32 %v3940, %v3986
        %v4022 = vadd.f32 %v3941, %v3986
        %v4023 = vadd.f32 %v3942, %v3991
        %v4024 = vadd.f32 %v3943, %v3991
        %v4025 = vadd.f32 %v3944, %v3991
        %v4026 = vadd.f32 %v3945, %v3991
        %v4027 = vadd.f32 %v3946, %v3996
        %v4028 = vadd.f32 %v3947, %v3996
        %v4029 = vadd.f32 %v3948, %v3996
        %v4030 = vadd.f32 %v3949, %v3996
        %v4031 = vadd.f32 %v3950, %v4001
        %v4032 = vadd.f32 %v3951, %v4001
        %v4033 = vadd.f32 %v3952, %v4001
        %v4034 = vadd.f32 %v3953, %v4001
        %v4035 = vtanh.pop %v4003
        %v4036 = vtanh.pop %v4004
        %v4037 = vtanh.pop %v4005
        %v4038 = vtanh.pop %v4006
        %v4039 = vtanh.pop %v4007
        %v4040 = vtanh.pop %v4008
        %v4041 = vtanh.pop %v4009
        %v4042 = vtanh.pop %v4010
        %v4043 = vtanh.pop %v4011
        %v4044 = vtanh.pop %v4012
        %v4045 = vtanh.pop %v4013
        %v4046 = vtanh.pop %v4014
        %v4047 = vtanh.pop %v4015
        %v4048 = vtanh.pop %v4016
        %v4049 = vtanh.pop %v4017
        %v4050 = vtanh.pop %v4018
        %v4051 = vxor.u32 %v4019, 2147483648
        %v4052 = vxor.u32 %v4020, 2147483648
        %v4053 = vxor.u32 %v4021, 2147483648
        %v4054 = vxor.u32 %v4022, 2147483648
        %v4055 = vxor.u32 %v4023, 2147483648
        %v4056 = vxor.u32 %v4024, 2147483648
        %v4057 = vxor.u32 %v4025, 2147483648
        %v4058 = vxor.u32 %v4026, 2147483648
        %v4059 = vxor.u32 %v4027, 2147483648
        %v4060 = vxor.u32 %v4028, 2147483648
        %v4061 = vxor.u32 %v4029, 2147483648
        %v4062 = vxor.u32 %v4030, 2147483648
        %v4063 = vxor.u32 %v4031, 2147483648
        %v4064 = vxor.u32 %v4032, 2147483648
        %v4065 = vxor.u32 %v4033, 2147483648
        %v4066 = vxor.u32 %v4034, 2147483648
        %v4067 = vmul.f32 %v4051, 1.442695
        %v4068 = vpow.pop %v4067
        %v4069 = vmul.f32 %v4052, 1.442695
        %v4070 = vpow.pop %v4069
        %v4071 = vmul.f32 %v4053, 1.442695
        %v4072 = vpow.pop %v4071
        %v4073 = vmul.f32 %v4054, 1.442695
        %v4074 = vpow.pop %v4073
        %v4075 = vmul.f32 %v4055, 1.442695
        %v4076 = vpow.pop %v4075
        %v4077 = vmul.f32 %v4056, 1.442695
        %v4078 = vpow.pop %v4077
        %v4079 = vmul.f32 %v4057, 1.442695
        %v4080 = vpow.pop %v4079
        %v4081 = vmul.f32 %v4058, 1.442695
        %v4082 = vpow.pop %v4081
        %v4083 = vmul.f32 %v4059, 1.442695
        %v4084 = vpow.pop %v4083
        %v4085 = vmul.f32 %v4060, 1.442695
        %v4086 = vpow.pop %v4085
        %v4087 = vmul.f32 %v4061, 1.442695
        %v4088 = vpow.pop %v4087
        %v4089 = vmul.f32 %v4062, 1.442695
        %v4090 = vpow.pop %v4089
        %v4091 = vmul.f32 %v4063, 1.442695
        %v4092 = vpow.pop %v4091
        %v4093 = vmul.f32 %v4064, 1.442695
        %v4094 = vpow.pop %v4093
        %v4095 = vmul.f32 %v4065, 1.442695
        %v4096 = vpow.pop %v4095
        %v4097 = vmul.f32 %v4066, 1.442695
        %v4098 = vpow.pop %v4097
        %v4099 = vadd.f32 %v4068, 1.0
        %v4100 = vadd.f32 %v4070, 1.0
        %v4101 = vadd.f32 %v4072, 1.0
        %v4102 = vadd.f32 %v4074, 1.0
        %v4103 = vadd.f32 %v4076, 1.0
        %v4104 = vadd.f32 %v4078, 1.0
        %v4105 = vadd.f32 %v4080, 1.0
        %v4106 = vadd.f32 %v4082, 1.0
        %v4107 = vadd.f32 %v4084, 1.0
        %v4108 = vadd.f32 %v4086, 1.0
        %v4109 = vadd.f32 %v4088, 1.0
        %v4110 = vadd.f32 %v4090, 1.0
        %v4111 = vadd.f32 %v4092, 1.0
        %v4112 = vadd.f32 %v4094, 1.0
        %v4113 = vadd.f32 %v4096, 1.0
        %v4114 = vadd.f32 %v4098, 1.0
        %v4115 = vrcp.pop %v4099
        %v4116 = vmul.f32 1.0, %v4115
        %v4117 = vrcp.pop %v4100
        %v4118 = vmul.f32 1.0, %v4117
        %v4119 = vrcp.pop %v4101
        %v4120 = vmul.f32 1.0, %v4119
        %v4121 = vrcp.pop %v4102
        %v4122 = vmul.f32 1.0, %v4121
        %v4123 = vrcp.pop %v4103
        %v4124 = vmul.f32 1.0, %v4123
        %v4125 = vrcp.pop %v4104
        %v4126 = vmul.f32 1.0, %v4125
        %v4127 = vrcp.pop %v4105
        %v4128 = vmul.f32 1.0, %v4127
        %v4129 = vrcp.pop %v4106
        %v4130 = vmul.f32 1.0, %v4129
        %v4131 = vrcp.pop %v4107
        %v4132 = vmul.f32 1.0, %v4131
        %v4133 = vrcp.pop %v4108
        %v4134 = vmul.f32 1.0, %v4133
        %v4135 = vrcp.pop %v4109
        %v4136 = vmul.f32 1.0, %v4135
        %v4137 = vrcp.pop %v4110
        %v4138 = vmul.f32 1.0, %v4137
        %v4139 = vrcp.pop %v4111
        %v4140 = vmul.f32 1.0, %v4139
        %v4141 = vrcp.pop %v4112
        %v4142 = vmul.f32 1.0, %v4141
        %v4143 = vrcp.pop %v4113
        %v4144 = vmul.f32 1.0, %v4143
        %v4145 = vrcp.pop %v4114
        %v4146 = vmul.f32 1.0, %v4145
        %v4147 = vmul.f32 %v4035, %v4116
        %v4148 = vmul.f32 %v4036, %v4118
        %v4149 = vmul.f32 %v4037, %v4120
        %v4150 = vmul.f32 %v4038, %v4122
        %v4151 = vmul.f32 %v4039, %v4124
        %v4152 = vmul.f32 %v4040, %v4126
        %v4153 = vmul.f32 %v4041, %v4128
        %v4154 = vmul.f32 %v4042, %v4130
        %v4155 = vmul.f32 %v4043, %v4132
        %v4156 = vmul.f32 %v4044, %v4134
        %v4157 = vmul.f32 %v4045, %v4136
        %v4158 = vmul.f32 %v4046, %v4138
        %v4159 = vmul.f32 %v4047, %v4140
        %v4160 = vmul.f32 %v4048, %v4142
        %v4161 = vmul.f32 %v4049, %v4144
        %v4162 = vmul.f32 %v4050, %v4146
        %s4163 = scalar_lea.vmem %s7, 32
        %v4164 = vld [vmem:[%s4163] sm:$0xf]
        %v4165 = vld [vmem:[%s4163 + $0x4] sm:$0xf]
        %v4166 = vld [vmem:[%s4163 + $0x8] sm:$0xf]
        %v4167 = vld [vmem:[%s4163 + $0xc] sm:$0xf]
        %v4168 = vld [vmem:[%s4163 + $0x10] sm:$0xf]
        %v4169 = vld [vmem:[%s4163 + $0x14] sm:$0xf]
        %v4170 = vld [vmem:[%s4163 + $0x18] sm:$0xf]
        %v4171 = vld [vmem:[%s4163 + $0x1c] sm:$0xf]
        %v4172 = vpack.c.bf16 %v4151, %v4147
        %v4173 = vpack.c.bf16 %v4152, %v4148
        %v4174 = vpack.c.bf16 %v4153, %v4149
        %v4175 = vpack.c.bf16 %v4154, %v4150
        %v4176 = vpack.c.bf16 %v4159, %v4155
        %v4177 = vpack.c.bf16 %v4160, %v4156
        %v4178 = vpack.c.bf16 %v4161, %v4157
        %v4179 = vpack.c.bf16 %v4162, %v4158
        %s4180 = scalar_lea.vmem %s8, 64
        %v4181 = vld [vmem:[%s4180] sm:$0xff]
        %v4182 = vld [vmem:[%s4180 + $0x8] sm:$0xff]
        %v4183 = vld [vmem:[%s4180 + $0x10] sm:$0xff]
        %v4184 = vld [vmem:[%s4180 + $0x18] sm:$0xff]
        %v4185 = vld [vmem:[%s4180 + $0x20] sm:$0xff]
        %v4186 = vld [vmem:[%s4180 + $0x28] sm:$0xff]
        %v4187 = vld [vmem:[%s4180 + $0x30] sm:$0xff]
        %v4188 = vld [vmem:[%s4180 + $0x38] sm:$0xff]
        %4190 = vset.pattern.permute.xlu0 0
        %4191 = vperm.xlu0 %4190, %v4181
        %v4192 = vpop.permute.xlu0 %4191
        %4195 = vset.pattern.permute.xlu0 0
        %4196 = vperm.xlu0 %4195, %v4182
        %v4197 = vpop.permute.xlu0 %4196
        %4200 = vset.pattern.permute.xlu0 0
        %4201 = vperm.xlu0 %4200, %v4183
        %v4202 = vpop.permute.xlu0 %4201
        %4205 = vset.pattern.permute.xlu0 0
        %4206 = vperm.xlu0 %4205, %v4184
        %v4207 = vpop.permute.xlu0 %4206
        %4210 = vset.pattern.permute.xlu0 0
        %4211 = vperm.xlu0 %4210, %v4185
        %v4212 = vpop.permute.xlu0 %4211
        %4215 = vset.pattern.permute.xlu0 0
        %4216 = vperm.xlu0 %4215, %v4186
        %v4217 = vpop.permute.xlu0 %4216
        %4220 = vset.pattern.permute.xlu0 0
        %4221 = vperm.xlu0 %4220, %v4187
        %v4222 = vpop.permute.xlu0 %4221
        %4225 = vset.pattern.permute.xlu0 0
        %4226 = vperm.xlu0 %4225, %v4188
        %v4227 = vpop.permute.xlu0 %4226
        %v4237 = vunpack.c.l.b16 %v4164
        %v4238 = vunpack.c.l.b16 %v4165
        %v4239 = vunpack.c.l.b16 %v4166
        %v4240 = vunpack.c.l.b16 %v4167
        %v4241 = vunpack.c.l.b16 %v4168
        %v4242 = vunpack.c.l.b16 %v4169
        %v4243 = vunpack.c.l.b16 %v4170
        %v4244 = vunpack.c.l.b16 %v4171
        %v4245 = vpack.c.b16 %v4238, %v4237
        %v4246 = vpack.c.b16 %v4240, %v4239
        %v4247 = vpack.c.b16 %v4242, %v4241
        %v4248 = vpack.c.b16 %v4244, %v4243
        %v4250 = vsel %vm1081, %v4245, 0
        %v4253 = vsel %vm1081, %v4246, 0
        %v4256 = vsel %vm1081, %v4247, 0
        %v4259 = vsel %vm1081, %v4248, 0
        %4261 = vmatprep.subr.bf16.mxu0 %v4173
        %4262 = vmatpush1.bf16.msra.mxu0 %v4172
        %4263 = vmatprep.subr.bf16.mxu0 %v4177
        %4264 = vmatpush1.bf16.msra.mxu0 %v4176
        %4265 = vmatprep.subr.bf16.mxu0 0
        %4266 = vmatpush1.bf16.msra.mxu0 0
        %4267 = vmatprep.subr.bf16.mxu0 0
        %4268 = vmatpush1.bf16.msra.mxu0 0
        %4269 = vmatprep.subr.bf16.mxu0 0
        %4270 = vmatpush1.bf16.msra.mxu0 0
        %4271 = vmatprep.subr.bf16.mxu0 0
        %4272 = vmatpush1.bf16.msra.mxu0 0
        %4273 = vmatprep.subr.bf16.mxu0 0
        %4274 = vmatpush1.bf16.msra.mxu0 0
        %4275 = vmatprep.subr.bf16.mxu0 0
        %4276 = vmatpush1.bf16.msra.mxu0 0
        %4277 = vmatprep.subr.bf16.mxu0 0
        %4278 = vmatpush1.bf16.msra.mxu0 0
        %4279 = vmatprep.subr.bf16.mxu0 0
        %4280 = vmatpush1.bf16.msra.mxu0 0
        %4281 = vmatprep.subr.bf16.mxu0 0
        %4282 = vmatpush1.bf16.msra.mxu0 0
        %4283 = vmatprep.subr.bf16.mxu0 0
        %4284 = vmatpush1.bf16.msra.mxu0 0
        %4285 = vmatprep.subr.bf16.mxu0 0
        %4286 = vmatpush1.bf16.msra.mxu0 0
        %4287 = vmatprep.subr.bf16.mxu0 0
        %4288 = vmatpush1.bf16.msra.mxu0 0
        %4289 = vmatprep.subr.bf16.mxu0 0
        %4290 = vmatpush1.bf16.msra.mxu0 0
        %4291 = vmatprep.subr.bf16.mxu0 0
        %4292 = vmatpush1.bf16.msra.mxu0 0
        %4293 = vmatprep.mubr.bf16.mxu0 0
        %4294 = vmatmul.mubr.bf16.gmra.mrb[0].mxu0 %v4250
        %v4295 = vpop.f32.mrb[0].mxu0
        %v4296 = vadd.f32 %v4192, %v4295
        %v4297 = vpop.f32.mrb[0].mxu0
        %v4298 = vadd.f32 %v4192, %v4297
        %v4299 = vpop.f32.mrb[0].mxu0
        %v4300 = vadd.f32 %v4197, %v4299
        %v4301 = vpop.f32.mrb[0].mxu0
        %v4302 = vadd.f32 %v4197, %v4301
        %4303 = vmatprep.mubr.bf16.mxu0 0
        %4304 = vmatmul.mubr.bf16.gmra.mrb[0].mxu0 %v4253
        %v4305 = vpop.f32.mrb[0].mxu0
        %v4306 = vadd.f32 %v4202, %v4305
        %v4307 = vpop.f32.mrb[0].mxu0
        %v4308 = vadd.f32 %v4202, %v4307
        %v4309 = vpop.f32.mrb[0].mxu0
        %v4310 = vadd.f32 %v4207, %v4309
        %v4311 = vpop.f32.mrb[0].mxu0
        %v4312 = vadd.f32 %v4207, %v4311
        %4313 = vmatprep.mubr.bf16.mxu0 0
        %4314 = vmatmul.mubr.bf16.gmra.mrb[0].mxu0 %v4256
        %v4315 = vpop.f32.mrb[0].mxu0
        %v4316 = vpop.f32.mrb[0].mxu0
        %v4317 = vadd.f32 %v4212, %v4316
        %v4318 = vpop.f32.mrb[0].mxu0
        %v4319 = vpop.f32.mrb[0].mxu0
        %v4320 = vadd.f32 %v4217, %v4319
        %4321 = vmatprep.mubr.bf16.mxu0 0
        %4322 = vmatmul.mubr.bf16.gmra.mrb[0].mxu0 %v4259
        %v4323 = vpop.f32.mrb[0].mxu0
        %v4324 = vpop.f32.mrb[0].mxu0
        %v4325 = vadd.f32 %v4222, %v4324
        %v4326 = vpop.f32.mrb[0].mxu0
        %v4327 = vpop.f32.mrb[0].mxu0
        %v4328 = vadd.f32 %v4227, %v4327
        %4329 = vdwg.mxu0
        %4330 = vmatprep.subr.bf16.mxu0 %v4175
        %4331 = vmatpush1.bf16.msra.mxu0 %v4174
        %4332 = vmatprep.subr.bf16.mxu0 %v4179
        %4333 = vmatpush1.bf16.msra.mxu0 %v4178
        %4334 = vmatprep.subr.bf16.mxu0 0
        %4335 = vmatpush1.bf16.msra.mxu0 0
        %4336 = vmatprep.subr.bf16.mxu0 0
        %4337 = vmatpush1.bf16.msra.mxu0 0
        %4338 = vmatprep.subr.bf16.mxu0 0
        %4339 = vmatpush1.bf16.msra.mxu0 0
        %4340 = vmatprep.subr.bf16.mxu0 0
        %4341 = vmatpush1.bf16.msra.mxu0 0
        %4342 = vmatprep.subr.bf16.mxu0 0
        %4343 = vmatpush1.bf16.msra.mxu0 0
        %4344 = vmatprep.subr.bf16.mxu0 0
        %4345 = vmatpush1.bf16.msra.mxu0 0
        %4346 = vmatprep.subr.bf16.mxu0 0
        %4347 = vmatpush1.bf16.msra.mxu0 0
        %4348 = vmatprep.subr.bf16.mxu0 0
        %4349 = vmatpush1.bf16.msra.mxu0 0
        %4350 = vmatprep.subr.bf16.mxu0 0
        %4351 = vmatpush1.bf16.msra.mxu0 0
        %4352 = vmatprep.subr.bf16.mxu0 0
        %4353 = vmatpush1.bf16.msra.mxu0 0
        %4354 = vmatprep.subr.bf16.mxu0 0
        %4355 = vmatpush1.bf16.msra.mxu0 0
        %4356 = vmatprep.subr.bf16.mxu0 0
        %4357 = vmatpush1.bf16.msra.mxu0 0
        %4358 = vmatprep.subr.bf16.mxu0 0
        %4359 = vmatpush1.bf16.msra.mxu0 0
        %4360 = vmatprep.subr.bf16.mxu0 0
        %4361 = vmatpush1.bf16.msra.mxu0 0
        %4362 = vmatprep.mubr.bf16.mxu0 0
        %4363 = vmatmul.mubr.bf16.gmra.mrb[0].mxu0 %v4250
        %v4364 = vpop.f32.mrb[0].mxu0
        %v4365 = vadd.f32 %v4192, %v4364
        %v4366 = vpop.f32.mrb[0].mxu0
        %v4367 = vadd.f32 %v4192, %v4366
        %v4368 = vpop.f32.mrb[0].mxu0
        %v4369 = vadd.f32 %v4197, %v4368
        %v4370 = vpop.f32.mrb[0].mxu0
        %v4371 = vadd.f32 %v4197, %v4370
        %4372 = vmatprep.mubr.bf16.mxu0 0
        %4373 = vmatmul.mubr.bf16.gmra.mrb[0].mxu0 %v4253
        %v4374 = vpop.f32.mrb[0].mxu0
        %v4375 = vadd.f32 %v4202, %v4374
        %v4376 = vpop.f32.mrb[0].mxu0
        %v4377 = vadd.f32 %v4202, %v4376
        %v4378 = vpop.f32.mrb[0].mxu0
        %v4379 = vadd.f32 %v4207, %v4378
        %v4380 = vpop.f32.mrb[0].mxu0
        %v4381 = vadd.f32 %v4207, %v4380
        %4382 = vmatprep.mubr.bf16.mxu0 0
        %4383 = vmatmul.mubr.bf16.gmra.mrb[0].mxu0 %v4256
        %v4384 = vpop.f32.mrb[0].mxu0
        %v4385 = vadd.f32 %v4212, %v4384
        %v4386 = vpop.f32.mrb[0].mxu0
        %v4387 = vpop.f32.mrb[0].mxu0
        %v4388 = vadd.f32 %v4217, %v4387
        %v4389 = vpop.f32.mrb[0].mxu0
        %4390 = vmatprep.mubr.bf16.mxu0 0
        %4391 = vmatmul.mubr.bf16.gmra.mrb[0].mxu0 %v4259
        %v4392 = vpop.f32.mrb[0].mxu0
        %v4393 = vadd.f32 %v4222, %v4392
        %v4394 = vpop.f32.mrb[0].mxu0
        %v4395 = vpop.f32.mrb[0].mxu0
        %v4396 = vadd.f32 %v4227, %v4395
        %v4397 = vpop.f32.mrb[0].mxu0
        %4398 = vdwg.mxu0
        %v4399 = vadd.f32 %v2644, %v4296
        %v4400 = vadd.f32 %v2645, %v4298
        %v4401 = vadd.f32 %v2646, %v4365
        %v4402 = vadd.f32 %v2647, %v4367
        %v4403 = vadd.f32 %v2648, %v4300
        %v4404 = vadd.f32 %v2649, %v4302
        %v4405 = vadd.f32 %v2650, %v4369
        %v4406 = vadd.f32 %v2651, %v4371
        %v4407 = vadd.f32 %v2652, %v4306
        %v4408 = vadd.f32 %v2653, %v4308
        %v4409 = vadd.f32 %v2654, %v4375
        %v4410 = vadd.f32 %v2655, %v4377
        %v4411 = vadd.f32 %v2656, %v4310
        %v4412 = vadd.f32 %v2657, %v4312
        %v4413 = vadd.f32 %v2658, %v4379
        %v4414 = vadd.f32 %v2659, %v4381
        %v4415 = vmul.f32 %v4399, %v894
        %v4416 = vmul.f32 %v4400, %v895
        %v4417 = vmul.f32 %v4401, %v896
        %v4418 = vmul.f32 %v4402, %v897
        %v4419 = vmul.f32 %v4403, %v894
        %v4420 = vmul.f32 %v4404, %v895
        %v4421 = vmul.f32 %v4405, %v896
        %v4422 = vmul.f32 %v4406, %v897
        %v4423 = vmul.f32 %v4407, %v894
        %v4424 = vmul.f32 %v4408, %v895
        %v4425 = vmul.f32 %v4409, %v896
        %v4426 = vmul.f32 %v4410, %v897
        %v4427 = vmul.f32 %v4411, %v894
        %v4428 = vmul.f32 %v4412, %v895
        %v4429 = vmul.f32 %v4413, %v896
        %v4430 = vmul.f32 %v4414, %v897
        %v4431 = vadd.f32 %v2660, %v4317
        %v4432 = vadd.f32 %v2661, %v4385
        %v4433 = vadd.f32 %v2662, %v4320
        %v4434 = vadd.f32 %v2663, %v4388
        %v4435 = vadd.f32 %v2664, %v4325
        %v4436 = vadd.f32 %v2665, %v4393
        %v4437 = vadd.f32 %v2666, %v4328
        %v4438 = vadd.f32 %v2667, %v4396
        %4455 = vrot.lane.b32.xlu0 %v4415, 8
        %v4456 = vpop.permute.xlu0 %4455
        %4457 = vrot.lane.b32.xlu0 %v4416, 8
        %v4458 = vpop.permute.xlu0 %4457
        %4459 = vrot.lane.b32.xlu0 %v4417, 8
        %v4460 = vpop.permute.xlu0 %4459
        %4461 = vrot.lane.b32.xlu0 %v4418, 8
        %v4462 = vpop.permute.xlu0 %4461
        %4463 = vrot.lane.b32.xlu0 %v4419, 8
        %v4464 = vpop.permute.xlu0 %4463
        %4465 = vrot.lane.b32.xlu0 %v4420, 8
        %v4466 = vpop.permute.xlu0 %4465
        %4467 = vrot.lane.b32.xlu0 %v4421, 8
        %v4468 = vpop.permute.xlu0 %4467
        %4469 = vrot.lane.b32.xlu0 %v4422, 8
        %v4470 = vpop.permute.xlu0 %4469
        %4471 = vrot.lane.b32.xlu0 %v4423, 8
        %v4472 = vpop.permute.xlu0 %4471
        %4473 = vrot.lane.b32.xlu0 %v4424, 8
        %v4474 = vpop.permute.xlu0 %4473
        %4475 = vrot.lane.b32.xlu0 %v4425, 8
        %v4476 = vpop.permute.xlu0 %4475
        %4477 = vrot.lane.b32.xlu0 %v4426, 8
        %v4478 = vpop.permute.xlu0 %4477
        %4479 = vrot.lane.b32.xlu0 %v4427, 8
        %v4480 = vpop.permute.xlu0 %4479
        %4481 = vrot.lane.b32.xlu0 %v4428, 8
        %v4482 = vpop.permute.xlu0 %4481
        %4483 = vrot.lane.b32.xlu0 %v4429, 8
        %v4484 = vpop.permute.xlu0 %4483
        %4485 = vrot.lane.b32.xlu0 %v4430, 8
        %v4486 = vpop.permute.xlu0 %4485
        %vm4487 = vcmask 64512
        %v4488 = vsel %vm4487, %v4456, %v4458
        %v4489 = vsel %vm4487, %v4458, %v4460
        %v4490 = vsel %vm4487, %v4460, %v4462
        %v4491 = vsel %vm4487, %v4464, %v4466
        %v4492 = vsel %vm4487, %v4466, %v4468
        %v4493 = vsel %vm4487, %v4468, %v4470
        %v4494 = vsel %vm4487, %v4472, %v4474
        %v4495 = vsel %vm4487, %v4474, %v4476
        %v4496 = vsel %vm4487, %v4476, %v4478
        %v4497 = vsel %vm4487, %v4480, %v4482
        %v4498 = vsel %vm4487, %v4482, %v4484
        %v4499 = vsel %vm4487, %v4484, %v4486
        %v4520 = vsel %vm4487, 0.0, %v4456
        %v4521 = vsel %vm4487, 0.0, %v4464
        %v4522 = vsel %vm4487, 0.0, %v4472
        %v4523 = vsel %vm4487, 0.0, %v4480
        %v4524 = vsel %vm4487, %v4462, 0.0
        %v4525 = vsel %vm4487, %v4470, 0.0
        %v4526 = vsel %vm4487, %v4478, 0.0
        %v4527 = vsel %vm4487, %v4486, 0.0
        %v4528 = vpack.c.bf16 %v4521, %v4520
        %v4529 = vpack.c.bf16 %v4491, %v4488
        %v4530 = vpack.c.bf16 %v4492, %v4489
        %v4531 = vpack.c.bf16 %v4493, %v4490
        %v4532 = vpack.c.bf16 %v4523, %v4522
        %v4533 = vpack.c.bf16 %v4497, %v4494
        %v4534 = vpack.c.bf16 %v4498, %v4495
        %v4535 = vpack.c.bf16 %v4499, %v4496
        %s4536 = scalar_lea.vmem %s6, 320
        %v4537 = vld [vmem:[%s4536] sm:$0xf]
        %v4538 = vld [vmem:[%s4536 + $0x4] sm:$0xf]
        %v4539 = vld [vmem:[%s4536 + $0x8] sm:$0xf]
        %v4540 = vld [vmem:[%s4536 + $0xc] sm:$0xf]
        %v4541 = vld [vmem:[%s4536 + $0x10] sm:$0xf]
        %v4542 = vld [vmem:[%s4536 + $0x14] sm:$0xf]
        %v4543 = vld [vmem:[%s4536 + $0x18] sm:$0xf]
        %v4544 = vld [vmem:[%s4536 + $0x1c] sm:$0xf]
        %v4545 = vpack.c.bf16 %v4525, %v4524
        %v4546 = vpack.c.bf16 %v4527, %v4526
        %s4547 = scalar_lea.vmem %s6, 352
        %v4548 = vld [vmem:[%s4547] sm:$0xf]
        %v4549 = vld [vmem:[%s4547 + $0x4] sm:$0xf]
        %v4550 = vld [vmem:[%s4547 + $0x8] sm:$0xf]
        %v4551 = vld [vmem:[%s4547 + $0xc] sm:$0xf]
        %v4552 = vld [vmem:[%s4547 + $0x10] sm:$0xf]
        %v4553 = vld [vmem:[%s4547 + $0x14] sm:$0xf]
        %v4554 = vld [vmem:[%s4547 + $0x18] sm:$0xf]
        %v4555 = vld [vmem:[%s4547 + $0x1c] sm:$0xf]
        %v4564 = vunpack.c.l.b16 %v4548
        %v4565 = vunpack.c.l.b16 %v4549
        %v4566 = vunpack.c.l.b16 %v4550
        %v4567 = vunpack.c.l.b16 %v4551
        %v4568 = vunpack.c.l.b16 %v4552
        %v4569 = vunpack.c.l.b16 %v4553
        %v4570 = vunpack.c.l.b16 %v4554
        %v4571 = vunpack.c.l.b16 %v4555
        %v4572 = vpack.c.b16 %v4565, %v4564
        %v4573 = vpack.c.b16 %v4567, %v4566
        %v4574 = vpack.c.b16 %v4569, %v4568
        %v4575 = vpack.c.b16 %v4571, %v4570
        %4586 = vrot.lane.b32.xlu0 %v4528, 124
        %v4587 = vpop.permute.xlu0 %4586
        %4588 = vrot.lane.b32.xlu0 %v4529, 124
        %v4589 = vpop.permute.xlu0 %4588
        %4590 = vrot.lane.b32.xlu0 %v4530, 124
        %v4591 = vpop.permute.xlu0 %4590
        %4592 = vrot.lane.b32.xlu0 %v4531, 124
        %v4593 = vpop.permute.xlu0 %4592
        %4594 = vrot.lane.b32.xlu0 %v4545, 124
        %v4595 = vpop.permute.xlu0 %4594
        %4596 = vrot.lane.b32.xlu0 %v4532, 124
        %v4597 = vpop.permute.xlu0 %4596
        %4598 = vrot.lane.b32.xlu0 %v4533, 124
        %v4599 = vpop.permute.xlu0 %4598
        %4600 = vrot.lane.b32.xlu0 %v4534, 124
        %v4601 = vpop.permute.xlu0 %4600
        %4602 = vrot.lane.b32.xlu0 %v4535, 124
        %v4603 = vpop.permute.xlu0 %4602
        %4604 = vrot.lane.b32.xlu0 %v4546, 124
        %v4605 = vpop.permute.xlu0 %4604
        %v4606 = vsel %vm1979, %v4587, %v4589
        %v4607 = vsel %vm1979, %v4589, %v4591
        %v4608 = vsel %vm1979, %v4591, %v4593
        %v4609 = vsel %vm1979, %v4593, %v4595
        %v4610 = vsel %vm1979, %v4597, %v4599
        %v4611 = vsel %vm1979, %v4599, %v4601
        %v4612 = vsel %vm1979, %v4601, %v4603
        %v4613 = vsel %vm1979, %v4603, %v4605
        %v4623 = vsel %vm1081, %v4572, 0
        %v4626 = vsel %vm1081, %v4573, 0
        %v4629 = vsel %vm1081, %v4574, 0
        %v4632 = vsel %vm1081, %v4575, 0
        %4634 = vmatprep.subr.bf16.mxu0 %v4607
        %4635 = vmatpush1.bf16.msra.mxu0 %v4606
        %4636 = vmatprep.subr.bf16.mxu0 %v4611
        %4637 = vmatpush1.bf16.msra.mxu0 %v4610
        %4638 = vmatprep.subr.bf16.mxu0 0
        %4639 = vmatpush1.bf16.msra.mxu0 0
        %4640 = vmatprep.subr.bf16.mxu0 0
        %4641 = vmatpush1.bf16.msra.mxu0 0
        %4642 = vmatprep.subr.bf16.mxu0 0
        %4643 = vmatpush1.bf16.msra.mxu0 0
        %4644 = vmatprep.subr.bf16.mxu0 0
        %4645 = vmatpush1.bf16.msra.mxu0 0
        %4646 = vmatprep.subr.bf16.mxu0 0
        %4647 = vmatpush1.bf16.msra.mxu0 0
        %4648 = vmatprep.subr.bf16.mxu0 0
        %4649 = vmatpush1.bf16.msra.mxu0 0
        %4650 = vmatprep.subr.bf16.mxu0 0
        %4651 = vmatpush1.bf16.msra.mxu0 0
        %4652 = vmatprep.subr.bf16.mxu0 0
        %4653 = vmatpush1.bf16.msra.mxu0 0
        %4654 = vmatprep.subr.bf16.mxu0 0
        %4655 = vmatpush1.bf16.msra.mxu0 0
        %4656 = vmatprep.subr.bf16.mxu0 0
        %4657 = vmatpush1.bf16.msra.mxu0 0
        %4658 = vmatprep.subr.bf16.mxu0 0
        %4659 = vmatpush1.bf16.msra.mxu0 0
        %4660 = vmatprep.subr.bf16.mxu0 0
        %4661 = vmatpush1.bf16.msra.mxu0 0
        %4662 = vmatprep.subr.bf16.mxu0 0
        %4663 = vmatpush1.bf16.msra.mxu0 0
        %4664 = vmatprep.subr.bf16.mxu0 0
        %4665 = vmatpush1.bf16.msra.mxu0 0
        %4666 = vmatprep.mubr.bf16.mxu0 0
        %4667 = vmatmul.mubr.bf16.gmra.mrb[0].mxu0 %v4623
        %v4668 = vpop.f32.mrb[0].mxu0
        %v4669 = vadd.f32 0.0, %v4668
        %v4670 = vpop.f32.mrb[0].mxu0
        %v4671 = vadd.f32 0.0, %v4670
        %v4672 = vpop.f32.mrb[0].mxu0
        %v4673 = vadd.f32 0.0, %v4672
        %v4674 = vpop.f32.mrb[0].mxu0
        %v4675 = vadd.f32 0.0, %v4674
        %4676 = vmatprep.mubr.bf16.mxu0 0
        %4677 = vmatmul.mubr.bf16.gmra.mrb[0].mxu0 %v4626
        %v4678 = vpop.f32.mrb[0].mxu0
        %v4679 = vadd.f32 0.0, %v4678
        %v4680 = vpop.f32.mrb[0].mxu0
        %v4681 = vadd.f32 0.0, %v4680
        %v4682 = vpop.f32.mrb[0].mxu0
        %v4683 = vadd.f32 0.0, %v4682
        %v4684 = vpop.f32.mrb[0].mxu0
        %v4685 = vadd.f32 0.0, %v4684
        %4686 = vmatprep.mubr.bf16.mxu0 0
        %4687 = vmatmul.mubr.bf16.gmra.mrb[0].mxu0 %v4629
        %v4688 = vpop.f32.mrb[0].mxu0
        %v4689 = vadd.f32 0.0, %v4688
        %v4690 = vpop.f32.mrb[0].mxu0
        %v4691 = vadd.f32 0.0, %v4690
        %v4692 = vpop.f32.mrb[0].mxu0
        %v4693 = vadd.f32 0.0, %v4692
        %v4694 = vpop.f32.mrb[0].mxu0
        %v4695 = vadd.f32 0.0, %v4694
        %4696 = vmatprep.mubr.bf16.mxu0 0
        %4697 = vmatmul.mubr.bf16.gmra.mrb[0].mxu0 %v4632
        %v4698 = vpop.f32.mrb[0].mxu0
        %v4699 = vadd.f32 0.0, %v4698
        %v4700 = vpop.f32.mrb[0].mxu0
        %v4701 = vadd.f32 0.0, %v4700
        %v4702 = vpop.f32.mrb[0].mxu0
        %v4703 = vadd.f32 0.0, %v4702
        %v4704 = vpop.f32.mrb[0].mxu0
        %v4705 = vadd.f32 0.0, %v4704
        %4706 = vdwg.mxu0
        %4707 = vmatprep.subr.bf16.mxu0 %v4609
        %4708 = vmatpush1.bf16.msra.mxu0 %v4608
        %4709 = vmatprep.subr.bf16.mxu0 %v4613
        %4710 = vmatpush1.bf16.msra.mxu0 %v4612
        %4711 = vmatprep.subr.bf16.mxu0 0
        %4712 = vmatpush1.bf16.msra.mxu0 0
        %4713 = vmatprep.subr.bf16.mxu0 0
        %4714 = vmatpush1.bf16.msra.mxu0 0
        %4715 = vmatprep.subr.bf16.mxu0 0
        %4716 = vmatpush1.bf16.msra.mxu0 0
        %4717 = vmatprep.subr.bf16.mxu0 0
        %4718 = vmatpush1.bf16.msra.mxu0 0
        %4719 = vmatprep.subr.bf16.mxu0 0
        %4720 = vmatpush1.bf16.msra.mxu0 0
        %4721 = vmatprep.subr.bf16.mxu0 0
        %4722 = vmatpush1.bf16.msra.mxu0 0
        %4723 = vmatprep.subr.bf16.mxu0 0
        %4724 = vmatpush1.bf16.msra.mxu0 0
        %4725 = vmatprep.subr.bf16.mxu0 0
        %4726 = vmatpush1.bf16.msra.mxu0 0
        %4727 = vmatprep.subr.bf16.mxu0 0
        %4728 = vmatpush1.bf16.msra.mxu0 0
        %4729 = vmatprep.subr.bf16.mxu0 0
        %4730 = vmatpush1.bf16.msra.mxu0 0
        %4731 = vmatprep.subr.bf16.mxu0 0
        %4732 = vmatpush1.bf16.msra.mxu0 0
        %4733 = vmatprep.subr.bf16.mxu0 0
        %4734 = vmatpush1.bf16.msra.mxu0 0
        %4735 = vmatprep.subr.bf16.mxu0 0
        %4736 = vmatpush1.bf16.msra.mxu0 0
        %4737 = vmatprep.subr.bf16.mxu0 0
        %4738 = vmatpush1.bf16.msra.mxu0 0
        %4739 = vmatprep.mubr.bf16.mxu0 0
        %4740 = vmatmul.mubr.bf16.gmra.mrb[0].mxu0 %v4623
        %v4741 = vpop.f32.mrb[0].mxu0
        %v4742 = vadd.f32 0.0, %v4741
        %v4743 = vpop.f32.mrb[0].mxu0
        %v4744 = vadd.f32 0.0, %v4743
        %v4745 = vpop.f32.mrb[0].mxu0
        %v4746 = vadd.f32 0.0, %v4745
        %v4747 = vpop.f32.mrb[0].mxu0
        %v4748 = vadd.f32 0.0, %v4747
        %4749 = vmatprep.mubr.bf16.mxu0 0
        %4750 = vmatmul.mubr.bf16.gmra.mrb[0].mxu0 %v4626
        %v4751 = vpop.f32.mrb[0].mxu0
        %v4752 = vadd.f32 0.0, %v4751
        %v4753 = vpop.f32.mrb[0].mxu0
        %v4754 = vadd.f32 0.0, %v4753
        %v4755 = vpop.f32.mrb[0].mxu0
        %v4756 = vadd.f32 0.0, %v4755
        %v4757 = vpop.f32.mrb[0].mxu0
        %v4758 = vadd.f32 0.0, %v4757
        %4759 = vmatprep.mubr.bf16.mxu0 0
        %4760 = vmatmul.mubr.bf16.gmra.mrb[0].mxu0 %v4629
        %v4761 = vpop.f32.mrb[0].mxu0
        %v4762 = vadd.f32 0.0, %v4761
        %v4763 = vpop.f32.mrb[0].mxu0
        %v4764 = vadd.f32 0.0, %v4763
        %v4765 = vpop.f32.mrb[0].mxu0
        %v4766 = vadd.f32 0.0, %v4765
        %v4767 = vpop.f32.mrb[0].mxu0
        %v4768 = vadd.f32 0.0, %v4767
        %4769 = vmatprep.mubr.bf16.mxu0 0
        %4770 = vmatmul.mubr.bf16.gmra.mrb[0].mxu0 %v4632
        %v4771 = vpop.f32.mrb[0].mxu0
        %v4772 = vadd.f32 0.0, %v4771
        %v4773 = vpop.f32.mrb[0].mxu0
        %v4774 = vadd.f32 0.0, %v4773
        %v4775 = vpop.f32.mrb[0].mxu0
        %v4776 = vadd.f32 0.0, %v4775
        %v4777 = vpop.f32.mrb[0].mxu0
        %v4778 = vadd.f32 0.0, %v4777
        %4779 = vdwg.mxu0
        %v4788 = vunpack.c.l.b16 %v4537
        %v4789 = vunpack.c.l.b16 %v4538
        %v4790 = vunpack.c.l.b16 %v4539
        %v4791 = vunpack.c.l.b16 %v4540
        %v4792 = vunpack.c.l.b16 %v4541
        %v4793 = vunpack.c.l.b16 %v4542
        %v4794 = vunpack.c.l.b16 %v4543
        %v4795 = vunpack.c.l.b16 %v4544
        %v4796 = vpack.c.b16 %v4789, %v4788
        %v4797 = vpack.c.b16 %v4791, %v4790
        %v4798 = vpack.c.b16 %v4793, %v4792
        %v4799 = vpack.c.b16 %v4795, %v4794
        %v4801 = vsel %vm1081, %v4796, 0
        %v4804 = vsel %vm1081, %v4797, 0
        %v4807 = vsel %vm1081, %v4798, 0
        %v4810 = vsel %vm1081, %v4799, 0
        %4812 = vmatprep.subr.bf16.mxu0 %v4529
        %4813 = vmatpush1.bf16.msra.mxu0 %v4528
        %4814 = vmatprep.subr.bf16.mxu0 %v4533
        %4815 = vmatpush1.bf16.msra.mxu0 %v4532
        %4816 = vmatprep.subr.bf16.mxu0 0
        %4817 = vmatpush1.bf16.msra.mxu0 0
        %4818 = vmatprep.subr.bf16.mxu0 0
        %4819 = vmatpush1.bf16.msra.mxu0 0
        %4820 = vmatprep.subr.bf16.mxu0 0
        %4821 = vmatpush1.bf16.msra.mxu0 0
        %4822 = vmatprep.subr.bf16.mxu0 0
        %4823 = vmatpush1.bf16.msra.mxu0 0
        %4824 = vmatprep.subr.bf16.mxu0 0
        %4825 = vmatpush1.bf16.msra.mxu0 0
        %4826 = vmatprep.subr.bf16.mxu0 0
        %4827 = vmatpush1.bf16.msra.mxu0 0
        %4828 = vmatprep.subr.bf16.mxu0 0
        %4829 = vmatpush1.bf16.msra.mxu0 0
        %4830 = vmatprep.subr.bf16.mxu0 0
        %4831 = vmatpush1.bf16.msra.mxu0 0
        %4832 = vmatprep.subr.bf16.mxu0 0
        %4833 = vmatpush1.bf16.msra.mxu0 0
        %4834 = vmatprep.subr.bf16.mxu0 0
        %4835 = vmatpush1.bf16.msra.mxu0 0
        %4836 = vmatprep.subr.bf16.mxu0 0
        %4837 = vmatpush1.bf16.msra.mxu0 0
        %4838 = vmatprep.subr.bf16.mxu0 0
        %4839 = vmatpush1.bf16.msra.mxu0 0
        %4840 = vmatprep.subr.bf16.mxu0 0
        %4841 = vmatpush1.bf16.msra.mxu0 0
        %4842 = vmatprep.subr.bf16.mxu0 0
        %4843 = vmatpush1.bf16.msra.mxu0 0
        %4844 = vmatprep.mubr.bf16.mxu0 0
        %4845 = vmatmul.mubr.bf16.gmra.mrb[0].mxu0 %v4801
        %v4846 = vpop.f32.mrb[0].mxu0
        %v4847 = vadd.f32 %v4669, %v4846
        %v4848 = vpop.f32.mrb[0].mxu0
        %v4849 = vadd.f32 %v4671, %v4848
        %v4850 = vpop.f32.mrb[0].mxu0
        %v4851 = vadd.f32 %v4673, %v4850
        %v4852 = vpop.f32.mrb[0].mxu0
        %v4853 = vadd.f32 %v4675, %v4852
        %4854 = vmatprep.mubr.bf16.mxu0 0
        %4855 = vmatmul.mubr.bf16.gmra.mrb[0].mxu0 %v4804
        %v4856 = vpop.f32.mrb[0].mxu0
        %v4857 = vadd.f32 %v4679, %v4856
        %v4858 = vpop.f32.mrb[0].mxu0
        %v4859 = vadd.f32 %v4681, %v4858
        %v4860 = vpop.f32.mrb[0].mxu0
        %v4861 = vadd.f32 %v4683, %v4860
        %v4862 = vpop.f32.mrb[0].mxu0
        %v4863 = vadd.f32 %v4685, %v4862
        %4864 = vmatprep.mubr.bf16.mxu0 0
        %4865 = vmatmul.mubr.bf16.gmra.mrb[0].mxu0 %v4807
        %v4866 = vpop.f32.mrb[0].mxu0
        %v4867 = vadd.f32 %v4689, %v4866
        %v4868 = vpop.f32.mrb[0].mxu0
        %v4869 = vadd.f32 %v4691, %v4868
        %v4870 = vpop.f32.mrb[0].mxu0
        %v4871 = vadd.f32 %v4693, %v4870
        %v4872 = vpop.f32.mrb[0].mxu0
        %v4873 = vadd.f32 %v4695, %v4872
        %4874 = vmatprep.mubr.bf16.mxu0 0
        %4875 = vmatmul.mubr.bf16.gmra.mrb[0].mxu0 %v4810
        %v4876 = vpop.f32.mrb[0].mxu0
        %v4877 = vadd.f32 %v4699, %v4876
        %v4878 = vpop.f32.mrb[0].mxu0
        %v4879 = vadd.f32 %v4701, %v4878
        %v4880 = vpop.f32.mrb[0].mxu0
        %v4881 = vadd.f32 %v4703, %v4880
        %v4882 = vpop.f32.mrb[0].mxu0
        %v4883 = vadd.f32 %v4705, %v4882
        %4884 = vdwg.mxu0
        %4885 = vmatprep.subr.bf16.mxu0 %v4531
        %4886 = vmatpush1.bf16.msra.mxu0 %v4530
        %4887 = vmatprep.subr.bf16.mxu0 %v4535
        %4888 = vmatpush1.bf16.msra.mxu0 %v4534
        %4889 = vmatprep.subr.bf16.mxu0 0
        %4890 = vmatpush1.bf16.msra.mxu0 0
        %4891 = vmatprep.subr.bf16.mxu0 0
        %4892 = vmatpush1.bf16.msra.mxu0 0
        %4893 = vmatprep.subr.bf16.mxu0 0
        %4894 = vmatpush1.bf16.msra.mxu0 0
        %4895 = vmatprep.subr.bf16.mxu0 0
        %4896 = vmatpush1.bf16.msra.mxu0 0
        %4897 = vmatprep.subr.bf16.mxu0 0
        %4898 = vmatpush1.bf16.msra.mxu0 0
        %4899 = vmatprep.subr.bf16.mxu0 0
        %4900 = vmatpush1.bf16.msra.mxu0 0
        %4901 = vmatprep.subr.bf16.mxu0 0
        %4902 = vmatpush1.bf16.msra.mxu0 0
        %4903 = vmatprep.subr.bf16.mxu0 0
        %4904 = vmatpush1.bf16.msra.mxu0 0
        %4905 = vmatprep.subr.bf16.mxu0 0
        %4906 = vmatpush1.bf16.msra.mxu0 0
        %4907 = vmatprep.subr.bf16.mxu0 0
        %4908 = vmatpush1.bf16.msra.mxu0 0
        %4909 = vmatprep.subr.bf16.mxu0 0
        %4910 = vmatpush1.bf16.msra.mxu0 0
        %4911 = vmatprep.subr.bf16.mxu0 0
        %4912 = vmatpush1.bf16.msra.mxu0 0
        %4913 = vmatprep.subr.bf16.mxu0 0
        %4914 = vmatpush1.bf16.msra.mxu0 0
        %4915 = vmatprep.subr.bf16.mxu0 0
        %4916 = vmatpush1.bf16.msra.mxu0 0
        %4917 = vmatprep.mubr.bf16.mxu0 0
        %4918 = vmatmul.mubr.bf16.gmra.mrb[0].mxu0 %v4801
        %v4919 = vpop.f32.mrb[0].mxu0
        %v4920 = vadd.f32 %v4742, %v4919
        %v4921 = vpop.f32.mrb[0].mxu0
        %v4922 = vadd.f32 %v4744, %v4921
        %v4923 = vpop.f32.mrb[0].mxu0
        %v4924 = vadd.f32 %v4746, %v4923
        %v4925 = vpop.f32.mrb[0].mxu0
        %v4926 = vadd.f32 %v4748, %v4925
        %4927 = vmatprep.mubr.bf16.mxu0 0
        %4928 = vmatmul.mubr.bf16.gmra.mrb[0].mxu0 %v4804
        %v4929 = vpop.f32.mrb[0].mxu0
        %v4930 = vadd.f32 %v4752, %v4929
        %v4931 = vpop.f32.mrb[0].mxu0
        %v4932 = vadd.f32 %v4754, %v4931
        %v4933 = vpop.f32.mrb[0].mxu0
        %v4934 = vadd.f32 %v4756, %v4933
        %v4935 = vpop.f32.mrb[0].mxu0
        %v4936 = vadd.f32 %v4758, %v4935
        %4937 = vmatprep.mubr.bf16.mxu0 0
        %4938 = vmatmul.mubr.bf16.gmra.mrb[0].mxu0 %v4807
        %v4939 = vpop.f32.mrb[0].mxu0
        %v4940 = vadd.f32 %v4762, %v4939
        %v4941 = vpop.f32.mrb[0].mxu0
        %v4942 = vadd.f32 %v4764, %v4941
        %v4943 = vpop.f32.mrb[0].mxu0
        %v4944 = vadd.f32 %v4766, %v4943
        %v4945 = vpop.f32.mrb[0].mxu0
        %v4946 = vadd.f32 %v4768, %v4945
        %4947 = vmatprep.mubr.bf16.mxu0 0
        %4948 = vmatmul.mubr.bf16.gmra.mrb[0].mxu0 %v4810
        %v4949 = vpop.f32.mrb[0].mxu0
        %v4950 = vadd.f32 %v4772, %v4949
        %v4951 = vpop.f32.mrb[0].mxu0
        %v4952 = vadd.f32 %v4774, %v4951
        %v4953 = vpop.f32.mrb[0].mxu0
        %v4954 = vadd.f32 %v4776, %v4953
        %v4955 = vpop.f32.mrb[0].mxu0
        %v4956 = vadd.f32 %v4778, %v4955
        %4957 = vdwg.mxu0
        %s4958 = scalar_lea.vmem %s6, 384
        %v4959 = vld [vmem:[%s4958] sm:$0xf]
        %v4960 = vld [vmem:[%s4958 + $0x4] sm:$0xf]
        %v4961 = vld [vmem:[%s4958 + $0x8] sm:$0xf]
        %v4962 = vld [vmem:[%s4958 + $0xc] sm:$0xf]
        %v4963 = vld [vmem:[%s4958 + $0x10] sm:$0xf]
        %v4964 = vld [vmem:[%s4958 + $0x14] sm:$0xf]
        %v4965 = vld [vmem:[%s4958 + $0x18] sm:$0xf]
        %v4966 = vld [vmem:[%s4958 + $0x1c] sm:$0xf]
        %v4975 = vunpack.c.l.b16 %v4959
        %v4976 = vunpack.c.l.b16 %v4960
        %v4977 = vunpack.c.l.b16 %v4961
        %v4978 = vunpack.c.l.b16 %v4962
        %v4979 = vunpack.c.l.b16 %v4963
        %v4980 = vunpack.c.l.b16 %v4964
        %v4981 = vunpack.c.l.b16 %v4965
        %v4982 = vunpack.c.l.b16 %v4966
        %v4983 = vpack.c.b16 %v4976, %v4975
        %v4984 = vpack.c.b16 %v4978, %v4977
        %v4985 = vpack.c.b16 %v4980, %v4979
        %v4986 = vpack.c.b16 %v4982, %v4981
        %4987 = vrot.lane.b32.xlu0 %v4528, 120
        %v4988 = vpop.permute.xlu0 %4987
        %4989 = vrot.lane.b32.xlu0 %v4529, 120
        %v4990 = vpop.permute.xlu0 %4989
        %4991 = vrot.lane.b32.xlu0 %v4530, 120
        %v4992 = vpop.permute.xlu0 %4991
        %4993 = vrot.lane.b32.xlu0 %v4531, 120
        %v4994 = vpop.permute.xlu0 %4993
        %4995 = vrot.lane.b32.xlu0 %v4545, 120
        %v4996 = vpop.permute.xlu0 %4995
        %4997 = vrot.lane.b32.xlu0 %v4532, 120
        %v4998 = vpop.permute.xlu0 %4997
        %4999 = vrot.lane.b32.xlu0 %v4533, 120
        %v5000 = vpop.permute.xlu0 %4999
        %5001 = vrot.lane.b32.xlu0 %v4534, 120
        %v5002 = vpop.permute.xlu0 %5001
        %5003 = vrot.lane.b32.xlu0 %v4535, 120
        %v5004 = vpop.permute.xlu0 %5003
        %5005 = vrot.lane.b32.xlu0 %v4546, 120
        %v5006 = vpop.permute.xlu0 %5005
        %v5007 = vsel %vm3747, %v4988, %v4990
        %v5008 = vsel %vm3747, %v4990, %v4992
        %v5009 = vsel %vm3747, %v4992, %v4994
        %v5010 = vsel %vm3747, %v4994, %v4996
        %v5011 = vsel %vm3747, %v4998, %v5000
        %v5012 = vsel %vm3747, %v5000, %v5002
        %v5013 = vsel %vm3747, %v5002, %v5004
        %v5014 = vsel %vm3747, %v5004, %v5006
        %v5024 = vsel %vm1081, %v4983, 0
        %v5027 = vsel %vm1081, %v4984, 0
        %v5030 = vsel %vm1081, %v4985, 0
        %v5033 = vsel %vm1081, %v4986, 0
        %5035 = vmatprep.subr.bf16.mxu0 %v5008
        %5036 = vmatpush1.bf16.msra.mxu0 %v5007
        %5037 = vmatprep.subr.bf16.mxu0 %v5012
        %5038 = vmatpush1.bf16.msra.mxu0 %v5011
        %5039 = vmatprep.subr.bf16.mxu0 0
        %5040 = vmatpush1.bf16.msra.mxu0 0
        %5041 = vmatprep.subr.bf16.mxu0 0
        %5042 = vmatpush1.bf16.msra.mxu0 0
        %5043 = vmatprep.subr.bf16.mxu0 0
        %5044 = vmatpush1.bf16.msra.mxu0 0
        %5045 = vmatprep.subr.bf16.mxu0 0
        %5046 = vmatpush1.bf16.msra.mxu0 0
        %5047 = vmatprep.subr.bf16.mxu0 0
        %5048 = vmatpush1.bf16.msra.mxu0 0
        %5049 = vmatprep.subr.bf16.mxu0 0
        %5050 = vmatpush1.bf16.msra.mxu0 0
        %5051 = vmatprep.subr.bf16.mxu0 0
        %5052 = vmatpush1.bf16.msra.mxu0 0
        %5053 = vmatprep.subr.bf16.mxu0 0
        %5054 = vmatpush1.bf16.msra.mxu0 0
        %5055 = vmatprep.subr.bf16.mxu0 0
        %5056 = vmatpush1.bf16.msra.mxu0 0
        %5057 = vmatprep.subr.bf16.mxu0 0
        %5058 = vmatpush1.bf16.msra.mxu0 0
        %5059 = vmatprep.subr.bf16.mxu0 0
        %5060 = vmatpush1.bf16.msra.mxu0 0
        %5061 = vmatprep.subr.bf16.mxu0 0
        %5062 = vmatpush1.bf16.msra.mxu0 0
        %5063 = vmatprep.subr.bf16.mxu0 0
        %5064 = vmatpush1.bf16.msra.mxu0 0
        %5065 = vmatprep.subr.bf16.mxu0 0
        %5066 = vmatpush1.bf16.msra.mxu0 0
        %5067 = vmatprep.mubr.bf16.mxu0 0
        %5068 = vmatmul.mubr.bf16.gmra.mrb[0].mxu0 %v5024
        %v5069 = vpop.f32.mrb[0].mxu0
        %v5070 = vadd.f32 0.0, %v5069
        %v5071 = vpop.f32.mrb[0].mxu0
        %v5072 = vadd.f32 0.0, %v5071
        %v5073 = vpop.f32.mrb[0].mxu0
        %v5074 = vadd.f32 0.0, %v5073
        %v5075 = vpop.f32.mrb[0].mxu0
        %v5076 = vadd.f32 0.0, %v5075
        %5077 = vmatprep.mubr.bf16.mxu0 0
        %5078 = vmatmul.mubr.bf16.gmra.mrb[0].mxu0 %v5027
        %v5079 = vpop.f32.mrb[0].mxu0
        %v5080 = vadd.f32 0.0, %v5079
        %v5081 = vpop.f32.mrb[0].mxu0
        %v5082 = vadd.f32 0.0, %v5081
        %v5083 = vpop.f32.mrb[0].mxu0
        %v5084 = vadd.f32 0.0, %v5083
        %v5085 = vpop.f32.mrb[0].mxu0
        %v5086 = vadd.f32 0.0, %v5085
        %5087 = vmatprep.mubr.bf16.mxu0 0
        %5088 = vmatmul.mubr.bf16.gmra.mrb[0].mxu0 %v5030
        %v5089 = vpop.f32.mrb[0].mxu0
        %v5090 = vadd.f32 0.0, %v5089
        %v5091 = vpop.f32.mrb[0].mxu0
        %v5092 = vadd.f32 0.0, %v5091
        %v5093 = vpop.f32.mrb[0].mxu0
        %v5094 = vadd.f32 0.0, %v5093
        %v5095 = vpop.f32.mrb[0].mxu0
        %v5096 = vadd.f32 0.0, %v5095
        %5097 = vmatprep.mubr.bf16.mxu0 0
        %5098 = vmatmul.mubr.bf16.gmra.mrb[0].mxu0 %v5033
        %v5099 = vpop.f32.mrb[0].mxu0
        %v5100 = vadd.f32 0.0, %v5099
        %v5101 = vpop.f32.mrb[0].mxu0
        %v5102 = vadd.f32 0.0, %v5101
        %v5103 = vpop.f32.mrb[0].mxu0
        %v5104 = vadd.f32 0.0, %v5103
        %v5105 = vpop.f32.mrb[0].mxu0
        %v5106 = vadd.f32 0.0, %v5105
        %5107 = vdwg.mxu0
        %5108 = vmatprep.subr.bf16.mxu0 %v5010
        %5109 = vmatpush1.bf16.msra.mxu0 %v5009
        %5110 = vmatprep.subr.bf16.mxu0 %v5014
        %5111 = vmatpush1.bf16.msra.mxu0 %v5013
        %5112 = vmatprep.subr.bf16.mxu0 0
        %5113 = vmatpush1.bf16.msra.mxu0 0
        %5114 = vmatprep.subr.bf16.mxu0 0
        %5115 = vmatpush1.bf16.msra.mxu0 0
        %5116 = vmatprep.subr.bf16.mxu0 0
        %5117 = vmatpush1.bf16.msra.mxu0 0
        %5118 = vmatprep.subr.bf16.mxu0 0
        %5119 = vmatpush1.bf16.msra.mxu0 0
        %5120 = vmatprep.subr.bf16.mxu0 0
        %5121 = vmatpush1.bf16.msra.mxu0 0
        %5122 = vmatprep.subr.bf16.mxu0 0
        %5123 = vmatpush1.bf16.msra.mxu0 0
        %5124 = vmatprep.subr.bf16.mxu0 0
        %5125 = vmatpush1.bf16.msra.mxu0 0
        %5126 = vmatprep.subr.bf16.mxu0 0
        %5127 = vmatpush1.bf16.msra.mxu0 0
        %5128 = vmatprep.subr.bf16.mxu0 0
        %5129 = vmatpush1.bf16.msra.mxu0 0
        %5130 = vmatprep.subr.bf16.mxu0 0
        %5131 = vmatpush1.bf16.msra.mxu0 0
        %5132 = vmatprep.subr.bf16.mxu0 0
        %5133 = vmatpush1.bf16.msra.mxu0 0
        %5134 = vmatprep.subr.bf16.mxu0 0
        %5135 = vmatpush1.bf16.msra.mxu0 0
        %5136 = vmatprep.subr.bf16.mxu0 0
        %5137 = vmatpush1.bf16.msra.mxu0 0
        %5138 = vmatprep.subr.bf16.mxu0 0
        %5139 = vmatpush1.bf16.msra.mxu0 0
        %5140 = vmatprep.mubr.bf16.mxu0 0
        %5141 = vmatmul.mubr.bf16.gmra.mrb[0].mxu0 %v5024
        %v5142 = vpop.f32.mrb[0].mxu0
        %v5143 = vadd.f32 0.0, %v5142
        %v5144 = vpop.f32.mrb[0].mxu0
        %v5145 = vadd.f32 0.0, %v5144
        %v5146 = vpop.f32.mrb[0].mxu0
        %v5147 = vadd.f32 0.0, %v5146
        %v5148 = vpop.f32.mrb[0].mxu0
        %v5149 = vadd.f32 0.0, %v5148
        %5150 = vmatprep.mubr.bf16.mxu0 0
        %5151 = vmatmul.mubr.bf16.gmra.mrb[0].mxu0 %v5027
        %v5152 = vpop.f32.mrb[0].mxu0
        %v5153 = vadd.f32 0.0, %v5152
        %v5154 = vpop.f32.mrb[0].mxu0
        %v5155 = vadd.f32 0.0, %v5154
        %v5156 = vpop.f32.mrb[0].mxu0
        %v5157 = vadd.f32 0.0, %v5156
        %v5158 = vpop.f32.mrb[0].mxu0
        %v5159 = vadd.f32 0.0, %v5158
        %5160 = vmatprep.mubr.bf16.mxu0 0
        %5161 = vmatmul.mubr.bf16.gmra.mrb[0].mxu0 %v5030
        %v5162 = vpop.f32.mrb[0].mxu0
        %v5163 = vadd.f32 0.0, %v5162
        %v5164 = vpop.f32.mrb[0].mxu0
        %v5165 = vadd.f32 0.0, %v5164
        %v5166 = vpop.f32.mrb[0].mxu0
        %v5167 = vadd.f32 0.0, %v5166
        %v5168 = vpop.f32.mrb[0].mxu0
        %v5169 = vadd.f32 0.0, %v5168
        %5170 = vmatprep.mubr.bf16.mxu0 0
        %5171 = vmatmul.mubr.bf16.gmra.mrb[0].mxu0 %v5033
        %v5172 = vpop.f32.mrb[0].mxu0
        %v5173 = vadd.f32 0.0, %v5172
        %v5174 = vpop.f32.mrb[0].mxu0
        %v5175 = vadd.f32 0.0, %v5174
        %v5176 = vpop.f32.mrb[0].mxu0
        %v5177 = vadd.f32 0.0, %v5176
        %v5178 = vpop.f32.mrb[0].mxu0
        %v5179 = vadd.f32 0.0, %v5178
        %5180 = vdwg.mxu0
        %v5181 = vadd.f32 %v4847, %v5070
        %v5182 = vadd.f32 %v4849, %v5072
        %v5183 = vadd.f32 %v4920, %v5143
        %v5184 = vadd.f32 %v4922, %v5145
        %v5185 = vadd.f32 %v4851, %v5074
        %v5186 = vadd.f32 %v4853, %v5076
        %v5187 = vadd.f32 %v4924, %v5147
        %v5188 = vadd.f32 %v4926, %v5149
        %v5189 = vadd.f32 %v4857, %v5080
        %v5190 = vadd.f32 %v4859, %v5082
        %v5191 = vadd.f32 %v4930, %v5153
        %v5192 = vadd.f32 %v4932, %v5155
        %v5193 = vadd.f32 %v4861, %v5084
        %v5194 = vadd.f32 %v4863, %v5086
        %v5195 = vadd.f32 %v4934, %v5157
        %v5196 = vadd.f32 %v4936, %v5159
        %v5197 = vadd.f32 %v4867, %v5090
        %v5198 = vadd.f32 %v4869, %v5092
        %v5199 = vadd.f32 %v4940, %v5163
        %v5200 = vadd.f32 %v4942, %v5165
        %v5201 = vadd.f32 %v4871, %v5094
        %v5202 = vadd.f32 %v4873, %v5096
        %v5203 = vadd.f32 %v4944, %v5167
        %v5204 = vadd.f32 %v4946, %v5169
        %v5205 = vadd.f32 %v4877, %v5100
        %v5206 = vadd.f32 %v4879, %v5102
        %v5207 = vadd.f32 %v4950, %v5173
        %v5208 = vadd.f32 %v4952, %v5175
        %v5209 = vadd.f32 %v4881, %v5104
        %v5210 = vadd.f32 %v4883, %v5106
        %v5211 = vadd.f32 %v4954, %v5177
        %v5212 = vadd.f32 %v4956, %v5179
        %s5213 = scalar_lea.vmem %s6, 416
        %v5214 = vld [vmem:[%s5213] sm:$0xf]
        %v5215 = vld [vmem:[%s5213 + $0x4] sm:$0xf]
        %v5216 = vld [vmem:[%s5213 + $0x8] sm:$0xf]
        %v5217 = vld [vmem:[%s5213 + $0xc] sm:$0xf]
        %v5218 = vld [vmem:[%s5213 + $0x10] sm:$0xf]
        %v5219 = vld [vmem:[%s5213 + $0x14] sm:$0xf]
        %v5220 = vld [vmem:[%s5213 + $0x18] sm:$0xf]
        %v5221 = vld [vmem:[%s5213 + $0x1c] sm:$0xf]
        %v5230 = vunpack.c.l.b16 %v5214
        %v5231 = vunpack.c.l.b16 %v5215
        %v5232 = vunpack.c.l.b16 %v5216
        %v5233 = vunpack.c.l.b16 %v5217
        %v5234 = vunpack.c.l.b16 %v5218
        %v5235 = vunpack.c.l.b16 %v5219
        %v5236 = vunpack.c.l.b16 %v5220
        %v5237 = vunpack.c.l.b16 %v5221
        %v5238 = vpack.c.b16 %v5231, %v5230
        %v5239 = vpack.c.b16 %v5233, %v5232
        %v5240 = vpack.c.b16 %v5235, %v5234
        %v5241 = vpack.c.b16 %v5237, %v5236
        %5242 = vrot.lane.b32.xlu0 %v4528, 116
        %v5243 = vpop.permute.xlu0 %5242
        %5244 = vrot.lane.b32.xlu0 %v4529, 116
        %v5245 = vpop.permute.xlu0 %5244
        %5246 = vrot.lane.b32.xlu0 %v4530, 116
        %v5247 = vpop.permute.xlu0 %5246
        %5248 = vrot.lane.b32.xlu0 %v4531, 116
        %v5249 = vpop.permute.xlu0 %5248
        %5250 = vrot.lane.b32.xlu0 %v4545, 116
        %v5251 = vpop.permute.xlu0 %5250
        %5252 = vrot.lane.b32.xlu0 %v4532, 116
        %v5253 = vpop.permute.xlu0 %5252
        %5254 = vrot.lane.b32.xlu0 %v4533, 116
        %v5255 = vpop.permute.xlu0 %5254
        %5256 = vrot.lane.b32.xlu0 %v4534, 116
        %v5257 = vpop.permute.xlu0 %5256
        %5258 = vrot.lane.b32.xlu0 %v4535, 116
        %v5259 = vpop.permute.xlu0 %5258
        %5260 = vrot.lane.b32.xlu0 %v4546, 116
        %v5261 = vpop.permute.xlu0 %5260
        %vm5262 = vcmask 949248
        %v5263 = vsel %vm5262, %v5243, %v5245
        %v5264 = vsel %vm5262, %v5245, %v5247
        %v5265 = vsel %vm5262, %v5247, %v5249
        %v5266 = vsel %vm5262, %v5249, %v5251
        %v5267 = vsel %vm5262, %v5253, %v5255
        %v5268 = vsel %vm5262, %v5255, %v5257
        %v5269 = vsel %vm5262, %v5257, %v5259
        %v5270 = vsel %vm5262, %v5259, %v5261
        %v5280 = vsel %vm1081, %v5238, 0
        %v5283 = vsel %vm1081, %v5239, 0
        %v5286 = vsel %vm1081, %v5240, 0
        %v5289 = vsel %vm1081, %v5241, 0
        %5291 = vmatprep.subr.bf16.mxu0 %v5264
        %5292 = vmatpush1.bf16.msra.mxu0 %v5263
        %5293 = vmatprep.subr.bf16.mxu0 %v5268
        %5294 = vmatpush1.bf16.msra.mxu0 %v5267
        %5295 = vmatprep.subr.bf16.mxu0 0
        %5296 = vmatpush1.bf16.msra.mxu0 0
        %5297 = vmatprep.subr.bf16.mxu0 0
        %5298 = vmatpush1.bf16.msra.mxu0 0
        %5299 = vmatprep.subr.bf16.mxu0 0
        %5300 = vmatpush1.bf16.msra.mxu0 0
        %5301 = vmatprep.subr.bf16.mxu0 0
        %5302 = vmatpush1.bf16.msra.mxu0 0
        %5303 = vmatprep.subr.bf16.mxu0 0
        %5304 = vmatpush1.bf16.msra.mxu0 0
        %5305 = vmatprep.subr.bf16.mxu0 0
        %5306 = vmatpush1.bf16.msra.mxu0 0
        %5307 = vmatprep.subr.bf16.mxu0 0
        %5308 = vmatpush1.bf16.msra.mxu0 0
        %5309 = vmatprep.subr.bf16.mxu0 0
        %5310 = vmatpush1.bf16.msra.mxu0 0
        %5311 = vmatprep.subr.bf16.mxu0 0
        %5312 = vmatpush1.bf16.msra.mxu0 0
        %5313 = vmatprep.subr.bf16.mxu0 0
        %5314 = vmatpush1.bf16.msra.mxu0 0
        %5315 = vmatprep.subr.bf16.mxu0 0
        %5316 = vmatpush1.bf16.msra.mxu0 0
        %5317 = vmatprep.subr.bf16.mxu0 0
        %5318 = vmatpush1.bf16.msra.mxu0 0
        %5319 = vmatprep.subr.bf16.mxu0 0
        %5320 = vmatpush1.bf16.msra.mxu0 0
        %5321 = vmatprep.subr.bf16.mxu0 0
        %5322 = vmatpush1.bf16.msra.mxu0 0
        %5323 = vmatprep.mubr.bf16.mxu0 0
        %5324 = vmatmul.mubr.bf16.gmra.mrb[0].mxu0 %v5280
        %v5325 = vpop.f32.mrb[0].mxu0
        %v5326 = vadd.f32 0.0, %v5325
        %v5327 = vpop.f32.mrb[0].mxu0
        %v5328 = vadd.f32 0.0, %v5327
        %v5329 = vpop.f32.mrb[0].mxu0
        %v5330 = vadd.f32 0.0, %v5329
        %v5331 = vpop.f32.mrb[0].mxu0
        %v5332 = vadd.f32 0.0, %v5331
        %5333 = vmatprep.mubr.bf16.mxu0 0
        %5334 = vmatmul.mubr.bf16.gmra.mrb[0].mxu0 %v5283
        %v5335 = vpop.f32.mrb[0].mxu0
        %v5336 = vadd.f32 0.0, %v5335
        %v5337 = vpop.f32.mrb[0].mxu0
        %v5338 = vadd.f32 0.0, %v5337
        %v5339 = vpop.f32.mrb[0].mxu0
        %v5340 = vadd.f32 0.0, %v5339
        %v5341 = vpop.f32.mrb[0].mxu0
        %v5342 = vadd.f32 0.0, %v5341
        %5343 = vmatprep.mubr.bf16.mxu0 0
        %5344 = vmatmul.mubr.bf16.gmra.mrb[0].mxu0 %v5286
        %v5345 = vpop.f32.mrb[0].mxu0
        %v5346 = vadd.f32 0.0, %v5345
        %v5347 = vpop.f32.mrb[0].mxu0
        %v5348 = vadd.f32 0.0, %v5347
        %v5349 = vpop.f32.mrb[0].mxu0
        %v5350 = vadd.f32 0.0, %v5349
        %v5351 = vpop.f32.mrb[0].mxu0
        %v5352 = vadd.f32 0.0, %v5351
        %5353 = vmatprep.mubr.bf16.mxu0 0
        %5354 = vmatmul.mubr.bf16.gmra.mrb[0].mxu0 %v5289
        %v5355 = vpop.f32.mrb[0].mxu0
        %v5356 = vadd.f32 0.0, %v5355
        %v5357 = vpop.f32.mrb[0].mxu0
        %v5358 = vadd.f32 0.0, %v5357
        %v5359 = vpop.f32.mrb[0].mxu0
        %v5360 = vadd.f32 0.0, %v5359
        %v5361 = vpop.f32.mrb[0].mxu0
        %v5362 = vadd.f32 0.0, %v5361
        %5363 = vdwg.mxu0
        %5364 = vmatprep.subr.bf16.mxu0 %v5266
        %5365 = vmatpush1.bf16.msra.mxu0 %v5265
        %5366 = vmatprep.subr.bf16.mxu0 %v5270
        %5367 = vmatpush1.bf16.msra.mxu0 %v5269
        %5368 = vmatprep.subr.bf16.mxu0 0
        %5369 = vmatpush1.bf16.msra.mxu0 0
        %5370 = vmatprep.subr.bf16.mxu0 0
        %5371 = vmatpush1.bf16.msra.mxu0 0
        %5372 = vmatprep.subr.bf16.mxu0 0
        %5373 = vmatpush1.bf16.msra.mxu0 0
        %5374 = vmatprep.subr.bf16.mxu0 0
        %5375 = vmatpush1.bf16.msra.mxu0 0
        %5376 = vmatprep.subr.bf16.mxu0 0
        %5377 = vmatpush1.bf16.msra.mxu0 0
        %5378 = vmatprep.subr.bf16.mxu0 0
        %5379 = vmatpush1.bf16.msra.mxu0 0
        %5380 = vmatprep.subr.bf16.mxu0 0
        %5381 = vmatpush1.bf16.msra.mxu0 0
        %5382 = vmatprep.subr.bf16.mxu0 0
        %5383 = vmatpush1.bf16.msra.mxu0 0
        %5384 = vmatprep.subr.bf16.mxu0 0
        %5385 = vmatpush1.bf16.msra.mxu0 0
        %5386 = vmatprep.subr.bf16.mxu0 0
        %5387 = vmatpush1.bf16.msra.mxu0 0
        %5388 = vmatprep.subr.bf16.mxu0 0
        %5389 = vmatpush1.bf16.msra.mxu0 0
        %5390 = vmatprep.subr.bf16.mxu0 0
        %5391 = vmatpush1.bf16.msra.mxu0 0
        %5392 = vmatprep.subr.bf16.mxu0 0
        %5393 = vmatpush1.bf16.msra.mxu0 0
        %5394 = vmatprep.subr.bf16.mxu0 0
        %5395 = vmatpush1.bf16.msra.mxu0 0
        %5396 = vmatprep.mubr.bf16.mxu0 0
        %5397 = vmatmul.mubr.bf16.gmra.mrb[0].mxu0 %v5280
        %v5398 = vpop.f32.mrb[0].mxu0
        %v5399 = vadd.f32 0.0, %v5398
        %v5400 = vpop.f32.mrb[0].mxu0
        %v5401 = vadd.f32 0.0, %v5400
        %v5402 = vpop.f32.mrb[0].mxu0
        %v5403 = vadd.f32 0.0, %v5402
        %v5404 = vpop.f32.mrb[0].mxu0
        %v5405 = vadd.f32 0.0, %v5404
        %5406 = vmatprep.mubr.bf16.mxu0 0
        %5407 = vmatmul.mubr.bf16.gmra.mrb[0].mxu0 %v5283
        %v5408 = vpop.f32.mrb[0].mxu0
        %v5409 = vadd.f32 0.0, %v5408
        %v5410 = vpop.f32.mrb[0].mxu0
        %v5411 = vadd.f32 0.0, %v5410
        %v5412 = vpop.f32.mrb[0].mxu0
        %v5413 = vadd.f32 0.0, %v5412
        %v5414 = vpop.f32.mrb[0].mxu0
        %v5415 = vadd.f32 0.0, %v5414
        %5416 = vmatprep.mubr.bf16.mxu0 0
        %5417 = vmatmul.mubr.bf16.gmra.mrb[0].mxu0 %v5286
        %v5418 = vpop.f32.mrb[0].mxu0
        %v5419 = vadd.f32 0.0, %v5418
        %v5420 = vpop.f32.mrb[0].mxu0
        %v5421 = vadd.f32 0.0, %v5420
        %v5422 = vpop.f32.mrb[0].mxu0
        %v5423 = vadd.f32 0.0, %v5422
        %v5424 = vpop.f32.mrb[0].mxu0
        %v5425 = vadd.f32 0.0, %v5424
        %5426 = vmatprep.mubr.bf16.mxu0 0
        %5427 = vmatmul.mubr.bf16.gmra.mrb[0].mxu0 %v5289
        %v5428 = vpop.f32.mrb[0].mxu0
        %v5429 = vadd.f32 0.0, %v5428
        %v5430 = vpop.f32.mrb[0].mxu0
        %v5431 = vadd.f32 0.0, %v5430
        %v5432 = vpop.f32.mrb[0].mxu0
        %v5433 = vadd.f32 0.0, %v5432
        %v5434 = vpop.f32.mrb[0].mxu0
        %v5435 = vadd.f32 0.0, %v5434
        %5436 = vdwg.mxu0
        %v5437 = vadd.f32 %v5181, %v5326
        %v5438 = vadd.f32 %v5182, %v5328
        %v5439 = vadd.f32 %v5183, %v5399
        %v5440 = vadd.f32 %v5184, %v5401
        %v5441 = vadd.f32 %v5185, %v5330
        %v5442 = vadd.f32 %v5186, %v5332
        %v5443 = vadd.f32 %v5187, %v5403
        %v5444 = vadd.f32 %v5188, %v5405
        %v5445 = vadd.f32 %v5189, %v5336
        %v5446 = vadd.f32 %v5190, %v5338
        %v5447 = vadd.f32 %v5191, %v5409
        %v5448 = vadd.f32 %v5192, %v5411
        %v5449 = vadd.f32 %v5193, %v5340
        %v5450 = vadd.f32 %v5194, %v5342
        %v5451 = vadd.f32 %v5195, %v5413
        %v5452 = vadd.f32 %v5196, %v5415
        %v5453 = vadd.f32 %v5197, %v5346
        %v5454 = vadd.f32 %v5198, %v5348
        %v5455 = vadd.f32 %v5199, %v5419
        %v5456 = vadd.f32 %v5200, %v5421
        %v5457 = vadd.f32 %v5201, %v5350
        %v5458 = vadd.f32 %v5202, %v5352
        %v5459 = vadd.f32 %v5203, %v5423
        %v5460 = vadd.f32 %v5204, %v5425
        %v5461 = vadd.f32 %v5205, %v5356
        %v5462 = vadd.f32 %v5206, %v5358
        %v5463 = vadd.f32 %v5207, %v5429
        %v5464 = vadd.f32 %v5208, %v5431
        %v5465 = vadd.f32 %v5209, %v5360
        %v5466 = vadd.f32 %v5210, %v5362
        %v5467 = vadd.f32 %v5211, %v5433
        %v5468 = vadd.f32 %v5212, %v5435
        %s5469 = scalar_lea.vmem %s6, 448
        %v5470 = vld [vmem:[%s5469] sm:$0xf]
        %v5471 = vld [vmem:[%s5469 + $0x4] sm:$0xf]
        %v5472 = vld [vmem:[%s5469 + $0x8] sm:$0xf]
        %v5473 = vld [vmem:[%s5469 + $0xc] sm:$0xf]
        %v5474 = vld [vmem:[%s5469 + $0x10] sm:$0xf]
        %v5475 = vld [vmem:[%s5469 + $0x14] sm:$0xf]
        %v5476 = vld [vmem:[%s5469 + $0x18] sm:$0xf]
        %v5477 = vld [vmem:[%s5469 + $0x1c] sm:$0xf]
        %v5486 = vunpack.c.l.b16 %v5470
        %v5487 = vunpack.c.l.b16 %v5471
        %v5488 = vunpack.c.l.b16 %v5472
        %v5489 = vunpack.c.l.b16 %v5473
        %v5490 = vunpack.c.l.b16 %v5474
        %v5491 = vunpack.c.l.b16 %v5475
        %v5492 = vunpack.c.l.b16 %v5476
        %v5493 = vunpack.c.l.b16 %v5477
        %v5494 = vpack.c.b16 %v5487, %v5486
        %v5495 = vpack.c.b16 %v5489, %v5488
        %v5496 = vpack.c.b16 %v5491, %v5490
        %v5497 = vpack.c.b16 %v5493, %v5492
        %5498 = vrot.lane.b32.xlu0 %v4528, 112
        %v5499 = vpop.permute.xlu0 %5498
        %5500 = vrot.lane.b32.xlu0 %v4529, 112
        %v5501 = vpop.permute.xlu0 %5500
        %5502 = vrot.lane.b32.xlu0 %v4530, 112
        %v5503 = vpop.permute.xlu0 %5502
        %5504 = vrot.lane.b32.xlu0 %v4531, 112
        %v5505 = vpop.permute.xlu0 %5504
        %5506 = vrot.lane.b32.xlu0 %v4545, 112
        %v5507 = vpop.permute.xlu0 %5506
        %5508 = vrot.lane.b32.xlu0 %v4532, 112
        %v5509 = vpop.permute.xlu0 %5508
        %5510 = vrot.lane.b32.xlu0 %v4533, 112
        %v5511 = vpop.permute.xlu0 %5510
        %5512 = vrot.lane.b32.xlu0 %v4534, 112
        %v5513 = vpop.permute.xlu0 %5512
        %5514 = vrot.lane.b32.xlu0 %v4535, 112
        %v5515 = vpop.permute.xlu0 %5514
        %5516 = vrot.lane.b32.xlu0 %v4546, 112
        %v5517 = vpop.permute.xlu0 %5516
        %vm5518 = vcmask 916480
        %v5519 = vsel %vm5518, %v5499, %v5501
        %v5520 = vsel %vm5518, %v5501, %v5503
        %v5521 = vsel %vm5518, %v5503, %v5505
        %v5522 = vsel %vm5518, %v5505, %v5507
        %v5523 = vsel %vm5518, %v5509, %v5511
        %v5524 = vsel %vm5518, %v5511, %v5513
        %v5525 = vsel %vm5518, %v5513, %v5515
        %v5526 = vsel %vm5518, %v5515, %v5517
        %v5536 = vsel %vm1081, %v5494, 0
        %v5539 = vsel %vm1081, %v5495, 0
        %v5542 = vsel %vm1081, %v5496, 0
        %v5545 = vsel %vm1081, %v5497, 0
        %5547 = vmatprep.subr.bf16.mxu0 %v5520
        %5548 = vmatpush1.bf16.msra.mxu0 %v5519
        %5549 = vmatprep.subr.bf16.mxu0 %v5524
        %5550 = vmatpush1.bf16.msra.mxu0 %v5523
        %5551 = vmatprep.subr.bf16.mxu0 0
        %5552 = vmatpush1.bf16.msra.mxu0 0
        %5553 = vmatprep.subr.bf16.mxu0 0
        %5554 = vmatpush1.bf16.msra.mxu0 0
        %5555 = vmatprep.subr.bf16.mxu0 0
        %5556 = vmatpush1.bf16.msra.mxu0 0
        %5557 = vmatprep.subr.bf16.mxu0 0
        %5558 = vmatpush1.bf16.msra.mxu0 0
        %5559 = vmatprep.subr.bf16.mxu0 0
        %5560 = vmatpush1.bf16.msra.mxu0 0
        %5561 = vmatprep.subr.bf16.mxu0 0
        %5562 = vmatpush1.bf16.msra.mxu0 0
        %5563 = vmatprep.subr.bf16.mxu0 0
        %5564 = vmatpush1.bf16.msra.mxu0 0
        %5565 = vmatprep.subr.bf16.mxu0 0
        %5566 = vmatpush1.bf16.msra.mxu0 0
        %5567 = vmatprep.subr.bf16.mxu0 0
        %5568 = vmatpush1.bf16.msra.mxu0 0
        %5569 = vmatprep.subr.bf16.mxu0 0
        %5570 = vmatpush1.bf16.msra.mxu0 0
        %5571 = vmatprep.subr.bf16.mxu0 0
        %5572 = vmatpush1.bf16.msra.mxu0 0
        %5573 = vmatprep.subr.bf16.mxu0 0
        %5574 = vmatpush1.bf16.msra.mxu0 0
        %5575 = vmatprep.subr.bf16.mxu0 0
        %5576 = vmatpush1.bf16.msra.mxu0 0
        %5577 = vmatprep.subr.bf16.mxu0 0
        %5578 = vmatpush1.bf16.msra.mxu0 0
        %5579 = vmatprep.mubr.bf16.mxu0 0
        %5580 = vmatmul.mubr.bf16.gmra.mrb[0].mxu0 %v5536
        %v5581 = vpop.f32.mrb[0].mxu0
        %v5582 = vadd.f32 0.0, %v5581
        %v5583 = vpop.f32.mrb[0].mxu0
        %v5584 = vadd.f32 0.0, %v5583
        %v5585 = vpop.f32.mrb[0].mxu0
        %v5586 = vadd.f32 0.0, %v5585
        %v5587 = vpop.f32.mrb[0].mxu0
        %v5588 = vadd.f32 0.0, %v5587
        %5589 = vmatprep.mubr.bf16.mxu0 0
        %5590 = vmatmul.mubr.bf16.gmra.mrb[0].mxu0 %v5539
        %v5591 = vpop.f32.mrb[0].mxu0
        %v5592 = vadd.f32 0.0, %v5591
        %v5593 = vpop.f32.mrb[0].mxu0
        %v5594 = vadd.f32 0.0, %v5593
        %v5595 = vpop.f32.mrb[0].mxu0
        %v5596 = vadd.f32 0.0, %v5595
        %v5597 = vpop.f32.mrb[0].mxu0
        %v5598 = vadd.f32 0.0, %v5597
        %5599 = vmatprep.mubr.bf16.mxu0 0
        %5600 = vmatmul.mubr.bf16.gmra.mrb[0].mxu0 %v5542
        %v5601 = vpop.f32.mrb[0].mxu0
        %v5602 = vadd.f32 0.0, %v5601
        %v5603 = vpop.f32.mrb[0].mxu0
        %v5604 = vadd.f32 0.0, %v5603
        %v5605 = vpop.f32.mrb[0].mxu0
        %v5606 = vadd.f32 0.0, %v5605
        %v5607 = vpop.f32.mrb[0].mxu0
        %v5608 = vadd.f32 0.0, %v5607
        %5609 = vmatprep.mubr.bf16.mxu0 0
        %5610 = vmatmul.mubr.bf16.gmra.mrb[0].mxu0 %v5545
        %v5611 = vpop.f32.mrb[0].mxu0
        %v5612 = vadd.f32 0.0, %v5611
        %v5613 = vpop.f32.mrb[0].mxu0
        %v5614 = vadd.f32 0.0, %v5613
        %v5615 = vpop.f32.mrb[0].mxu0
        %v5616 = vadd.f32 0.0, %v5615
        %v5617 = vpop.f32.mrb[0].mxu0
        %v5618 = vadd.f32 0.0, %v5617
        %5619 = vdwg.mxu0
        %5620 = vmatprep.subr.bf16.mxu0 %v5522
        %5621 = vmatpush1.bf16.msra.mxu0 %v5521
        %5622 = vmatprep.subr.bf16.mxu0 %v5526
        %5623 = vmatpush1.bf16.msra.mxu0 %v5525
        %5624 = vmatprep.subr.bf16.mxu0 0
        %5625 = vmatpush1.bf16.msra.mxu0 0
        %5626 = vmatprep.subr.bf16.mxu0 0
        %5627 = vmatpush1.bf16.msra.mxu0 0
        %5628 = vmatprep.subr.bf16.mxu0 0
        %5629 = vmatpush1.bf16.msra.mxu0 0
        %5630 = vmatprep.subr.bf16.mxu0 0
        %5631 = vmatpush1.bf16.msra.mxu0 0
        %5632 = vmatprep.subr.bf16.mxu0 0
        %5633 = vmatpush1.bf16.msra.mxu0 0
        %5634 = vmatprep.subr.bf16.mxu0 0
        %5635 = vmatpush1.bf16.msra.mxu0 0
        %5636 = vmatprep.subr.bf16.mxu0 0
        %5637 = vmatpush1.bf16.msra.mxu0 0
        %5638 = vmatprep.subr.bf16.mxu0 0
        %5639 = vmatpush1.bf16.msra.mxu0 0
        %5640 = vmatprep.subr.bf16.mxu0 0
        %5641 = vmatpush1.bf16.msra.mxu0 0
        %5642 = vmatprep.subr.bf16.mxu0 0
        %5643 = vmatpush1.bf16.msra.mxu0 0
        %5644 = vmatprep.subr.bf16.mxu0 0
        %5645 = vmatpush1.bf16.msra.mxu0 0
        %5646 = vmatprep.subr.bf16.mxu0 0
        %5647 = vmatpush1.bf16.msra.mxu0 0
        %5648 = vmatprep.subr.bf16.mxu0 0
        %5649 = vmatpush1.bf16.msra.mxu0 0
        %5650 = vmatprep.subr.bf16.mxu0 0
        %5651 = vmatpush1.bf16.msra.mxu0 0
        %5652 = vmatprep.mubr.bf16.mxu0 0
        %5653 = vmatmul.mubr.bf16.gmra.mrb[0].mxu0 %v5536
        %v5654 = vpop.f32.mrb[0].mxu0
        %v5655 = vadd.f32 0.0, %v5654
        %v5656 = vpop.f32.mrb[0].mxu0
        %v5657 = vadd.f32 0.0, %v5656
        %v5658 = vpop.f32.mrb[0].mxu0
        %v5659 = vadd.f32 0.0, %v5658
        %v5660 = vpop.f32.mrb[0].mxu0
        %v5661 = vadd.f32 0.0, %v5660
        %5662 = vmatprep.mubr.bf16.mxu0 0
        %5663 = vmatmul.mubr.bf16.gmra.mrb[0].mxu0 %v5539
        %v5664 = vpop.f32.mrb[0].mxu0
        %v5665 = vadd.f32 0.0, %v5664
        %v5666 = vpop.f32.mrb[0].mxu0
        %v5667 = vadd.f32 0.0, %v5666
        %v5668 = vpop.f32.mrb[0].mxu0
        %v5669 = vadd.f32 0.0, %v5668
        %v5670 = vpop.f32.mrb[0].mxu0
        %v5671 = vadd.f32 0.0, %v5670
        %5672 = vmatprep.mubr.bf16.mxu0 0
        %5673 = vmatmul.mubr.bf16.gmra.mrb[0].mxu0 %v5542
        %v5674 = vpop.f32.mrb[0].mxu0
        %v5675 = vadd.f32 0.0, %v5674
        %v5676 = vpop.f32.mrb[0].mxu0
        %v5677 = vadd.f32 0.0, %v5676
        %v5678 = vpop.f32.mrb[0].mxu0
        %v5679 = vadd.f32 0.0, %v5678
        %v5680 = vpop.f32.mrb[0].mxu0
        %v5681 = vadd.f32 0.0, %v5680
        %5682 = vmatprep.mubr.bf16.mxu0 0
        %5683 = vmatmul.mubr.bf16.gmra.mrb[0].mxu0 %v5545
        %v5684 = vpop.f32.mrb[0].mxu0
        %v5685 = vadd.f32 0.0, %v5684
        %v5686 = vpop.f32.mrb[0].mxu0
        %v5687 = vadd.f32 0.0, %v5686
        %v5688 = vpop.f32.mrb[0].mxu0
        %v5689 = vadd.f32 0.0, %v5688
        %v5690 = vpop.f32.mrb[0].mxu0
        %v5691 = vadd.f32 0.0, %v5690
        %5692 = vdwg.mxu0
        %v5693 = vadd.f32 %v5437, %v5582
        %v5694 = vadd.f32 %v5438, %v5584
        %v5695 = vadd.f32 %v5439, %v5655
        %v5696 = vadd.f32 %v5440, %v5657
        %v5697 = vadd.f32 %v5441, %v5586
        %v5698 = vadd.f32 %v5442, %v5588
        %v5699 = vadd.f32 %v5443, %v5659
        %v5700 = vadd.f32 %v5444, %v5661
        %v5701 = vadd.f32 %v5445, %v5592
        %v5702 = vadd.f32 %v5446, %v5594
        %v5703 = vadd.f32 %v5447, %v5665
        %v5704 = vadd.f32 %v5448, %v5667
        %v5705 = vadd.f32 %v5449, %v5596
        %v5706 = vadd.f32 %v5450, %v5598
        %v5707 = vadd.f32 %v5451, %v5669
        %v5708 = vadd.f32 %v5452, %v5671
        %v5709 = vadd.f32 %v5453, %v5602
        %v5710 = vadd.f32 %v5454, %v5604
        %v5711 = vadd.f32 %v5455, %v5675
        %v5712 = vadd.f32 %v5456, %v5677
        %v5713 = vadd.f32 %v5457, %v5606
        %v5714 = vadd.f32 %v5458, %v5608
        %v5715 = vadd.f32 %v5459, %v5679
        %v5716 = vadd.f32 %v5460, %v5681
        %v5717 = vadd.f32 %v5461, %v5612
        %v5718 = vadd.f32 %v5462, %v5614
        %v5719 = vadd.f32 %v5463, %v5685
        %v5720 = vadd.f32 %v5464, %v5687
        %v5721 = vadd.f32 %v5465, %v5616
        %v5722 = vadd.f32 %v5466, %v5618
        %v5723 = vadd.f32 %v5467, %v5689
        %v5724 = vadd.f32 %v5468, %v5691
        %s5725 = scalar_lea.vmem %s788, 128
        %v5726 = vld [vmem:[%s5725] sm:$0xff]
        %v5727 = vld [vmem:[%s5725 + $0x8] sm:$0xff]
        %v5728 = vld [vmem:[%s5725 + $0x10] sm:$0xff]
        %v5729 = vld [vmem:[%s5725 + $0x18] sm:$0xff]
        %v5730 = vld [vmem:[%s5725 + $0x20] sm:$0xff]
        %v5731 = vld [vmem:[%s5725 + $0x28] sm:$0xff]
        %v5732 = vld [vmem:[%s5725 + $0x30] sm:$0xff]
        %v5733 = vld [vmem:[%s5725 + $0x38] sm:$0xff]
        %5735 = vset.pattern.permute.xlu0 0
        %5736 = vperm.xlu0 %5735, %v5726
        %v5737 = vpop.permute.xlu0 %5736
        %5740 = vset.pattern.permute.xlu0 0
        %5741 = vperm.xlu0 %5740, %v5727
        %v5742 = vpop.permute.xlu0 %5741
        %5745 = vset.pattern.permute.xlu0 0
        %5746 = vperm.xlu0 %5745, %v5728
        %v5747 = vpop.permute.xlu0 %5746
        %5750 = vset.pattern.permute.xlu0 0
        %5751 = vperm.xlu0 %5750, %v5729
        %v5752 = vpop.permute.xlu0 %5751
        %5755 = vset.pattern.permute.xlu0 0
        %5756 = vperm.xlu0 %5755, %v5730
        %v5757 = vpop.permute.xlu0 %5756
        %5760 = vset.pattern.permute.xlu0 0
        %5761 = vperm.xlu0 %5760, %v5731
        %v5762 = vpop.permute.xlu0 %5761
        %5765 = vset.pattern.permute.xlu0 0
        %5766 = vperm.xlu0 %5765, %v5732
        %v5767 = vpop.permute.xlu0 %5766
        %5770 = vset.pattern.permute.xlu0 0
        %5771 = vperm.xlu0 %5770, %v5733
        %v5772 = vpop.permute.xlu0 %5771
        %v5774 = vadd.f32 %v5693, %v5737
        %v5775 = vadd.f32 %v5694, %v5737
        %v5776 = vadd.f32 %v5695, %v5737
        %v5777 = vadd.f32 %v5696, %v5737
        %v5778 = vadd.f32 %v5697, %v5742
        %v5779 = vadd.f32 %v5698, %v5742
        %v5780 = vadd.f32 %v5699, %v5742
        %v5781 = vadd.f32 %v5700, %v5742
        %v5782 = vadd.f32 %v5701, %v5747
        %v5783 = vadd.f32 %v5702, %v5747
        %v5784 = vadd.f32 %v5703, %v5747
        %v5785 = vadd.f32 %v5704, %v5747
        %v5786 = vadd.f32 %v5705, %v5752
        %v5787 = vadd.f32 %v5706, %v5752
        %v5788 = vadd.f32 %v5707, %v5752
        %v5789 = vadd.f32 %v5708, %v5752
        %v5790 = vadd.f32 %v5709, %v5757
        %v5791 = vadd.f32 %v5710, %v5757
        %v5792 = vadd.f32 %v5711, %v5757
        %v5793 = vadd.f32 %v5712, %v5757
        %v5794 = vadd.f32 %v5713, %v5762
        %v5795 = vadd.f32 %v5714, %v5762
        %v5796 = vadd.f32 %v5715, %v5762
        %v5797 = vadd.f32 %v5716, %v5762
        %v5798 = vadd.f32 %v5717, %v5767
        %v5799 = vadd.f32 %v5718, %v5767
        %v5800 = vadd.f32 %v5719, %v5767
        %v5801 = vadd.f32 %v5720, %v5767
        %v5802 = vadd.f32 %v5721, %v5772
        %v5803 = vadd.f32 %v5722, %v5772
        %v5804 = vadd.f32 %v5723, %v5772
        %v5805 = vadd.f32 %v5724, %v5772
        %v5806 = vtanh.pop %v5774
        %v5807 = vtanh.pop %v5775
        %v5808 = vtanh.pop %v5776
        %v5809 = vtanh.pop %v5777
        %v5810 = vtanh.pop %v5778
        %v5811 = vtanh.pop %v5779
        %v5812 = vtanh.pop %v5780
        %v5813 = vtanh.pop %v5781
        %v5814 = vtanh.pop %v5782
        %v5815 = vtanh.pop %v5783
        %v5816 = vtanh.pop %v5784
        %v5817 = vtanh.pop %v5785
        %v5818 = vtanh.pop %v5786
        %v5819 = vtanh.pop %v5787
        %v5820 = vtanh.pop %v5788
        %v5821 = vtanh.pop %v5789
        %v5822 = vxor.u32 %v5790, 2147483648
        %v5823 = vxor.u32 %v5791, 2147483648
        %v5824 = vxor.u32 %v5792, 2147483648
        %v5825 = vxor.u32 %v5793, 2147483648
        %v5826 = vxor.u32 %v5794, 2147483648
        %v5827 = vxor.u32 %v5795, 2147483648
        %v5828 = vxor.u32 %v5796, 2147483648
        %v5829 = vxor.u32 %v5797, 2147483648
        %v5830 = vxor.u32 %v5798, 2147483648
        %v5831 = vxor.u32 %v5799, 2147483648
        %v5832 = vxor.u32 %v5800, 2147483648
        %v5833 = vxor.u32 %v5801, 2147483648
        %v5834 = vxor.u32 %v5802, 2147483648
        %v5835 = vxor.u32 %v5803, 2147483648
        %v5836 = vxor.u32 %v5804, 2147483648
        %v5837 = vxor.u32 %v5805, 2147483648
        %v5838 = vmul.f32 %v5822, 1.442695
        %v5839 = vpow.pop %v5838
        %v5840 = vmul.f32 %v5823, 1.442695
        %v5841 = vpow.pop %v5840
        %v5842 = vmul.f32 %v5824, 1.442695
        %v5843 = vpow.pop %v5842
        %v5844 = vmul.f32 %v5825, 1.442695
        %v5845 = vpow.pop %v5844
        %v5846 = vmul.f32 %v5826, 1.442695
        %v5847 = vpow.pop %v5846
        %v5848 = vmul.f32 %v5827, 1.442695
        %v5849 = vpow.pop %v5848
        %v5850 = vmul.f32 %v5828, 1.442695
        %v5851 = vpow.pop %v5850
        %v5852 = vmul.f32 %v5829, 1.442695
        %v5853 = vpow.pop %v5852
        %v5854 = vmul.f32 %v5830, 1.442695
        %v5855 = vpow.pop %v5854
        %v5856 = vmul.f32 %v5831, 1.442695
        %v5857 = vpow.pop %v5856
        %v5858 = vmul.f32 %v5832, 1.442695
        %v5859 = vpow.pop %v5858
        %v5860 = vmul.f32 %v5833, 1.442695
        %v5861 = vpow.pop %v5860
        %v5862 = vmul.f32 %v5834, 1.442695
        %v5863 = vpow.pop %v5862
        %v5864 = vmul.f32 %v5835, 1.442695
        %v5865 = vpow.pop %v5864
        %v5866 = vmul.f32 %v5836, 1.442695
        %v5867 = vpow.pop %v5866
        %v5868 = vmul.f32 %v5837, 1.442695
        %v5869 = vpow.pop %v5868
        %v5870 = vadd.f32 %v5839, 1.0
        %v5871 = vadd.f32 %v5841, 1.0
        %v5872 = vadd.f32 %v5843, 1.0
        %v5873 = vadd.f32 %v5845, 1.0
        %v5874 = vadd.f32 %v5847, 1.0
        %v5875 = vadd.f32 %v5849, 1.0
        %v5876 = vadd.f32 %v5851, 1.0
        %v5877 = vadd.f32 %v5853, 1.0
        %v5878 = vadd.f32 %v5855, 1.0
        %v5879 = vadd.f32 %v5857, 1.0
        %v5880 = vadd.f32 %v5859, 1.0
        %v5881 = vadd.f32 %v5861, 1.0
        %v5882 = vadd.f32 %v5863, 1.0
        %v5883 = vadd.f32 %v5865, 1.0
        %v5884 = vadd.f32 %v5867, 1.0
        %v5885 = vadd.f32 %v5869, 1.0
        %v5886 = vrcp.pop %v5870
        %v5887 = vmul.f32 1.0, %v5886
        %v5888 = vrcp.pop %v5871
        %v5889 = vmul.f32 1.0, %v5888
        %v5890 = vrcp.pop %v5872
        %v5891 = vmul.f32 1.0, %v5890
        %v5892 = vrcp.pop %v5873
        %v5893 = vmul.f32 1.0, %v5892
        %v5894 = vrcp.pop %v5874
        %v5895 = vmul.f32 1.0, %v5894
        %v5896 = vrcp.pop %v5875
        %v5897 = vmul.f32 1.0, %v5896
        %v5898 = vrcp.pop %v5876
        %v5899 = vmul.f32 1.0, %v5898
        %v5900 = vrcp.pop %v5877
        %v5901 = vmul.f32 1.0, %v5900
        %v5902 = vrcp.pop %v5878
        %v5903 = vmul.f32 1.0, %v5902
        %v5904 = vrcp.pop %v5879
        %v5905 = vmul.f32 1.0, %v5904
        %v5906 = vrcp.pop %v5880
        %v5907 = vmul.f32 1.0, %v5906
        %v5908 = vrcp.pop %v5881
        %v5909 = vmul.f32 1.0, %v5908
        %v5910 = vrcp.pop %v5882
        %v5911 = vmul.f32 1.0, %v5910
        %v5912 = vrcp.pop %v5883
        %v5913 = vmul.f32 1.0, %v5912
        %v5914 = vrcp.pop %v5884
        %v5915 = vmul.f32 1.0, %v5914
        %v5916 = vrcp.pop %v5885
        %v5917 = vmul.f32 1.0, %v5916
        %v5918 = vmul.f32 %v5806, %v5887
        %v5919 = vmul.f32 %v5807, %v5889
        %v5920 = vmul.f32 %v5808, %v5891
        %v5921 = vmul.f32 %v5809, %v5893
        %v5922 = vmul.f32 %v5810, %v5895
        %v5923 = vmul.f32 %v5811, %v5897
        %v5924 = vmul.f32 %v5812, %v5899
        %v5925 = vmul.f32 %v5813, %v5901
        %v5926 = vmul.f32 %v5814, %v5903
        %v5927 = vmul.f32 %v5815, %v5905
        %v5928 = vmul.f32 %v5816, %v5907
        %v5929 = vmul.f32 %v5817, %v5909
        %v5930 = vmul.f32 %v5818, %v5911
        %v5931 = vmul.f32 %v5819, %v5913
        %v5932 = vmul.f32 %v5820, %v5915
        %v5933 = vmul.f32 %v5821, %v5917
        %s5934 = scalar_lea.vmem %s7, 64
        %v5935 = vld [vmem:[%s5934] sm:$0xf]
        %v5936 = vld [vmem:[%s5934 + $0x4] sm:$0xf]
        %v5937 = vld [vmem:[%s5934 + $0x8] sm:$0xf]
        %v5938 = vld [vmem:[%s5934 + $0xc] sm:$0xf]
        %v5939 = vld [vmem:[%s5934 + $0x10] sm:$0xf]
        %v5940 = vld [vmem:[%s5934 + $0x14] sm:$0xf]
        %v5941 = vld [vmem:[%s5934 + $0x18] sm:$0xf]
        %v5942 = vld [vmem:[%s5934 + $0x1c] sm:$0xf]
        %v5943 = vpack.c.bf16 %v5922, %v5918
        %v5944 = vpack.c.bf16 %v5923, %v5919
        %v5945 = vpack.c.bf16 %v5924, %v5920
        %v5946 = vpack.c.bf16 %v5925, %v5921
        %v5947 = vpack.c.bf16 %v5930, %v5926
        %v5948 = vpack.c.bf16 %v5931, %v5927
        %v5949 = vpack.c.bf16 %v5932, %v5928
        %v5950 = vpack.c.bf16 %v5933, %v5929
        %s5951 = scalar_lea.vmem %s8, 128
        %v5952 = vld [vmem:[%s5951] sm:$0xff]
        %v5953 = vld [vmem:[%s5951 + $0x8] sm:$0xff]
        %v5954 = vld [vmem:[%s5951 + $0x10] sm:$0xff]
        %v5955 = vld [vmem:[%s5951 + $0x18] sm:$0xff]
        %v5956 = vld [vmem:[%s5951 + $0x20] sm:$0xff]
        %v5957 = vld [vmem:[%s5951 + $0x28] sm:$0xff]
        %v5958 = vld [vmem:[%s5951 + $0x30] sm:$0xff]
        %v5959 = vld [vmem:[%s5951 + $0x38] sm:$0xff]
        %5961 = vset.pattern.permute.xlu0 0
        %5962 = vperm.xlu0 %5961, %v5952
        %v5963 = vpop.permute.xlu0 %5962
        %5966 = vset.pattern.permute.xlu0 0
        %5967 = vperm.xlu0 %5966, %v5953
        %v5968 = vpop.permute.xlu0 %5967
        %5971 = vset.pattern.permute.xlu0 0
        %5972 = vperm.xlu0 %5971, %v5954
        %v5973 = vpop.permute.xlu0 %5972
        %5976 = vset.pattern.permute.xlu0 0
        %5977 = vperm.xlu0 %5976, %v5955
        %v5978 = vpop.permute.xlu0 %5977
        %5981 = vset.pattern.permute.xlu0 0
        %5982 = vperm.xlu0 %5981, %v5956
        %v5983 = vpop.permute.xlu0 %5982
        %5986 = vset.pattern.permute.xlu0 0
        %5987 = vperm.xlu0 %5986, %v5957
        %v5988 = vpop.permute.xlu0 %5987
        %5991 = vset.pattern.permute.xlu0 0
        %5992 = vperm.xlu0 %5991, %v5958
        %v5993 = vpop.permute.xlu0 %5992
        %5996 = vset.pattern.permute.xlu0 0
        %5997 = vperm.xlu0 %5996, %v5959
        %v5998 = vpop.permute.xlu0 %5997
        %v6008 = vunpack.c.l.b16 %v5935
        %v6009 = vunpack.c.l.b16 %v5936
        %v6010 = vunpack.c.l.b16 %v5937
        %v6011 = vunpack.c.l.b16 %v5938
        %v6012 = vunpack.c.l.b16 %v5939
        %v6013 = vunpack.c.l.b16 %v5940
        %v6014 = vunpack.c.l.b16 %v5941
        %v6015 = vunpack.c.l.b16 %v5942
        %v6016 = vpack.c.b16 %v6009, %v6008
        %v6017 = vpack.c.b16 %v6011, %v6010
        %v6018 = vpack.c.b16 %v6013, %v6012
        %v6019 = vpack.c.b16 %v6015, %v6014
        %v6021 = vsel %vm1081, %v6016, 0
        %v6024 = vsel %vm1081, %v6017, 0
        %v6027 = vsel %vm1081, %v6018, 0
        %v6030 = vsel %vm1081, %v6019, 0
        %6032 = vmatprep.subr.bf16.mxu0 %v5944
        %6033 = vmatpush1.bf16.msra.mxu0 %v5943
        %6034 = vmatprep.subr.bf16.mxu0 %v5948
        %6035 = vmatpush1.bf16.msra.mxu0 %v5947
        %6036 = vmatprep.subr.bf16.mxu0 0
        %6037 = vmatpush1.bf16.msra.mxu0 0
        %6038 = vmatprep.subr.bf16.mxu0 0
        %6039 = vmatpush1.bf16.msra.mxu0 0
        %6040 = vmatprep.subr.bf16.mxu0 0
        %6041 = vmatpush1.bf16.msra.mxu0 0
        %6042 = vmatprep.subr.bf16.mxu0 0
        %6043 = vmatpush1.bf16.msra.mxu0 0
        %6044 = vmatprep.subr.bf16.mxu0 0
        %6045 = vmatpush1.bf16.msra.mxu0 0
        %6046 = vmatprep.subr.bf16.mxu0 0
        %6047 = vmatpush1.bf16.msra.mxu0 0
        %6048 = vmatprep.subr.bf16.mxu0 0
        %6049 = vmatpush1.bf16.msra.mxu0 0
        %6050 = vmatprep.subr.bf16.mxu0 0
        %6051 = vmatpush1.bf16.msra.mxu0 0
        %6052 = vmatprep.subr.bf16.mxu0 0
        %6053 = vmatpush1.bf16.msra.mxu0 0
        %6054 = vmatprep.subr.bf16.mxu0 0
        %6055 = vmatpush1.bf16.msra.mxu0 0
        %6056 = vmatprep.subr.bf16.mxu0 0
        %6057 = vmatpush1.bf16.msra.mxu0 0
        %6058 = vmatprep.subr.bf16.mxu0 0
        %6059 = vmatpush1.bf16.msra.mxu0 0
        %6060 = vmatprep.subr.bf16.mxu0 0
        %6061 = vmatpush1.bf16.msra.mxu0 0
        %6062 = vmatprep.subr.bf16.mxu0 0
        %6063 = vmatpush1.bf16.msra.mxu0 0
        %6064 = vmatprep.mubr.bf16.mxu0 0
        %6065 = vmatmul.mubr.bf16.gmra.mrb[0].mxu0 %v6021
        %v6066 = vpop.f32.mrb[0].mxu0
        %v6067 = vadd.f32 %v5963, %v6066
        %v6068 = vpop.f32.mrb[0].mxu0
        %v6069 = vadd.f32 %v5963, %v6068
        %v6070 = vpop.f32.mrb[0].mxu0
        %v6071 = vadd.f32 %v5968, %v6070
        %v6072 = vpop.f32.mrb[0].mxu0
        %v6073 = vadd.f32 %v5968, %v6072
        %6074 = vmatprep.mubr.bf16.mxu0 0
        %6075 = vmatmul.mubr.bf16.gmra.mrb[0].mxu0 %v6024
        %v6076 = vpop.f32.mrb[0].mxu0
        %v6077 = vadd.f32 %v5973, %v6076
        %v6078 = vpop.f32.mrb[0].mxu0
        %v6079 = vadd.f32 %v5973, %v6078
        %v6080 = vpop.f32.mrb[0].mxu0
        %v6081 = vadd.f32 %v5978, %v6080
        %v6082 = vpop.f32.mrb[0].mxu0
        %v6083 = vadd.f32 %v5978, %v6082
        %6084 = vmatprep.mubr.bf16.mxu0 0
        %6085 = vmatmul.mubr.bf16.gmra.mrb[0].mxu0 %v6027
        %v6086 = vpop.f32.mrb[0].mxu0
        %v6087 = vpop.f32.mrb[0].mxu0
        %v6088 = vadd.f32 %v5983, %v6087
        %v6089 = vpop.f32.mrb[0].mxu0
        %v6090 = vpop.f32.mrb[0].mxu0
        %v6091 = vadd.f32 %v5988, %v6090
        %6092 = vmatprep.mubr.bf16.mxu0 0
        %6093 = vmatmul.mubr.bf16.gmra.mrb[0].mxu0 %v6030
        %v6094 = vpop.f32.mrb[0].mxu0
        %v6095 = vpop.f32.mrb[0].mxu0
        %v6096 = vadd.f32 %v5993, %v6095
        %v6097 = vpop.f32.mrb[0].mxu0
        %v6098 = vpop.f32.mrb[0].mxu0
        %v6099 = vadd.f32 %v5998, %v6098
        %6100 = vdwg.mxu0
        %6101 = vmatprep.subr.bf16.mxu0 %v5946
        %6102 = vmatpush1.bf16.msra.mxu0 %v5945
        %6103 = vmatprep.subr.bf16.mxu0 %v5950
        %6104 = vmatpush1.bf16.msra.mxu0 %v5949
        %6105 = vmatprep.subr.bf16.mxu0 0
        %6106 = vmatpush1.bf16.msra.mxu0 0
        %6107 = vmatprep.subr.bf16.mxu0 0
        %6108 = vmatpush1.bf16.msra.mxu0 0
        %6109 = vmatprep.subr.bf16.mxu0 0
        %6110 = vmatpush1.bf16.msra.mxu0 0
        %6111 = vmatprep.subr.bf16.mxu0 0
        %6112 = vmatpush1.bf16.msra.mxu0 0
        %6113 = vmatprep.subr.bf16.mxu0 0
        %6114 = vmatpush1.bf16.msra.mxu0 0
        %6115 = vmatprep.subr.bf16.mxu0 0
        %6116 = vmatpush1.bf16.msra.mxu0 0
        %6117 = vmatprep.subr.bf16.mxu0 0
        %6118 = vmatpush1.bf16.msra.mxu0 0
        %6119 = vmatprep.subr.bf16.mxu0 0
        %6120 = vmatpush1.bf16.msra.mxu0 0
        %6121 = vmatprep.subr.bf16.mxu0 0
        %6122 = vmatpush1.bf16.msra.mxu0 0
        %6123 = vmatprep.subr.bf16.mxu0 0
        %6124 = vmatpush1.bf16.msra.mxu0 0
        %6125 = vmatprep.subr.bf16.mxu0 0
        %6126 = vmatpush1.bf16.msra.mxu0 0
        %6127 = vmatprep.subr.bf16.mxu0 0
        %6128 = vmatpush1.bf16.msra.mxu0 0
        %6129 = vmatprep.subr.bf16.mxu0 0
        %6130 = vmatpush1.bf16.msra.mxu0 0
        %6131 = vmatprep.subr.bf16.mxu0 0
        %6132 = vmatpush1.bf16.msra.mxu0 0
        %6133 = vmatprep.mubr.bf16.mxu0 0
        %6134 = vmatmul.mubr.bf16.gmra.mrb[0].mxu0 %v6021
        %v6135 = vpop.f32.mrb[0].mxu0
        %v6136 = vadd.f32 %v5963, %v6135
        %v6137 = vpop.f32.mrb[0].mxu0
        %v6138 = vadd.f32 %v5963, %v6137
        %v6139 = vpop.f32.mrb[0].mxu0
        %v6140 = vadd.f32 %v5968, %v6139
        %v6141 = vpop.f32.mrb[0].mxu0
        %v6142 = vadd.f32 %v5968, %v6141
        %6143 = vmatprep.mubr.bf16.mxu0 0
        %6144 = vmatmul.mubr.bf16.gmra.mrb[0].mxu0 %v6024
        %v6145 = vpop.f32.mrb[0].mxu0
        %v6146 = vadd.f32 %v5973, %v6145
        %v6147 = vpop.f32.mrb[0].mxu0
        %v6148 = vadd.f32 %v5973, %v6147
        %v6149 = vpop.f32.mrb[0].mxu0
        %v6150 = vadd.f32 %v5978, %v6149
        %v6151 = vpop.f32.mrb[0].mxu0
        %v6152 = vadd.f32 %v5978, %v6151
        %6153 = vmatprep.mubr.bf16.mxu0 0
        %6154 = vmatmul.mubr.bf16.gmra.mrb[0].mxu0 %v6027
        %v6155 = vpop.f32.mrb[0].mxu0
        %v6156 = vadd.f32 %v5983, %v6155
        %v6157 = vpop.f32.mrb[0].mxu0
        %v6158 = vpop.f32.mrb[0].mxu0
        %v6159 = vadd.f32 %v5988, %v6158
        %v6160 = vpop.f32.mrb[0].mxu0
        %6161 = vmatprep.mubr.bf16.mxu0 0
        %6162 = vmatmul.mubr.bf16.gmra.mrb[0].mxu0 %v6030
        %v6163 = vpop.f32.mrb[0].mxu0
        %v6164 = vadd.f32 %v5993, %v6163
        %v6165 = vpop.f32.mrb[0].mxu0
        %v6166 = vpop.f32.mrb[0].mxu0
        %v6167 = vadd.f32 %v5998, %v6166
        %v6168 = vpop.f32.mrb[0].mxu0
        %6169 = vdwg.mxu0
        %v6170 = vadd.f32 %v4415, %v6067
        %v6171 = vadd.f32 %v4416, %v6069
        %v6172 = vadd.f32 %v4417, %v6136
        %v6173 = vadd.f32 %v4418, %v6138
        %v6174 = vadd.f32 %v4419, %v6071
        %v6175 = vadd.f32 %v4420, %v6073
        %v6176 = vadd.f32 %v4421, %v6140
        %v6177 = vadd.f32 %v4422, %v6142
        %v6178 = vadd.f32 %v4423, %v6077
        %v6179 = vadd.f32 %v4424, %v6079
        %v6180 = vadd.f32 %v4425, %v6146
        %v6181 = vadd.f32 %v4426, %v6148
        %v6182 = vadd.f32 %v4427, %v6081
        %v6183 = vadd.f32 %v4428, %v6083
        %v6184 = vadd.f32 %v4429, %v6150
        %v6185 = vadd.f32 %v4430, %v6152
        %v6186 = vmul.f32 %v6170, %v894
        %v6187 = vmul.f32 %v6171, %v895
        %v6188 = vmul.f32 %v6172, %v896
        %v6189 = vmul.f32 %v6173, %v897
        %v6190 = vmul.f32 %v6174, %v894
        %v6191 = vmul.f32 %v6175, %v895
        %v6192 = vmul.f32 %v6176, %v896
        %v6193 = vmul.f32 %v6177, %v897
        %v6194 = vmul.f32 %v6178, %v894
        %v6195 = vmul.f32 %v6179, %v895
        %v6196 = vmul.f32 %v6180, %v896
        %v6197 = vmul.f32 %v6181, %v897
        %v6198 = vmul.f32 %v6182, %v894
        %v6199 = vmul.f32 %v6183, %v895
        %v6200 = vmul.f32 %v6184, %v896
        %v6201 = vmul.f32 %v6185, %v897
        %v6202 = vadd.f32 %v4431, %v6088
        %v6203 = vadd.f32 %v4432, %v6156
        %v6204 = vadd.f32 %v4433, %v6091
        %v6205 = vadd.f32 %v4434, %v6159
        %v6206 = vadd.f32 %v4435, %v6096
        %v6207 = vadd.f32 %v4436, %v6164
        %v6208 = vadd.f32 %v4437, %v6099
        %v6209 = vadd.f32 %v4438, %v6167
        %6226 = vrot.lane.b32.xlu0 %v6186, 16
        %v6227 = vpop.permute.xlu0 %6226
        %6228 = vrot.lane.b32.xlu0 %v6187, 16
        %v6229 = vpop.permute.xlu0 %6228
        %6230 = vrot.lane.b32.xlu0 %v6188, 16
        %v6231 = vpop.permute.xlu0 %6230
        %6232 = vrot.lane.b32.xlu0 %v6189, 16
        %v6233 = vpop.permute.xlu0 %6232
        %6234 = vrot.lane.b32.xlu0 %v6190, 16
        %v6235 = vpop.permute.xlu0 %6234
        %6236 = vrot.lane.b32.xlu0 %v6191, 16
        %v6237 = vpop.permute.xlu0 %6236
        %6238 = vrot.lane.b32.xlu0 %v6192, 16
        %v6239 = vpop.permute.xlu0 %6238
        %6240 = vrot.lane.b32.xlu0 %v6193, 16
        %v6241 = vpop.permute.xlu0 %6240
        %6242 = vrot.lane.b32.xlu0 %v6194, 16
        %v6243 = vpop.permute.xlu0 %6242
        %6244 = vrot.lane.b32.xlu0 %v6195, 16
        %v6245 = vpop.permute.xlu0 %6244
        %6246 = vrot.lane.b32.xlu0 %v6196, 16
        %v6247 = vpop.permute.xlu0 %6246
        %6248 = vrot.lane.b32.xlu0 %v6197, 16
        %v6249 = vpop.permute.xlu0 %6248
        %6250 = vrot.lane.b32.xlu0 %v6198, 16
        %v6251 = vpop.permute.xlu0 %6250
        %6252 = vrot.lane.b32.xlu0 %v6199, 16
        %v6253 = vpop.permute.xlu0 %6252
        %6254 = vrot.lane.b32.xlu0 %v6200, 16
        %v6255 = vpop.permute.xlu0 %6254
        %6256 = vrot.lane.b32.xlu0 %v6201, 16
        %v6257 = vpop.permute.xlu0 %6256
        %vm6258 = vcmask 130048
        %v6259 = vsel %vm6258, %v6227, %v6229
        %v6260 = vsel %vm6258, %v6229, %v6231
        %v6261 = vsel %vm6258, %v6231, %v6233
        %v6262 = vsel %vm6258, %v6235, %v6237
        %v6263 = vsel %vm6258, %v6237, %v6239
        %v6264 = vsel %vm6258, %v6239, %v6241
        %v6265 = vsel %vm6258, %v6243, %v6245
        %v6266 = vsel %vm6258, %v6245, %v6247
        %v6267 = vsel %vm6258, %v6247, %v6249
        %v6268 = vsel %vm6258, %v6251, %v6253
        %v6269 = vsel %vm6258, %v6253, %v6255
        %v6270 = vsel %vm6258, %v6255, %v6257
        %v6291 = vsel %vm6258, 0.0, %v6227
        %v6292 = vsel %vm6258, 0.0, %v6235
        %v6293 = vsel %vm6258, 0.0, %v6243
        %v6294 = vsel %vm6258, 0.0, %v6251
        %v6295 = vsel %vm6258, %v6233, 0.0
        %v6296 = vsel %vm6258, %v6241, 0.0
        %v6297 = vsel %vm6258, %v6249, 0.0
        %v6298 = vsel %vm6258, %v6257, 0.0
        %v6299 = vpack.c.bf16 %v6292, %v6291
        %v6300 = vpack.c.bf16 %v6262, %v6259
        %v6301 = vpack.c.bf16 %v6263, %v6260
        %v6302 = vpack.c.bf16 %v6264, %v6261
        %v6303 = vpack.c.bf16 %v6294, %v6293
        %v6304 = vpack.c.bf16 %v6268, %v6265
        %v6305 = vpack.c.bf16 %v6269, %v6266
        %v6306 = vpack.c.bf16 %v6270, %v6267
        %s6307 = scalar_lea.vmem %s6, 480
        %v6308 = vld [vmem:[%s6307] sm:$0xf]
        %v6309 = vld [vmem:[%s6307 + $0x4] sm:$0xf]
        %v6310 = vld [vmem:[%s6307 + $0x8] sm:$0xf]
        %v6311 = vld [vmem:[%s6307 + $0xc] sm:$0xf]
        %v6312 = vld [vmem:[%s6307 + $0x10] sm:$0xf]
        %v6313 = vld [vmem:[%s6307 + $0x14] sm:$0xf]
        %v6314 = vld [vmem:[%s6307 + $0x18] sm:$0xf]
        %v6315 = vld [vmem:[%s6307 + $0x1c] sm:$0xf]
        %v6316 = vpack.c.bf16 %v6296, %v6295
        %v6317 = vpack.c.bf16 %v6298, %v6297
        %s6318 = scalar_lea.vmem %s6, 512
        %v6319 = vld [vmem:[%s6318] sm:$0xf]
        %v6320 = vld [vmem:[%s6318 + $0x4] sm:$0xf]
        %v6321 = vld [vmem:[%s6318 + $0x8] sm:$0xf]
        %v6322 = vld [vmem:[%s6318 + $0xc] sm:$0xf]
        %v6323 = vld [vmem:[%s6318 + $0x10] sm:$0xf]
        %v6324 = vld [vmem:[%s6318 + $0x14] sm:$0xf]
        %v6325 = vld [vmem:[%s6318 + $0x18] sm:$0xf]
        %v6326 = vld [vmem:[%s6318 + $0x1c] sm:$0xf]
        %v6335 = vunpack.c.l.b16 %v6319
        %v6336 = vunpack.c.l.b16 %v6320
        %v6337 = vunpack.c.l.b16 %v6321
        %v6338 = vunpack.c.l.b16 %v6322
        %v6339 = vunpack.c.l.b16 %v6323
        %v6340 = vunpack.c.l.b16 %v6324
        %v6341 = vunpack.c.l.b16 %v6325
        %v6342 = vunpack.c.l.b16 %v6326
        %v6343 = vpack.c.b16 %v6336, %v6335
        %v6344 = vpack.c.b16 %v6338, %v6337
        %v6345 = vpack.c.b16 %v6340, %v6339
        %v6346 = vpack.c.b16 %v6342, %v6341
        %6357 = vrot.lane.b32.xlu0 %v6299, 120
        %v6358 = vpop.permute.xlu0 %6357
        %6359 = vrot.lane.b32.xlu0 %v6300, 120
        %v6360 = vpop.permute.xlu0 %6359
        %6361 = vrot.lane.b32.xlu0 %v6301, 120
        %v6362 = vpop.permute.xlu0 %6361
        %6363 = vrot.lane.b32.xlu0 %v6302, 120
        %v6364 = vpop.permute.xlu0 %6363
        %6365 = vrot.lane.b32.xlu0 %v6316, 120
        %v6366 = vpop.permute.xlu0 %6365
        %6367 = vrot.lane.b32.xlu0 %v6303, 120
        %v6368 = vpop.permute.xlu0 %6367
        %6369 = vrot.lane.b32.xlu0 %v6304, 120
        %v6370 = vpop.permute.xlu0 %6369
        %6371 = vrot.lane.b32.xlu0 %v6305, 120
        %v6372 = vpop.permute.xlu0 %6371
        %6373 = vrot.lane.b32.xlu0 %v6306, 120
        %v6374 = vpop.permute.xlu0 %6373
        %6375 = vrot.lane.b32.xlu0 %v6317, 120
        %v6376 = vpop.permute.xlu0 %6375
        %v6377 = vsel %vm3747, %v6358, %v6360
        %v6378 = vsel %vm3747, %v6360, %v6362
        %v6379 = vsel %vm3747, %v6362, %v6364
        %v6380 = vsel %vm3747, %v6364, %v6366
        %v6381 = vsel %vm3747, %v6368, %v6370
        %v6382 = vsel %vm3747, %v6370, %v6372
        %v6383 = vsel %vm3747, %v6372, %v6374
        %v6384 = vsel %vm3747, %v6374, %v6376
        %v6394 = vsel %vm1081, %v6343, 0
        %v6397 = vsel %vm1081, %v6344, 0
        %v6400 = vsel %vm1081, %v6345, 0
        %v6403 = vsel %vm1081, %v6346, 0
        %6405 = vmatprep.subr.bf16.mxu0 %v6378
        %6406 = vmatpush1.bf16.msra.mxu0 %v6377
        %6407 = vmatprep.subr.bf16.mxu0 %v6382
        %6408 = vmatpush1.bf16.msra.mxu0 %v6381
        %6409 = vmatprep.subr.bf16.mxu0 0
        %6410 = vmatpush1.bf16.msra.mxu0 0
        %6411 = vmatprep.subr.bf16.mxu0 0
        %6412 = vmatpush1.bf16.msra.mxu0 0
        %6413 = vmatprep.subr.bf16.mxu0 0
        %6414 = vmatpush1.bf16.msra.mxu0 0
        %6415 = vmatprep.subr.bf16.mxu0 0
        %6416 = vmatpush1.bf16.msra.mxu0 0
        %6417 = vmatprep.subr.bf16.mxu0 0
        %6418 = vmatpush1.bf16.msra.mxu0 0
        %6419 = vmatprep.subr.bf16.mxu0 0
        %6420 = vmatpush1.bf16.msra.mxu0 0
        %6421 = vmatprep.subr.bf16.mxu0 0
        %6422 = vmatpush1.bf16.msra.mxu0 0
        %6423 = vmatprep.subr.bf16.mxu0 0
        %6424 = vmatpush1.bf16.msra.mxu0 0
        %6425 = vmatprep.subr.bf16.mxu0 0
        %6426 = vmatpush1.bf16.msra.mxu0 0
        %6427 = vmatprep.subr.bf16.mxu0 0
        %6428 = vmatpush1.bf16.msra.mxu0 0
        %6429 = vmatprep.subr.bf16.mxu0 0
        %6430 = vmatpush1.bf16.msra.mxu0 0
        %6431 = vmatprep.subr.bf16.mxu0 0
        %6432 = vmatpush1.bf16.msra.mxu0 0
        %6433 = vmatprep.subr.bf16.mxu0 0
        %6434 = vmatpush1.bf16.msra.mxu0 0
        %6435 = vmatprep.subr.bf16.mxu0 0
        %6436 = vmatpush1.bf16.msra.mxu0 0
        %6437 = vmatprep.mubr.bf16.mxu0 0
        %6438 = vmatmul.mubr.bf16.gmra.mrb[0].mxu0 %v6394
        %v6439 = vpop.f32.mrb[0].mxu0
        %v6440 = vadd.f32 0.0, %v6439
        %v6441 = vpop.f32.mrb[0].mxu0
        %v6442 = vadd.f32 0.0, %v6441
        %v6443 = vpop.f32.mrb[0].mxu0
        %v6444 = vadd.f32 0.0, %v6443
        %v6445 = vpop.f32.mrb[0].mxu0
        %v6446 = vadd.f32 0.0, %v6445
        %6447 = vmatprep.mubr.bf16.mxu0 0
        %6448 = vmatmul.mubr.bf16.gmra.mrb[0].mxu0 %v6397
        %v6449 = vpop.f32.mrb[0].mxu0
        %v6450 = vadd.f32 0.0, %v6449
        %v6451 = vpop.f32.mrb[0].mxu0
        %v6452 = vadd.f32 0.0, %v6451
        %v6453 = vpop.f32.mrb[0].mxu0
        %v6454 = vadd.f32 0.0, %v6453
        %v6455 = vpop.f32.mrb[0].mxu0
        %v6456 = vadd.f32 0.0, %v6455
        %6457 = vmatprep.mubr.bf16.mxu0 0
        %6458 = vmatmul.mubr.bf16.gmra.mrb[0].mxu0 %v6400
        %v6459 = vpop.f32.mrb[0].mxu0
        %v6460 = vadd.f32 0.0, %v6459
        %v6461 = vpop.f32.mrb[0].mxu0
        %v6462 = vadd.f32 0.0, %v6461
        %v6463 = vpop.f32.mrb[0].mxu0
        %v6464 = vadd.f32 0.0, %v6463
        %v6465 = vpop.f32.mrb[0].mxu0
        %v6466 = vadd.f32 0.0, %v6465
        %6467 = vmatprep.mubr.bf16.mxu0 0
        %6468 = vmatmul.mubr.bf16.gmra.mrb[0].mxu0 %v6403
        %v6469 = vpop.f32.mrb[0].mxu0
        %v6470 = vadd.f32 0.0, %v6469
        %v6471 = vpop.f32.mrb[0].mxu0
        %v6472 = vadd.f32 0.0, %v6471
        %v6473 = vpop.f32.mrb[0].mxu0
        %v6474 = vadd.f32 0.0, %v6473
        %v6475 = vpop.f32.mrb[0].mxu0
        %v6476 = vadd.f32 0.0, %v6475
        %6477 = vdwg.mxu0
        %6478 = vmatprep.subr.bf16.mxu0 %v6380
        %6479 = vmatpush1.bf16.msra.mxu0 %v6379
        %6480 = vmatprep.subr.bf16.mxu0 %v6384
        %6481 = vmatpush1.bf16.msra.mxu0 %v6383
        %6482 = vmatprep.subr.bf16.mxu0 0
        %6483 = vmatpush1.bf16.msra.mxu0 0
        %6484 = vmatprep.subr.bf16.mxu0 0
        %6485 = vmatpush1.bf16.msra.mxu0 0
        %6486 = vmatprep.subr.bf16.mxu0 0
        %6487 = vmatpush1.bf16.msra.mxu0 0
        %6488 = vmatprep.subr.bf16.mxu0 0
        %6489 = vmatpush1.bf16.msra.mxu0 0
        %6490 = vmatprep.subr.bf16.mxu0 0
        %6491 = vmatpush1.bf16.msra.mxu0 0
        %6492 = vmatprep.subr.bf16.mxu0 0
        %6493 = vmatpush1.bf16.msra.mxu0 0
        %6494 = vmatprep.subr.bf16.mxu0 0
        %6495 = vmatpush1.bf16.msra.mxu0 0
        %6496 = vmatprep.subr.bf16.mxu0 0
        %6497 = vmatpush1.bf16.msra.mxu0 0
        %6498 = vmatprep.subr.bf16.mxu0 0
        %6499 = vmatpush1.bf16.msra.mxu0 0
        %6500 = vmatprep.subr.bf16.mxu0 0
        %6501 = vmatpush1.bf16.msra.mxu0 0
        %6502 = vmatprep.subr.bf16.mxu0 0
        %6503 = vmatpush1.bf16.msra.mxu0 0
        %6504 = vmatprep.subr.bf16.mxu0 0
        %6505 = vmatpush1.bf16.msra.mxu0 0
        %6506 = vmatprep.subr.bf16.mxu0 0
        %6507 = vmatpush1.bf16.msra.mxu0 0
        %6508 = vmatprep.subr.bf16.mxu0 0
        %6509 = vmatpush1.bf16.msra.mxu0 0
        %6510 = vmatprep.mubr.bf16.mxu0 0
        %6511 = vmatmul.mubr.bf16.gmra.mrb[0].mxu0 %v6394
        %v6512 = vpop.f32.mrb[0].mxu0
        %v6513 = vadd.f32 0.0, %v6512
        %v6514 = vpop.f32.mrb[0].mxu0
        %v6515 = vadd.f32 0.0, %v6514
        %v6516 = vpop.f32.mrb[0].mxu0
        %v6517 = vadd.f32 0.0, %v6516
        %v6518 = vpop.f32.mrb[0].mxu0
        %v6519 = vadd.f32 0.0, %v6518
        %6520 = vmatprep.mubr.bf16.mxu0 0
        %6521 = vmatmul.mubr.bf16.gmra.mrb[0].mxu0 %v6397
        %v6522 = vpop.f32.mrb[0].mxu0
        %v6523 = vadd.f32 0.0, %v6522
        %v6524 = vpop.f32.mrb[0].mxu0
        %v6525 = vadd.f32 0.0, %v6524
        %v6526 = vpop.f32.mrb[0].mxu0
        %v6527 = vadd.f32 0.0, %v6526
        %v6528 = vpop.f32.mrb[0].mxu0
        %v6529 = vadd.f32 0.0, %v6528
        %6530 = vmatprep.mubr.bf16.mxu0 0
        %6531 = vmatmul.mubr.bf16.gmra.mrb[0].mxu0 %v6400
        %v6532 = vpop.f32.mrb[0].mxu0
        %v6533 = vadd.f32 0.0, %v6532
        %v6534 = vpop.f32.mrb[0].mxu0
        %v6535 = vadd.f32 0.0, %v6534
        %v6536 = vpop.f32.mrb[0].mxu0
        %v6537 = vadd.f32 0.0, %v6536
        %v6538 = vpop.f32.mrb[0].mxu0
        %v6539 = vadd.f32 0.0, %v6538
        %6540 = vmatprep.mubr.bf16.mxu0 0
        %6541 = vmatmul.mubr.bf16.gmra.mrb[0].mxu0 %v6403
        %v6542 = vpop.f32.mrb[0].mxu0
        %v6543 = vadd.f32 0.0, %v6542
        %v6544 = vpop.f32.mrb[0].mxu0
        %v6545 = vadd.f32 0.0, %v6544
        %v6546 = vpop.f32.mrb[0].mxu0
        %v6547 = vadd.f32 0.0, %v6546
        %v6548 = vpop.f32.mrb[0].mxu0
        %v6549 = vadd.f32 0.0, %v6548
        %6550 = vdwg.mxu0
        %v6559 = vunpack.c.l.b16 %v6308
        %v6560 = vunpack.c.l.b16 %v6309
        %v6561 = vunpack.c.l.b16 %v6310
        %v6562 = vunpack.c.l.b16 %v6311
        %v6563 = vunpack.c.l.b16 %v6312
        %v6564 = vunpack.c.l.b16 %v6313
        %v6565 = vunpack.c.l.b16 %v6314
        %v6566 = vunpack.c.l.b16 %v6315
        %v6567 = vpack.c.b16 %v6560, %v6559
        %v6568 = vpack.c.b16 %v6562, %v6561
        %v6569 = vpack.c.b16 %v6564, %v6563
        %v6570 = vpack.c.b16 %v6566, %v6565
        %v6572 = vsel %vm1081, %v6567, 0
        %v6575 = vsel %vm1081, %v6568, 0
        %v6578 = vsel %vm1081, %v6569, 0
        %v6581 = vsel %vm1081, %v6570, 0
        %6583 = vmatprep.subr.bf16.mxu0 %v6300
        %6584 = vmatpush1.bf16.msra.mxu0 %v6299
        %6585 = vmatprep.subr.bf16.mxu0 %v6304
        %6586 = vmatpush1.bf16.msra.mxu0 %v6303
        %6587 = vmatprep.subr.bf16.mxu0 0
        %6588 = vmatpush1.bf16.msra.mxu0 0
        %6589 = vmatprep.subr.bf16.mxu0 0
        %6590 = vmatpush1.bf16.msra.mxu0 0
        %6591 = vmatprep.subr.bf16.mxu0 0
        %6592 = vmatpush1.bf16.msra.mxu0 0
        %6593 = vmatprep.subr.bf16.mxu0 0
        %6594 = vmatpush1.bf16.msra.mxu0 0
        %6595 = vmatprep.subr.bf16.mxu0 0
        %6596 = vmatpush1.bf16.msra.mxu0 0
        %6597 = vmatprep.subr.bf16.mxu0 0
        %6598 = vmatpush1.bf16.msra.mxu0 0
        %6599 = vmatprep.subr.bf16.mxu0 0
        %6600 = vmatpush1.bf16.msra.mxu0 0
        %6601 = vmatprep.subr.bf16.mxu0 0
        %6602 = vmatpush1.bf16.msra.mxu0 0
        %6603 = vmatprep.subr.bf16.mxu0 0
        %6604 = vmatpush1.bf16.msra.mxu0 0
        %6605 = vmatprep.subr.bf16.mxu0 0
        %6606 = vmatpush1.bf16.msra.mxu0 0
        %6607 = vmatprep.subr.bf16.mxu0 0
        %6608 = vmatpush1.bf16.msra.mxu0 0
        %6609 = vmatprep.subr.bf16.mxu0 0
        %6610 = vmatpush1.bf16.msra.mxu0 0
        %6611 = vmatprep.subr.bf16.mxu0 0
        %6612 = vmatpush1.bf16.msra.mxu0 0
        %6613 = vmatprep.subr.bf16.mxu0 0
        %6614 = vmatpush1.bf16.msra.mxu0 0
        %6615 = vmatprep.mubr.bf16.mxu0 0
        %6616 = vmatmul.mubr.bf16.gmra.mrb[0].mxu0 %v6572
        %v6617 = vpop.f32.mrb[0].mxu0
        %v6618 = vadd.f32 %v6440, %v6617
        %v6619 = vpop.f32.mrb[0].mxu0
        %v6620 = vadd.f32 %v6442, %v6619
        %v6621 = vpop.f32.mrb[0].mxu0
        %v6622 = vadd.f32 %v6444, %v6621
        %v6623 = vpop.f32.mrb[0].mxu0
        %v6624 = vadd.f32 %v6446, %v6623
        %6625 = vmatprep.mubr.bf16.mxu0 0
        %6626 = vmatmul.mubr.bf16.gmra.mrb[0].mxu0 %v6575
        %v6627 = vpop.f32.mrb[0].mxu0
        %v6628 = vadd.f32 %v6450, %v6627
        %v6629 = vpop.f32.mrb[0].mxu0
        %v6630 = vadd.f32 %v6452, %v6629
        %v6631 = vpop.f32.mrb[0].mxu0
        %v6632 = vadd.f32 %v6454, %v6631
        %v6633 = vpop.f32.mrb[0].mxu0
        %v6634 = vadd.f32 %v6456, %v6633
        %6635 = vmatprep.mubr.bf16.mxu0 0
        %6636 = vmatmul.mubr.bf16.gmra.mrb[0].mxu0 %v6578
        %v6637 = vpop.f32.mrb[0].mxu0
        %v6638 = vadd.f32 %v6460, %v6637
        %v6639 = vpop.f32.mrb[0].mxu0
        %v6640 = vadd.f32 %v6462, %v6639
        %v6641 = vpop.f32.mrb[0].mxu0
        %v6642 = vadd.f32 %v6464, %v6641
        %v6643 = vpop.f32.mrb[0].mxu0
        %v6644 = vadd.f32 %v6466, %v6643
        %6645 = vmatprep.mubr.bf16.mxu0 0
        %6646 = vmatmul.mubr.bf16.gmra.mrb[0].mxu0 %v6581
        %v6647 = vpop.f32.mrb[0].mxu0
        %v6648 = vadd.f32 %v6470, %v6647
        %v6649 = vpop.f32.mrb[0].mxu0
        %v6650 = vadd.f32 %v6472, %v6649
        %v6651 = vpop.f32.mrb[0].mxu0
        %v6652 = vadd.f32 %v6474, %v6651
        %v6653 = vpop.f32.mrb[0].mxu0
        %v6654 = vadd.f32 %v6476, %v6653
        %6655 = vdwg.mxu0
        %6656 = vmatprep.subr.bf16.mxu0 %v6302
        %6657 = vmatpush1.bf16.msra.mxu0 %v6301
        %6658 = vmatprep.subr.bf16.mxu0 %v6306
        %6659 = vmatpush1.bf16.msra.mxu0 %v6305
        %6660 = vmatprep.subr.bf16.mxu0 0
        %6661 = vmatpush1.bf16.msra.mxu0 0
        %6662 = vmatprep.subr.bf16.mxu0 0
        %6663 = vmatpush1.bf16.msra.mxu0 0
        %6664 = vmatprep.subr.bf16.mxu0 0
        %6665 = vmatpush1.bf16.msra.mxu0 0
        %6666 = vmatprep.subr.bf16.mxu0 0
        %6667 = vmatpush1.bf16.msra.mxu0 0
        %6668 = vmatprep.subr.bf16.mxu0 0
        %6669 = vmatpush1.bf16.msra.mxu0 0
        %6670 = vmatprep.subr.bf16.mxu0 0
        %6671 = vmatpush1.bf16.msra.mxu0 0
        %6672 = vmatprep.subr.bf16.mxu0 0
        %6673 = vmatpush1.bf16.msra.mxu0 0
        %6674 = vmatprep.subr.bf16.mxu0 0
        %6675 = vmatpush1.bf16.msra.mxu0 0
        %6676 = vmatprep.subr.bf16.mxu0 0
        %6677 = vmatpush1.bf16.msra.mxu0 0
        %6678 = vmatprep.subr.bf16.mxu0 0
        %6679 = vmatpush1.bf16.msra.mxu0 0
        %6680 = vmatprep.subr.bf16.mxu0 0
        %6681 = vmatpush1.bf16.msra.mxu0 0
        %6682 = vmatprep.subr.bf16.mxu0 0
        %6683 = vmatpush1.bf16.msra.mxu0 0
        %6684 = vmatprep.subr.bf16.mxu0 0
        %6685 = vmatpush1.bf16.msra.mxu0 0
        %6686 = vmatprep.subr.bf16.mxu0 0
        %6687 = vmatpush1.bf16.msra.mxu0 0
        %6688 = vmatprep.mubr.bf16.mxu0 0
        %6689 = vmatmul.mubr.bf16.gmra.mrb[0].mxu0 %v6572
        %v6690 = vpop.f32.mrb[0].mxu0
        %v6691 = vadd.f32 %v6513, %v6690
        %v6692 = vpop.f32.mrb[0].mxu0
        %v6693 = vadd.f32 %v6515, %v6692
        %v6694 = vpop.f32.mrb[0].mxu0
        %v6695 = vadd.f32 %v6517, %v6694
        %v6696 = vpop.f32.mrb[0].mxu0
        %v6697 = vadd.f32 %v6519, %v6696
        %6698 = vmatprep.mubr.bf16.mxu0 0
        %6699 = vmatmul.mubr.bf16.gmra.mrb[0].mxu0 %v6575
        %v6700 = vpop.f32.mrb[0].mxu0
        %v6701 = vadd.f32 %v6523, %v6700
        %v6702 = vpop.f32.mrb[0].mxu0
        %v6703 = vadd.f32 %v6525, %v6702
        %v6704 = vpop.f32.mrb[0].mxu0
        %v6705 = vadd.f32 %v6527, %v6704
        %v6706 = vpop.f32.mrb[0].mxu0
        %v6707 = vadd.f32 %v6529, %v6706
        %6708 = vmatprep.mubr.bf16.mxu0 0
        %6709 = vmatmul.mubr.bf16.gmra.mrb[0].mxu0 %v6578
        %v6710 = vpop.f32.mrb[0].mxu0
        %v6711 = vadd.f32 %v6533, %v6710
        %v6712 = vpop.f32.mrb[0].mxu0
        %v6713 = vadd.f32 %v6535, %v6712
        %v6714 = vpop.f32.mrb[0].mxu0
        %v6715 = vadd.f32 %v6537, %v6714
        %v6716 = vpop.f32.mrb[0].mxu0
        %v6717 = vadd.f32 %v6539, %v6716
        %6718 = vmatprep.mubr.bf16.mxu0 0
        %6719 = vmatmul.mubr.bf16.gmra.mrb[0].mxu0 %v6581
        %v6720 = vpop.f32.mrb[0].mxu0
        %v6721 = vadd.f32 %v6543, %v6720
        %v6722 = vpop.f32.mrb[0].mxu0
        %v6723 = vadd.f32 %v6545, %v6722
        %v6724 = vpop.f32.mrb[0].mxu0
        %v6725 = vadd.f32 %v6547, %v6724
        %v6726 = vpop.f32.mrb[0].mxu0
        %v6727 = vadd.f32 %v6549, %v6726
        %6728 = vdwg.mxu0
        %s6729 = scalar_lea.vmem %s6, 544
        %v6730 = vld [vmem:[%s6729] sm:$0xf]
        %v6731 = vld [vmem:[%s6729 + $0x4] sm:$0xf]
        %v6732 = vld [vmem:[%s6729 + $0x8] sm:$0xf]
        %v6733 = vld [vmem:[%s6729 + $0xc] sm:$0xf]
        %v6734 = vld [vmem:[%s6729 + $0x10] sm:$0xf]
        %v6735 = vld [vmem:[%s6729 + $0x14] sm:$0xf]
        %v6736 = vld [vmem:[%s6729 + $0x18] sm:$0xf]
        %v6737 = vld [vmem:[%s6729 + $0x1c] sm:$0xf]
        %v6746 = vunpack.c.l.b16 %v6730
        %v6747 = vunpack.c.l.b16 %v6731
        %v6748 = vunpack.c.l.b16 %v6732
        %v6749 = vunpack.c.l.b16 %v6733
        %v6750 = vunpack.c.l.b16 %v6734
        %v6751 = vunpack.c.l.b16 %v6735
        %v6752 = vunpack.c.l.b16 %v6736
        %v6753 = vunpack.c.l.b16 %v6737
        %v6754 = vpack.c.b16 %v6747, %v6746
        %v6755 = vpack.c.b16 %v6749, %v6748
        %v6756 = vpack.c.b16 %v6751, %v6750
        %v6757 = vpack.c.b16 %v6753, %v6752
        %6758 = vrot.lane.b32.xlu0 %v6299, 112
        %v6759 = vpop.permute.xlu0 %6758
        %6760 = vrot.lane.b32.xlu0 %v6300, 112
        %v6761 = vpop.permute.xlu0 %6760
        %6762 = vrot.lane.b32.xlu0 %v6301, 112
        %v6763 = vpop.permute.xlu0 %6762
        %6764 = vrot.lane.b32.xlu0 %v6302, 112
        %v6765 = vpop.permute.xlu0 %6764
        %6766 = vrot.lane.b32.xlu0 %v6316, 112
        %v6767 = vpop.permute.xlu0 %6766
        %6768 = vrot.lane.b32.xlu0 %v6303, 112
        %v6769 = vpop.permute.xlu0 %6768
        %6770 = vrot.lane.b32.xlu0 %v6304, 112
        %v6771 = vpop.permute.xlu0 %6770
        %6772 = vrot.lane.b32.xlu0 %v6305, 112
        %v6773 = vpop.permute.xlu0 %6772
        %6774 = vrot.lane.b32.xlu0 %v6306, 112
        %v6775 = vpop.permute.xlu0 %6774
        %6776 = vrot.lane.b32.xlu0 %v6317, 112
        %v6777 = vpop.permute.xlu0 %6776
        %v6778 = vsel %vm5518, %v6759, %v6761
        %v6779 = vsel %vm5518, %v6761, %v6763
        %v6780 = vsel %vm5518, %v6763, %v6765
        %v6781 = vsel %vm5518, %v6765, %v6767
        %v6782 = vsel %vm5518, %v6769, %v6771
        %v6783 = vsel %vm5518, %v6771, %v6773
        %v6784 = vsel %vm5518, %v6773, %v6775
        %v6785 = vsel %vm5518, %v6775, %v6777
        %v6795 = vsel %vm1081, %v6754, 0
        %v6798 = vsel %vm1081, %v6755, 0
        %v6801 = vsel %vm1081, %v6756, 0
        %v6804 = vsel %vm1081, %v6757, 0
        %6806 = vmatprep.subr.bf16.mxu0 %v6779
        %6807 = vmatpush1.bf16.msra.mxu0 %v6778
        %6808 = vmatprep.subr.bf16.mxu0 %v6783
        %6809 = vmatpush1.bf16.msra.mxu0 %v6782
        %6810 = vmatprep.subr.bf16.mxu0 0
        %6811 = vmatpush1.bf16.msra.mxu0 0
        %6812 = vmatprep.subr.bf16.mxu0 0
        %6813 = vmatpush1.bf16.msra.mxu0 0
        %6814 = vmatprep.subr.bf16.mxu0 0
        %6815 = vmatpush1.bf16.msra.mxu0 0
        %6816 = vmatprep.subr.bf16.mxu0 0
        %6817 = vmatpush1.bf16.msra.mxu0 0
        %6818 = vmatprep.subr.bf16.mxu0 0
        %6819 = vmatpush1.bf16.msra.mxu0 0
        %6820 = vmatprep.subr.bf16.mxu0 0
        %6821 = vmatpush1.bf16.msra.mxu0 0
        %6822 = vmatprep.subr.bf16.mxu0 0
        %6823 = vmatpush1.bf16.msra.mxu0 0
        %6824 = vmatprep.subr.bf16.mxu0 0
        %6825 = vmatpush1.bf16.msra.mxu0 0
        %6826 = vmatprep.subr.bf16.mxu0 0
        %6827 = vmatpush1.bf16.msra.mxu0 0
        %6828 = vmatprep.subr.bf16.mxu0 0
        %6829 = vmatpush1.bf16.msra.mxu0 0
        %6830 = vmatprep.subr.bf16.mxu0 0
        %6831 = vmatpush1.bf16.msra.mxu0 0
        %6832 = vmatprep.subr.bf16.mxu0 0
        %6833 = vmatpush1.bf16.msra.mxu0 0
        %6834 = vmatprep.subr.bf16.mxu0 0
        %6835 = vmatpush1.bf16.msra.mxu0 0
        %6836 = vmatprep.subr.bf16.mxu0 0
        %6837 = vmatpush1.bf16.msra.mxu0 0
        %6838 = vmatprep.mubr.bf16.mxu0 0
        %6839 = vmatmul.mubr.bf16.gmra.mrb[0].mxu0 %v6795
        %v6840 = vpop.f32.mrb[0].mxu0
        %v6841 = vadd.f32 0.0, %v6840
        %v6842 = vpop.f32.mrb[0].mxu0
        %v6843 = vadd.f32 0.0, %v6842
        %v6844 = vpop.f32.mrb[0].mxu0
        %v6845 = vadd.f32 0.0, %v6844
        %v6846 = vpop.f32.mrb[0].mxu0
        %v6847 = vadd.f32 0.0, %v6846
        %6848 = vmatprep.mubr.bf16.mxu0 0
        %6849 = vmatmul.mubr.bf16.gmra.mrb[0].mxu0 %v6798
        %v6850 = vpop.f32.mrb[0].mxu0
        %v6851 = vadd.f32 0.0, %v6850
        %v6852 = vpop.f32.mrb[0].mxu0
        %v6853 = vadd.f32 0.0, %v6852
        %v6854 = vpop.f32.mrb[0].mxu0
        %v6855 = vadd.f32 0.0, %v6854
        %v6856 = vpop.f32.mrb[0].mxu0
        %v6857 = vadd.f32 0.0, %v6856
        %6858 = vmatprep.mubr.bf16.mxu0 0
        %6859 = vmatmul.mubr.bf16.gmra.mrb[0].mxu0 %v6801
        %v6860 = vpop.f32.mrb[0].mxu0
        %v6861 = vadd.f32 0.0, %v6860
        %v6862 = vpop.f32.mrb[0].mxu0
        %v6863 = vadd.f32 0.0, %v6862
        %v6864 = vpop.f32.mrb[0].mxu0
        %v6865 = vadd.f32 0.0, %v6864
        %v6866 = vpop.f32.mrb[0].mxu0
        %v6867 = vadd.f32 0.0, %v6866
        %6868 = vmatprep.mubr.bf16.mxu0 0
        %6869 = vmatmul.mubr.bf16.gmra.mrb[0].mxu0 %v6804
        %v6870 = vpop.f32.mrb[0].mxu0
        %v6871 = vadd.f32 0.0, %v6870
        %v6872 = vpop.f32.mrb[0].mxu0
        %v6873 = vadd.f32 0.0, %v6872
        %v6874 = vpop.f32.mrb[0].mxu0
        %v6875 = vadd.f32 0.0, %v6874
        %v6876 = vpop.f32.mrb[0].mxu0
        %v6877 = vadd.f32 0.0, %v6876
        %6878 = vdwg.mxu0
        %6879 = vmatprep.subr.bf16.mxu0 %v6781
        %6880 = vmatpush1.bf16.msra.mxu0 %v6780
        %6881 = vmatprep.subr.bf16.mxu0 %v6785
        %6882 = vmatpush1.bf16.msra.mxu0 %v6784
        %6883 = vmatprep.subr.bf16.mxu0 0
        %6884 = vmatpush1.bf16.msra.mxu0 0
        %6885 = vmatprep.subr.bf16.mxu0 0
        %6886 = vmatpush1.bf16.msra.mxu0 0
        %6887 = vmatprep.subr.bf16.mxu0 0
        %6888 = vmatpush1.bf16.msra.mxu0 0
        %6889 = vmatprep.subr.bf16.mxu0 0
        %6890 = vmatpush1.bf16.msra.mxu0 0
        %6891 = vmatprep.subr.bf16.mxu0 0
        %6892 = vmatpush1.bf16.msra.mxu0 0
        %6893 = vmatprep.subr.bf16.mxu0 0
        %6894 = vmatpush1.bf16.msra.mxu0 0
        %6895 = vmatprep.subr.bf16.mxu0 0
        %6896 = vmatpush1.bf16.msra.mxu0 0
        %6897 = vmatprep.subr.bf16.mxu0 0
        %6898 = vmatpush1.bf16.msra.mxu0 0
        %6899 = vmatprep.subr.bf16.mxu0 0
        %6900 = vmatpush1.bf16.msra.mxu0 0
        %6901 = vmatprep.subr.bf16.mxu0 0
        %6902 = vmatpush1.bf16.msra.mxu0 0
        %6903 = vmatprep.subr.bf16.mxu0 0
        %6904 = vmatpush1.bf16.msra.mxu0 0
        %6905 = vmatprep.subr.bf16.mxu0 0
        %6906 = vmatpush1.bf16.msra.mxu0 0
        %6907 = vmatprep.subr.bf16.mxu0 0
        %6908 = vmatpush1.bf16.msra.mxu0 0
        %6909 = vmatprep.subr.bf16.mxu0 0
        %6910 = vmatpush1.bf16.msra.mxu0 0
        %6911 = vmatprep.mubr.bf16.mxu0 0
        %6912 = vmatmul.mubr.bf16.gmra.mrb[0].mxu0 %v6795
        %v6913 = vpop.f32.mrb[0].mxu0
        %v6914 = vadd.f32 0.0, %v6913
        %v6915 = vpop.f32.mrb[0].mxu0
        %v6916 = vadd.f32 0.0, %v6915
        %v6917 = vpop.f32.mrb[0].mxu0
        %v6918 = vadd.f32 0.0, %v6917
        %v6919 = vpop.f32.mrb[0].mxu0
        %v6920 = vadd.f32 0.0, %v6919
        %6921 = vmatprep.mubr.bf16.mxu0 0
        %6922 = vmatmul.mubr.bf16.gmra.mrb[0].mxu0 %v6798
        %v6923 = vpop.f32.mrb[0].mxu0
        %v6924 = vadd.f32 0.0, %v6923
        %v6925 = vpop.f32.mrb[0].mxu0
        %v6926 = vadd.f32 0.0, %v6925
        %v6927 = vpop.f32.mrb[0].mxu0
        %v6928 = vadd.f32 0.0, %v6927
        %v6929 = vpop.f32.mrb[0].mxu0
        %v6930 = vadd.f32 0.0, %v6929
        %6931 = vmatprep.mubr.bf16.mxu0 0
        %6932 = vmatmul.mubr.bf16.gmra.mrb[0].mxu0 %v6801
        %v6933 = vpop.f32.mrb[0].mxu0
        %v6934 = vadd.f32 0.0, %v6933
        %v6935 = vpop.f32.mrb[0].mxu0
        %v6936 = vadd.f32 0.0, %v6935
        %v6937 = vpop.f32.mrb[0].mxu0
        %v6938 = vadd.f32 0.0, %v6937
        %v6939 = vpop.f32.mrb[0].mxu0
        %v6940 = vadd.f32 0.0, %v6939
        %6941 = vmatprep.mubr.bf16.mxu0 0
        %6942 = vmatmul.mubr.bf16.gmra.mrb[0].mxu0 %v6804
        %v6943 = vpop.f32.mrb[0].mxu0
        %v6944 = vadd.f32 0.0, %v6943
        %v6945 = vpop.f32.mrb[0].mxu0
        %v6946 = vadd.f32 0.0, %v6945
        %v6947 = vpop.f32.mrb[0].mxu0
        %v6948 = vadd.f32 0.0, %v6947
        %v6949 = vpop.f32.mrb[0].mxu0
        %v6950 = vadd.f32 0.0, %v6949
        %6951 = vdwg.mxu0
        %v6952 = vadd.f32 %v6618, %v6841
        %v6953 = vadd.f32 %v6620, %v6843
        %v6954 = vadd.f32 %v6691, %v6914
        %v6955 = vadd.f32 %v6693, %v6916
        %v6956 = vadd.f32 %v6622, %v6845
        %v6957 = vadd.f32 %v6624, %v6847
        %v6958 = vadd.f32 %v6695, %v6918
        %v6959 = vadd.f32 %v6697, %v6920
        %v6960 = vadd.f32 %v6628, %v6851
        %v6961 = vadd.f32 %v6630, %v6853
        %v6962 = vadd.f32 %v6701, %v6924
        %v6963 = vadd.f32 %v6703, %v6926
        %v6964 = vadd.f32 %v6632, %v6855
        %v6965 = vadd.f32 %v6634, %v6857
        %v6966 = vadd.f32 %v6705, %v6928
        %v6967 = vadd.f32 %v6707, %v6930
        %v6968 = vadd.f32 %v6638, %v6861
        %v6969 = vadd.f32 %v6640, %v6863
        %v6970 = vadd.f32 %v6711, %v6934
        %v6971 = vadd.f32 %v6713, %v6936
        %v6972 = vadd.f32 %v6642, %v6865
        %v6973 = vadd.f32 %v6644, %v6867
        %v6974 = vadd.f32 %v6715, %v6938
        %v6975 = vadd.f32 %v6717, %v6940
        %v6976 = vadd.f32 %v6648, %v6871
        %v6977 = vadd.f32 %v6650, %v6873
        %v6978 = vadd.f32 %v6721, %v6944
        %v6979 = vadd.f32 %v6723, %v6946
        %v6980 = vadd.f32 %v6652, %v6875
        %v6981 = vadd.f32 %v6654, %v6877
        %v6982 = vadd.f32 %v6725, %v6948
        %v6983 = vadd.f32 %v6727, %v6950
        %s6984 = scalar_lea.vmem %s6, 576
        %v6985 = vld [vmem:[%s6984] sm:$0xf]
        %v6986 = vld [vmem:[%s6984 + $0x4] sm:$0xf]
        %v6987 = vld [vmem:[%s6984 + $0x8] sm:$0xf]
        %v6988 = vld [vmem:[%s6984 + $0xc] sm:$0xf]
        %v6989 = vld [vmem:[%s6984 + $0x10] sm:$0xf]
        %v6990 = vld [vmem:[%s6984 + $0x14] sm:$0xf]
        %v6991 = vld [vmem:[%s6984 + $0x18] sm:$0xf]
        %v6992 = vld [vmem:[%s6984 + $0x1c] sm:$0xf]
        %v7001 = vunpack.c.l.b16 %v6985
        %v7002 = vunpack.c.l.b16 %v6986
        %v7003 = vunpack.c.l.b16 %v6987
        %v7004 = vunpack.c.l.b16 %v6988
        %v7005 = vunpack.c.l.b16 %v6989
        %v7006 = vunpack.c.l.b16 %v6990
        %v7007 = vunpack.c.l.b16 %v6991
        %v7008 = vunpack.c.l.b16 %v6992
        %v7009 = vpack.c.b16 %v7002, %v7001
        %v7010 = vpack.c.b16 %v7004, %v7003
        %v7011 = vpack.c.b16 %v7006, %v7005
        %v7012 = vpack.c.b16 %v7008, %v7007
        %7013 = vrot.lane.b32.xlu0 %v6299, 104
        %v7014 = vpop.permute.xlu0 %7013
        %7015 = vrot.lane.b32.xlu0 %v6300, 104
        %v7016 = vpop.permute.xlu0 %7015
        %7017 = vrot.lane.b32.xlu0 %v6301, 104
        %v7018 = vpop.permute.xlu0 %7017
        %7019 = vrot.lane.b32.xlu0 %v6302, 104
        %v7020 = vpop.permute.xlu0 %7019
        %7021 = vrot.lane.b32.xlu0 %v6316, 104
        %v7022 = vpop.permute.xlu0 %7021
        %7023 = vrot.lane.b32.xlu0 %v6303, 104
        %v7024 = vpop.permute.xlu0 %7023
        %7025 = vrot.lane.b32.xlu0 %v6304, 104
        %v7026 = vpop.permute.xlu0 %7025
        %7027 = vrot.lane.b32.xlu0 %v6305, 104
        %v7028 = vpop.permute.xlu0 %7027
        %7029 = vrot.lane.b32.xlu0 %v6306, 104
        %v7030 = vpop.permute.xlu0 %7029
        %7031 = vrot.lane.b32.xlu0 %v6317, 104
        %v7032 = vpop.permute.xlu0 %7031
        %vm7033 = vcmask 850944
        %v7034 = vsel %vm7033, %v7014, %v7016
        %v7035 = vsel %vm7033, %v7016, %v7018
        %v7036 = vsel %vm7033, %v7018, %v7020
        %v7037 = vsel %vm7033, %v7020, %v7022
        %v7038 = vsel %vm7033, %v7024, %v7026
        %v7039 = vsel %vm7033, %v7026, %v7028
        %v7040 = vsel %vm7033, %v7028, %v7030
        %v7041 = vsel %vm7033, %v7030, %v7032
        %v7051 = vsel %vm1081, %v7009, 0
        %v7054 = vsel %vm1081, %v7010, 0
        %v7057 = vsel %vm1081, %v7011, 0
        %v7060 = vsel %vm1081, %v7012, 0
        %7062 = vmatprep.subr.bf16.mxu0 %v7035
        %7063 = vmatpush1.bf16.msra.mxu0 %v7034
        %7064 = vmatprep.subr.bf16.mxu0 %v7039
        %7065 = vmatpush1.bf16.msra.mxu0 %v7038
        %7066 = vmatprep.subr.bf16.mxu0 0
        %7067 = vmatpush1.bf16.msra.mxu0 0
        %7068 = vmatprep.subr.bf16.mxu0 0
        %7069 = vmatpush1.bf16.msra.mxu0 0
        %7070 = vmatprep.subr.bf16.mxu0 0
        %7071 = vmatpush1.bf16.msra.mxu0 0
        %7072 = vmatprep.subr.bf16.mxu0 0
        %7073 = vmatpush1.bf16.msra.mxu0 0
        %7074 = vmatprep.subr.bf16.mxu0 0
        %7075 = vmatpush1.bf16.msra.mxu0 0
        %7076 = vmatprep.subr.bf16.mxu0 0
        %7077 = vmatpush1.bf16.msra.mxu0 0
        %7078 = vmatprep.subr.bf16.mxu0 0
        %7079 = vmatpush1.bf16.msra.mxu0 0
        %7080 = vmatprep.subr.bf16.mxu0 0
        %7081 = vmatpush1.bf16.msra.mxu0 0
        %7082 = vmatprep.subr.bf16.mxu0 0
        %7083 = vmatpush1.bf16.msra.mxu0 0
        %7084 = vmatprep.subr.bf16.mxu0 0
        %7085 = vmatpush1.bf16.msra.mxu0 0
        %7086 = vmatprep.subr.bf16.mxu0 0
        %7087 = vmatpush1.bf16.msra.mxu0 0
        %7088 = vmatprep.subr.bf16.mxu0 0
        %7089 = vmatpush1.bf16.msra.mxu0 0
        %7090 = vmatprep.subr.bf16.mxu0 0
        %7091 = vmatpush1.bf16.msra.mxu0 0
        %7092 = vmatprep.subr.bf16.mxu0 0
        %7093 = vmatpush1.bf16.msra.mxu0 0
        %7094 = vmatprep.mubr.bf16.mxu0 0
        %7095 = vmatmul.mubr.bf16.gmra.mrb[0].mxu0 %v7051
        %v7096 = vpop.f32.mrb[0].mxu0
        %v7097 = vadd.f32 0.0, %v7096
        %v7098 = vpop.f32.mrb[0].mxu0
        %v7099 = vadd.f32 0.0, %v7098
        %v7100 = vpop.f32.mrb[0].mxu0
        %v7101 = vadd.f32 0.0, %v7100
        %v7102 = vpop.f32.mrb[0].mxu0
        %v7103 = vadd.f32 0.0, %v7102
        %7104 = vmatprep.mubr.bf16.mxu0 0
        %7105 = vmatmul.mubr.bf16.gmra.mrb[0].mxu0 %v7054
        %v7106 = vpop.f32.mrb[0].mxu0
        %v7107 = vadd.f32 0.0, %v7106
        %v7108 = vpop.f32.mrb[0].mxu0
        %v7109 = vadd.f32 0.0, %v7108
        %v7110 = vpop.f32.mrb[0].mxu0
        %v7111 = vadd.f32 0.0, %v7110
        %v7112 = vpop.f32.mrb[0].mxu0
        %v7113 = vadd.f32 0.0, %v7112
        %7114 = vmatprep.mubr.bf16.mxu0 0
        %7115 = vmatmul.mubr.bf16.gmra.mrb[0].mxu0 %v7057
        %v7116 = vpop.f32.mrb[0].mxu0
        %v7117 = vadd.f32 0.0, %v7116
        %v7118 = vpop.f32.mrb[0].mxu0
        %v7119 = vadd.f32 0.0, %v7118
        %v7120 = vpop.f32.mrb[0].mxu0
        %v7121 = vadd.f32 0.0, %v7120
        %v7122 = vpop.f32.mrb[0].mxu0
        %v7123 = vadd.f32 0.0, %v7122
        %7124 = vmatprep.mubr.bf16.mxu0 0
        %7125 = vmatmul.mubr.bf16.gmra.mrb[0].mxu0 %v7060
        %v7126 = vpop.f32.mrb[0].mxu0
        %v7127 = vadd.f32 0.0, %v7126
        %v7128 = vpop.f32.mrb[0].mxu0
        %v7129 = vadd.f32 0.0, %v7128
        %v7130 = vpop.f32.mrb[0].mxu0
        %v7131 = vadd.f32 0.0, %v7130
        %v7132 = vpop.f32.mrb[0].mxu0
        %v7133 = vadd.f32 0.0, %v7132
        %7134 = vdwg.mxu0
        %7135 = vmatprep.subr.bf16.mxu0 %v7037
        %7136 = vmatpush1.bf16.msra.mxu0 %v7036
        %7137 = vmatprep.subr.bf16.mxu0 %v7041
        %7138 = vmatpush1.bf16.msra.mxu0 %v7040
        %7139 = vmatprep.subr.bf16.mxu0 0
        %7140 = vmatpush1.bf16.msra.mxu0 0
        %7141 = vmatprep.subr.bf16.mxu0 0
        %7142 = vmatpush1.bf16.msra.mxu0 0
        %7143 = vmatprep.subr.bf16.mxu0 0
        %7144 = vmatpush1.bf16.msra.mxu0 0
        %7145 = vmatprep.subr.bf16.mxu0 0
        %7146 = vmatpush1.bf16.msra.mxu0 0
        %7147 = vmatprep.subr.bf16.mxu0 0
        %7148 = vmatpush1.bf16.msra.mxu0 0
        %7149 = vmatprep.subr.bf16.mxu0 0
        %7150 = vmatpush1.bf16.msra.mxu0 0
        %7151 = vmatprep.subr.bf16.mxu0 0
        %7152 = vmatpush1.bf16.msra.mxu0 0
        %7153 = vmatprep.subr.bf16.mxu0 0
        %7154 = vmatpush1.bf16.msra.mxu0 0
        %7155 = vmatprep.subr.bf16.mxu0 0
        %7156 = vmatpush1.bf16.msra.mxu0 0
        %7157 = vmatprep.subr.bf16.mxu0 0
        %7158 = vmatpush1.bf16.msra.mxu0 0
        %7159 = vmatprep.subr.bf16.mxu0 0
        %7160 = vmatpush1.bf16.msra.mxu0 0
        %7161 = vmatprep.subr.bf16.mxu0 0
        %7162 = vmatpush1.bf16.msra.mxu0 0
        %7163 = vmatprep.subr.bf16.mxu0 0
        %7164 = vmatpush1.bf16.msra.mxu0 0
        %7165 = vmatprep.subr.bf16.mxu0 0
        %7166 = vmatpush1.bf16.msra.mxu0 0
        %7167 = vmatprep.mubr.bf16.mxu0 0
        %7168 = vmatmul.mubr.bf16.gmra.mrb[0].mxu0 %v7051
        %v7169 = vpop.f32.mrb[0].mxu0
        %v7170 = vadd.f32 0.0, %v7169
        %v7171 = vpop.f32.mrb[0].mxu0
        %v7172 = vadd.f32 0.0, %v7171
        %v7173 = vpop.f32.mrb[0].mxu0
        %v7174 = vadd.f32 0.0, %v7173
        %v7175 = vpop.f32.mrb[0].mxu0
        %v7176 = vadd.f32 0.0, %v7175
        %7177 = vmatprep.mubr.bf16.mxu0 0
        %7178 = vmatmul.mubr.bf16.gmra.mrb[0].mxu0 %v7054
        %v7179 = vpop.f32.mrb[0].mxu0
        %v7180 = vadd.f32 0.0, %v7179
        %v7181 = vpop.f32.mrb[0].mxu0
        %v7182 = vadd.f32 0.0, %v7181
        %v7183 = vpop.f32.mrb[0].mxu0
        %v7184 = vadd.f32 0.0, %v7183
        %v7185 = vpop.f32.mrb[0].mxu0
        %v7186 = vadd.f32 0.0, %v7185
        %7187 = vmatprep.mubr.bf16.mxu0 0
        %7188 = vmatmul.mubr.bf16.gmra.mrb[0].mxu0 %v7057
        %v7189 = vpop.f32.mrb[0].mxu0
        %v7190 = vadd.f32 0.0, %v7189
        %v7191 = vpop.f32.mrb[0].mxu0
        %v7192 = vadd.f32 0.0, %v7191
        %v7193 = vpop.f32.mrb[0].mxu0
        %v7194 = vadd.f32 0.0, %v7193
        %v7195 = vpop.f32.mrb[0].mxu0
        %v7196 = vadd.f32 0.0, %v7195
        %7197 = vmatprep.mubr.bf16.mxu0 0
        %7198 = vmatmul.mubr.bf16.gmra.mrb[0].mxu0 %v7060
        %v7199 = vpop.f32.mrb[0].mxu0
        %v7200 = vadd.f32 0.0, %v7199
        %v7201 = vpop.f32.mrb[0].mxu0
        %v7202 = vadd.f32 0.0, %v7201
        %v7203 = vpop.f32.mrb[0].mxu0
        %v7204 = vadd.f32 0.0, %v7203
        %v7205 = vpop.f32.mrb[0].mxu0
        %v7206 = vadd.f32 0.0, %v7205
        %7207 = vdwg.mxu0
        %v7208 = vadd.f32 %v6952, %v7097
        %v7209 = vadd.f32 %v6953, %v7099
        %v7210 = vadd.f32 %v6954, %v7170
        %v7211 = vadd.f32 %v6955, %v7172
        %v7212 = vadd.f32 %v6956, %v7101
        %v7213 = vadd.f32 %v6957, %v7103
        %v7214 = vadd.f32 %v6958, %v7174
        %v7215 = vadd.f32 %v6959, %v7176
        %v7216 = vadd.f32 %v6960, %v7107
        %v7217 = vadd.f32 %v6961, %v7109
        %v7218 = vadd.f32 %v6962, %v7180
        %v7219 = vadd.f32 %v6963, %v7182
        %v7220 = vadd.f32 %v6964, %v7111
        %v7221 = vadd.f32 %v6965, %v7113
        %v7222 = vadd.f32 %v6966, %v7184
        %v7223 = vadd.f32 %v6967, %v7186
        %v7224 = vadd.f32 %v6968, %v7117
        %v7225 = vadd.f32 %v6969, %v7119
        %v7226 = vadd.f32 %v6970, %v7190
        %v7227 = vadd.f32 %v6971, %v7192
        %v7228 = vadd.f32 %v6972, %v7121
        %v7229 = vadd.f32 %v6973, %v7123
        %v7230 = vadd.f32 %v6974, %v7194
        %v7231 = vadd.f32 %v6975, %v7196
        %v7232 = vadd.f32 %v6976, %v7127
        %v7233 = vadd.f32 %v6977, %v7129
        %v7234 = vadd.f32 %v6978, %v7200
        %v7235 = vadd.f32 %v6979, %v7202
        %v7236 = vadd.f32 %v6980, %v7131
        %v7237 = vadd.f32 %v6981, %v7133
        %v7238 = vadd.f32 %v6982, %v7204
        %v7239 = vadd.f32 %v6983, %v7206
        %s7240 = scalar_lea.vmem %s6, 608
        %v7241 = vld [vmem:[%s7240] sm:$0xf]
        %v7242 = vld [vmem:[%s7240 + $0x4] sm:$0xf]
        %v7243 = vld [vmem:[%s7240 + $0x8] sm:$0xf]
        %v7244 = vld [vmem:[%s7240 + $0xc] sm:$0xf]
        %v7245 = vld [vmem:[%s7240 + $0x10] sm:$0xf]
        %v7246 = vld [vmem:[%s7240 + $0x14] sm:$0xf]
        %v7247 = vld [vmem:[%s7240 + $0x18] sm:$0xf]
        %v7248 = vld [vmem:[%s7240 + $0x1c] sm:$0xf]
        %v7257 = vunpack.c.l.b16 %v7241
        %v7258 = vunpack.c.l.b16 %v7242
        %v7259 = vunpack.c.l.b16 %v7243
        %v7260 = vunpack.c.l.b16 %v7244
        %v7261 = vunpack.c.l.b16 %v7245
        %v7262 = vunpack.c.l.b16 %v7246
        %v7263 = vunpack.c.l.b16 %v7247
        %v7264 = vunpack.c.l.b16 %v7248
        %v7265 = vpack.c.b16 %v7258, %v7257
        %v7266 = vpack.c.b16 %v7260, %v7259
        %v7267 = vpack.c.b16 %v7262, %v7261
        %v7268 = vpack.c.b16 %v7264, %v7263
        %7269 = vrot.lane.b32.xlu0 %v6299, 96
        %v7270 = vpop.permute.xlu0 %7269
        %7271 = vrot.lane.b32.xlu0 %v6300, 96
        %v7272 = vpop.permute.xlu0 %7271
        %7273 = vrot.lane.b32.xlu0 %v6301, 96
        %v7274 = vpop.permute.xlu0 %7273
        %7275 = vrot.lane.b32.xlu0 %v6302, 96
        %v7276 = vpop.permute.xlu0 %7275
        %7277 = vrot.lane.b32.xlu0 %v6316, 96
        %v7278 = vpop.permute.xlu0 %7277
        %7279 = vrot.lane.b32.xlu0 %v6303, 96
        %v7280 = vpop.permute.xlu0 %7279
        %7281 = vrot.lane.b32.xlu0 %v6304, 96
        %v7282 = vpop.permute.xlu0 %7281
        %7283 = vrot.lane.b32.xlu0 %v6305, 96
        %v7284 = vpop.permute.xlu0 %7283
        %7285 = vrot.lane.b32.xlu0 %v6306, 96
        %v7286 = vpop.permute.xlu0 %7285
        %7287 = vrot.lane.b32.xlu0 %v6317, 96
        %v7288 = vpop.permute.xlu0 %7287
        %vm7289 = vcmask 785408
        %v7290 = vsel %vm7289, %v7270, %v7272
        %v7291 = vsel %vm7289, %v7272, %v7274
        %v7292 = vsel %vm7289, %v7274, %v7276
        %v7293 = vsel %vm7289, %v7276, %v7278
        %v7294 = vsel %vm7289, %v7280, %v7282
        %v7295 = vsel %vm7289, %v7282, %v7284
        %v7296 = vsel %vm7289, %v7284, %v7286
        %v7297 = vsel %vm7289, %v7286, %v7288
        %v7307 = vsel %vm1081, %v7265, 0
        %v7310 = vsel %vm1081, %v7266, 0
        %v7313 = vsel %vm1081, %v7267, 0
        %v7316 = vsel %vm1081, %v7268, 0
        %7318 = vmatprep.subr.bf16.mxu0 %v7291
        %7319 = vmatpush1.bf16.msra.mxu0 %v7290
        %7320 = vmatprep.subr.bf16.mxu0 %v7295
        %7321 = vmatpush1.bf16.msra.mxu0 %v7294
        %7322 = vmatprep.subr.bf16.mxu0 0
        %7323 = vmatpush1.bf16.msra.mxu0 0
        %7324 = vmatprep.subr.bf16.mxu0 0
        %7325 = vmatpush1.bf16.msra.mxu0 0
        %7326 = vmatprep.subr.bf16.mxu0 0
        %7327 = vmatpush1.bf16.msra.mxu0 0
        %7328 = vmatprep.subr.bf16.mxu0 0
        %7329 = vmatpush1.bf16.msra.mxu0 0
        %7330 = vmatprep.subr.bf16.mxu0 0
        %7331 = vmatpush1.bf16.msra.mxu0 0
        %7332 = vmatprep.subr.bf16.mxu0 0
        %7333 = vmatpush1.bf16.msra.mxu0 0
        %7334 = vmatprep.subr.bf16.mxu0 0
        %7335 = vmatpush1.bf16.msra.mxu0 0
        %7336 = vmatprep.subr.bf16.mxu0 0
        %7337 = vmatpush1.bf16.msra.mxu0 0
        %7338 = vmatprep.subr.bf16.mxu0 0
        %7339 = vmatpush1.bf16.msra.mxu0 0
        %7340 = vmatprep.subr.bf16.mxu0 0
        %7341 = vmatpush1.bf16.msra.mxu0 0
        %7342 = vmatprep.subr.bf16.mxu0 0
        %7343 = vmatpush1.bf16.msra.mxu0 0
        %7344 = vmatprep.subr.bf16.mxu0 0
        %7345 = vmatpush1.bf16.msra.mxu0 0
        %7346 = vmatprep.subr.bf16.mxu0 0
        %7347 = vmatpush1.bf16.msra.mxu0 0
        %7348 = vmatprep.subr.bf16.mxu0 0
        %7349 = vmatpush1.bf16.msra.mxu0 0
        %7350 = vmatprep.mubr.bf16.mxu0 0
        %7351 = vmatmul.mubr.bf16.gmra.mrb[0].mxu0 %v7307
        %v7352 = vpop.f32.mrb[0].mxu0
        %v7353 = vadd.f32 0.0, %v7352
        %v7354 = vpop.f32.mrb[0].mxu0
        %v7355 = vadd.f32 0.0, %v7354
        %v7356 = vpop.f32.mrb[0].mxu0
        %v7357 = vadd.f32 0.0, %v7356
        %v7358 = vpop.f32.mrb[0].mxu0
        %v7359 = vadd.f32 0.0, %v7358
        %7360 = vmatprep.mubr.bf16.mxu0 0
        %7361 = vmatmul.mubr.bf16.gmra.mrb[0].mxu0 %v7310
        %v7362 = vpop.f32.mrb[0].mxu0
        %v7363 = vadd.f32 0.0, %v7362
        %v7364 = vpop.f32.mrb[0].mxu0
        %v7365 = vadd.f32 0.0, %v7364
        %v7366 = vpop.f32.mrb[0].mxu0
        %v7367 = vadd.f32 0.0, %v7366
        %v7368 = vpop.f32.mrb[0].mxu0
        %v7369 = vadd.f32 0.0, %v7368
        %7370 = vmatprep.mubr.bf16.mxu0 0
        %7371 = vmatmul.mubr.bf16.gmra.mrb[0].mxu0 %v7313
        %v7372 = vpop.f32.mrb[0].mxu0
        %v7373 = vadd.f32 0.0, %v7372
        %v7374 = vpop.f32.mrb[0].mxu0
        %v7375 = vadd.f32 0.0, %v7374
        %v7376 = vpop.f32.mrb[0].mxu0
        %v7377 = vadd.f32 0.0, %v7376
        %v7378 = vpop.f32.mrb[0].mxu0
        %v7379 = vadd.f32 0.0, %v7378
        %7380 = vmatprep.mubr.bf16.mxu0 0
        %7381 = vmatmul.mubr.bf16.gmra.mrb[0].mxu0 %v7316
        %v7382 = vpop.f32.mrb[0].mxu0
        %v7383 = vadd.f32 0.0, %v7382
        %v7384 = vpop.f32.mrb[0].mxu0
        %v7385 = vadd.f32 0.0, %v7384
        %v7386 = vpop.f32.mrb[0].mxu0
        %v7387 = vadd.f32 0.0, %v7386
        %v7388 = vpop.f32.mrb[0].mxu0
        %v7389 = vadd.f32 0.0, %v7388
        %7390 = vdwg.mxu0
        %7391 = vmatprep.subr.bf16.mxu0 %v7293
        %7392 = vmatpush1.bf16.msra.mxu0 %v7292
        %7393 = vmatprep.subr.bf16.mxu0 %v7297
        %7394 = vmatpush1.bf16.msra.mxu0 %v7296
        %7395 = vmatprep.subr.bf16.mxu0 0
        %7396 = vmatpush1.bf16.msra.mxu0 0
        %7397 = vmatprep.subr.bf16.mxu0 0
        %7398 = vmatpush1.bf16.msra.mxu0 0
        %7399 = vmatprep.subr.bf16.mxu0 0
        %7400 = vmatpush1.bf16.msra.mxu0 0
        %7401 = vmatprep.subr.bf16.mxu0 0
        %7402 = vmatpush1.bf16.msra.mxu0 0
        %7403 = vmatprep.subr.bf16.mxu0 0
        %7404 = vmatpush1.bf16.msra.mxu0 0
        %7405 = vmatprep.subr.bf16.mxu0 0
        %7406 = vmatpush1.bf16.msra.mxu0 0
        %7407 = vmatprep.subr.bf16.mxu0 0
        %7408 = vmatpush1.bf16.msra.mxu0 0
        %7409 = vmatprep.subr.bf16.mxu0 0
        %7410 = vmatpush1.bf16.msra.mxu0 0
        %7411 = vmatprep.subr.bf16.mxu0 0
        %7412 = vmatpush1.bf16.msra.mxu0 0
        %7413 = vmatprep.subr.bf16.mxu0 0
        %7414 = vmatpush1.bf16.msra.mxu0 0
        %7415 = vmatprep.subr.bf16.mxu0 0
        %7416 = vmatpush1.bf16.msra.mxu0 0
        %7417 = vmatprep.subr.bf16.mxu0 0
        %7418 = vmatpush1.bf16.msra.mxu0 0
        %7419 = vmatprep.subr.bf16.mxu0 0
        %7420 = vmatpush1.bf16.msra.mxu0 0
        %7421 = vmatprep.subr.bf16.mxu0 0
        %7422 = vmatpush1.bf16.msra.mxu0 0
        %7423 = vmatprep.mubr.bf16.mxu0 0
        %7424 = vmatmul.mubr.bf16.gmra.mrb[0].mxu0 %v7307
        %v7425 = vpop.f32.mrb[0].mxu0
        %v7426 = vadd.f32 0.0, %v7425
        %v7427 = vpop.f32.mrb[0].mxu0
        %v7428 = vadd.f32 0.0, %v7427
        %v7429 = vpop.f32.mrb[0].mxu0
        %v7430 = vadd.f32 0.0, %v7429
        %v7431 = vpop.f32.mrb[0].mxu0
        %v7432 = vadd.f32 0.0, %v7431
        %7433 = vmatprep.mubr.bf16.mxu0 0
        %7434 = vmatmul.mubr.bf16.gmra.mrb[0].mxu0 %v7310
        %v7435 = vpop.f32.mrb[0].mxu0
        %v7436 = vadd.f32 0.0, %v7435
        %v7437 = vpop.f32.mrb[0].mxu0
        %v7438 = vadd.f32 0.0, %v7437
        %v7439 = vpop.f32.mrb[0].mxu0
        %v7440 = vadd.f32 0.0, %v7439
        %v7441 = vpop.f32.mrb[0].mxu0
        %v7442 = vadd.f32 0.0, %v7441
        %7443 = vmatprep.mubr.bf16.mxu0 0
        %7444 = vmatmul.mubr.bf16.gmra.mrb[0].mxu0 %v7313
        %v7445 = vpop.f32.mrb[0].mxu0
        %v7446 = vadd.f32 0.0, %v7445
        %v7447 = vpop.f32.mrb[0].mxu0
        %v7448 = vadd.f32 0.0, %v7447
        %v7449 = vpop.f32.mrb[0].mxu0
        %v7450 = vadd.f32 0.0, %v7449
        %v7451 = vpop.f32.mrb[0].mxu0
        %v7452 = vadd.f32 0.0, %v7451
        %7453 = vmatprep.mubr.bf16.mxu0 0
        %7454 = vmatmul.mubr.bf16.gmra.mrb[0].mxu0 %v7316
        %v7455 = vpop.f32.mrb[0].mxu0
        %v7456 = vadd.f32 0.0, %v7455
        %v7457 = vpop.f32.mrb[0].mxu0
        %v7458 = vadd.f32 0.0, %v7457
        %v7459 = vpop.f32.mrb[0].mxu0
        %v7460 = vadd.f32 0.0, %v7459
        %v7461 = vpop.f32.mrb[0].mxu0
        %v7462 = vadd.f32 0.0, %v7461
        %7463 = vdwg.mxu0
        %v7464 = vadd.f32 %v7208, %v7353
        %v7465 = vadd.f32 %v7209, %v7355
        %v7466 = vadd.f32 %v7210, %v7426
        %v7467 = vadd.f32 %v7211, %v7428
        %v7468 = vadd.f32 %v7212, %v7357
        %v7469 = vadd.f32 %v7213, %v7359
        %v7470 = vadd.f32 %v7214, %v7430
        %v7471 = vadd.f32 %v7215, %v7432
        %v7472 = vadd.f32 %v7216, %v7363
        %v7473 = vadd.f32 %v7217, %v7365
        %v7474 = vadd.f32 %v7218, %v7436
        %v7475 = vadd.f32 %v7219, %v7438
        %v7476 = vadd.f32 %v7220, %v7367
        %v7477 = vadd.f32 %v7221, %v7369
        %v7478 = vadd.f32 %v7222, %v7440
        %v7479 = vadd.f32 %v7223, %v7442
        %v7480 = vadd.f32 %v7224, %v7373
        %v7481 = vadd.f32 %v7225, %v7375
        %v7482 = vadd.f32 %v7226, %v7446
        %v7483 = vadd.f32 %v7227, %v7448
        %v7484 = vadd.f32 %v7228, %v7377
        %v7485 = vadd.f32 %v7229, %v7379
        %v7486 = vadd.f32 %v7230, %v7450
        %v7487 = vadd.f32 %v7231, %v7452
        %v7488 = vadd.f32 %v7232, %v7383
        %v7489 = vadd.f32 %v7233, %v7385
        %v7490 = vadd.f32 %v7234, %v7456
        %v7491 = vadd.f32 %v7235, %v7458
        %v7492 = vadd.f32 %v7236, %v7387
        %v7493 = vadd.f32 %v7237, %v7389
        %v7494 = vadd.f32 %v7238, %v7460
        %v7495 = vadd.f32 %v7239, %v7462
        %s7496 = scalar_lea.vmem %s788, 192
        %v7497 = vld [vmem:[%s7496] sm:$0xff]
        %v7498 = vld [vmem:[%s7496 + $0x8] sm:$0xff]
        %v7499 = vld [vmem:[%s7496 + $0x10] sm:$0xff]
        %v7500 = vld [vmem:[%s7496 + $0x18] sm:$0xff]
        %v7501 = vld [vmem:[%s7496 + $0x20] sm:$0xff]
        %v7502 = vld [vmem:[%s7496 + $0x28] sm:$0xff]
        %v7503 = vld [vmem:[%s7496 + $0x30] sm:$0xff]
        %v7504 = vld [vmem:[%s7496 + $0x38] sm:$0xff]
        %7506 = vset.pattern.permute.xlu0 0
        %7507 = vperm.xlu0 %7506, %v7497
        %v7508 = vpop.permute.xlu0 %7507
        %7511 = vset.pattern.permute.xlu0 0
        %7512 = vperm.xlu0 %7511, %v7498
        %v7513 = vpop.permute.xlu0 %7512
        %7516 = vset.pattern.permute.xlu0 0
        %7517 = vperm.xlu0 %7516, %v7499
        %v7518 = vpop.permute.xlu0 %7517
        %7521 = vset.pattern.permute.xlu0 0
        %7522 = vperm.xlu0 %7521, %v7500
        %v7523 = vpop.permute.xlu0 %7522
        %7526 = vset.pattern.permute.xlu0 0
        %7527 = vperm.xlu0 %7526, %v7501
        %v7528 = vpop.permute.xlu0 %7527
        %7531 = vset.pattern.permute.xlu0 0
        %7532 = vperm.xlu0 %7531, %v7502
        %v7533 = vpop.permute.xlu0 %7532
        %7536 = vset.pattern.permute.xlu0 0
        %7537 = vperm.xlu0 %7536, %v7503
        %v7538 = vpop.permute.xlu0 %7537
        %7541 = vset.pattern.permute.xlu0 0
        %7542 = vperm.xlu0 %7541, %v7504
        %v7543 = vpop.permute.xlu0 %7542
        %v7545 = vadd.f32 %v7464, %v7508
        %v7546 = vadd.f32 %v7465, %v7508
        %v7547 = vadd.f32 %v7466, %v7508
        %v7548 = vadd.f32 %v7467, %v7508
        %v7549 = vadd.f32 %v7468, %v7513
        %v7550 = vadd.f32 %v7469, %v7513
        %v7551 = vadd.f32 %v7470, %v7513
        %v7552 = vadd.f32 %v7471, %v7513
        %v7553 = vadd.f32 %v7472, %v7518
        %v7554 = vadd.f32 %v7473, %v7518
        %v7555 = vadd.f32 %v7474, %v7518
        %v7556 = vadd.f32 %v7475, %v7518
        %v7557 = vadd.f32 %v7476, %v7523
        %v7558 = vadd.f32 %v7477, %v7523
        %v7559 = vadd.f32 %v7478, %v7523
        %v7560 = vadd.f32 %v7479, %v7523
        %v7561 = vadd.f32 %v7480, %v7528
        %v7562 = vadd.f32 %v7481, %v7528
        %v7563 = vadd.f32 %v7482, %v7528
        %v7564 = vadd.f32 %v7483, %v7528
        %v7565 = vadd.f32 %v7484, %v7533
        %v7566 = vadd.f32 %v7485, %v7533
        %v7567 = vadd.f32 %v7486, %v7533
        %v7568 = vadd.f32 %v7487, %v7533
        %v7569 = vadd.f32 %v7488, %v7538
        %v7570 = vadd.f32 %v7489, %v7538
        %v7571 = vadd.f32 %v7490, %v7538
        %v7572 = vadd.f32 %v7491, %v7538
        %v7573 = vadd.f32 %v7492, %v7543
        %v7574 = vadd.f32 %v7493, %v7543
        %v7575 = vadd.f32 %v7494, %v7543
        %v7576 = vadd.f32 %v7495, %v7543
        %v7577 = vtanh.pop %v7545
        %v7578 = vtanh.pop %v7546
        %v7579 = vtanh.pop %v7547
        %v7580 = vtanh.pop %v7548
        %v7581 = vtanh.pop %v7549
        %v7582 = vtanh.pop %v7550
        %v7583 = vtanh.pop %v7551
        %v7584 = vtanh.pop %v7552
        %v7585 = vtanh.pop %v7553
        %v7586 = vtanh.pop %v7554
        %v7587 = vtanh.pop %v7555
        %v7588 = vtanh.pop %v7556
        %v7589 = vtanh.pop %v7557
        %v7590 = vtanh.pop %v7558
        %v7591 = vtanh.pop %v7559
        %v7592 = vtanh.pop %v7560
        %v7593 = vxor.u32 %v7561, 2147483648
        %v7594 = vxor.u32 %v7562, 2147483648
        %v7595 = vxor.u32 %v7563, 2147483648
        %v7596 = vxor.u32 %v7564, 2147483648
        %v7597 = vxor.u32 %v7565, 2147483648
        %v7598 = vxor.u32 %v7566, 2147483648
        %v7599 = vxor.u32 %v7567, 2147483648
        %v7600 = vxor.u32 %v7568, 2147483648
        %v7601 = vxor.u32 %v7569, 2147483648
        %v7602 = vxor.u32 %v7570, 2147483648
        %v7603 = vxor.u32 %v7571, 2147483648
        %v7604 = vxor.u32 %v7572, 2147483648
        %v7605 = vxor.u32 %v7573, 2147483648
        %v7606 = vxor.u32 %v7574, 2147483648
        %v7607 = vxor.u32 %v7575, 2147483648
        %v7608 = vxor.u32 %v7576, 2147483648
        %v7609 = vmul.f32 %v7593, 1.442695
        %v7610 = vpow.pop %v7609
        %v7611 = vmul.f32 %v7594, 1.442695
        %v7612 = vpow.pop %v7611
        %v7613 = vmul.f32 %v7595, 1.442695
        %v7614 = vpow.pop %v7613
        %v7615 = vmul.f32 %v7596, 1.442695
        %v7616 = vpow.pop %v7615
        %v7617 = vmul.f32 %v7597, 1.442695
        %v7618 = vpow.pop %v7617
        %v7619 = vmul.f32 %v7598, 1.442695
        %v7620 = vpow.pop %v7619
        %v7621 = vmul.f32 %v7599, 1.442695
        %v7622 = vpow.pop %v7621
        %v7623 = vmul.f32 %v7600, 1.442695
        %v7624 = vpow.pop %v7623
        %v7625 = vmul.f32 %v7601, 1.442695
        %v7626 = vpow.pop %v7625
        %v7627 = vmul.f32 %v7602, 1.442695
        %v7628 = vpow.pop %v7627
        %v7629 = vmul.f32 %v7603, 1.442695
        %v7630 = vpow.pop %v7629
        %v7631 = vmul.f32 %v7604, 1.442695
        %v7632 = vpow.pop %v7631
        %v7633 = vmul.f32 %v7605, 1.442695
        %v7634 = vpow.pop %v7633
        %v7635 = vmul.f32 %v7606, 1.442695
        %v7636 = vpow.pop %v7635
        %v7637 = vmul.f32 %v7607, 1.442695
        %v7638 = vpow.pop %v7637
        %v7639 = vmul.f32 %v7608, 1.442695
        %v7640 = vpow.pop %v7639
        %v7641 = vadd.f32 %v7610, 1.0
        %v7642 = vadd.f32 %v7612, 1.0
        %v7643 = vadd.f32 %v7614, 1.0
        %v7644 = vadd.f32 %v7616, 1.0
        %v7645 = vadd.f32 %v7618, 1.0
        %v7646 = vadd.f32 %v7620, 1.0
        %v7647 = vadd.f32 %v7622, 1.0
        %v7648 = vadd.f32 %v7624, 1.0
        %v7649 = vadd.f32 %v7626, 1.0
        %v7650 = vadd.f32 %v7628, 1.0
        %v7651 = vadd.f32 %v7630, 1.0
        %v7652 = vadd.f32 %v7632, 1.0
        %v7653 = vadd.f32 %v7634, 1.0
        %v7654 = vadd.f32 %v7636, 1.0
        %v7655 = vadd.f32 %v7638, 1.0
        %v7656 = vadd.f32 %v7640, 1.0
        %v7657 = vrcp.pop %v7641
        %v7658 = vmul.f32 1.0, %v7657
        %v7659 = vrcp.pop %v7642
        %v7660 = vmul.f32 1.0, %v7659
        %v7661 = vrcp.pop %v7643
        %v7662 = vmul.f32 1.0, %v7661
        %v7663 = vrcp.pop %v7644
        %v7664 = vmul.f32 1.0, %v7663
        %v7665 = vrcp.pop %v7645
        %v7666 = vmul.f32 1.0, %v7665
        %v7667 = vrcp.pop %v7646
        %v7668 = vmul.f32 1.0, %v7667
        %v7669 = vrcp.pop %v7647
        %v7670 = vmul.f32 1.0, %v7669
        %v7671 = vrcp.pop %v7648
        %v7672 = vmul.f32 1.0, %v7671
        %v7673 = vrcp.pop %v7649
        %v7674 = vmul.f32 1.0, %v7673
        %v7675 = vrcp.pop %v7650
        %v7676 = vmul.f32 1.0, %v7675
        %v7677 = vrcp.pop %v7651
        %v7678 = vmul.f32 1.0, %v7677
        %v7679 = vrcp.pop %v7652
        %v7680 = vmul.f32 1.0, %v7679
        %v7681 = vrcp.pop %v7653
        %v7682 = vmul.f32 1.0, %v7681
        %v7683 = vrcp.pop %v7654
        %v7684 = vmul.f32 1.0, %v7683
        %v7685 = vrcp.pop %v7655
        %v7686 = vmul.f32 1.0, %v7685
        %v7687 = vrcp.pop %v7656
        %v7688 = vmul.f32 1.0, %v7687
        %v7689 = vmul.f32 %v7577, %v7658
        %v7690 = vmul.f32 %v7578, %v7660
        %v7691 = vmul.f32 %v7579, %v7662
        %v7692 = vmul.f32 %v7580, %v7664
        %v7693 = vmul.f32 %v7581, %v7666
        %v7694 = vmul.f32 %v7582, %v7668
        %v7695 = vmul.f32 %v7583, %v7670
        %v7696 = vmul.f32 %v7584, %v7672
        %v7697 = vmul.f32 %v7585, %v7674
        %v7698 = vmul.f32 %v7586, %v7676
        %v7699 = vmul.f32 %v7587, %v7678
        %v7700 = vmul.f32 %v7588, %v7680
        %v7701 = vmul.f32 %v7589, %v7682
        %v7702 = vmul.f32 %v7590, %v7684
        %v7703 = vmul.f32 %v7591, %v7686
        %v7704 = vmul.f32 %v7592, %v7688
        %s7705 = scalar_lea.vmem %s7, 96
        %v7706 = vld [vmem:[%s7705] sm:$0xf]
        %v7707 = vld [vmem:[%s7705 + $0x4] sm:$0xf]
        %v7708 = vld [vmem:[%s7705 + $0x8] sm:$0xf]
        %v7709 = vld [vmem:[%s7705 + $0xc] sm:$0xf]
        %v7710 = vld [vmem:[%s7705 + $0x10] sm:$0xf]
        %v7711 = vld [vmem:[%s7705 + $0x14] sm:$0xf]
        %v7712 = vld [vmem:[%s7705 + $0x18] sm:$0xf]
        %v7713 = vld [vmem:[%s7705 + $0x1c] sm:$0xf]
        %v7714 = vpack.c.bf16 %v7693, %v7689
        %v7715 = vpack.c.bf16 %v7694, %v7690
        %v7716 = vpack.c.bf16 %v7695, %v7691
        %v7717 = vpack.c.bf16 %v7696, %v7692
        %v7718 = vpack.c.bf16 %v7701, %v7697
        %v7719 = vpack.c.bf16 %v7702, %v7698
        %v7720 = vpack.c.bf16 %v7703, %v7699
        %v7721 = vpack.c.bf16 %v7704, %v7700
        %s7722 = scalar_lea.vmem %s8, 192
        %v7723 = vld [vmem:[%s7722] sm:$0xff]
        %v7724 = vld [vmem:[%s7722 + $0x8] sm:$0xff]
        %v7725 = vld [vmem:[%s7722 + $0x10] sm:$0xff]
        %v7726 = vld [vmem:[%s7722 + $0x18] sm:$0xff]
        %v7727 = vld [vmem:[%s7722 + $0x20] sm:$0xff]
        %v7728 = vld [vmem:[%s7722 + $0x28] sm:$0xff]
        %v7729 = vld [vmem:[%s7722 + $0x30] sm:$0xff]
        %v7730 = vld [vmem:[%s7722 + $0x38] sm:$0xff]
        %7732 = vset.pattern.permute.xlu0 0
        %7733 = vperm.xlu0 %7732, %v7723
        %v7734 = vpop.permute.xlu0 %7733
        %7736 = vset.pattern.permute.xlu0 0
        %7737 = vperm.xlu0 %7736, %v7724
        %v7738 = vpop.permute.xlu0 %7737
        %7740 = vset.pattern.permute.xlu0 0
        %7741 = vperm.xlu0 %7740, %v7725
        %v7742 = vpop.permute.xlu0 %7741
        %7744 = vset.pattern.permute.xlu0 0
        %7745 = vperm.xlu0 %7744, %v7726
        %v7746 = vpop.permute.xlu0 %7745
        %7748 = vset.pattern.permute.xlu0 0
        %7749 = vperm.xlu0 %7748, %v7727
        %v7750 = vpop.permute.xlu0 %7749
        %7753 = vset.pattern.permute.xlu0 0
        %7754 = vperm.xlu0 %7753, %v7728
        %v7755 = vpop.permute.xlu0 %7754
        %7758 = vset.pattern.permute.xlu0 0
        %7759 = vperm.xlu0 %7758, %v7729
        %v7760 = vpop.permute.xlu0 %7759
        %7763 = vset.pattern.permute.xlu0 0
        %7764 = vperm.xlu0 %7763, %v7730
        %v7765 = vpop.permute.xlu0 %7764
        %v7775 = vunpack.c.l.b16 %v7706
        %v7776 = vunpack.c.l.b16 %v7707
        %v7777 = vunpack.c.l.b16 %v7708
        %v7778 = vunpack.c.l.b16 %v7709
        %v7779 = vunpack.c.l.b16 %v7710
        %v7780 = vunpack.c.l.b16 %v7711
        %v7781 = vunpack.c.l.b16 %v7712
        %v7782 = vunpack.c.l.b16 %v7713
        %v7783 = vpack.c.b16 %v7776, %v7775
        %v7784 = vpack.c.b16 %v7778, %v7777
        %v7785 = vpack.c.b16 %v7780, %v7779
        %v7786 = vpack.c.b16 %v7782, %v7781
        %v7788 = vsel %vm1081, %v7783, 0
        %v7791 = vsel %vm1081, %v7784, 0
        %v7794 = vsel %vm1081, %v7785, 0
        %v7797 = vsel %vm1081, %v7786, 0
        %7799 = vmatprep.subr.bf16.mxu0 %v7715
        %7800 = vmatpush1.bf16.msra.mxu0 %v7714
        %7801 = vmatprep.subr.bf16.mxu0 %v7719
        %7802 = vmatpush1.bf16.msra.mxu0 %v7718
        %7803 = vmatprep.subr.bf16.mxu0 0
        %7804 = vmatpush1.bf16.msra.mxu0 0
        %7805 = vmatprep.subr.bf16.mxu0 0
        %7806 = vmatpush1.bf16.msra.mxu0 0
        %7807 = vmatprep.subr.bf16.mxu0 0
        %7808 = vmatpush1.bf16.msra.mxu0 0
        %7809 = vmatprep.subr.bf16.mxu0 0
        %7810 = vmatpush1.bf16.msra.mxu0 0
        %7811 = vmatprep.subr.bf16.mxu0 0
        %7812 = vmatpush1.bf16.msra.mxu0 0
        %7813 = vmatprep.subr.bf16.mxu0 0
        %7814 = vmatpush1.bf16.msra.mxu0 0
        %7815 = vmatprep.subr.bf16.mxu0 0
        %7816 = vmatpush1.bf16.msra.mxu0 0
        %7817 = vmatprep.subr.bf16.mxu0 0
        %7818 = vmatpush1.bf16.msra.mxu0 0
        %7819 = vmatprep.subr.bf16.mxu0 0
        %7820 = vmatpush1.bf16.msra.mxu0 0
        %7821 = vmatprep.subr.bf16.mxu0 0
        %7822 = vmatpush1.bf16.msra.mxu0 0
        %7823 = vmatprep.subr.bf16.mxu0 0
        %7824 = vmatpush1.bf16.msra.mxu0 0
        %7825 = vmatprep.subr.bf16.mxu0 0
        %7826 = vmatpush1.bf16.msra.mxu0 0
        %7827 = vmatprep.subr.bf16.mxu0 0
        %7828 = vmatpush1.bf16.msra.mxu0 0
        %7829 = vmatprep.subr.bf16.mxu0 0
        %7830 = vmatpush1.bf16.msra.mxu0 0
        %7831 = vmatprep.mubr.bf16.mxu0 0
        %7832 = vmatmul.mubr.bf16.gmra.mrb[0].mxu0 %v7788
        %v7833 = vpop.f32.mrb[0].mxu0
        %v7834 = vpop.f32.mrb[0].mxu0
        %v7835 = vpop.f32.mrb[0].mxu0
        %v7836 = vpop.f32.mrb[0].mxu0
        %7837 = vmatprep.mubr.bf16.mxu0 0
        %7838 = vmatmul.mubr.bf16.gmra.mrb[0].mxu0 %v7791
        %v7839 = vpop.f32.mrb[0].mxu0
        %v7840 = vpop.f32.mrb[0].mxu0
        %v7841 = vpop.f32.mrb[0].mxu0
        %v7842 = vpop.f32.mrb[0].mxu0
        %7843 = vmatprep.mubr.bf16.mxu0 0
        %7844 = vmatmul.mubr.bf16.gmra.mrb[0].mxu0 %v7794
        %v7845 = vpop.f32.mrb[0].mxu0
        %v7846 = vpop.f32.mrb[0].mxu0
        %v7847 = vadd.f32 %v7750, %v7846
        %v7848 = vpop.f32.mrb[0].mxu0
        %v7849 = vpop.f32.mrb[0].mxu0
        %v7850 = vadd.f32 %v7755, %v7849
        %7851 = vmatprep.mubr.bf16.mxu0 0
        %7852 = vmatmul.mubr.bf16.gmra.mrb[0].mxu0 %v7797
        %v7853 = vpop.f32.mrb[0].mxu0
        %v7854 = vpop.f32.mrb[0].mxu0
        %v7855 = vadd.f32 %v7760, %v7854
        %v7856 = vpop.f32.mrb[0].mxu0
        %v7857 = vpop.f32.mrb[0].mxu0
        %v7858 = vadd.f32 %v7765, %v7857
        %7859 = vdwg.mxu0
        %7860 = vmatprep.subr.bf16.mxu0 %v7717
        %7861 = vmatpush1.bf16.msra.mxu0 %v7716
        %7862 = vmatprep.subr.bf16.mxu0 %v7721
        %7863 = vmatpush1.bf16.msra.mxu0 %v7720
        %7864 = vmatprep.subr.bf16.mxu0 0
        %7865 = vmatpush1.bf16.msra.mxu0 0
        %7866 = vmatprep.subr.bf16.mxu0 0
        %7867 = vmatpush1.bf16.msra.mxu0 0
        %7868 = vmatprep.subr.bf16.mxu0 0
        %7869 = vmatpush1.bf16.msra.mxu0 0
        %7870 = vmatprep.subr.bf16.mxu0 0
        %7871 = vmatpush1.bf16.msra.mxu0 0
        %7872 = vmatprep.subr.bf16.mxu0 0
        %7873 = vmatpush1.bf16.msra.mxu0 0
        %7874 = vmatprep.subr.bf16.mxu0 0
        %7875 = vmatpush1.bf16.msra.mxu0 0
        %7876 = vmatprep.subr.bf16.mxu0 0
        %7877 = vmatpush1.bf16.msra.mxu0 0
        %7878 = vmatprep.subr.bf16.mxu0 0
        %7879 = vmatpush1.bf16.msra.mxu0 0
        %7880 = vmatprep.subr.bf16.mxu0 0
        %7881 = vmatpush1.bf16.msra.mxu0 0
        %7882 = vmatprep.subr.bf16.mxu0 0
        %7883 = vmatpush1.bf16.msra.mxu0 0
        %7884 = vmatprep.subr.bf16.mxu0 0
        %7885 = vmatpush1.bf16.msra.mxu0 0
        %7886 = vmatprep.subr.bf16.mxu0 0
        %7887 = vmatpush1.bf16.msra.mxu0 0
        %7888 = vmatprep.subr.bf16.mxu0 0
        %7889 = vmatpush1.bf16.msra.mxu0 0
        %7890 = vmatprep.subr.bf16.mxu0 0
        %7891 = vmatpush1.bf16.msra.mxu0 0
        %7892 = vmatprep.mubr.bf16.mxu0 0
        %7893 = vmatmul.mubr.bf16.gmra.mrb[0].mxu0 %v7788
        %v7894 = vpop.f32.mrb[0].mxu0
        %v7895 = vpop.f32.mrb[0].mxu0
        %v7896 = vpop.f32.mrb[0].mxu0
        %v7897 = vpop.f32.mrb[0].mxu0
        %7898 = vmatprep.mubr.bf16.mxu0 0
        %7899 = vmatmul.mubr.bf16.gmra.mrb[0].mxu0 %v7791
        %v7900 = vpop.f32.mrb[0].mxu0
        %v7901 = vpop.f32.mrb[0].mxu0
        %v7902 = vpop.f32.mrb[0].mxu0
        %v7903 = vpop.f32.mrb[0].mxu0
        %7904 = vmatprep.mubr.bf16.mxu0 0
        %7905 = vmatmul.mubr.bf16.gmra.mrb[0].mxu0 %v7794
        %v7906 = vpop.f32.mrb[0].mxu0
        %v7907 = vadd.f32 %v7750, %v7906
        %v7908 = vpop.f32.mrb[0].mxu0
        %v7909 = vpop.f32.mrb[0].mxu0
        %v7910 = vadd.f32 %v7755, %v7909
        %v7911 = vpop.f32.mrb[0].mxu0
        %7912 = vmatprep.mubr.bf16.mxu0 0
        %7913 = vmatmul.mubr.bf16.gmra.mrb[0].mxu0 %v7797
        %v7914 = vpop.f32.mrb[0].mxu0
        %v7915 = vadd.f32 %v7760, %v7914
        %v7916 = vpop.f32.mrb[0].mxu0
        %v7917 = vpop.f32.mrb[0].mxu0
        %v7918 = vadd.f32 %v7765, %v7917
        %v7919 = vpop.f32.mrb[0].mxu0
        %7920 = vdwg.mxu0
        %v7921 = vadd.f32 %v6202, %v7847
        %v7922 = vadd.f32 %v6203, %v7907
        %v7923 = vadd.f32 %v6204, %v7850
        %v7924 = vadd.f32 %v6205, %v7910
        %v7925 = vadd.f32 %v6206, %v7855
        %v7926 = vadd.f32 %v6207, %v7915
        %v7927 = vadd.f32 %v6208, %v7858
        %v7928 = vadd.f32 %v6209, %v7918
        %v7929 = vld [vmem:[%s9] sm:$0xf]
        %v7930 = vld [vmem:[%s9 + $0x4] sm:$0xf]
        %v7931 = vpack.c.bf16 %v7923, %v7921
        %v7932 = vpack.c.bf16 %v7924, %v7922
        %v7933 = vpack.c.bf16 %v7927, %v7925
        %v7934 = vpack.c.bf16 %v7928, %v7926
        %v7935 = vld [vmem:[%s10] sm:$0xff]
        %v7936 = vld [vmem:[%s10 + $0x8] sm:$0xff]
        %7938 = vset.pattern.permute.xlu0 0
        %7939 = vperm.xlu0 %7938, %v7935
        %v7940 = vpop.permute.xlu0 %7939
        %7943 = vset.pattern.permute.xlu0 0
        %7944 = vperm.xlu0 %7943, %v7936
        %v7945 = vpop.permute.xlu0 %7944
        %v7949 = vunpack.c.l.b16 %v7929
        %v7950 = vunpack.c.l.b16 %v7930
        %v7951 = vpack.c.b16 %v7950, %v7949
        %v7953 = vsel %vm1081, %v7951, 0
        %7955 = vmatprep.subr.bf16.mxu0 %v7932
        %7956 = vmatpush1.bf16.msra.mxu0 %v7931
        %7957 = vmatprep.subr.bf16.mxu0 %v7934
        %7958 = vmatpush1.bf16.msra.mxu0 %v7933
        %7959 = vmatprep.subr.bf16.mxu0 0
        %7960 = vmatpush1.bf16.msra.mxu0 0
        %7961 = vmatprep.subr.bf16.mxu0 0
        %7962 = vmatpush1.bf16.msra.mxu0 0
        %7963 = vmatprep.subr.bf16.mxu0 0
        %7964 = vmatpush1.bf16.msra.mxu0 0
        %7965 = vmatprep.subr.bf16.mxu0 0
        %7966 = vmatpush1.bf16.msra.mxu0 0
        %7967 = vmatprep.subr.bf16.mxu0 0
        %7968 = vmatpush1.bf16.msra.mxu0 0
        %7969 = vmatprep.subr.bf16.mxu0 0
        %7970 = vmatpush1.bf16.msra.mxu0 0
        %7971 = vmatprep.subr.bf16.mxu0 0
        %7972 = vmatpush1.bf16.msra.mxu0 0
        %7973 = vmatprep.subr.bf16.mxu0 0
        %7974 = vmatpush1.bf16.msra.mxu0 0
        %7975 = vmatprep.subr.bf16.mxu0 0
        %7976 = vmatpush1.bf16.msra.mxu0 0
        %7977 = vmatprep.subr.bf16.mxu0 0
        %7978 = vmatpush1.bf16.msra.mxu0 0
        %7979 = vmatprep.subr.bf16.mxu0 0
        %7980 = vmatpush1.bf16.msra.mxu0 0
        %7981 = vmatprep.subr.bf16.mxu0 0
        %7982 = vmatpush1.bf16.msra.mxu0 0
        %7983 = vmatprep.subr.bf16.mxu0 0
        %7984 = vmatpush1.bf16.msra.mxu0 0
        %7985 = vmatprep.subr.bf16.mxu0 0
        %7986 = vmatpush1.bf16.msra.mxu0 0
        %7987 = vmatprep.mubr.bf16.mxu0 0
        %7988 = vmatmul.mubr.bf16.gmra.mrb[0].mxu0 %v7953
        %v7989 = vpop.f32.mrb[0].mxu0
        %v7990 = vadd.f32 %v7940, %v7989
        %v7991 = vpop.f32.mrb[0].mxu0
        %v7992 = vadd.f32 %v7940, %v7991
        %v7993 = vpop.f32.mrb[0].mxu0
        %v7994 = vadd.f32 %v7945, %v7993
        %v7995 = vpop.f32.mrb[0].mxu0
        %v7996 = vadd.f32 %v7945, %v7995
        %7997 = vdwg.mxu0
        %v7998 = vmul.f32 %v7990, %v895
        %v7999 = vmul.f32 %v7992, %v896
        %v8000 = vmul.f32 %v7994, %v895
        %v8001 = vmul.f32 %v7996, %v896
        %v8002 = vld [vmem:[%s782] sm:$0xff]
        %v8003 = vld [vmem:[%s782 + $0x8] sm:$0xff]
        %v8004 = vmul.f32 %v8000, 1.442695
        %v8005 = vpow.pop %v8004
        %v8006 = vmul.f32 %v8001, 1.442695
        %v8007 = vpow.pop %v8006
        %v8008 = vmul.f32 %v8002, %v8005
        %v8009 = vmul.f32 %v8003, %v8007
        %v8010 = vadd.f32 %v7998, %v8008
        %v8011 = vadd.f32 %v7999, %v8009
        %v8012 = vmul.f32 %v8010, %v895
        %v8013 = vmul.f32 %v8011, %v896
        %8014 = vst [vmem:[%s797] sm:$0xff] %v8012
        %8015 = vst [vmem:[%s797 + $0x8] sm:$0xff] %v8013
        %v8016 = vpack.c.bf16 %v7998, %v7998
        %v8017 = vpack.c.bf16 %v7999, %v7999
        %v8020 = vunpack.c.l.b16 %v8016
        %v8021 = vunpack.c.l.b16 %v8017
        %v8022 = vpack.c.b16 %v8021, %v8020
        %8024 = vst [vmem:[%s807] sm:$0xff] %v8022
        %v8025 = vpack.c.bf16 %v8000, %v8000
        %v8026 = vpack.c.bf16 %v8001, %v8001
        %v8029 = vunpack.c.l.b16 %v8025
        %v8030 = vunpack.c.l.b16 %v8026
        %v8031 = vpack.c.b16 %v8030, %v8029
        %8033 = vst [vmem:[%s817] sm:$0xff] %v8031
        %s8034 = smul.u32 2, %s31
        %p8035 = scmp.lt.s32.totalorder %s30, 1
        %s8036 = scalar_select %p8035, %s30, 1
        %p8037 = scmp.lt.s32.totalorder %s8034, 5
        %s8038 = scalar_select %p8037, %s8034, 5
        %s8039 = smul.addr %s8036, 6
        %s8040 = sadd.s32 %s8038, %s8039
        %s8041 = smul.addr %s8040, 8
        %s8042 = scalar_lea.vmem %s11, %s8041
        %s8043 = smul.u32 2, %s31
        %p8044 = scmp.lt.s32.totalorder %s30, 1
        %s8045 = scalar_select %p8044, %s30, 1
        %p8046 = scmp.lt.s32.totalorder %s8043, 5
        %s8047 = scalar_select %p8046, %s8043, 5
        %s8048 = smul.addr %s8045, 6
        %s8049 = sadd.s32 %s8047, %s8048
        %s8050 = smul.addr %s8049, 4
        %s8051 = scalar_lea.vmem %s12, %s8050
        %s8052 = smul.u32 2, %s31
        %p8053 = scmp.lt.s32.totalorder %s30, 1
        %s8054 = scalar_select %p8053, %s30, 1
        %p8055 = scmp.lt.s32.totalorder %s8052, 5
        %s8056 = scalar_select %p8055, %s8052, 5
        %s8057 = smul.addr %s8054, 6
        %s8058 = sadd.s32 %s8056, %s8057
        %s8059 = smul.addr %s8058, 4
        %s8060 = scalar_lea.vmem %s13, %s8059
        // Predicated region
        $region189: #{posterior_encoder_forward.3} parent=171 // pred_check
          %p8061 = pneg %p338
        $region190: #{posterior_encoder_forward.3} parent=171 // pred_check_branch
          %8063 = sbr.rel (%p8061) target = $region192
        $region191: #{posterior_encoder_forward.3} parent=171 // pred_region
          %s8064 = smul.u32 2, %s31
        $region192: #{posterior_encoder_forward.3} parent=171 // pred_fallthru
          _
        // Predicated region
        $region193: #{posterior_encoder_forward.3} parent=171 // pred_check
          %p8065 = pneg %p366
        $region194: #{posterior_encoder_forward.3} parent=171 // pred_check_branch
          %8067 = sbr.rel (%p8065) target = $region196
        $region195: #{posterior_encoder_forward.3} parent=171 // pred_region
          %s8068 = smul.u32 2, %s31
        $region196: #{posterior_encoder_forward.3} parent=171 // pred_fallthru
          _
        // Predicated region
        $region197: #{posterior_encoder_forward.3} parent=171 // pred_check
          %p8069 = pneg %p394
        $region198: #{posterior_encoder_forward.3} parent=171 // pred_check_branch
          %8071 = sbr.rel (%p8069) target = $region200
        $region199: #{posterior_encoder_forward.3} parent=171 // pred_region
          %s8072 = smul.u32 2, %s31
        $region200: #{posterior_encoder_forward.3} parent=171 // pred_fallthru
          _
      $region172: #{posterior_encoder_forward.3} parent=5 // pred_fallthru
        _
      %p8073 = scmp.le.s32.totalorder 2, %s21
      // Predicated region
      $region201: #{posterior_encoder_forward.3} parent=5 // pred_check
        %p8074 = pneg %p8073
      $region202: #{posterior_encoder_forward.3} parent=5 // pred_check_branch
        %8076 = sbr.rel (%p8074) target = $region204
      $region203: #{posterior_encoder_forward.3} parent=5 // pred_region
        %s8077 = ssub.s32 %s21, 2
        // Predicated region
        $region205: #{posterior_encoder_forward.3} parent=203 // pred_check
          %p8078 = pneg %p344
        $region206: #{posterior_encoder_forward.3} parent=203 // pred_check_branch
          %8080 = sbr.rel (%p8078) target = $region208
        $region207: #{posterior_encoder_forward.3} parent=203 // pred_region
          %s8081 = smul.u32 2, %s33
          %p8082 = scmp.lt.s32.totalorder %s32, 1
          %s8083 = scalar_select %p8082, %s32, 1
          %p8084 = scmp.lt.s32.totalorder %s8081, 5
          %s8085 = scalar_select %p8084, %s8081, 5
          %s8086 = smul.addr %s8083, 6
          %s8087 = sadd.s32 %s8085, %s8086
          %s8088 = smul.addr %s8087, 8
          %s8089 = scalar_lea.vmem %s11, %s8088
        $region208: #{posterior_encoder_forward.3} parent=203 // pred_fallthru
          _
        // Predicated region
        $region209: #{posterior_encoder_forward.3} parent=203 // pred_check
          %p8090 = pneg %p372
        $region210: #{posterior_encoder_forward.3} parent=203 // pred_check_branch
          %8092 = sbr.rel (%p8090) target = $region212
        $region211: #{posterior_encoder_forward.3} parent=203 // pred_region
          %s8093 = smul.u32 2, %s33
          %p8094 = scmp.lt.s32.totalorder %s32, 1
          %s8095 = scalar_select %p8094, %s32, 1
          %p8096 = scmp.lt.s32.totalorder %s8093, 5
          %s8097 = scalar_select %p8096, %s8093, 5
          %s8098 = smul.addr %s8095, 6
          %s8099 = sadd.s32 %s8097, %s8098
          %s8100 = smul.addr %s8099, 4
          %s8101 = scalar_lea.vmem %s12, %s8100
        $region212: #{posterior_encoder_forward.3} parent=203 // pred_fallthru
          _
        // Predicated region
        $region213: #{posterior_encoder_forward.3} parent=203 // pred_check
          %p8102 = pneg %p400
        $region214: #{posterior_encoder_forward.3} parent=203 // pred_check_branch
          %8104 = sbr.rel (%p8102) target = $region216
        $region215: #{posterior_encoder_forward.3} parent=203 // pred_region
          %s8105 = smul.u32 2, %s33
          %p8106 = scmp.lt.s32.totalorder %s32, 1
          %s8107 = scalar_select %p8106, %s32, 1
          %p8108 = scmp.lt.s32.totalorder %s8105, 5
          %s8109 = scalar_select %p8108, %s8105, 5
          %s8110 = smul.addr %s8107, 6
          %s8111 = sadd.s32 %s8109, %s8110
          %s8112 = smul.addr %s8111, 4
          %s8113 = scalar_lea.vmem %s13, %s8112
        $region216: #{posterior_encoder_forward.3} parent=203 // pred_fallthru
          _
      $region204: #{posterior_encoder_forward.3} parent=5 // pred_fallthru
        _
    $region6: #{posterior_encoder_forward.3} parent=1 // loop_footer
      %s25 = sadd.s32 1, %s21
    $region7: #{posterior_encoder_forward.3} parent=1 // loop_footer_branch
      %20 = sbr.rel target = $region3
    $region8: #{posterior_encoder_forward.3} parent=1 // loop_exit
      _
    %8114 = vsyncpa [#allocation3], 1
    %s8115 = scalar_lea.sflag [#allocation3], 1
    %8116 = vsyncpa %s8115, 1

</llo_original>
